<compile_context>
chip_gen: v7x
topology: tpu7x:2x2x1
jax: 0.10.0
libtpu: 0.0.40
codegen_flags: <defaults>
</compile_context>

<pallas_src>
import jax
import jax.numpy as jnp
from jax.experimental import pallas as pl
from jax.experimental.pallas import tpu as pltpu

EPS = 1e-5


def _round_up(x, m):
    return ((x + m - 1) // m) * m


def periodic_padding_3d(x):
    # circular pad of 1 on each side of the 3 spatial dims (NCDHW)
    return jnp.pad(x, ((0, 0), (0, 0), (1, 1), (1, 1), (1, 1)), mode="wrap")


def _make_conv_stats_kernel(koffs, cout, tm):
    def kernel(x_ref, w_ref, mask_ref, conv_ref, sum_ref, sq_ref):
        # x_ref:    [1, 1, Cin, TSLAB] bf16  activation slab (tile + halo), resident per (n, m)
        # w_ref:    [27, Cout, Cin]    bf16  resident (constant index_map)
        # mask_ref: [1, TM]            f32   1.0 at valid output positions
        # conv_ref: [1, Cout, TM]      f32   full-correlation conv tile (lane-dense)
        # sum_ref / sq_ref: [1, Cout, 1] f32 per-batch stat accumulators (resident over m)
        m = pl.program_id(1)

        @pl.when(m == 0)
        def _():
            sum_ref[...] = jnp.zeros_like(sum_ref)
            sq_ref[...] = jnp.zeros_like(sq_ref)

        acc = jnp.zeros((cout, tm), jnp.float32)
        for k, off in enumerate(koffs):              # 27 taps, unrolled
            xk = x_ref[0, 0, :, off:off + tm]        # [Cin, TM] bf16, static shifted slice
            acc = acc + jnp.dot(w_ref[k], xk,
                                preferred_element_type=jnp.float32)

        conv_ref[0] = acc
        masked = acc * mask_ref[...]                 # zero invalid / padded lanes
        sum_ref[0] += jnp.sum(masked, axis=1, keepdims=True)
        sq_ref[0] += jnp.sum(masked * acc, axis=1, keepdims=True)

    return kernel


def _bn_relu_kernel(conv_ref, scale_ref, shift_ref, o_ref):
    # conv_ref: [1, Cout, TM] f32; scale/shift: [Cout, 1] f32 (pre-folded)
    y = conv_ref[0] * scale_ref[...] + shift_ref[...]
    o_ref[0] = jnp.maximum(y, 0.0).astype(o_ref.dtype)


def basic_block_forward(x, conv_b_unused_w=None, conv_b=None, gamma=None, beta=None,
                        stride=1, tm=2048):
    raise NotImplementedError  # placeholder guard; real entry point below


def basic_block_forward(x, conv_w, conv_b, gamma, beta, stride=1, tm=2048):
    # Conv bias is mathematically cancelled by training-mode BN mean subtraction.
    del conv_b
    N, Cin, D, H, W = x.shape
    Cout = conv_w.shape[0]

    Dp, Hp, Wp = D + 2, H + 2, W + 2
    Do = (Dp - 3) // stride + 1
    Ho = (Hp - 3) // stride + 1
    Wo = (Wp - 3) // stride + 1

    # ---- wrapper-side prep: only the activation (bf16), no 27x im2col ----
    x_pad = periodic_padding_3d(x).astype(jnp.bfloat16)   # cast BEFORE any copies
    P = Dp * Hp * Wp
    x_flat = x_pad.reshape(N, Cin, P)

    # Full-correlation flat layout: the conv window starting at padded position
    # p = d*Hp*Wp + h*Wp + w is  sum_k  W_k @ x_flat[:, p + koff(k)],
    # with koff(kd,kh,kw) = kd*Hp*Wp + kh*Wp + kw.
    Dtop = (Do - 1) * stride + 1
    Mneed = Dtop * Hp * Wp                          # flat range covering all outputs
    tm_eff = _round_up(min(tm, _round_up(Mneed, 128)), 128)
    Mp = _round_up(Mneed, tm_eff)
    nm = Mp // tm_eff

    koff_max = 2 * Hp * Wp + 2 * Wp + 2
    tslab = tm_eff + _round_up(koff_max, 128)       # tile + halo, lane-aligned
    lpad = (nm - 1) * tm_eff + tslab
    if lpad > P:
        x_flat = jnp.pad(x_flat, ((0, 0), (0, 0), (0, lpad - P)))
    # Overlapping (tile + halo) slabs: duplication ~ tslab/tm_eff, all in bf16.
    x_slabs = jnp.stack(
        [x_flat[:, :, m * tm_eff:m * tm_eff + tslab] for m in range(nm)], axis=1)

    # Per-tap weights [27, Cout, Cin], same (kd, kh, kw) ordering as koffs.
    w_stack = jnp.transpose(conv_w, (2, 3, 4, 0, 1)).reshape(27, Cout, Cin)
    w_stack = w_stack.astype(jnp.bfloat16)
    koffs = [kd * Hp * Wp + kh * Wp + kw
             for kd in range(3) for kh in range(3) for kw in range(3)]

    # Validity mask over the padded flat layout (selects the strided output grid).
    p_idx = jnp.arange(Mp, dtype=jnp.int32)
    d_i = p_idx // (Hp * Wp)
    r_i = p_idx % (Hp * Wp)
    h_i = r_i // Wp
    w_i = r_i % Wp
    valid = ((d_i % stride == 0) & (d_i // stride < Do) &
             (h_i % stride == 0) & (h_i // stride < Ho) &
             (w_i % stride == 0) & (w_i // stride < Wo))
    mask = valid.astype(jnp.float32).reshape(1, Mp)

    grid = (N, nm)
    kernel1 = _make_conv_stats_kernel(koffs, Cout, tm_eff)

    # ---- pass 1: conv (lane-dense [Cout, TM] tiles) + per-batch BN partial stats ----
    conv_flat, ch_sum, ch_sq = pl.pallas_call(
        kernel1,
        out_shape=(
            jax.ShapeDtypeStruct((N, Cout, Mp), jnp.float32),
            jax.ShapeDtypeStruct((N, Cout, 1), jnp.float32),
            jax.ShapeDtypeStruct((N, Cout, 1), jnp.float32),
        ),
        grid_spec=pltpu.PrefetchScalarGridSpec(
            num_scalar_prefetch=0,
            grid=grid,
            in_specs=[
                pl.BlockSpec((1, 1, Cin, tslab), lambda n, m: (n, m, 0, 0)),
                pl.BlockSpec((27, Cout, Cin), lambda n, m: (0, 0, 0)),
                pl.BlockSpec((1, tm_eff), lambda n, m: (0, m)),
            ],
            out_specs=(
                pl.BlockSpec((1, Cout, tm_eff), lambda n, m: (n, 0, m)),
                pl.BlockSpec((1, Cout, 1), lambda n, m: (n, 0, 0)),
                pl.BlockSpec((1, Cout, 1), lambda n, m: (n, 0, 0)),
            ),
        ),
        compiler_params=pltpu.CompilerParams(
            # per-batch stat blocks -> batch axis is safely megacore-parallel (v7x)
            dimension_semantics=("parallel", "arbitrary"),
            vmem_limit_bytes=32 * 1024 * 1024),
    )(x_slabs, w_stack, mask)

    # ---- fold BN into a single per-channel scale/shift (tiny [Cout] math) ----
    count = jnp.float32(N * Do * Ho * Wo)           # true element count (mask-exact)
    s1 = jnp.sum(ch_sum[:, :, 0], axis=0)
    s2 = jnp.sum(ch_sq[:, :, 0], axis=0)
    mean = s1 / count
    var = jnp.maximum(s2 / count - mean * mean, 0.0)  # biased var (BN training mode)
    inv_std = jax.lax.rsqrt(var + EPS)
    scale_v = gamma.astype(jnp.float32) * inv_std
    shift_v = beta.astype(jnp.float32) - mean * scale_v
    scale = scale_v.reshape(Cout, 1)
    shift = shift_v.reshape(Cout, 1)

    # ---- pass 2: fused normalize + ReLU (fully parallel, large lane-dense tiles) ----
    out_flat = pl.pallas_call(
        _bn_relu_kernel,
        out_shape=jax.ShapeDtypeStruct((N, Cout, Mp), jnp.float32),
        grid_spec=pltpu.PrefetchScalarGridSpec(
            num_scalar_prefetch=0,
            grid=grid,
            in_specs=[
                pl.BlockSpec((1, Cout, tm_eff), lambda n, m: (n, 0, m)),
                pl.BlockSpec((Cout, 1), lambda n, m: (0, 0)),
                pl.BlockSpec((Cout, 1), lambda n, m: (0, 0)),
            ],
            out_specs=pl.BlockSpec((1, Cout, tm_eff), lambda n, m: (n, 0, m)),
        ),
        compiler_params=pltpu.CompilerParams(
            dimension_semantics=("parallel", "parallel"),
            vmem_limit_bytes=32 * 1024 * 1024),
    )(conv_flat, scale, shift)

    # ---- select the valid (strided) output grid and reshape to NCDHW ----
    out = out_flat[:, :, :Mneed].reshape(N, Cout, Dtop, Hp, Wp)
    out = out[:, :,
              0:(Do - 1) * stride + 1:stride,
              0:(Ho - 1) * stride + 1:stride,
              0:(Wo - 1) * stride + 1:stride]
    return out


if __name__ == "__main__":
    key = jax.random.PRNGKey(0)
    N, Cin, Cout, D, H, W = 2, 4, 8, 8, 8, 8

    k1, k2, k3 = jax.random.split(key, 3)
    x = jax.random.normal(k1, (N, Cin, D, H, W), dtype=jnp.float32)

    # Conv3d params (deterministic synthetic init)
    fan_in = Cin * 27
    bound = 1.0 / (fan_in ** 0.5)
    conv_w = jax.random.uniform(k2, (Cout, Cin, 3, 3, 3), jnp.float32, -bound, bound)
    conv_b = jax.random.uniform(k3, (Cout,), jnp.float32, -bound, bound)

    # BatchNorm3d default affine params
    gamma = jnp.ones((Cout,), jnp.float32)
    beta = jnp.zeros((Cout,), jnp.float32)

    fwd = jax.jit(basic_block_forward, static_argnames=("stride", "tm"))
    out = fwd(x, conv_w, conv_b, gamma, beta)
    jax.block_until_ready(out)
    assert out.shape == (N, Cout, D, H, W)
    print("KERNEL_OK")
</pallas_src>

<mosaic_0001>
module attributes {stable_mosaic.version = 11 : i64} {
  func.func @kernel(%arg0: i32, %arg1: i32, %arg2: memref<1x1x4x1152xbf16, #tpu.memory_space<vmem>>, %arg3: memref<27x8x4xbf16, #tpu.memory_space<vmem>>, %arg4: memref<1x896xf32, #tpu.memory_space<vmem>>, %arg5: memref<1x8x896xf32, #tpu.memory_space<vmem>>, %arg6: memref<1x8x1xf32, #tpu.memory_space<vmem>>, %arg7: memref<1x8x1xf32, #tpu.memory_space<vmem>>) attributes {dimension_semantics = [#tpu.dimension_semantics<parallel>, #tpu.dimension_semantics<arbitrary>], iteration_bounds = array<i64: 2, 1>, scalar_prefetch = 0 : i64, scratch_operands = 0 : i64, tpu.core_type = #tpu.core_type<tc>, window_params = [{transform_indices = @transform_0, window_bounds = array<i64: 1, 1, 4, 1152>}, {pipeline_mode = #tpu.pipeline_mode<synchronous>, transform_indices = @transform_1, window_bounds = array<i64: 27, 8, 4>}, {transform_indices = @transform_2, window_bounds = array<i64: 1, 896>}, {transform_indices = @transform_3, window_bounds = array<i64: 1, 8, 896>}, {transform_indices = @transform_4, window_bounds = array<i64: 1, 8, 1>}, {transform_indices = @transform_5, window_bounds = array<i64: 1, 8, 1>}]} {
    %c0_i32 = arith.constant 0 : i32
    %0 = arith.cmpi eq, %arg1, %c0_i32 : i32
    %1 = arith.extui %0 : i1 to i32
    %c0_i32_0 = arith.constant 0 : i32
    %2 = arith.cmpi ne, %1, %c0_i32_0 : i32
    scf.if %2 {
      %cst_191 = arith.constant 0.000000e+00 : f32
      %189 = vector.broadcast %cst_191 : f32 to vector<1x8x1xf32>
      %c0_192 = arith.constant 0 : index
      %c0_193 = arith.constant 0 : index
      %c0_194 = arith.constant 0 : index
      %190 = vector.load %arg6[%c0_192, %c0_193, %c0_194] : memref<1x8x1xf32, #tpu.memory_space<vmem>>, vector<1x8x1xf32>
      tpu.vector_store %arg6[%c0_192, %c0_193, %c0_194], %189 {strides = array<i32>} : memref<1x8x1xf32, #tpu.memory_space<vmem>>, vector<1x8x1xf32>,
      %cst_195 = arith.constant 0.000000e+00 : f32
      %191 = vector.broadcast %cst_195 : f32 to vector<1x8x1xf32>
      %c0_196 = arith.constant 0 : index
      %c0_197 = arith.constant 0 : index
      %c0_198 = arith.constant 0 : index
      %192 = vector.load %arg7[%c0_196, %c0_197, %c0_198] : memref<1x8x1xf32, #tpu.memory_space<vmem>>, vector<1x8x1xf32>
      tpu.vector_store %arg7[%c0_196, %c0_197, %c0_198], %191 {strides = array<i32>} : memref<1x8x1xf32, #tpu.memory_space<vmem>>, vector<1x8x1xf32>,
    } else {
    }
    %cst = arith.constant 0.000000e+00 : f32
    %3 = vector.broadcast %cst : f32 to vector<8x896xf32>
    %c0 = arith.constant 0 : index
    %c0_1 = arith.constant 0 : index
    %c0_2 = arith.constant 0 : index
    %c0_3 = arith.constant 0 : index
    %4 = vector.load %arg2[%c0, %c0_1, %c0_2, %c0_3] : memref<1x1x4x1152xbf16, #tpu.memory_space<vmem>>, vector<1x1x4x896xbf16>
    %5 = vector.shape_cast %4 : vector<1x1x4x896xbf16> to vector<4x896xbf16>
    %c0_4 = arith.constant 0 : index
    %c0_5 = arith.constant 0 : index
    %c0_6 = arith.constant 0 : index
    %6 = vector.load %arg3[%c0_4, %c0_5, %c0_6] : memref<27x8x4xbf16, #tpu.memory_space<vmem>>, vector<1x8x4xbf16>
    %7 = vector.shape_cast %6 : vector<1x8x4xbf16> to vector<8x4xbf16>
    %cst_7 = arith.constant dense<0.000000e+00> : vector<8x896xf32>
    %8 = tpu.matmul %7, %5, %cst_7 {dimension_numbers = #tpu.dot_dimension_numbers<[1], [0], [0], [1], [0, 0, 1, 1], [], []>} : vector<8x4xbf16>, vector<4x896xbf16>, vector<8x896xf32> -> vector<8x896xf32>
    %9 = arith.addf %3, %8 : vector<8x896xf32>
    %c0_8 = arith.constant 0 : index
    %c0_9 = arith.constant 0 : index
    %c0_10 = arith.constant 0 : index
    %c1 = arith.constant 1 : index
    %10 = vector.load %arg2[%c0_8, %c0_9, %c0_10, %c1] : memref<1x1x4x1152xbf16, #tpu.memory_space<vmem>>, vector<1x1x4x896xbf16>
    %11 = vector.shape_cast %10 : vector<1x1x4x896xbf16> to vector<4x896xbf16>
    %c1_11 = arith.constant 1 : index
    %c0_12 = arith.constant 0 : index
    %c0_13 = arith.constant 0 : index
    %12 = vector.load %arg3[%c1_11, %c0_12, %c0_13] : memref<27x8x4xbf16, #tpu.memory_space<vmem>>, vector<1x8x4xbf16>
    %13 = vector.shape_cast %12 : vector<1x8x4xbf16> to vector<8x4xbf16>
    %cst_14 = arith.constant dense<0.000000e+00> : vector<8x896xf32>
    %14 = tpu.matmul %13, %11, %cst_14 {dimension_numbers = #tpu.dot_dimension_numbers<[1], [0], [0], [1], [0, 0, 1, 1], [], []>} : vector<8x4xbf16>, vector<4x896xbf16>, vector<8x896xf32> -> vector<8x896xf32>
    %15 = arith.addf %9, %14 : vector<8x896xf32>
    %c0_15 = arith.constant 0 : index
    %c0_16 = arith.constant 0 : index
    %c0_17 = arith.constant 0 : index
    %c2 = arith.constant 2 : index
    %16 = vector.load %arg2[%c0_15, %c0_16, %c0_17, %c2] : memref<1x1x4x1152xbf16, #tpu.memory_space<vmem>>, vector<1x1x4x896xbf16>
    %17 = vector.shape_cast %16 : vector<1x1x4x896xbf16> to vector<4x896xbf16>
    %c2_18 = arith.constant 2 : index
    %c0_19 = arith.constant 0 : index
    %c0_20 = arith.constant 0 : index
    %18 = vector.load %arg3[%c2_18, %c0_19, %c0_20] : memref<27x8x4xbf16, #tpu.memory_space<vmem>>, vector<1x8x4xbf16>
    %19 = vector.shape_cast %18 : vector<1x8x4xbf16> to vector<8x4xbf16>
    %cst_21 = arith.constant dense<0.000000e+00> : vector<8x896xf32>
    %20 = tpu.matmul %19, %17, %cst_21 {dimension_numbers = #tpu.dot_dimension_numbers<[1], [0], [0], [1], [0, 0, 1, 1], [], []>} : vector<8x4xbf16>, vector<4x896xbf16>, vector<8x896xf32> -> vector<8x896xf32>
    %21 = arith.addf %15, %20 : vector<8x896xf32>
    %c0_22 = arith.constant 0 : index
    %c0_23 = arith.constant 0 : index
    %c0_24 = arith.constant 0 : index
    %c10 = arith.constant 10 : index
    %22 = vector.load %arg2[%c0_22, %c0_23, %c0_24, %c10] : memref<1x1x4x1152xbf16, #tpu.memory_space<vmem>>, vector<1x1x4x896xbf16>
    %23 = vector.shape_cast %22 : vector<1x1x4x896xbf16> to vector<4x896xbf16>
    %c3 = arith.constant 3 : index
    %c0_25 = arith.constant 0 : index
    %c0_26 = arith.constant 0 : index
    %24 = vector.load %arg3[%c3, %c0_25, %c0_26] : memref<27x8x4xbf16, #tpu.memory_space<vmem>>, vector<1x8x4xbf16>
    %25 = vector.shape_cast %24 : vector<1x8x4xbf16> to vector<8x4xbf16>
    %cst_27 = arith.constant dense<0.000000e+00> : vector<8x896xf32>
    %26 = tpu.matmul %25, %23, %cst_27 {dimension_numbers = #tpu.dot_dimension_numbers<[1], [0], [0], [1], [0, 0, 1, 1], [], []>} : vector<8x4xbf16>, vector<4x896xbf16>, vector<8x896xf32> -> vector<8x896xf32>
    %27 = arith.addf %21, %26 : vector<8x896xf32>
    %c0_28 = arith.constant 0 : index
    %c0_29 = arith.constant 0 : index
    %c0_30 = arith.constant 0 : index
    %c11 = arith.constant 11 : index
    %28 = vector.load %arg2[%c0_28, %c0_29, %c0_30, %c11] : memref<1x1x4x1152xbf16, #tpu.memory_space<vmem>>, vector<1x1x4x896xbf16>
    %29 = vector.shape_cast %28 : vector<1x1x4x896xbf16> to vector<4x896xbf16>
    %c4 = arith.constant 4 : index
    %c0_31 = arith.constant 0 : index
    %c0_32 = arith.constant 0 : index
    %30 = vector.load %arg3[%c4, %c0_31, %c0_32] : memref<27x8x4xbf16, #tpu.memory_space<vmem>>, vector<1x8x4xbf16>
    %31 = vector.shape_cast %30 : vector<1x8x4xbf16> to vector<8x4xbf16>
    %cst_33 = arith.constant dense<0.000000e+00> : vector<8x896xf32>
    %32 = tpu.matmul %31, %29, %cst_33 {dimension_numbers = #tpu.dot_dimension_numbers<[1], [0], [0], [1], [0, 0, 1, 1], [], []>} : vector<8x4xbf16>, vector<4x896xbf16>, vector<8x896xf32> -> vector<8x896xf32>
    %33 = arith.addf %27, %32 : vector<8x896xf32>
    %c0_34 = arith.constant 0 : index
    %c0_35 = arith.constant 0 : index
    %c0_36 = arith.constant 0 : index
    %c12 = arith.constant 12 : index
    %34 = vector.load %arg2[%c0_34, %c0_35, %c0_36, %c12] : memref<1x1x4x1152xbf16, #tpu.memory_space<vmem>>, vector<1x1x4x896xbf16>
    %35 = vector.shape_cast %34 : vector<1x1x4x896xbf16> to vector<4x896xbf16>
    %c5 = arith.constant 5 : index
    %c0_37 = arith.constant 0 : index
    %c0_38 = arith.constant 0 : index
    %36 = vector.load %arg3[%c5, %c0_37, %c0_38] : memref<27x8x4xbf16, #tpu.memory_space<vmem>>, vector<1x8x4xbf16>
    %37 = vector.shape_cast %36 : vector<1x8x4xbf16> to vector<8x4xbf16>
    %cst_39 = arith.constant dense<0.000000e+00> : vector<8x896xf32>
    %38 = tpu.matmul %37, %35, %cst_39 {dimension_numbers = #tpu.dot_dimension_numbers<[1], [0], [0], [1], [0, 0, 1, 1], [], []>} : vector<8x4xbf16>, vector<4x896xbf16>, vector<8x896xf32> -> vector<8x896xf32>
    %39 = arith.addf %33, %38 : vector<8x896xf32>
    %c0_40 = arith.constant 0 : index
    %c0_41 = arith.constant 0 : index
    %c0_42 = arith.constant 0 : index
    %c20 = arith.constant 20 : index
    %40 = vector.load %arg2[%c0_40, %c0_41, %c0_42, %c20] : memref<1x1x4x1152xbf16, #tpu.memory_space<vmem>>, vector<1x1x4x896xbf16>
    %41 = vector.shape_cast %40 : vector<1x1x4x896xbf16> to vector<4x896xbf16>
    %c6 = arith.constant 6 : index
    %c0_43 = arith.constant 0 : index
    %c0_44 = arith.constant 0 : index
    %42 = vector.load %arg3[%c6, %c0_43, %c0_44] : memref<27x8x4xbf16, #tpu.memory_space<vmem>>, vector<1x8x4xbf16>
    %43 = vector.shape_cast %42 : vector<1x8x4xbf16> to vector<8x4xbf16>
    %cst_45 = arith.constant dense<0.000000e+00> : vector<8x896xf32>
    %44 = tpu.matmul %43, %41, %cst_45 {dimension_numbers = #tpu.dot_dimension_numbers<[1], [0], [0], [1], [0, 0, 1, 1], [], []>} : vector<8x4xbf16>, vector<4x896xbf16>, vector<8x896xf32> -> vector<8x896xf32>
    %45 = arith.addf %39, %44 : vector<8x896xf32>
    %c0_46 = arith.constant 0 : index
    %c0_47 = arith.constant 0 : index
    %c0_48 = arith.constant 0 : index
    %c21 = arith.constant 21 : index
    %46 = vector.load %arg2[%c0_46, %c0_47, %c0_48, %c21] : memref<1x1x4x1152xbf16, #tpu.memory_space<vmem>>, vector<1x1x4x896xbf16>
    %47 = vector.shape_cast %46 : vector<1x1x4x896xbf16> to vector<4x896xbf16>
    %c7 = arith.constant 7 : index
    %c0_49 = arith.constant 0 : index
    %c0_50 = arith.constant 0 : index
    %48 = vector.load %arg3[%c7, %c0_49, %c0_50] : memref<27x8x4xbf16, #tpu.memory_space<vmem>>, vector<1x8x4xbf16>
    %49 = vector.shape_cast %48 : vector<1x8x4xbf16> to vector<8x4xbf16>
    %cst_51 = arith.constant dense<0.000000e+00> : vector<8x896xf32>
    %50 = tpu.matmul %49, %47, %cst_51 {dimension_numbers = #tpu.dot_dimension_numbers<[1], [0], [0], [1], [0, 0, 1, 1], [], []>} : vector<8x4xbf16>, vector<4x896xbf16>, vector<8x896xf32> -> vector<8x896xf32>
    %51 = arith.addf %45, %50 : vector<8x896xf32>
    %c0_52 = arith.constant 0 : index
    %c0_53 = arith.constant 0 : index
    %c0_54 = arith.constant 0 : index
    %c22 = arith.constant 22 : index
    %52 = vector.load %arg2[%c0_52, %c0_53, %c0_54, %c22] : memref<1x1x4x1152xbf16, #tpu.memory_space<vmem>>, vector<1x1x4x896xbf16>
    %53 = vector.shape_cast %52 : vector<1x1x4x896xbf16> to vector<4x896xbf16>
    %c8 = arith.constant 8 : index
    %c0_55 = arith.constant 0 : index
    %c0_56 = arith.constant 0 : index
    %54 = vector.load %arg3[%c8, %c0_55, %c0_56] : memref<27x8x4xbf16, #tpu.memory_space<vmem>>, vector<1x8x4xbf16>
    %55 = vector.shape_cast %54 : vector<1x8x4xbf16> to vector<8x4xbf16>
    %cst_57 = arith.constant dense<0.000000e+00> : vector<8x896xf32>
    %56 = tpu.matmul %55, %53, %cst_57 {dimension_numbers = #tpu.dot_dimension_numbers<[1], [0], [0], [1], [0, 0, 1, 1], [], []>} : vector<8x4xbf16>, vector<4x896xbf16>, vector<8x896xf32> -> vector<8x896xf32>
    %57 = arith.addf %51, %56 : vector<8x896xf32>
    %c0_58 = arith.constant 0 : index
    %c0_59 = arith.constant 0 : index
    %c0_60 = arith.constant 0 : index
    %c100 = arith.constant 100 : index
    %58 = vector.load %arg2[%c0_58, %c0_59, %c0_60, %c100] : memref<1x1x4x1152xbf16, #tpu.memory_space<vmem>>, vector<1x1x4x896xbf16>
    %59 = vector.shape_cast %58 : vector<1x1x4x896xbf16> to vector<4x896xbf16>
    %c9 = arith.constant 9 : index
    %c0_61 = arith.constant 0 : index
    %c0_62 = arith.constant 0 : index
    %60 = vector.load %arg3[%c9, %c0_61, %c0_62] : memref<27x8x4xbf16, #tpu.memory_space<vmem>>, vector<1x8x4xbf16>
    %61 = vector.shape_cast %60 : vector<1x8x4xbf16> to vector<8x4xbf16>
    %cst_63 = arith.constant dense<0.000000e+00> : vector<8x896xf32>
    %62 = tpu.matmul %61, %59, %cst_63 {dimension_numbers = #tpu.dot_dimension_numbers<[1], [0], [0], [1], [0, 0, 1, 1], [], []>} : vector<8x4xbf16>, vector<4x896xbf16>, vector<8x896xf32> -> vector<8x896xf32>
    %63 = arith.addf %57, %62 : vector<8x896xf32>
    %c0_64 = arith.constant 0 : index
    %c0_65 = arith.constant 0 : index
    %c0_66 = arith.constant 0 : index
    %c101 = arith.constant 101 : index
    %64 = vector.load %arg2[%c0_64, %c0_65, %c0_66, %c101] : memref<1x1x4x1152xbf16, #tpu.memory_space<vmem>>, vector<1x1x4x896xbf16>
    %65 = vector.shape_cast %64 : vector<1x1x4x896xbf16> to vector<4x896xbf16>
    %c10_67 = arith.constant 10 : index
    %c0_68 = arith.constant 0 : index
    %c0_69 = arith.constant 0 : index
    %66 = vector.load %arg3[%c10_67, %c0_68, %c0_69] : memref<27x8x4xbf16, #tpu.memory_space<vmem>>, vector<1x8x4xbf16>
    %67 = vector.shape_cast %66 : vector<1x8x4xbf16> to vector<8x4xbf16>
    %cst_70 = arith.constant dense<0.000000e+00> : vector<8x896xf32>
    %68 = tpu.matmul %67, %65, %cst_70 {dimension_numbers = #tpu.dot_dimension_numbers<[1], [0], [0], [1], [0, 0, 1, 1], [], []>} : vector<8x4xbf16>, vector<4x896xbf16>, vector<8x896xf32> -> vector<8x896xf32>
    %69 = arith.addf %63, %68 : vector<8x896xf32>
    %c0_71 = arith.constant 0 : index
    %c0_72 = arith.constant 0 : index
    %c0_73 = arith.constant 0 : index
    %c102 = arith.constant 102 : index
    %70 = vector.load %arg2[%c0_71, %c0_72, %c0_73, %c102] : memref<1x1x4x1152xbf16, #tpu.memory_space<vmem>>, vector<1x1x4x896xbf16>
    %71 = vector.shape_cast %70 : vector<1x1x4x896xbf16> to vector<4x896xbf16>
    %c11_74 = arith.constant 11 : index
    %c0_75 = arith.constant 0 : index
    %c0_76 = arith.constant 0 : index
    %72 = vector.load %arg3[%c11_74, %c0_75, %c0_76] : memref<27x8x4xbf16, #tpu.memory_space<vmem>>, vector<1x8x4xbf16>
    %73 = vector.shape_cast %72 : vector<1x8x4xbf16> to vector<8x4xbf16>
    %cst_77 = arith.constant dense<0.000000e+00> : vector<8x896xf32>
    %74 = tpu.matmul %73, %71, %cst_77 {dimension_numbers = #tpu.dot_dimension_numbers<[1], [0], [0], [1], [0, 0, 1, 1], [], []>} : vector<8x4xbf16>, vector<4x896xbf16>, vector<8x896xf32> -> vector<8x896xf32>
    %75 = arith.addf %69, %74 : vector<8x896xf32>
    %c0_78 = arith.constant 0 : index
    %c0_79 = arith.constant 0 : index
    %c0_80 = arith.constant 0 : index
    %c110 = arith.constant 110 : index
    %76 = vector.load %arg2[%c0_78, %c0_79, %c0_80, %c110] : memref<1x1x4x1152xbf16, #tpu.memory_space<vmem>>, vector<1x1x4x896xbf16>
    %77 = vector.shape_cast %76 : vector<1x1x4x896xbf16> to vector<4x896xbf16>
    %c12_81 = arith.constant 12 : index
    %c0_82 = arith.constant 0 : index
    %c0_83 = arith.constant 0 : index
    %78 = vector.load %arg3[%c12_81, %c0_82, %c0_83] : memref<27x8x4xbf16, #tpu.memory_space<vmem>>, vector<1x8x4xbf16>
    %79 = vector.shape_cast %78 : vector<1x8x4xbf16> to vector<8x4xbf16>
    %cst_84 = arith.constant dense<0.000000e+00> : vector<8x896xf32>
    %80 = tpu.matmul %79, %77, %cst_84 {dimension_numbers = #tpu.dot_dimension_numbers<[1], [0], [0], [1], [0, 0, 1, 1], [], []>} : vector<8x4xbf16>, vector<4x896xbf16>, vector<8x896xf32> -> vector<8x896xf32>
    %81 = arith.addf %75, %80 : vector<8x896xf32>
    %c0_85 = arith.constant 0 : index
    %c0_86 = arith.constant 0 : index
    %c0_87 = arith.constant 0 : index
    %c111 = arith.constant 111 : index
    %82 = vector.load %arg2[%c0_85, %c0_86, %c0_87, %c111] : memref<1x1x4x1152xbf16, #tpu.memory_space<vmem>>, vector<1x1x4x896xbf16>
    %83 = vector.shape_cast %82 : vector<1x1x4x896xbf16> to vector<4x896xbf16>
    %c13 = arith.constant 13 : index
    %c0_88 = arith.constant 0 : index
    %c0_89 = arith.constant 0 : index
    %84 = vector.load %arg3[%c13, %c0_88, %c0_89] : memref<27x8x4xbf16, #tpu.memory_space<vmem>>, vector<1x8x4xbf16>
    %85 = vector.shape_cast %84 : vector<1x8x4xbf16> to vector<8x4xbf16>
    %cst_90 = arith.constant dense<0.000000e+00> : vector<8x896xf32>
    %86 = tpu.matmul %85, %83, %cst_90 {dimension_numbers = #tpu.dot_dimension_numbers<[1], [0], [0], [1], [0, 0, 1, 1], [], []>} : vector<8x4xbf16>, vector<4x896xbf16>, vector<8x896xf32> -> vector<8x896xf32>
    %87 = arith.addf %81, %86 : vector<8x896xf32>
    %c0_91 = arith.constant 0 : index
    %c0_92 = arith.constant 0 : index
    %c0_93 = arith.constant 0 : index
    %c112 = arith.constant 112 : index
    %88 = vector.load %arg2[%c0_91, %c0_92, %c0_93, %c112] : memref<1x1x4x1152xbf16, #tpu.memory_space<vmem>>, vector<1x1x4x896xbf16>
    %89 = vector.shape_cast %88 : vector<1x1x4x896xbf16> to vector<4x896xbf16>
    %c14 = arith.constant 14 : index
    %c0_94 = arith.constant 0 : index
    %c0_95 = arith.constant 0 : index
    %90 = vector.load %arg3[%c14, %c0_94, %c0_95] : memref<27x8x4xbf16, #tpu.memory_space<vmem>>, vector<1x8x4xbf16>
    %91 = vector.shape_cast %90 : vector<1x8x4xbf16> to vector<8x4xbf16>
    %cst_96 = arith.constant dense<0.000000e+00> : vector<8x896xf32>
    %92 = tpu.matmul %91, %89, %cst_96 {dimension_numbers = #tpu.dot_dimension_numbers<[1], [0], [0], [1], [0, 0, 1, 1], [], []>} : vector<8x4xbf16>, vector<4x896xbf16>, vector<8x896xf32> -> vector<8x896xf32>
    %93 = arith.addf %87, %92 : vector<8x896xf32>
    %c0_97 = arith.constant 0 : index
    %c0_98 = arith.constant 0 : index
    %c0_99 = arith.constant 0 : index
    %c120 = arith.constant 120 : index
    %94 = vector.load %arg2[%c0_97, %c0_98, %c0_99, %c120] : memref<1x1x4x1152xbf16, #tpu.memory_space<vmem>>, vector<1x1x4x896xbf16>
    %95 = vector.shape_cast %94 : vector<1x1x4x896xbf16> to vector<4x896xbf16>
    %c15 = arith.constant 15 : index
    %c0_100 = arith.constant 0 : index
    %c0_101 = arith.constant 0 : index
    %96 = vector.load %arg3[%c15, %c0_100, %c0_101] : memref<27x8x4xbf16, #tpu.memory_space<vmem>>, vector<1x8x4xbf16>
    %97 = vector.shape_cast %96 : vector<1x8x4xbf16> to vector<8x4xbf16>
    %cst_102 = arith.constant dense<0.000000e+00> : vector<8x896xf32>
    %98 = tpu.matmul %97, %95, %cst_102 {dimension_numbers = #tpu.dot_dimension_numbers<[1], [0], [0], [1], [0, 0, 1, 1], [], []>} : vector<8x4xbf16>, vector<4x896xbf16>, vector<8x896xf32> -> vector<8x896xf32>
    %99 = arith.addf %93, %98 : vector<8x896xf32>
    %c0_103 = arith.constant 0 : index
    %c0_104 = arith.constant 0 : index
    %c0_105 = arith.constant 0 : index
    %c121 = arith.constant 121 : index
    %100 = vector.load %arg2[%c0_103, %c0_104, %c0_105, %c121] : memref<1x1x4x1152xbf16, #tpu.memory_space<vmem>>, vector<1x1x4x896xbf16>
    %101 = vector.shape_cast %100 : vector<1x1x4x896xbf16> to vector<4x896xbf16>
    %c16 = arith.constant 16 : index
    %c0_106 = arith.constant 0 : index
    %c0_107 = arith.constant 0 : index
    %102 = vector.load %arg3[%c16, %c0_106, %c0_107] : memref<27x8x4xbf16, #tpu.memory_space<vmem>>, vector<1x8x4xbf16>
    %103 = vector.shape_cast %102 : vector<1x8x4xbf16> to vector<8x4xbf16>
    %cst_108 = arith.constant dense<0.000000e+00> : vector<8x896xf32>
    %104 = tpu.matmul %103, %101, %cst_108 {dimension_numbers = #tpu.dot_dimension_numbers<[1], [0], [0], [1], [0, 0, 1, 1], [], []>} : vector<8x4xbf16>, vector<4x896xbf16>, vector<8x896xf32> -> vector<8x896xf32>
    %105 = arith.addf %99, %104 : vector<8x896xf32>
    %c0_109 = arith.constant 0 : index
    %c0_110 = arith.constant 0 : index
    %c0_111 = arith.constant 0 : index
    %c122 = arith.constant 122 : index
    %106 = vector.load %arg2[%c0_109, %c0_110, %c0_111, %c122] : memref<1x1x4x1152xbf16, #tpu.memory_space<vmem>>, vector<1x1x4x896xbf16>
    %107 = vector.shape_cast %106 : vector<1x1x4x896xbf16> to vector<4x896xbf16>
    %c17 = arith.constant 17 : index
    %c0_112 = arith.constant 0 : index
    %c0_113 = arith.constant 0 : index
    %108 = vector.load %arg3[%c17, %c0_112, %c0_113] : memref<27x8x4xbf16, #tpu.memory_space<vmem>>, vector<1x8x4xbf16>
    %109 = vector.shape_cast %108 : vector<1x8x4xbf16> to vector<8x4xbf16>
    %cst_114 = arith.constant dense<0.000000e+00> : vector<8x896xf32>
    %110 = tpu.matmul %109, %107, %cst_114 {dimension_numbers = #tpu.dot_dimension_numbers<[1], [0], [0], [1], [0, 0, 1, 1], [], []>} : vector<8x4xbf16>, vector<4x896xbf16>, vector<8x896xf32> -> vector<8x896xf32>
    %111 = arith.addf %105, %110 : vector<8x896xf32>
    %c0_115 = arith.constant 0 : index
    %c0_116 = arith.constant 0 : index
    %c0_117 = arith.constant 0 : index
    %c200 = arith.constant 200 : index
    %112 = vector.load %arg2[%c0_115, %c0_116, %c0_117, %c200] : memref<1x1x4x1152xbf16, #tpu.memory_space<vmem>>, vector<1x1x4x896xbf16>
    %113 = vector.shape_cast %112 : vector<1x1x4x896xbf16> to vector<4x896xbf16>
    %c18 = arith.constant 18 : index
    %c0_118 = arith.constant 0 : index
    %c0_119 = arith.constant 0 : index
    %114 = vector.load %arg3[%c18, %c0_118, %c0_119] : memref<27x8x4xbf16, #tpu.memory_space<vmem>>, vector<1x8x4xbf16>
    %115 = vector.shape_cast %114 : vector<1x8x4xbf16> to vector<8x4xbf16>
    %cst_120 = arith.constant dense<0.000000e+00> : vector<8x896xf32>
    %116 = tpu.matmul %115, %113, %cst_120 {dimension_numbers = #tpu.dot_dimension_numbers<[1], [0], [0], [1], [0, 0, 1, 1], [], []>} : vector<8x4xbf16>, vector<4x896xbf16>, vector<8x896xf32> -> vector<8x896xf32>
    %117 = arith.addf %111, %116 : vector<8x896xf32>
    %c0_121 = arith.constant 0 : index
    %c0_122 = arith.constant 0 : index
    %c0_123 = arith.constant 0 : index
    %c201 = arith.constant 201 : index
    %118 = vector.load %arg2[%c0_121, %c0_122, %c0_123, %c201] : memref<1x1x4x1152xbf16, #tpu.memory_space<vmem>>, vector<1x1x4x896xbf16>
    %119 = vector.shape_cast %118 : vector<1x1x4x896xbf16> to vector<4x896xbf16>
    %c19 = arith.constant 19 : index
    %c0_124 = arith.constant 0 : index
    %c0_125 = arith.constant 0 : index
    %120 = vector.load %arg3[%c19, %c0_124, %c0_125] : memref<27x8x4xbf16, #tpu.memory_space<vmem>>, vector<1x8x4xbf16>
    %121 = vector.shape_cast %120 : vector<1x8x4xbf16> to vector<8x4xbf16>
    %cst_126 = arith.constant dense<0.000000e+00> : vector<8x896xf32>
    %122 = tpu.matmul %121, %119, %cst_126 {dimension_numbers = #tpu.dot_dimension_numbers<[1], [0], [0], [1], [0, 0, 1, 1], [], []>} : vector<8x4xbf16>, vector<4x896xbf16>, vector<8x896xf32> -> vector<8x896xf32>
    %123 = arith.addf %117, %122 : vector<8x896xf32>
    %c0_127 = arith.constant 0 : index
    %c0_128 = arith.constant 0 : index
    %c0_129 = arith.constant 0 : index
    %c202 = arith.constant 202 : index
    %124 = vector.load %arg2[%c0_127, %c0_128, %c0_129, %c202] : memref<1x1x4x1152xbf16, #tpu.memory_space<vmem>>, vector<1x1x4x896xbf16>
    %125 = vector.shape_cast %124 : vector<1x1x4x896xbf16> to vector<4x896xbf16>
    %c20_130 = arith.constant 20 : index
    %c0_131 = arith.constant 0 : index
    %c0_132 = arith.constant 0 : index
    %126 = vector.load %arg3[%c20_130, %c0_131, %c0_132] : memref<27x8x4xbf16, #tpu.memory_space<vmem>>, vector<1x8x4xbf16>
    %127 = vector.shape_cast %126 : vector<1x8x4xbf16> to vector<8x4xbf16>
    %cst_133 = arith.constant dense<0.000000e+00> : vector<8x896xf32>
    %128 = tpu.matmul %127, %125, %cst_133 {dimension_numbers = #tpu.dot_dimension_numbers<[1], [0], [0], [1], [0, 0, 1, 1], [], []>} : vector<8x4xbf16>, vector<4x896xbf16>, vector<8x896xf32> -> vector<8x896xf32>
    %129 = arith.addf %123, %128 : vector<8x896xf32>
    %c0_134 = arith.constant 0 : index
    %c0_135 = arith.constant 0 : index
    %c0_136 = arith.constant 0 : index
    %c210 = arith.constant 210 : index
    %130 = vector.load %arg2[%c0_134, %c0_135, %c0_136, %c210] : memref<1x1x4x1152xbf16, #tpu.memory_space<vmem>>, vector<1x1x4x896xbf16>
    %131 = vector.shape_cast %130 : vector<1x1x4x896xbf16> to vector<4x896xbf16>
    %c21_137 = arith.constant 21 : index
    %c0_138 = arith.constant 0 : index
    %c0_139 = arith.constant 0 : index
    %132 = vector.load %arg3[%c21_137, %c0_138, %c0_139] : memref<27x8x4xbf16, #tpu.memory_space<vmem>>, vector<1x8x4xbf16>
    %133 = vector.shape_cast %132 : vector<1x8x4xbf16> to vector<8x4xbf16>
    %cst_140 = arith.constant dense<0.000000e+00> : vector<8x896xf32>
    %134 = tpu.matmul %133, %131, %cst_140 {dimension_numbers = #tpu.dot_dimension_numbers<[1], [0], [0], [1], [0, 0, 1, 1], [], []>} : vector<8x4xbf16>, vector<4x896xbf16>, vector<8x896xf32> -> vector<8x896xf32>
    %135 = arith.addf %129, %134 : vector<8x896xf32>
    %c0_141 = arith.constant 0 : index
    %c0_142 = arith.constant 0 : index
    %c0_143 = arith.constant 0 : index
    %c211 = arith.constant 211 : index
    %136 = vector.load %arg2[%c0_141, %c0_142, %c0_143, %c211] : memref<1x1x4x1152xbf16, #tpu.memory_space<vmem>>, vector<1x1x4x896xbf16>
    %137 = vector.shape_cast %136 : vector<1x1x4x896xbf16> to vector<4x896xbf16>
    %c22_144 = arith.constant 22 : index
    %c0_145 = arith.constant 0 : index
    %c0_146 = arith.constant 0 : index
    %138 = vector.load %arg3[%c22_144, %c0_145, %c0_146] : memref<27x8x4xbf16, #tpu.memory_space<vmem>>, vector<1x8x4xbf16>
    %139 = vector.shape_cast %138 : vector<1x8x4xbf16> to vector<8x4xbf16>
    %cst_147 = arith.constant dense<0.000000e+00> : vector<8x896xf32>
    %140 = tpu.matmul %139, %137, %cst_147 {dimension_numbers = #tpu.dot_dimension_numbers<[1], [0], [0], [1], [0, 0, 1, 1], [], []>} : vector<8x4xbf16>, vector<4x896xbf16>, vector<8x896xf32> -> vector<8x896xf32>
    %141 = arith.addf %135, %140 : vector<8x896xf32>
    %c0_148 = arith.constant 0 : index
    %c0_149 = arith.constant 0 : index
    %c0_150 = arith.constant 0 : index
    %c212 = arith.constant 212 : index
    %142 = vector.load %arg2[%c0_148, %c0_149, %c0_150, %c212] : memref<1x1x4x1152xbf16, #tpu.memory_space<vmem>>, vector<1x1x4x896xbf16>
    %143 = vector.shape_cast %142 : vector<1x1x4x896xbf16> to vector<4x896xbf16>
    %c23 = arith.constant 23 : index
    %c0_151 = arith.constant 0 : index
    %c0_152 = arith.constant 0 : index
    %144 = vector.load %arg3[%c23, %c0_151, %c0_152] : memref<27x8x4xbf16, #tpu.memory_space<vmem>>, vector<1x8x4xbf16>
    %145 = vector.shape_cast %144 : vector<1x8x4xbf16> to vector<8x4xbf16>
    %cst_153 = arith.constant dense<0.000000e+00> : vector<8x896xf32>
    %146 = tpu.matmul %145, %143, %cst_153 {dimension_numbers = #tpu.dot_dimension_numbers<[1], [0], [0], [1], [0, 0, 1, 1], [], []>} : vector<8x4xbf16>, vector<4x896xbf16>, vector<8x896xf32> -> vector<8x896xf32>
    %147 = arith.addf %141, %146 : vector<8x896xf32>
    %c0_154 = arith.constant 0 : index
    %c0_155 = arith.constant 0 : index
    %c0_156 = arith.constant 0 : index
    %c220 = arith.constant 220 : index
    %148 = vector.load %arg2[%c0_154, %c0_155, %c0_156, %c220] : memref<1x1x4x1152xbf16, #tpu.memory_space<vmem>>, vector<1x1x4x896xbf16>
    %149 = vector.shape_cast %148 : vector<1x1x4x896xbf16> to vector<4x896xbf16>
    %c24 = arith.constant 24 : index
    %c0_157 = arith.constant 0 : index
    %c0_158 = arith.constant 0 : index
    %150 = vector.load %arg3[%c24, %c0_157, %c0_158] : memref<27x8x4xbf16, #tpu.memory_space<vmem>>, vector<1x8x4xbf16>
    %151 = vector.shape_cast %150 : vector<1x8x4xbf16> to vector<8x4xbf16>
    %cst_159 = arith.constant dense<0.000000e+00> : vector<8x896xf32>
    %152 = tpu.matmul %151, %149, %cst_159 {dimension_numbers = #tpu.dot_dimension_numbers<[1], [0], [0], [1], [0, 0, 1, 1], [], []>} : vector<8x4xbf16>, vector<4x896xbf16>, vector<8x896xf32> -> vector<8x896xf32>
    %153 = arith.addf %147, %152 : vector<8x896xf32>
    %c0_160 = arith.constant 0 : index
    %c0_161 = arith.constant 0 : index
    %c0_162 = arith.constant 0 : index
    %c221 = arith.constant 221 : index
    %154 = vector.load %arg2[%c0_160, %c0_161, %c0_162, %c221] : memref<1x1x4x1152xbf16, #tpu.memory_space<vmem>>, vector<1x1x4x896xbf16>
    %155 = vector.shape_cast %154 : vector<1x1x4x896xbf16> to vector<4x896xbf16>
    %c25 = arith.constant 25 : index
    %c0_163 = arith.constant 0 : index
    %c0_164 = arith.constant 0 : index
    %156 = vector.load %arg3[%c25, %c0_163, %c0_164] : memref<27x8x4xbf16, #tpu.memory_space<vmem>>, vector<1x8x4xbf16>
    %157 = vector.shape_cast %156 : vector<1x8x4xbf16> to vector<8x4xbf16>
    %cst_165 = arith.constant dense<0.000000e+00> : vector<8x896xf32>
    %158 = tpu.matmul %157, %155, %cst_165 {dimension_numbers = #tpu.dot_dimension_numbers<[1], [0], [0], [1], [0, 0, 1, 1], [], []>} : vector<8x4xbf16>, vector<4x896xbf16>, vector<8x896xf32> -> vector<8x896xf32>
    %159 = arith.addf %153, %158 : vector<8x896xf32>
    %c0_166 = arith.constant 0 : index
    %c0_167 = arith.constant 0 : index
    %c0_168 = arith.constant 0 : index
    %c222 = arith.constant 222 : index
    %160 = vector.load %arg2[%c0_166, %c0_167, %c0_168, %c222] : memref<1x1x4x1152xbf16, #tpu.memory_space<vmem>>, vector<1x1x4x896xbf16>
    %161 = vector.shape_cast %160 : vector<1x1x4x896xbf16> to vector<4x896xbf16>
    %c26 = arith.constant 26 : index
    %c0_169 = arith.constant 0 : index
    %c0_170 = arith.constant 0 : index
    %162 = vector.load %arg3[%c26, %c0_169, %c0_170] : memref<27x8x4xbf16, #tpu.memory_space<vmem>>, vector<1x8x4xbf16>
    %163 = vector.shape_cast %162 : vector<1x8x4xbf16> to vector<8x4xbf16>
    %cst_171 = arith.constant dense<0.000000e+00> : vector<8x896xf32>
    %164 = tpu.matmul %163, %161, %cst_171 {dimension_numbers = #tpu.dot_dimension_numbers<[1], [0], [0], [1], [0, 0, 1, 1], [], []>} : vector<8x4xbf16>, vector<4x896xbf16>, vector<8x896xf32> -> vector<8x896xf32>
    %165 = arith.addf %159, %164 : vector<8x896xf32>
    %c0_172 = arith.constant 0 : index
    %c0_173 = arith.constant 0 : index
    %c0_174 = arith.constant 0 : index
    %166 = vector.load %arg5[%c0_172, %c0_173, %c0_174] : memref<1x8x896xf32, #tpu.memory_space<vmem>>, vector<1x8x896xf32>
    %167 = vector.shape_cast %166 : vector<1x8x896xf32> to vector<8x896xf32>
    %168 = vector.shape_cast %165 : vector<8x896xf32> to vector<1x8x896xf32>
    tpu.vector_store %arg5[%c0_172, %c0_173, %c0_174], %168 {strides = array<i32>} : memref<1x8x896xf32, #tpu.memory_space<vmem>>, vector<1x8x896xf32>,
    %c0_175 = arith.constant 0 : index
    %c0_176 = arith.constant 0 : index
    %169 = vector.load %arg4[%c0_175, %c0_176] : memref<1x896xf32, #tpu.memory_space<vmem>>, vector<1x896xf32>
    %170 = vector.broadcast %169 : vector<1x896xf32> to vector<8x896xf32>
    %171 = arith.mulf %165, %170 : vector<8x896xf32>
    %c0_177 = arith.constant 0 : index
    %c0_178 = arith.constant 0 : index
    %c0_179 = arith.constant 0 : index
    %172 = vector.load %arg6[%c0_177, %c0_178, %c0_179] : memref<1x8x1xf32, #tpu.memory_space<vmem>>, vector<1x8x1xf32>
    %173 = vector.shape_cast %172 : vector<1x8x1xf32> to vector<8x1xf32>
    %cst_180 = arith.constant dense<0.000000e+00> : vector<8xf32>
    %174 = vector.multi_reduction <add>, %171, %cst_180 [1] : vector<8x896xf32> to vector<8xf32>
    %175 = vector.shape_cast %174 : vector<8xf32> to vector<8x1xf32>
    %176 = arith.addf %173, %175 : vector<8x1xf32>
    %c0_181 = arith.constant 0 : index
    %c0_182 = arith.constant 0 : index
    %c0_183 = arith.constant 0 : index
    %177 = vector.load %arg6[%c0_181, %c0_182, %c0_183] : memref<1x8x1xf32, #tpu.memory_space<vmem>>, vector<1x8x1xf32>
    %178 = vector.shape_cast %177 : vector<1x8x1xf32> to vector<8x1xf32>
    %179 = vector.shape_cast %176 : vector<8x1xf32> to vector<1x8x1xf32>
    tpu.vector_store %arg6[%c0_181, %c0_182, %c0_183], %179 {strides = array<i32>} : memref<1x8x1xf32, #tpu.memory_space<vmem>>, vector<1x8x1xf32>,
    %c0_184 = arith.constant 0 : index
    %c0_185 = arith.constant 0 : index
    %c0_186 = arith.constant 0 : index
    %180 = vector.load %arg7[%c0_184, %c0_185, %c0_186] : memref<1x8x1xf32, #tpu.memory_space<vmem>>, vector<1x8x1xf32>
    %181 = vector.shape_cast %180 : vector<1x8x1xf32> to vector<8x1xf32>
    %182 = arith.mulf %171, %165 : vector<8x896xf32>
    %cst_187 = arith.constant dense<0.000000e+00> : vector<8xf32>
    %183 = vector.multi_reduction <add>, %182, %cst_187 [1] : vector<8x896xf32> to vector<8xf32>
    %184 = vector.shape_cast %183 : vector<8xf32> to vector<8x1xf32>
    %185 = arith.addf %181, %184 : vector<8x1xf32>
    %c0_188 = arith.constant 0 : index
    %c0_189 = arith.constant 0 : index
    %c0_190 = arith.constant 0 : index
    %186 = vector.load %arg7[%c0_188, %c0_189, %c0_190] : memref<1x8x1xf32, #tpu.memory_space<vmem>>, vector<1x8x1xf32>
    %187 = vector.shape_cast %186 : vector<1x8x1xf32> to vector<8x1xf32>
    %188 = vector.shape_cast %185 : vector<8x1xf32> to vector<1x8x1xf32>
    tpu.vector_store %arg7[%c0_188, %c0_189, %c0_190], %188 {strides = array<i32>} : memref<1x8x1xf32, #tpu.memory_space<vmem>>, vector<1x8x1xf32>,
    return
  }
  func.func @transform_0(%arg0: i32, %arg1: i32) -> (i32, i32, i32, i32) {
    %c0_i32 = arith.constant 0 : i32
    %c0_i32_0 = arith.constant 0 : i32
    %c0_i32_1 = arith.constant 0 : i32
    return %arg0, %arg1, %c0_i32, %c0_i32_0 : i32, i32, i32, i32
  }
  func.func @transform_1(%arg0: i32, %arg1: i32) -> (i32, i32, i32) {
    %c0_i32 = arith.constant 0 : i32
    %c0_i32_0 = arith.constant 0 : i32
    %c0_i32_1 = arith.constant 0 : i32
    %c0_i32_2 = arith.constant 0 : i32
    return %c0_i32, %c0_i32_0, %c0_i32_1 : i32, i32, i32
  }
  func.func @transform_2(%arg0: i32, %arg1: i32) -> (i32, i32) {
    %c0_i32 = arith.constant 0 : i32
    %c0_i32_0 = arith.constant 0 : i32
    return %c0_i32, %arg1 : i32, i32
  }
  func.func @transform_3(%arg0: i32, %arg1: i32) -> (i32, i32, i32) {
    %c0_i32 = arith.constant 0 : i32
    %c0_i32_0 = arith.constant 0 : i32
    return %arg0, %c0_i32, %arg1 : i32, i32, i32
  }
  func.func @transform_4(%arg0: i32, %arg1: i32) -> (i32, i32, i32) {
    %c0_i32 = arith.constant 0 : i32
    %c0_i32_0 = arith.constant 0 : i32
    %c0_i32_1 = arith.constant 0 : i32
    return %arg0, %c0_i32, %c0_i32_0 : i32, i32, i32
  }
  func.func @transform_5(%arg0: i32, %arg1: i32) -> (i32, i32, i32) {
    %c0_i32 = arith.constant 0 : i32
    %c0_i32_0 = arith.constant 0 : i32
    %c0_i32_1 = arith.constant 0 : i32
    return %arg0, %c0_i32, %c0_i32_0 : i32, i32, i32
  }
}

module attributes {stable_mosaic.version = 11 : i64} {
  func.func @_bn_relu_kernel(%arg0: i32, %arg1: i32, %arg2: memref<1x8x896xf32, #tpu.memory_space<vmem>>, %arg3: memref<8x1xf32, #tpu.memory_space<vmem>>, %arg4: memref<8x1xf32, #tpu.memory_space<vmem>>, %arg5: memref<1x8x896xf32, #tpu.memory_space<vmem>>) attributes {dimension_semantics = [#tpu.dimension_semantics<parallel>, #tpu.dimension_semantics<parallel>], iteration_bounds = array<i64: 2, 1>, scalar_prefetch = 0 : i64, scratch_operands = 0 : i64, tpu.core_type = #tpu.core_type<tc>, window_params = [{transform_indices = @transform_0, window_bounds = array<i64: 1, 8, 896>}, {pipeline_mode = #tpu.pipeline_mode<synchronous>, transform_indices = @transform_1, window_bounds = array<i64: 8, 1>}, {pipeline_mode = #tpu.pipeline_mode<synchronous>, transform_indices = @transform_2, window_bounds = array<i64: 8, 1>}, {transform_indices = @transform_3, window_bounds = array<i64: 1, 8, 896>}]} {
    %c0 = arith.constant 0 : index
    %c0_0 = arith.constant 0 : index
    %c0_1 = arith.constant 0 : index
    %0 = vector.load %arg2[%c0, %c0_0, %c0_1] : memref<1x8x896xf32, #tpu.memory_space<vmem>>, vector<1x8x896xf32>
    %1 = vector.shape_cast %0 : vector<1x8x896xf32> to vector<8x896xf32>
    %c0_2 = arith.constant 0 : index
    %c0_3 = arith.constant 0 : index
    %2 = vector.load %arg3[%c0_2, %c0_3] : memref<8x1xf32, #tpu.memory_space<vmem>>, vector<8x1xf32>
    %3 = vector.broadcast %2 : vector<8x1xf32> to vector<8x896xf32>
    %4 = arith.mulf %1, %3 : vector<8x896xf32>
    %c0_4 = arith.constant 0 : index
    %c0_5 = arith.constant 0 : index
    %5 = vector.load %arg4[%c0_4, %c0_5] : memref<8x1xf32, #tpu.memory_space<vmem>>, vector<8x1xf32>
    %6 = vector.broadcast %5 : vector<8x1xf32> to vector<8x896xf32>
    %7 = arith.addf %4, %6 : vector<8x896xf32>
    %cst = arith.constant 0.000000e+00 : f32
    %8 = vector.broadcast %cst : f32 to vector<8x896xf32>
    %9 = arith.maximumf %7, %8 : vector<8x896xf32>
    %c0_6 = arith.constant 0 : index
    %c0_7 = arith.constant 0 : index
    %c0_8 = arith.constant 0 : index
    %10 = vector.load %arg5[%c0_6, %c0_7, %c0_8] : memref<1x8x896xf32, #tpu.memory_space<vmem>>, vector<1x8x896xf32>
    %11 = vector.shape_cast %10 : vector<1x8x896xf32> to vector<8x896xf32>
    %12 = vector.shape_cast %9 : vector<8x896xf32> to vector<1x8x896xf32>
    tpu.vector_store %arg5[%c0_6, %c0_7, %c0_8], %12 {strides = array<i32>} : memref<1x8x896xf32, #tpu.memory_space<vmem>>, vector<1x8x896xf32>,
    return
  }
  func.func @transform_0(%arg0: i32, %arg1: i32) -> (i32, i32, i32) {
    %c0_i32 = arith.constant 0 : i32
    %c0_i32_0 = arith.constant 0 : i32
    return %arg0, %c0_i32, %arg1 : i32, i32, i32
  }
  func.func @transform_1(%arg0: i32, %arg1: i32) -> (i32, i32) {
    %c0_i32 = arith.constant 0 : i32
    %c0_i32_0 = arith.constant 0 : i32
    %c0_i32_1 = arith.constant 0 : i32
    return %c0_i32, %c0_i32_0 : i32, i32
  }
  func.func @transform_2(%arg0: i32, %arg1: i32) -> (i32, i32) {
    %c0_i32 = arith.constant 0 : i32
    %c0_i32_0 = arith.constant 0 : i32
    %c0_i32_1 = arith.constant 0 : i32
    return %c0_i32, %c0_i32_0 : i32, i32
  }
  func.func @transform_3(%arg0: i32, %arg1: i32) -> (i32, i32, i32) {
    %c0_i32 = arith.constant 0 : i32
    %c0_i32_0 = arith.constant 0 : i32
    return %arg0, %c0_i32, %arg1 : i32, i32, i32
  }
}

</mosaic_0001>

<llo_original>
// kernel: basic_block_forward.3
$region0: #{basic_block_forward.3}
  #allocation0 [shape = 'u32[]', space=smem, size = 0x4, offset = 0x4, fixed_abs, tag = 'smem constant byte address 0x4 - core index']
  #allocation1 [shape = 'u32[144,128]{1,0:T(1,128)}', space=vmem, size = 0x12000, scoped, tag = 'internal scratch']
  %s0 = inlined_call_operand.vmem [shape: f32[2,8,896], index: 0, kind: input, shape index: {}]
  %s1 = inlined_call_operand.vmem [shape: f32[8,1], index: 1, kind: input, shape index: {}]
  %s2 = inlined_call_operand.vmem [shape: f32[8,1], index: 2, kind: input, shape index: {}]
  %s3 = inlined_call_operand.vmem [shape: f32[2,8,896], index: 3, kind: output, shape index: {}]
  %s4 = sld [smem:[#allocation0]]
  $region45: #{basic_block_forward.3} parent=0
    _
  %s6 = ssub.s32 1, %s4
  %s7 = scalar_select 0, %s6, %s4
  loop: start=0, step=1, limit=4
  $region2: #{basic_block_forward.3} parent=0 // loop_pre_header
    _
  $region3: #{basic_block_forward.3} parent=0 // loop_header
    %s9 = sphi 0, %s13
    %p10 = scmp.ge.s32.totalorder %s9, 4
    %s16 = sphi 0, %s28
    %s17 = sphi 0, %s24
    %s18 = sphi 0, %s16
    %s19 = sphi 0, %s17
    %s20 = sphi 0, %s18
    %s21 = sphi 0, %s19
    %s33 = sphi 0, %s35
    %s36 = sphi 0, %s33
    %s37 = sphi 0, %s36
    %s53 = sphi 0, %s37
    %s57 = sphi 0, %s57
    %s59 = sphi 0, %s57
    %s60 = sphi 0, %s59
    %s74 = sphi 0, %s60
    %s78 = sphi 0, %s78
    %s80 = sphi 0, %s78
    %s81 = sphi 0, %s80
    %s95 = sphi 0, %s81
    %s103 = sphi 0, %s105
    %s106 = sphi 0, %s103
    %s107 = sphi 0, %s106
    %s123 = sphi 0, %s107
  $region4: #{basic_block_forward.3} parent=0 // loop_header_branch
    %12 = sbr.rel (%p10) target = $region8
  $region5: #{basic_block_forward.3} parent=0 // loop_body
    %s14 = ssub.s32 %s9, 1
    %s15 = ssub.s32 %s9, 2
    %s22 = sadd.s32 1, %s17
    %p23 = scmp.ge.s32.totalorder %s22, 1
    %s24 = scalar_select %p23, 0, %s22
    %s25 = sadd.s32 1, %s16
    %s26 = scalar_select %p23, %s25, %s16
    %p27 = scmp.ge.s32.totalorder %s26, 2
    %s28 = scalar_select %p27, 0, %s26
    %s29 = ssub.s32 %s16, %s28
    %s30 = ssub.s32 %s17, %s24
    %s31 = sor.u32 %s29, %s30
    %p32 = scmp.eq.s32.totalorder %s31, 0
    %s34 = sadd.s32 %s33, 1
    %s35 = scalar_select %p32, %s33, %s34
    %p38 = pneg %p32
    %p39 = scmp.eq.s32.totalorder %s9, 1
    %p40 = por %p38, %p39
    %p41 = scmp.ne.s32.totalorder %s33, %s36
    %p42 = scmp.eq.s32.totalorder %s9, 0
    %p43 = por %p41, %p42
    %p44 = scmp.ne.s32.totalorder %s33, %s36
    %p45 = scmp.eq.s32.totalorder %s14, 1
    %p46 = por %p44, %p45
    %p47 = scmp.ne.s32.totalorder %s36, %s37
    %p48 = scmp.eq.s32.totalorder %s14, 0
    %p49 = por %p47, %p48
    %p50 = scmp.ne.s32.totalorder %s36, %s37
    %p51 = scmp.eq.s32.totalorder %s15, 1
    %p52 = por %p50, %p51
    %p54 = scmp.ne.s32.totalorder %s37, %s53
    %p55 = scmp.eq.s32.totalorder %s15, 0
    %p56 = por %p54, %p55
    %s58 = sadd.s32 %s57, 1
    %p61 = scmp.eq.s32.totalorder %s9, 1
    %p62 = scmp.ne.s32.totalorder %s57, %s59
    %p63 = scmp.eq.s32.totalorder %s9, 0
    %p64 = por %p62, %p63
    %p65 = scmp.ne.s32.totalorder %s57, %s59
    %p66 = scmp.eq.s32.totalorder %s14, 1
    %p67 = por %p65, %p66
    %p68 = scmp.ne.s32.totalorder %s59, %s60
    %p69 = scmp.eq.s32.totalorder %s14, 0
    %p70 = por %p68, %p69
    %p71 = scmp.ne.s32.totalorder %s59, %s60
    %p72 = scmp.eq.s32.totalorder %s15, 1
    %p73 = por %p71, %p72
    %p75 = scmp.ne.s32.totalorder %s60, %s74
    %p76 = scmp.eq.s32.totalorder %s15, 0
    %p77 = por %p75, %p76
    %s79 = sadd.s32 %s78, 1
    %p82 = scmp.eq.s32.totalorder %s9, 1
    %p83 = scmp.ne.s32.totalorder %s78, %s80
    %p84 = scmp.eq.s32.totalorder %s9, 0
    %p85 = por %p83, %p84
    %p86 = scmp.ne.s32.totalorder %s78, %s80
    %p87 = scmp.eq.s32.totalorder %s14, 1
    %p88 = por %p86, %p87
    %p89 = scmp.ne.s32.totalorder %s80, %s81
    %p90 = scmp.eq.s32.totalorder %s14, 0
    %p91 = por %p89, %p90
    %p92 = scmp.ne.s32.totalorder %s80, %s81
    %p93 = scmp.eq.s32.totalorder %s15, 1
    %p94 = por %p92, %p93
    %p96 = scmp.ne.s32.totalorder %s81, %s95
    %p97 = scmp.eq.s32.totalorder %s15, 0
    %p98 = por %p96, %p97
    %s99 = ssub.s32 %s16, %s28
    %s100 = ssub.s32 %s17, %s24
    %s101 = sor.u32 %s99, %s100
    %p102 = scmp.eq.s32.totalorder %s101, 0
    %s104 = sadd.s32 %s103, 1
    %s105 = scalar_select %p102, %s103, %s104
    %p108 = pneg %p102
    %p109 = scmp.eq.s32.totalorder %s9, 1
    %p110 = por %p108, %p109
    %p111 = scmp.ne.s32.totalorder %s103, %s106
    %p112 = scmp.eq.s32.totalorder %s9, 0
    %p113 = por %p111, %p112
    %p114 = scmp.ne.s32.totalorder %s103, %s106
    %p115 = scmp.eq.s32.totalorder %s14, 1
    %p116 = por %p114, %p115
    %p117 = scmp.ne.s32.totalorder %s106, %s107
    %p118 = scmp.eq.s32.totalorder %s14, 0
    %p119 = por %p117, %p118
    %p120 = scmp.ne.s32.totalorder %s106, %s107
    %p121 = scmp.eq.s32.totalorder %s15, 1
    %p122 = por %p120, %p121
    %p124 = scmp.ne.s32.totalorder %s107, %s123
    %p125 = scmp.eq.s32.totalorder %s15, 0
    %p126 = por %p124, %p125
    %p127 = scmp.le.s32.totalorder 1, %s9
    %p128 = scmp.lt.s32.totalorder %s9, 3
    %p129 = pnand %p127, %p128
    %p130 = pneg %p129
    // Predicated region
    $region9: #{basic_block_forward.3} parent=5 // pred_check
      _
    $region10: #{basic_block_forward.3} parent=5 // pred_check_branch
      %132 = sbr.rel (%p129) target = $region12
    $region11: #{basic_block_forward.3} parent=5 // pred_region
      %s133 = ssub.s32 %s9, 1
      // Predicated region
      $region13: #{basic_block_forward.3} parent=11 // pred_check
        %p134 = pneg %p70
      $region14: #{basic_block_forward.3} parent=11 // pred_check_branch
        %136 = sbr.rel (%p134) target = $region16
      $region15: #{basic_block_forward.3} parent=11 // pred_region
        _
      $region16: #{basic_block_forward.3} parent=11 // pred_fallthru
        _
      // Predicated region
      $region17: #{basic_block_forward.3} parent=11 // pred_check
        %p137 = pneg %p91
      $region18: #{basic_block_forward.3} parent=11 // pred_check_branch
        %139 = sbr.rel (%p137) target = $region20
      $region19: #{basic_block_forward.3} parent=11 // pred_region
        _
      $region20: #{basic_block_forward.3} parent=11 // pred_fallthru
        _
    $region12: #{basic_block_forward.3} parent=5 // pred_fallthru
      _
    %p140 = scmp.lt.s32.totalorder %s9, 2
    // Predicated region
    $region21: #{basic_block_forward.3} parent=5 // pred_check
      %p141 = pneg %p140
    $region22: #{basic_block_forward.3} parent=5 // pred_check_branch
      %143 = sbr.rel (%p141) target = $region24
    $region23: #{basic_block_forward.3} parent=5 // pred_region
      // Predicated region
      $region25: #{basic_block_forward.3} parent=23 // pred_check
        %p144 = pneg %p43
      $region26: #{basic_block_forward.3} parent=23 // pred_check_branch
        %146 = sbr.rel (%p144) target = $region28
      $region27: #{basic_block_forward.3} parent=23 // pred_region
        %s147 = smul.u32 7, %s17
        %p148 = scmp.lt.s32.totalorder %s16, 1
        %s149 = scalar_select %p148, %s16, 1
        %p150 = scmp.lt.s32.totalorder %s147, 6
        %s151 = scalar_select %p150, %s147, 6
        %s152 = smul.addr %s149, 7
        %s153 = sadd.s32 %s151, %s152
        %s154 = smul.addr %s153, 8
        %s155 = scalar_lea.vmem %s0, %s154
        %s156 = smul.u32 7, %s17
      $region28: #{basic_block_forward.3} parent=23 // pred_fallthru
        _
    $region24: #{basic_block_forward.3} parent=5 // pred_fallthru
      _
    %p157 = scmp.le.s32.totalorder 1, %s9
    %p158 = scmp.lt.s32.totalorder %s9, 3
    %p159 = pnand %p157, %p158
    %p160 = pneg %p159
    // Predicated region
    $region29: #{basic_block_forward.3} parent=5 // pred_check
      _
    $region30: #{basic_block_forward.3} parent=5 // pred_check_branch
      %162 = sbr.rel (%p159) target = $region32
    $region31: #{basic_block_forward.3} parent=5 // pred_region
      %s163 = ssub.s32 %s9, 1
      %s164 = smul.u32 7, %s19
      %p165 = scmp.lt.s32.totalorder %s18, 1
      %s166 = scalar_select %p165, %s18, 1
      %p167 = scmp.lt.s32.totalorder %s164, 6
      %s168 = scalar_select %p167, %s164, 6
      %s169 = smul.addr %s166, 7
      %s170 = sadd.s32 %s168, %s169
      %s171 = smul.addr %s170, 8
      %s172 = scalar_lea.vmem %s0, %s171
      %p173 = pneg %p49
      %p174 = pneg %p46
      %p175 = pneg %p70
      %p176 = pneg %p67
      %p177 = pneg %p91
      %p178 = pneg %p88
      %p179 = pneg %p119
      %p180 = pneg %p116
      %s181 = smul.u32 7, %s19
      %p182 = scmp.lt.s32.totalorder %s18, 1
      %s183 = scalar_select %p182, %s18, 1
      %p184 = scmp.lt.s32.totalorder %s181, 6
      %s185 = scalar_select %p184, %s181, 6
      %s186 = smul.addr %s183, 7
      %s187 = sadd.s32 %s185, %s186
      %s188 = smul.addr %s187, 8
      %s189 = scalar_lea.vmem %s3, %s188
      %s190 = smul.u32 7, %s19
      %p191 = scmp.lt.s32.totalorder %s18, 1
      %s192 = scalar_select %p191, %s18, 1
      %p193 = scmp.lt.s32.totalorder %s190, 6
      %s194 = scalar_select %p193, %s190, 6
      %s195 = smul.addr %s192, 7
      %s196 = sadd.s32 %s194, %s195
      %s197 = smul.addr %s196, 8
      %s198 = scalar_lea.vmem %s0, %s197
      %s199 = smul.u32 7, %s19
      %s200 = smul.u32 7, %s19
      %p201 = scmp.lt.s32.totalorder %s18, 1
      %s202 = scalar_select %p201, %s18, 1
      %p203 = scmp.lt.s32.totalorder %s200, 6
      %s204 = scalar_select %p203, %s200, 6
      %s205 = smul.addr %s202, 7
      %s206 = sadd.s32 %s204, %s205
      %s207 = smul.addr %s206, 8
      %s208 = scalar_lea.vmem %s3, %s207
      %s209 = smul.u32 7, %s19
      %v210 = vld [vmem:[%s198] sm:$0xff]
      %v211 = vld [vmem:[%s198 + $0x8] sm:$0xff]
      %v212 = vld [vmem:[%s198 + $0x10] sm:$0xff]
      %v213 = vld [vmem:[%s198 + $0x18] sm:$0xff]
      %v214 = vld [vmem:[%s198 + $0x20] sm:$0xff]
      %v215 = vld [vmem:[%s198 + $0x28] sm:$0xff]
      %v216 = vld [vmem:[%s198 + $0x30] sm:$0xff]
      %v217 = vld [vmem:[%s1] sm:$0xff]
      %219 = vset.pattern.permute.xlu0 0
      %220 = vperm.xlu0 %219, %v217
      %v221 = vpop.permute.xlu0 %220
      %v223 = vmul.f32 %v210, %v221
      %v224 = vmul.f32 %v211, %v221
      %v225 = vmul.f32 %v212, %v221
      %v226 = vmul.f32 %v213, %v221
      %v227 = vmul.f32 %v214, %v221
      %v228 = vmul.f32 %v215, %v221
      %v229 = vmul.f32 %v216, %v221
      %v230 = vld [vmem:[%s2] sm:$0xff]
      %232 = vset.pattern.permute.xlu0 0
      %233 = vperm.xlu0 %232, %v230
      %v234 = vpop.permute.xlu0 %233
      %v236 = vadd.f32 %v223, %v234
      %v237 = vadd.f32 %v224, %v234
      %v238 = vadd.f32 %v225, %v234
      %v239 = vadd.f32 %v226, %v234
      %v240 = vadd.f32 %v227, %v234
      %v241 = vadd.f32 %v228, %v234
      %v242 = vadd.f32 %v229, %v234
      %v243 = vmax.f32 %v236, 0.0
      %v244 = vmax.f32 %v237, 0.0
      %v245 = vmax.f32 %v238, 0.0
      %v246 = vmax.f32 %v239, 0.0
      %v247 = vmax.f32 %v240, 0.0
      %v248 = vmax.f32 %v241, 0.0
      %v249 = vmax.f32 %v242, 0.0
      %250 = vst [vmem:[%s208] sm:$0xff] %v243
      %251 = vst [vmem:[%s208 + $0x8] sm:$0xff] %v244
      %252 = vst [vmem:[%s208 + $0x10] sm:$0xff] %v245
      %253 = vst [vmem:[%s208 + $0x18] sm:$0xff] %v246
      %254 = vst [vmem:[%s208 + $0x20] sm:$0xff] %v247
      %255 = vst [vmem:[%s208 + $0x28] sm:$0xff] %v248
      %256 = vst [vmem:[%s208 + $0x30] sm:$0xff] %v249
      %s257 = smul.u32 7, %s19
      %p258 = scmp.lt.s32.totalorder %s18, 1
      %s259 = scalar_select %p258, %s18, 1
      %p260 = scmp.lt.s32.totalorder %s257, 6
      %s261 = scalar_select %p260, %s257, 6
      %s262 = smul.addr %s259, 7
      %s263 = sadd.s32 %s261, %s262
      %s264 = smul.addr %s263, 8
      %s265 = scalar_lea.vmem %s3, %s264
      // Predicated region
      $region33: #{basic_block_forward.3} parent=31 // pred_check
        %p266 = pneg %p116
      $region34: #{basic_block_forward.3} parent=31 // pred_check_branch
        %268 = sbr.rel (%p266) target = $region36
      $region35: #{basic_block_forward.3} parent=31 // pred_region
        %s269 = smul.u32 7, %s19
      $region36: #{basic_block_forward.3} parent=31 // pred_fallthru
        _
    $region32: #{basic_block_forward.3} parent=5 // pred_fallthru
      _
    %p270 = scmp.le.s32.totalorder 2, %s9
    // Predicated region
    $region37: #{basic_block_forward.3} parent=5 // pred_check
      %p271 = pneg %p270
    $region38: #{basic_block_forward.3} parent=5 // pred_check_branch
      %273 = sbr.rel (%p271) target = $region40
    $region39: #{basic_block_forward.3} parent=5 // pred_region
      %s274 = ssub.s32 %s9, 2
      // Predicated region
      $region41: #{basic_block_forward.3} parent=39 // pred_check
        %p275 = pneg %p122
      $region42: #{basic_block_forward.3} parent=39 // pred_check_branch
        %277 = sbr.rel (%p275) target = $region44
      $region43: #{basic_block_forward.3} parent=39 // pred_region
        %s278 = smul.u32 7, %s21
        %p279 = scmp.lt.s32.totalorder %s20, 1
        %s280 = scalar_select %p279, %s20, 1
        %p281 = scmp.lt.s32.totalorder %s278, 6
        %s282 = scalar_select %p281, %s278, 6
        %s283 = smul.addr %s280, 7
        %s284 = sadd.s32 %s282, %s283
        %s285 = smul.addr %s284, 8
        %s286 = scalar_lea.vmem %s3, %s285
      $region44: #{basic_block_forward.3} parent=39 // pred_fallthru
        _
    $region40: #{basic_block_forward.3} parent=5 // pred_fallthru
      _
  $region6: #{basic_block_forward.3} parent=0 // loop_footer
    %s13 = sadd.s32 1, %s9
  $region7: #{basic_block_forward.3} parent=0 // loop_footer_branch
    %8 = sbr.rel target = $region3
  $region8: #{basic_block_forward.3} parent=0 // loop_exit
    _

// kernel: basic_block_forward.2
$region0: #{basic_block_forward.2}
  #allocation0 [shape = 'u32[]', space=smem, size = 0x4, offset = 0x4, fixed_abs, tag = 'smem constant byte address 0x4 - core index']
  #allocation1 [shape = 'u32[144,128]{1,0:T(1,128)}', space=vmem, size = 0x12000, scoped, tag = 'internal scratch']
  %s0 = inlined_call_operand.vmem [shape: bf16[2,1,4,1152], index: 0, kind: input, shape index: {}]
  %s1 = inlined_call_operand.vmem [shape: bf16[27,8,4], index: 1, kind: input, shape index: {}]
  %s2 = inlined_call_operand.vmem [shape: f32[1,896], index: 2, kind: input, shape index: {}]
  %s3 = inlined_call_operand.vmem [shape: f32[2,8,896], index: 3, kind: output, shape index: {0}]
  %s4 = inlined_call_operand.vmem [shape: f32[2,8,1], index: 4, kind: output, shape index: {1}]
  %s5 = inlined_call_operand.vmem [shape: f32[2,8,1], index: 5, kind: output, shape index: {2}]
  %6 = xla_tuple %s3, %s4, %s5
  %s7 = sld [smem:[#allocation0]]
  $region65: #{basic_block_forward.2} parent=0
    _
  %s9 = ssub.s32 1, %s7
  %s10 = scalar_select 0, %s9, %s7
  loop: start=0, step=1, limit=4
  $region2: #{basic_block_forward.2} parent=0 // loop_pre_header
    _
  $region3: #{basic_block_forward.2} parent=0 // loop_header
    %s12 = sphi 0, %s16
    %p13 = scmp.ge.s32.totalorder %s12, 4
    %s19 = sphi 0, %s31
    %s20 = sphi 0, %s27
    %s21 = sphi 0, %s19
    %s22 = sphi 0, %s20
    %s23 = sphi 0, %s21
    %s24 = sphi 0, %s22
    %s36 = sphi 0, %s38
    %s39 = sphi 0, %s36
    %s40 = sphi 0, %s39
    %s56 = sphi 0, %s40
    %s60 = sphi 0, %s60
    %s62 = sphi 0, %s60
    %s63 = sphi 0, %s62
    %s77 = sphi 0, %s63
    %s83 = sphi 0, %s85
    %s86 = sphi 0, %s83
    %s87 = sphi 0, %s86
    %s103 = sphi 0, %s87
    %s111 = sphi 0, %s113
    %s114 = sphi 0, %s111
    %s115 = sphi 0, %s114
    %s131 = sphi 0, %s115
    %s137 = sphi 0, %s139
    %s140 = sphi 0, %s137
    %s141 = sphi 0, %s140
    %s157 = sphi 0, %s141
    %s163 = sphi 0, %s165
    %s166 = sphi 0, %s163
    %s167 = sphi 0, %s166
    %s183 = sphi 0, %s167
  $region4: #{basic_block_forward.2} parent=0 // loop_header_branch
    %15 = sbr.rel (%p13) target = $region8
  $region5: #{basic_block_forward.2} parent=0 // loop_body
    %s17 = ssub.s32 %s12, 1
    %s18 = ssub.s32 %s12, 2
    %s25 = sadd.s32 1, %s20
    %p26 = scmp.ge.s32.totalorder %s25, 1
    %s27 = scalar_select %p26, 0, %s25
    %s28 = sadd.s32 1, %s19
    %s29 = scalar_select %p26, %s28, %s19
    %p30 = scmp.ge.s32.totalorder %s29, 2
    %s31 = scalar_select %p30, 0, %s29
    %s32 = ssub.s32 %s19, %s31
    %s33 = ssub.s32 %s20, %s27
    %s34 = sor.u32 %s32, %s33
    %p35 = scmp.eq.s32.totalorder %s34, 0
    %s37 = sadd.s32 %s36, 1
    %s38 = scalar_select %p35, %s36, %s37
    %p41 = pneg %p35
    %p42 = scmp.eq.s32.totalorder %s12, 1
    %p43 = por %p41, %p42
    %p44 = scmp.ne.s32.totalorder %s36, %s39
    %p45 = scmp.eq.s32.totalorder %s12, 0
    %p46 = por %p44, %p45
    %p47 = scmp.ne.s32.totalorder %s36, %s39
    %p48 = scmp.eq.s32.totalorder %s17, 1
    %p49 = por %p47, %p48
    %p50 = scmp.ne.s32.totalorder %s39, %s40
    %p51 = scmp.eq.s32.totalorder %s17, 0
    %p52 = por %p50, %p51
    %p53 = scmp.ne.s32.totalorder %s39, %s40
    %p54 = scmp.eq.s32.totalorder %s18, 1
    %p55 = por %p53, %p54
    %p57 = scmp.ne.s32.totalorder %s40, %s56
    %p58 = scmp.eq.s32.totalorder %s18, 0
    %p59 = por %p57, %p58
    %s61 = sadd.s32 %s60, 1
    %p64 = scmp.eq.s32.totalorder %s12, 1
    %p65 = scmp.ne.s32.totalorder %s60, %s62
    %p66 = scmp.eq.s32.totalorder %s12, 0
    %p67 = por %p65, %p66
    %p68 = scmp.ne.s32.totalorder %s60, %s62
    %p69 = scmp.eq.s32.totalorder %s17, 1
    %p70 = por %p68, %p69
    %p71 = scmp.ne.s32.totalorder %s62, %s63
    %p72 = scmp.eq.s32.totalorder %s17, 0
    %p73 = por %p71, %p72
    %p74 = scmp.ne.s32.totalorder %s62, %s63
    %p75 = scmp.eq.s32.totalorder %s18, 1
    %p76 = por %p74, %p75
    %p78 = scmp.ne.s32.totalorder %s63, %s77
    %p79 = scmp.eq.s32.totalorder %s18, 0
    %p80 = por %p78, %p79
    %s81 = ssub.s32 %s20, %s27
    %p82 = scmp.eq.s32.totalorder %s81, 0
    %s84 = sadd.s32 %s83, 1
    %s85 = scalar_select %p82, %s83, %s84
    %p88 = pneg %p82
    %p89 = scmp.eq.s32.totalorder %s12, 1
    %p90 = por %p88, %p89
    %p91 = scmp.ne.s32.totalorder %s83, %s86
    %p92 = scmp.eq.s32.totalorder %s12, 0
    %p93 = por %p91, %p92
    %p94 = scmp.ne.s32.totalorder %s83, %s86
    %p95 = scmp.eq.s32.totalorder %s17, 1
    %p96 = por %p94, %p95
    %p97 = scmp.ne.s32.totalorder %s86, %s87
    %p98 = scmp.eq.s32.totalorder %s17, 0
    %p99 = por %p97, %p98
    %p100 = scmp.ne.s32.totalorder %s86, %s87
    %p101 = scmp.eq.s32.totalorder %s18, 1
    %p102 = por %p100, %p101
    %p104 = scmp.ne.s32.totalorder %s87, %s103
    %p105 = scmp.eq.s32.totalorder %s18, 0
    %p106 = por %p104, %p105
    %s107 = ssub.s32 %s19, %s31
    %s108 = ssub.s32 %s20, %s27
    %s109 = sor.u32 %s107, %s108
    %p110 = scmp.eq.s32.totalorder %s109, 0
    %s112 = sadd.s32 %s111, 1
    %s113 = scalar_select %p110, %s111, %s112
    %p116 = pneg %p110
    %p117 = scmp.eq.s32.totalorder %s12, 1
    %p118 = por %p116, %p117
    %p119 = scmp.ne.s32.totalorder %s111, %s114
    %p120 = scmp.eq.s32.totalorder %s12, 0
    %p121 = por %p119, %p120
    %p122 = scmp.ne.s32.totalorder %s111, %s114
    %p123 = scmp.eq.s32.totalorder %s17, 1
    %p124 = por %p122, %p123
    %p125 = scmp.ne.s32.totalorder %s114, %s115
    %p126 = scmp.eq.s32.totalorder %s17, 0
    %p127 = por %p125, %p126
    %p128 = scmp.ne.s32.totalorder %s114, %s115
    %p129 = scmp.eq.s32.totalorder %s18, 1
    %p130 = por %p128, %p129
    %p132 = scmp.ne.s32.totalorder %s115, %s131
    %p133 = scmp.eq.s32.totalorder %s18, 0
    %p134 = por %p132, %p133
    %s135 = ssub.s32 %s19, %s31
    %p136 = scmp.eq.s32.totalorder %s135, 0
    %s138 = sadd.s32 %s137, 1
    %s139 = scalar_select %p136, %s137, %s138
    %p142 = pneg %p136
    %p143 = scmp.eq.s32.totalorder %s12, 1
    %p144 = por %p142, %p143
    %p145 = scmp.ne.s32.totalorder %s137, %s140
    %p146 = scmp.eq.s32.totalorder %s12, 0
    %p147 = por %p145, %p146
    %p148 = scmp.ne.s32.totalorder %s137, %s140
    %p149 = scmp.eq.s32.totalorder %s17, 1
    %p150 = por %p148, %p149
    %p151 = scmp.ne.s32.totalorder %s140, %s141
    %p152 = scmp.eq.s32.totalorder %s17, 0
    %p153 = por %p151, %p152
    %p154 = scmp.ne.s32.totalorder %s140, %s141
    %p155 = scmp.eq.s32.totalorder %s18, 1
    %p156 = por %p154, %p155
    %p158 = scmp.ne.s32.totalorder %s141, %s157
    %p159 = scmp.eq.s32.totalorder %s18, 0
    %p160 = por %p158, %p159
    %s161 = ssub.s32 %s19, %s31
    %p162 = scmp.eq.s32.totalorder %s161, 0
    %s164 = sadd.s32 %s163, 1
    %s165 = scalar_select %p162, %s163, %s164
    %p168 = pneg %p162
    %p169 = scmp.eq.s32.totalorder %s12, 1
    %p170 = por %p168, %p169
    %p171 = scmp.ne.s32.totalorder %s163, %s166
    %p172 = scmp.eq.s32.totalorder %s12, 0
    %p173 = por %p171, %p172
    %p174 = scmp.ne.s32.totalorder %s163, %s166
    %p175 = scmp.eq.s32.totalorder %s17, 1
    %p176 = por %p174, %p175
    %p177 = scmp.ne.s32.totalorder %s166, %s167
    %p178 = scmp.eq.s32.totalorder %s17, 0
    %p179 = por %p177, %p178
    %p180 = scmp.ne.s32.totalorder %s166, %s167
    %p181 = scmp.eq.s32.totalorder %s18, 1
    %p182 = por %p180, %p181
    %p184 = scmp.ne.s32.totalorder %s167, %s183
    %p185 = scmp.eq.s32.totalorder %s18, 0
    %p186 = por %p184, %p185
    %p187 = scmp.le.s32.totalorder 1, %s12
    %p188 = scmp.lt.s32.totalorder %s12, 3
    %p189 = pnand %p187, %p188
    %p190 = pneg %p189
    // Predicated region
    $region9: #{basic_block_forward.2} parent=5 // pred_check
      _
    $region10: #{basic_block_forward.2} parent=5 // pred_check_branch
      %192 = sbr.rel (%p189) target = $region12
    $region11: #{basic_block_forward.2} parent=5 // pred_region
      %s193 = ssub.s32 %s12, 1
      // Predicated region
      $region13: #{basic_block_forward.2} parent=11 // pred_check
        %p194 = pneg %p73
      $region14: #{basic_block_forward.2} parent=11 // pred_check_branch
        %196 = sbr.rel (%p194) target = $region16
      $region15: #{basic_block_forward.2} parent=11 // pred_region
        _
      $region16: #{basic_block_forward.2} parent=11 // pred_fallthru
        _
      // Predicated region
      $region17: #{basic_block_forward.2} parent=11 // pred_check
        %p197 = pneg %p99
      $region18: #{basic_block_forward.2} parent=11 // pred_check_branch
        %199 = sbr.rel (%p197) target = $region20
      $region19: #{basic_block_forward.2} parent=11 // pred_region
        %s200 = smul.u32 7, %s22
        %p201 = scmp.lt.s32.totalorder %s200, 6
        %s202 = scalar_select %p201, %s200, 6
        %s203 = scalar_lea.vmem %s2, %s202
        %s204 = smul.u32 7, %s22
      $region20: #{basic_block_forward.2} parent=11 // pred_fallthru
        _
    $region12: #{basic_block_forward.2} parent=5 // pred_fallthru
      _
    %p205 = scmp.lt.s32.totalorder %s12, 2
    // Predicated region
    $region21: #{basic_block_forward.2} parent=5 // pred_check
      %p206 = pneg %p205
    $region22: #{basic_block_forward.2} parent=5 // pred_check_branch
      %208 = sbr.rel (%p206) target = $region24
    $region23: #{basic_block_forward.2} parent=5 // pred_region
      // Predicated region
      $region25: #{basic_block_forward.2} parent=23 // pred_check
        %p209 = pneg %p46
      $region26: #{basic_block_forward.2} parent=23 // pred_check_branch
        %211 = sbr.rel (%p209) target = $region28
      $region27: #{basic_block_forward.2} parent=23 // pred_region
        %p212 = scmp.lt.s32.totalorder %s19, 1
        %s213 = scalar_select %p212, %s19, 1
        %p214 = scmp.lt.s32.totalorder %s20, 0
        %s215 = scalar_select %p214, %s20, 0
        %s216 = smul.addr %s215, 9
        %s217 = smul.addr %s213, 9
        %s218 = sadd.s32 %s216, %s217
        %s219 = smul.addr %s218, 2
        %s220 = scalar_lea.vmem %s0, %s219
      $region28: #{basic_block_forward.2} parent=23 // pred_fallthru
        _
    $region24: #{basic_block_forward.2} parent=5 // pred_fallthru
      _
    %p221 = scmp.le.s32.totalorder 1, %s12
    %p222 = scmp.lt.s32.totalorder %s12, 3
    %p223 = pnand %p221, %p222
    %p224 = pneg %p223
    // Predicated region
    $region29: #{basic_block_forward.2} parent=5 // pred_check
      _
    $region30: #{basic_block_forward.2} parent=5 // pred_check_branch
      %226 = sbr.rel (%p223) target = $region32
    $region31: #{basic_block_forward.2} parent=5 // pred_region
      %s227 = ssub.s32 %s12, 1
      %p228 = scmp.lt.s32.totalorder %s21, 1
      %s229 = scalar_select %p228, %s21, 1
      %p230 = scmp.lt.s32.totalorder %s22, 0
      %s231 = scalar_select %p230, %s22, 0
      %s232 = smul.addr %s231, 9
      %s233 = smul.addr %s229, 9
      %s234 = sadd.s32 %s232, %s233
      %s235 = smul.addr %s234, 2
      %s236 = scalar_lea.vmem %s0, %s235
      %p237 = pneg %p52
      %p238 = pneg %p49
      %p239 = pneg %p73
      %p240 = pneg %p70
      %s241 = smul.u32 7, %s22
      %p242 = scmp.lt.s32.totalorder %s241, 6
      %s243 = scalar_select %p242, %s241, 6
      %s244 = scalar_lea.vmem %s2, %s243
      %p245 = pneg %p99
      %p246 = pneg %p96
      %p247 = pneg %p127
      %p248 = pneg %p124
      %s249 = smul.u32 7, %s22
      %p250 = scmp.lt.s32.totalorder %s21, 1
      %s251 = scalar_select %p250, %s21, 1
      %p252 = scmp.lt.s32.totalorder %s249, 6
      %s253 = scalar_select %p252, %s249, 6
      %s254 = smul.addr %s251, 7
      %s255 = sadd.s32 %s253, %s254
      %s256 = smul.addr %s255, 8
      %s257 = scalar_lea.vmem %s3, %s256
      %p258 = pneg %p153
      %p259 = pneg %p150
      %p260 = scmp.lt.s32.totalorder %s21, 1
      %s261 = scalar_select %p260, %s21, 1
      %s262 = smul.addr %s261, 8
      %s263 = scalar_lea.vmem %s4, %s262
      %p264 = pneg %p179
      %p265 = pneg %p176
      %p266 = scmp.lt.s32.totalorder %s21, 1
      %s267 = scalar_select %p266, %s21, 1
      %s268 = smul.addr %s267, 8
      %s269 = scalar_lea.vmem %s5, %s268
      %p270 = scmp.lt.s32.totalorder %s21, 1
      %s271 = scalar_select %p270, %s21, 1
      %p272 = scmp.lt.s32.totalorder %s22, 0
      %s273 = scalar_select %p272, %s22, 0
      %s274 = smul.addr %s273, 9
      %s275 = smul.addr %s271, 9
      %s276 = sadd.s32 %s274, %s275
      %s277 = smul.addr %s276, 2
      %s278 = scalar_lea.vmem %s0, %s277
      %s279 = smul.u32 7, %s22
      %p280 = scmp.lt.s32.totalorder %s279, 6
      %s281 = scalar_select %p280, %s279, 6
      %s282 = scalar_lea.vmem %s2, %s281
      %s283 = smul.u32 7, %s22
      %s284 = smul.u32 7, %s22
      %p285 = scmp.lt.s32.totalorder %s21, 1
      %s286 = scalar_select %p285, %s21, 1
      %p287 = scmp.lt.s32.totalorder %s284, 6
      %s288 = scalar_select %p287, %s284, 6
      %s289 = smul.addr %s286, 7
      %s290 = sadd.s32 %s288, %s289
      %s291 = smul.addr %s290, 8
      %s292 = scalar_lea.vmem %s3, %s291
      %s293 = smul.u32 7, %s22
      %p294 = scmp.lt.s32.totalorder %s21, 1
      %s295 = scalar_select %p294, %s21, 1
      %s296 = smul.addr %s295, 8
      %s297 = scalar_lea.vmem %s4, %s296
      %p298 = scmp.lt.s32.totalorder %s21, 1
      %s299 = scalar_select %p298, %s21, 1
      %s300 = smul.addr %s299, 8
      %s301 = scalar_lea.vmem %s5, %s300
      %p303 = scmp.eq.s32.totalorder %s22, 0
      // Predicated region
      $region33: #{basic_block_forward.2} parent=31 // pred_check
        %p304 = pneg %p303
      $region34: #{basic_block_forward.2} parent=31 // pred_check_branch
        %306 = sbr.rel (%p304) target = $region36
      $region35: #{basic_block_forward.2} parent=31 // pred_region
        %vm307 = vcmask 7168
        %308 = vst.msk [vmem:[%s297] sm:$0xff] %vm307, 0.0
        %309 = vst.msk [vmem:[%s301] sm:$0xff] %vm307, 0.0
      $region36: #{basic_block_forward.2} parent=31 // pred_fallthru
        _
      %v310 = vld [vmem:[%s278] sm:$0xff]
      %v311 = vld [vmem:[%s278 + $0x8] sm:$0x3f]
      %v312 = vld [vmem:[%s1] sm:$0xf]
      %v313 = vld [vmem:[%s278 + $0x8] sm:$0xff]
      %s314 = scalar_lea.vmem %s1, 4
      %v315 = vld [vmem:[%s314] sm:$0xf]
      %v318 = vcombine.high %v310, %v310
      %v320 = vunpack.c.l.s4 1983009808
      %v321 = vunpack.c.0.s8 %v320
      %v322 = vlaneseq
      %v323 = vshrl.u32 %v322, 7
      %v324 = vsub.s32 %v321, %v323
      %v325 = vrot.slane %v310, %v324
      %v327 = vunpack.c.l.s4 1983009808
      %v328 = vunpack.c.0.s8 %v327
      %v329 = vlaneseq
      %v330 = vshrl.u32 %v329, 7
      %v331 = vsub.s32 %v328, %v330
      %v332 = vrot.slane %v318, %v331
      %v333 = vcombine.high %v325, %v325
      %v334 = vcombine.high %v332, %v332
      %v335 = vcombine.high %v313, %v313
      %v337 = vunpack.c.l.s4 1983009808
      %v338 = vunpack.c.0.s8 %v337
      %v339 = vlaneseq
      %v340 = vshrl.u32 %v339, 7
      %v341 = vsub.s32 %v338, %v340
      %v342 = vrot.slane %v313, %v341
      %v344 = vunpack.c.l.s4 1983009808
      %v345 = vunpack.c.0.s8 %v344
      %v346 = vlaneseq
      %v347 = vshrl.u32 %v346, 7
      %v348 = vsub.s32 %v345, %v347
      %v349 = vrot.slane %v335, %v348
      %v350 = vcombine.high %v342, %v342
      %v351 = vcombine.high %v349, %v349
      %352 = vrot.lane.b32.xlu0 %v325, 127
      %v353 = vpop.permute.xlu0 %352
      %354 = vrot.lane.b32.xlu0 %v333, 127
      %v355 = vpop.permute.xlu0 %354
      %356 = vrot.lane.b32.xlu0 %v332, 127
      %v357 = vpop.permute.xlu0 %356
      %358 = vrot.lane.b32.xlu0 %v334, 127
      %v359 = vpop.permute.xlu0 %358
      %360 = vrot.lane.b32.xlu0 %v342, 127
      %v361 = vpop.permute.xlu0 %360
      %362 = vrot.lane.b32.xlu0 %v350, 127
      %v363 = vpop.permute.xlu0 %362
      %364 = vrot.lane.b32.xlu0 %v349, 127
      %v365 = vpop.permute.xlu0 %364
      %366 = vrot.lane.b32.xlu0 %v351, 127
      %v367 = vpop.permute.xlu0 %366
      %vm368 = vcmask 1039360
      %v369 = vsel %vm368, %v353, %v355
      %v370 = vsel %vm368, %v355, %v357
      %v371 = vsel %vm368, %v357, %v359
      %v372 = vsel %vm368, %v359, %v361
      %v373 = vsel %vm368, %v361, %v363
      %v374 = vsel %vm368, %v363, %v365
      %v375 = vsel %vm368, %v365, %v367
      %vm376 = vcmask 31744
      %v378 = vsel %vm376, %v315, 0
      %vm380 = vcmask 1041408
      %v382 = vsel %vm380, %v369, 0
      %v385 = vsel %vm380, %v370, 0
      %v388 = vsel %vm380, %v371, 0
      %v391 = vsel %vm380, %v372, 0
      %v394 = vsel %vm380, %v373, 0
      %v397 = vsel %vm380, %v374, 0
      %v400 = vsel %vm380, %v375, 0
      %402 = vmatprep.subr.bf16.mxu0 %v385
      %403 = vmatpush1.bf16.msra.mxu0 %v382
      %404 = vmatprep.subr.bf16.mxu0 0
      %405 = vmatpush1.bf16.msra.mxu0 0
      %406 = vmatprep.subr.bf16.mxu0 0
      %407 = vmatpush1.bf16.msra.mxu0 0
      %408 = vmatprep.subr.bf16.mxu0 0
      %409 = vmatpush1.bf16.msra.mxu0 0
      %410 = vmatprep.subr.bf16.mxu0 0
      %411 = vmatpush1.bf16.msra.mxu0 0
      %412 = vmatprep.subr.bf16.mxu0 0
      %413 = vmatpush1.bf16.msra.mxu0 0
      %414 = vmatprep.subr.bf16.mxu0 0
      %415 = vmatpush1.bf16.msra.mxu0 0
      %416 = vmatprep.subr.bf16.mxu0 0
      %417 = vmatpush1.bf16.msra.mxu0 0
      %418 = vmatprep.subr.bf16.mxu0 0
      %419 = vmatpush1.bf16.msra.mxu0 0
      %420 = vmatprep.subr.bf16.mxu0 0
      %421 = vmatpush1.bf16.msra.mxu0 0
      %422 = vmatprep.subr.bf16.mxu0 0
      %423 = vmatpush1.bf16.msra.mxu0 0
      %424 = vmatprep.subr.bf16.mxu0 0
      %425 = vmatpush1.bf16.msra.mxu0 0
      %426 = vmatprep.subr.bf16.mxu0 0
      %427 = vmatpush1.bf16.msra.mxu0 0
      %428 = vmatprep.subr.bf16.mxu0 0
      %429 = vmatpush1.bf16.msra.mxu0 0
      %430 = vmatprep.subr.bf16.mxu0 0
      %431 = vmatpush1.bf16.msra.mxu0 0
      %432 = vmatprep.subr.bf16.mxu0 0
      %433 = vmatpush1.bf16.msra.mxu0 0
      %434 = vmatprep.mubr.bf16.mxu0 0
      %435 = vmatmul.mubr.bf16.gmra.mrb[0].mxu0 %v378
      %v436 = vpop.f32.mrb[0].mxu0
      %v437 = vadd.f32 0.0, %v436
      %v438 = vpop.f32.mrb[0].mxu0
      %v439 = vadd.f32 0.0, %v438
      %v440 = vpop.f32.mrb[0].mxu0
      %v441 = vpop.f32.mrb[0].mxu0
      %442 = vdwg.mxu0
      %443 = vmatprep.subr.bf16.mxu0 %v391
      %444 = vmatpush1.bf16.msra.mxu0 %v388
      %445 = vmatprep.subr.bf16.mxu0 0
      %446 = vmatpush1.bf16.msra.mxu0 0
      %447 = vmatprep.subr.bf16.mxu0 0
      %448 = vmatpush1.bf16.msra.mxu0 0
      %449 = vmatprep.subr.bf16.mxu0 0
      %450 = vmatpush1.bf16.msra.mxu0 0
      %451 = vmatprep.subr.bf16.mxu0 0
      %452 = vmatpush1.bf16.msra.mxu0 0
      %453 = vmatprep.subr.bf16.mxu0 0
      %454 = vmatpush1.bf16.msra.mxu0 0
      %455 = vmatprep.subr.bf16.mxu0 0
      %456 = vmatpush1.bf16.msra.mxu0 0
      %457 = vmatprep.subr.bf16.mxu0 0
      %458 = vmatpush1.bf16.msra.mxu0 0
      %459 = vmatprep.subr.bf16.mxu0 0
      %460 = vmatpush1.bf16.msra.mxu0 0
      %461 = vmatprep.subr.bf16.mxu0 0
      %462 = vmatpush1.bf16.msra.mxu0 0
      %463 = vmatprep.subr.bf16.mxu0 0
      %464 = vmatpush1.bf16.msra.mxu0 0
      %465 = vmatprep.subr.bf16.mxu0 0
      %466 = vmatpush1.bf16.msra.mxu0 0
      %467 = vmatprep.subr.bf16.mxu0 0
      %468 = vmatpush1.bf16.msra.mxu0 0
      %469 = vmatprep.subr.bf16.mxu0 0
      %470 = vmatpush1.bf16.msra.mxu0 0
      %471 = vmatprep.subr.bf16.mxu0 0
      %472 = vmatpush1.bf16.msra.mxu0 0
      %473 = vmatprep.subr.bf16.mxu0 0
      %474 = vmatpush1.bf16.msra.mxu0 0
      %475 = vmatprep.mubr.bf16.mxu0 0
      %476 = vmatmul.mubr.bf16.gmra.mrb[0].mxu0 %v378
      %v477 = vpop.f32.mrb[0].mxu0
      %v478 = vadd.f32 0.0, %v477
      %v479 = vpop.f32.mrb[0].mxu0
      %v480 = vadd.f32 0.0, %v479
      %v481 = vpop.f32.mrb[0].mxu0
      %v482 = vpop.f32.mrb[0].mxu0
      %483 = vdwg.mxu0
      %484 = vmatprep.subr.bf16.mxu0 %v397
      %485 = vmatpush1.bf16.msra.mxu0 %v394
      %486 = vmatprep.subr.bf16.mxu0 0
      %487 = vmatpush1.bf16.msra.mxu0 0
      %488 = vmatprep.subr.bf16.mxu0 0
      %489 = vmatpush1.bf16.msra.mxu0 0
      %490 = vmatprep.subr.bf16.mxu0 0
      %491 = vmatpush1.bf16.msra.mxu0 0
      %492 = vmatprep.subr.bf16.mxu0 0
      %493 = vmatpush1.bf16.msra.mxu0 0
      %494 = vmatprep.subr.bf16.mxu0 0
      %495 = vmatpush1.bf16.msra.mxu0 0
      %496 = vmatprep.subr.bf16.mxu0 0
      %497 = vmatpush1.bf16.msra.mxu0 0
      %498 = vmatprep.subr.bf16.mxu0 0
      %499 = vmatpush1.bf16.msra.mxu0 0
      %500 = vmatprep.subr.bf16.mxu0 0
      %501 = vmatpush1.bf16.msra.mxu0 0
      %502 = vmatprep.subr.bf16.mxu0 0
      %503 = vmatpush1.bf16.msra.mxu0 0
      %504 = vmatprep.subr.bf16.mxu0 0
      %505 = vmatpush1.bf16.msra.mxu0 0
      %506 = vmatprep.subr.bf16.mxu0 0
      %507 = vmatpush1.bf16.msra.mxu0 0
      %508 = vmatprep.subr.bf16.mxu0 0
      %509 = vmatpush1.bf16.msra.mxu0 0
      %510 = vmatprep.subr.bf16.mxu0 0
      %511 = vmatpush1.bf16.msra.mxu0 0
      %512 = vmatprep.subr.bf16.mxu0 0
      %513 = vmatpush1.bf16.msra.mxu0 0
      %514 = vmatprep.subr.bf16.mxu0 0
      %515 = vmatpush1.bf16.msra.mxu0 0
      %516 = vmatprep.mubr.bf16.mxu0 0
      %517 = vmatmul.mubr.bf16.gmra.mrb[0].mxu0 %v378
      %v518 = vpop.f32.mrb[0].mxu0
      %v519 = vadd.f32 0.0, %v518
      %v520 = vpop.f32.mrb[0].mxu0
      %v521 = vadd.f32 0.0, %v520
      %v522 = vpop.f32.mrb[0].mxu0
      %v523 = vpop.f32.mrb[0].mxu0
      %524 = vdwg.mxu0
      %525 = vmatprep.subr.bf16.mxu0 0
      %526 = vmatpush1.bf16.msra.mxu0 %v400
      %527 = vmatprep.subr.bf16.mxu0 0
      %528 = vmatpush1.bf16.msra.mxu0 0
      %529 = vmatprep.subr.bf16.mxu0 0
      %530 = vmatpush1.bf16.msra.mxu0 0
      %531 = vmatprep.subr.bf16.mxu0 0
      %532 = vmatpush1.bf16.msra.mxu0 0
      %533 = vmatprep.subr.bf16.mxu0 0
      %534 = vmatpush1.bf16.msra.mxu0 0
      %535 = vmatprep.subr.bf16.mxu0 0
      %536 = vmatpush1.bf16.msra.mxu0 0
      %537 = vmatprep.subr.bf16.mxu0 0
      %538 = vmatpush1.bf16.msra.mxu0 0
      %539 = vmatprep.subr.bf16.mxu0 0
      %540 = vmatpush1.bf16.msra.mxu0 0
      %541 = vmatprep.subr.bf16.mxu0 0
      %542 = vmatpush1.bf16.msra.mxu0 0
      %543 = vmatprep.subr.bf16.mxu0 0
      %544 = vmatpush1.bf16.msra.mxu0 0
      %545 = vmatprep.subr.bf16.mxu0 0
      %546 = vmatpush1.bf16.msra.mxu0 0
      %547 = vmatprep.subr.bf16.mxu0 0
      %548 = vmatpush1.bf16.msra.mxu0 0
      %549 = vmatprep.subr.bf16.mxu0 0
      %550 = vmatpush1.bf16.msra.mxu0 0
      %551 = vmatprep.subr.bf16.mxu0 0
      %552 = vmatpush1.bf16.msra.mxu0 0
      %553 = vmatprep.subr.bf16.mxu0 0
      %554 = vmatpush1.bf16.msra.mxu0 0
      %555 = vmatprep.subr.bf16.mxu0 0
      %556 = vmatpush1.bf16.msra.mxu0 0
      %557 = vmatprep.mubr.bf16.mxu0 0
      %558 = vmatmul.mubr.bf16.gmra.mrb[0].mxu0 %v378
      %v559 = vpop.f32.mrb[0].mxu0
      %v560 = vadd.f32 0.0, %v559
      %v561 = vpop.f32.mrb[0].mxu0
      %v562 = vpop.f32.mrb[0].mxu0
      %v563 = vpop.f32.mrb[0].mxu0
      %564 = vdwg.mxu0
      %v566 = vcombine.high %v311, %v311
      %v568 = vunpack.c.l.s4 1983009808
      %v569 = vunpack.c.0.s8 %v568
      %v570 = vlaneseq
      %v571 = vshrl.u32 %v570, 7
      %v572 = vsub.s32 %v569, %v571
      %v573 = vrot.slane %v311, %v572
      %v575 = vunpack.c.l.s4 1983009808
      %v576 = vunpack.c.0.s8 %v575
      %v577 = vlaneseq
      %v578 = vshrl.u32 %v577, 7
      %v579 = vsub.s32 %v576, %v578
      %v580 = vrot.slane %v566, %v579
      %v581 = vcombine.high %v573, %v573
      %v583 = vsel %vm376, %v312, 0
      %v586 = vsel %vm380, %v325, 0
      %v589 = vsel %vm380, %v333, 0
      %v592 = vsel %vm380, %v332, 0
      %v595 = vsel %vm380, %v334, 0
      %v598 = vsel %vm380, %v573, 0
      %v601 = vsel %vm380, %v581, 0
      %v604 = vsel %vm380, %v580, 0
      %606 = vmatprep.subr.bf16.mxu0 %v589
      %607 = vmatpush1.bf16.msra.mxu0 %v586
      %608 = vmatprep.subr.bf16.mxu0 0
      %609 = vmatpush1.bf16.msra.mxu0 0
      %610 = vmatprep.subr.bf16.mxu0 0
      %611 = vmatpush1.bf16.msra.mxu0 0
      %612 = vmatprep.subr.bf16.mxu0 0
      %613 = vmatpush1.bf16.msra.mxu0 0
      %614 = vmatprep.subr.bf16.mxu0 0
      %615 = vmatpush1.bf16.msra.mxu0 0
      %616 = vmatprep.subr.bf16.mxu0 0
      %617 = vmatpush1.bf16.msra.mxu0 0
      %618 = vmatprep.subr.bf16.mxu0 0
      %619 = vmatpush1.bf16.msra.mxu0 0
      %620 = vmatprep.subr.bf16.mxu0 0
      %621 = vmatpush1.bf16.msra.mxu0 0
      %622 = vmatprep.subr.bf16.mxu0 0
      %623 = vmatpush1.bf16.msra.mxu0 0
      %624 = vmatprep.subr.bf16.mxu0 0
      %625 = vmatpush1.bf16.msra.mxu0 0
      %626 = vmatprep.subr.bf16.mxu0 0
      %627 = vmatpush1.bf16.msra.mxu0 0
      %628 = vmatprep.subr.bf16.mxu0 0
      %629 = vmatpush1.bf16.msra.mxu0 0
      %630 = vmatprep.subr.bf16.mxu0 0
      %631 = vmatpush1.bf16.msra.mxu0 0
      %632 = vmatprep.subr.bf16.mxu0 0
      %633 = vmatpush1.bf16.msra.mxu0 0
      %634 = vmatprep.subr.bf16.mxu0 0
      %635 = vmatpush1.bf16.msra.mxu0 0
      %636 = vmatprep.subr.bf16.mxu0 0
      %637 = vmatpush1.bf16.msra.mxu0 0
      %638 = vmatprep.mubr.bf16.mxu0 0
      %639 = vmatmul.mubr.bf16.gmra.mrb[0].mxu0 %v583
      %v640 = vpop.f32.mrb[0].mxu0
      %v641 = vadd.f32 %v437, %v640
      %v642 = vpop.f32.mrb[0].mxu0
      %v643 = vadd.f32 %v439, %v642
      %v644 = vpop.f32.mrb[0].mxu0
      %v645 = vpop.f32.mrb[0].mxu0
      %646 = vdwg.mxu0
      %647 = vmatprep.subr.bf16.mxu0 %v595
      %648 = vmatpush1.bf16.msra.mxu0 %v592
      %649 = vmatprep.subr.bf16.mxu0 0
      %650 = vmatpush1.bf16.msra.mxu0 0
      %651 = vmatprep.subr.bf16.mxu0 0
      %652 = vmatpush1.bf16.msra.mxu0 0
      %653 = vmatprep.subr.bf16.mxu0 0
      %654 = vmatpush1.bf16.msra.mxu0 0
      %655 = vmatprep.subr.bf16.mxu0 0
      %656 = vmatpush1.bf16.msra.mxu0 0
      %657 = vmatprep.subr.bf16.mxu0 0
      %658 = vmatpush1.bf16.msra.mxu0 0
      %659 = vmatprep.subr.bf16.mxu0 0
      %660 = vmatpush1.bf16.msra.mxu0 0
      %661 = vmatprep.subr.bf16.mxu0 0
      %662 = vmatpush1.bf16.msra.mxu0 0
      %663 = vmatprep.subr.bf16.mxu0 0
      %664 = vmatpush1.bf16.msra.mxu0 0
      %665 = vmatprep.subr.bf16.mxu0 0
      %666 = vmatpush1.bf16.msra.mxu0 0
      %667 = vmatprep.subr.bf16.mxu0 0
      %668 = vmatpush1.bf16.msra.mxu0 0
      %669 = vmatprep.subr.bf16.mxu0 0
      %670 = vmatpush1.bf16.msra.mxu0 0
      %671 = vmatprep.subr.bf16.mxu0 0
      %672 = vmatpush1.bf16.msra.mxu0 0
      %673 = vmatprep.subr.bf16.mxu0 0
      %674 = vmatpush1.bf16.msra.mxu0 0
      %675 = vmatprep.subr.bf16.mxu0 0
      %676 = vmatpush1.bf16.msra.mxu0 0
      %677 = vmatprep.subr.bf16.mxu0 0
      %678 = vmatpush1.bf16.msra.mxu0 0
      %679 = vmatprep.mubr.bf16.mxu0 0
      %680 = vmatmul.mubr.bf16.gmra.mrb[0].mxu0 %v583
      %v681 = vpop.f32.mrb[0].mxu0
      %v682 = vadd.f32 %v478, %v681
      %v683 = vpop.f32.mrb[0].mxu0
      %v684 = vadd.f32 %v480, %v683
      %v685 = vpop.f32.mrb[0].mxu0
      %v686 = vpop.f32.mrb[0].mxu0
      %687 = vdwg.mxu0
      %688 = vmatprep.subr.bf16.mxu0 %v601
      %689 = vmatpush1.bf16.msra.mxu0 %v598
      %690 = vmatprep.subr.bf16.mxu0 0
      %691 = vmatpush1.bf16.msra.mxu0 0
      %692 = vmatprep.subr.bf16.mxu0 0
      %693 = vmatpush1.bf16.msra.mxu0 0
      %694 = vmatprep.subr.bf16.mxu0 0
      %695 = vmatpush1.bf16.msra.mxu0 0
      %696 = vmatprep.subr.bf16.mxu0 0
      %697 = vmatpush1.bf16.msra.mxu0 0
      %698 = vmatprep.subr.bf16.mxu0 0
      %699 = vmatpush1.bf16.msra.mxu0 0
      %700 = vmatprep.subr.bf16.mxu0 0
      %701 = vmatpush1.bf16.msra.mxu0 0
      %702 = vmatprep.subr.bf16.mxu0 0
      %703 = vmatpush1.bf16.msra.mxu0 0
      %704 = vmatprep.subr.bf16.mxu0 0
      %705 = vmatpush1.bf16.msra.mxu0 0
      %706 = vmatprep.subr.bf16.mxu0 0
      %707 = vmatpush1.bf16.msra.mxu0 0
      %708 = vmatprep.subr.bf16.mxu0 0
      %709 = vmatpush1.bf16.msra.mxu0 0
      %710 = vmatprep.subr.bf16.mxu0 0
      %711 = vmatpush1.bf16.msra.mxu0 0
      %712 = vmatprep.subr.bf16.mxu0 0
      %713 = vmatpush1.bf16.msra.mxu0 0
      %714 = vmatprep.subr.bf16.mxu0 0
      %715 = vmatpush1.bf16.msra.mxu0 0
      %716 = vmatprep.subr.bf16.mxu0 0
      %717 = vmatpush1.bf16.msra.mxu0 0
      %718 = vmatprep.subr.bf16.mxu0 0
      %719 = vmatpush1.bf16.msra.mxu0 0
      %720 = vmatprep.mubr.bf16.mxu0 0
      %721 = vmatmul.mubr.bf16.gmra.mrb[0].mxu0 %v583
      %v722 = vpop.f32.mrb[0].mxu0
      %v723 = vadd.f32 %v519, %v722
      %v724 = vpop.f32.mrb[0].mxu0
      %v725 = vadd.f32 %v521, %v724
      %v726 = vpop.f32.mrb[0].mxu0
      %v727 = vpop.f32.mrb[0].mxu0
      %728 = vdwg.mxu0
      %729 = vmatprep.subr.bf16.mxu0 0
      %730 = vmatpush1.bf16.msra.mxu0 %v604
      %731 = vmatprep.subr.bf16.mxu0 0
      %732 = vmatpush1.bf16.msra.mxu0 0
      %733 = vmatprep.subr.bf16.mxu0 0
      %734 = vmatpush1.bf16.msra.mxu0 0
      %735 = vmatprep.subr.bf16.mxu0 0
      %736 = vmatpush1.bf16.msra.mxu0 0
      %737 = vmatprep.subr.bf16.mxu0 0
      %738 = vmatpush1.bf16.msra.mxu0 0
      %739 = vmatprep.subr.bf16.mxu0 0
      %740 = vmatpush1.bf16.msra.mxu0 0
      %741 = vmatprep.subr.bf16.mxu0 0
      %742 = vmatpush1.bf16.msra.mxu0 0
      %743 = vmatprep.subr.bf16.mxu0 0
      %744 = vmatpush1.bf16.msra.mxu0 0
      %745 = vmatprep.subr.bf16.mxu0 0
      %746 = vmatpush1.bf16.msra.mxu0 0
      %747 = vmatprep.subr.bf16.mxu0 0
      %748 = vmatpush1.bf16.msra.mxu0 0
      %749 = vmatprep.subr.bf16.mxu0 0
      %750 = vmatpush1.bf16.msra.mxu0 0
      %751 = vmatprep.subr.bf16.mxu0 0
      %752 = vmatpush1.bf16.msra.mxu0 0
      %753 = vmatprep.subr.bf16.mxu0 0
      %754 = vmatpush1.bf16.msra.mxu0 0
      %755 = vmatprep.subr.bf16.mxu0 0
      %756 = vmatpush1.bf16.msra.mxu0 0
      %757 = vmatprep.subr.bf16.mxu0 0
      %758 = vmatpush1.bf16.msra.mxu0 0
      %759 = vmatprep.subr.bf16.mxu0 0
      %760 = vmatpush1.bf16.msra.mxu0 0
      %761 = vmatprep.mubr.bf16.mxu0 0
      %762 = vmatmul.mubr.bf16.gmra.mrb[0].mxu0 %v583
      %v763 = vpop.f32.mrb[0].mxu0
      %v764 = vadd.f32 %v560, %v763
      %v765 = vpop.f32.mrb[0].mxu0
      %v766 = vpop.f32.mrb[0].mxu0
      %v767 = vpop.f32.mrb[0].mxu0
      %768 = vdwg.mxu0
      %v769 = vld [vmem:[%s278] sm:$0xff]
      %v770 = vld [vmem:[%s278 + $0x8] sm:$0xff]
      %s771 = scalar_lea.vmem %s1, 8
      %v772 = vld [vmem:[%s771] sm:$0xf]
      %v775 = vcombine.high %v769, %v769
      %v777 = vunpack.c.l.s4 1983009808
      %v778 = vunpack.c.0.s8 %v777
      %v779 = vlaneseq
      %v780 = vshrl.u32 %v779, 7
      %v781 = vsub.s32 %v778, %v780
      %v782 = vrot.slane %v769, %v781
      %v784 = vunpack.c.l.s4 1983009808
      %v785 = vunpack.c.0.s8 %v784
      %v786 = vlaneseq
      %v787 = vshrl.u32 %v786, 7
      %v788 = vsub.s32 %v785, %v787
      %v789 = vrot.slane %v775, %v788
      %v790 = vcombine.high %v782, %v782
      %v791 = vcombine.high %v789, %v789
      %v792 = vcombine.high %v770, %v770
      %v794 = vunpack.c.l.s4 1983009808
      %v795 = vunpack.c.0.s8 %v794
      %v796 = vlaneseq
      %v797 = vshrl.u32 %v796, 7
      %v798 = vsub.s32 %v795, %v797
      %v799 = vrot.slane %v770, %v798
      %v801 = vunpack.c.l.s4 1983009808
      %v802 = vunpack.c.0.s8 %v801
      %v803 = vlaneseq
      %v804 = vshrl.u32 %v803, 7
      %v805 = vsub.s32 %v802, %v804
      %v806 = vrot.slane %v792, %v805
      %v807 = vcombine.high %v799, %v799
      %v808 = vcombine.high %v806, %v806
      %809 = vrot.lane.b32.xlu0 %v782, 126
      %v810 = vpop.permute.xlu0 %809
      %811 = vrot.lane.b32.xlu0 %v790, 126
      %v812 = vpop.permute.xlu0 %811
      %813 = vrot.lane.b32.xlu0 %v789, 126
      %v814 = vpop.permute.xlu0 %813
      %815 = vrot.lane.b32.xlu0 %v791, 126
      %v816 = vpop.permute.xlu0 %815
      %817 = vrot.lane.b32.xlu0 %v799, 126
      %v818 = vpop.permute.xlu0 %817
      %819 = vrot.lane.b32.xlu0 %v807, 126
      %v820 = vpop.permute.xlu0 %819
      %821 = vrot.lane.b32.xlu0 %v806, 126
      %v822 = vpop.permute.xlu0 %821
      %823 = vrot.lane.b32.xlu0 %v808, 126
      %v824 = vpop.permute.xlu0 %823
      %vm825 = vcmask 1031168
      %v826 = vsel %vm825, %v810, %v812
      %v827 = vsel %vm825, %v812, %v814
      %v828 = vsel %vm825, %v814, %v816
      %v829 = vsel %vm825, %v816, %v818
      %v830 = vsel %vm825, %v818, %v820
      %v831 = vsel %vm825, %v820, %v822
      %v832 = vsel %vm825, %v822, %v824
      %v834 = vsel %vm376, %v772, 0
      %v837 = vsel %vm380, %v826, 0
      %v840 = vsel %vm380, %v827, 0
      %v843 = vsel %vm380, %v828, 0
      %v846 = vsel %vm380, %v829, 0
      %v849 = vsel %vm380, %v830, 0
      %v852 = vsel %vm380, %v831, 0
      %v855 = vsel %vm380, %v832, 0
      %857 = vmatprep.subr.bf16.mxu0 %v840
      %858 = vmatpush1.bf16.msra.mxu0 %v837
      %859 = vmatprep.subr.bf16.mxu0 0
      %860 = vmatpush1.bf16.msra.mxu0 0
      %861 = vmatprep.subr.bf16.mxu0 0
      %862 = vmatpush1.bf16.msra.mxu0 0
      %863 = vmatprep.subr.bf16.mxu0 0
      %864 = vmatpush1.bf16.msra.mxu0 0
      %865 = vmatprep.subr.bf16.mxu0 0
      %866 = vmatpush1.bf16.msra.mxu0 0
      %867 = vmatprep.subr.bf16.mxu0 0
      %868 = vmatpush1.bf16.msra.mxu0 0
      %869 = vmatprep.subr.bf16.mxu0 0
      %870 = vmatpush1.bf16.msra.mxu0 0
      %871 = vmatprep.subr.bf16.mxu0 0
      %872 = vmatpush1.bf16.msra.mxu0 0
      %873 = vmatprep.subr.bf16.mxu0 0
      %874 = vmatpush1.bf16.msra.mxu0 0
      %875 = vmatprep.subr.bf16.mxu0 0
      %876 = vmatpush1.bf16.msra.mxu0 0
      %877 = vmatprep.subr.bf16.mxu0 0
      %878 = vmatpush1.bf16.msra.mxu0 0
      %879 = vmatprep.subr.bf16.mxu0 0
      %880 = vmatpush1.bf16.msra.mxu0 0
      %881 = vmatprep.subr.bf16.mxu0 0
      %882 = vmatpush1.bf16.msra.mxu0 0
      %883 = vmatprep.subr.bf16.mxu0 0
      %884 = vmatpush1.bf16.msra.mxu0 0
      %885 = vmatprep.subr.bf16.mxu0 0
      %886 = vmatpush1.bf16.msra.mxu0 0
      %887 = vmatprep.subr.bf16.mxu0 0
      %888 = vmatpush1.bf16.msra.mxu0 0
      %889 = vmatprep.mubr.bf16.mxu0 0
      %890 = vmatmul.mubr.bf16.gmra.mrb[0].mxu0 %v834
      %v891 = vpop.f32.mrb[0].mxu0
      %v892 = vadd.f32 0.0, %v891
      %v893 = vpop.f32.mrb[0].mxu0
      %v894 = vadd.f32 0.0, %v893
      %v895 = vpop.f32.mrb[0].mxu0
      %v896 = vpop.f32.mrb[0].mxu0
      %897 = vdwg.mxu0
      %898 = vmatprep.subr.bf16.mxu0 %v846
      %899 = vmatpush1.bf16.msra.mxu0 %v843
      %900 = vmatprep.subr.bf16.mxu0 0
      %901 = vmatpush1.bf16.msra.mxu0 0
      %902 = vmatprep.subr.bf16.mxu0 0
      %903 = vmatpush1.bf16.msra.mxu0 0
      %904 = vmatprep.subr.bf16.mxu0 0
      %905 = vmatpush1.bf16.msra.mxu0 0
      %906 = vmatprep.subr.bf16.mxu0 0
      %907 = vmatpush1.bf16.msra.mxu0 0
      %908 = vmatprep.subr.bf16.mxu0 0
      %909 = vmatpush1.bf16.msra.mxu0 0
      %910 = vmatprep.subr.bf16.mxu0 0
      %911 = vmatpush1.bf16.msra.mxu0 0
      %912 = vmatprep.subr.bf16.mxu0 0
      %913 = vmatpush1.bf16.msra.mxu0 0
      %914 = vmatprep.subr.bf16.mxu0 0
      %915 = vmatpush1.bf16.msra.mxu0 0
      %916 = vmatprep.subr.bf16.mxu0 0
      %917 = vmatpush1.bf16.msra.mxu0 0
      %918 = vmatprep.subr.bf16.mxu0 0
      %919 = vmatpush1.bf16.msra.mxu0 0
      %920 = vmatprep.subr.bf16.mxu0 0
      %921 = vmatpush1.bf16.msra.mxu0 0
      %922 = vmatprep.subr.bf16.mxu0 0
      %923 = vmatpush1.bf16.msra.mxu0 0
      %924 = vmatprep.subr.bf16.mxu0 0
      %925 = vmatpush1.bf16.msra.mxu0 0
      %926 = vmatprep.subr.bf16.mxu0 0
      %927 = vmatpush1.bf16.msra.mxu0 0
      %928 = vmatprep.subr.bf16.mxu0 0
      %929 = vmatpush1.bf16.msra.mxu0 0
      %930 = vmatprep.mubr.bf16.mxu0 0
      %931 = vmatmul.mubr.bf16.gmra.mrb[0].mxu0 %v834
      %v932 = vpop.f32.mrb[0].mxu0
      %v933 = vadd.f32 0.0, %v932
      %v934 = vpop.f32.mrb[0].mxu0
      %v935 = vadd.f32 0.0, %v934
      %v936 = vpop.f32.mrb[0].mxu0
      %v937 = vpop.f32.mrb[0].mxu0
      %938 = vdwg.mxu0
      %939 = vmatprep.subr.bf16.mxu0 %v852
      %940 = vmatpush1.bf16.msra.mxu0 %v849
      %941 = vmatprep.subr.bf16.mxu0 0
      %942 = vmatpush1.bf16.msra.mxu0 0
      %943 = vmatprep.subr.bf16.mxu0 0
      %944 = vmatpush1.bf16.msra.mxu0 0
      %945 = vmatprep.subr.bf16.mxu0 0
      %946 = vmatpush1.bf16.msra.mxu0 0
      %947 = vmatprep.subr.bf16.mxu0 0
      %948 = vmatpush1.bf16.msra.mxu0 0
      %949 = vmatprep.subr.bf16.mxu0 0
      %950 = vmatpush1.bf16.msra.mxu0 0
      %951 = vmatprep.subr.bf16.mxu0 0
      %952 = vmatpush1.bf16.msra.mxu0 0
      %953 = vmatprep.subr.bf16.mxu0 0
      %954 = vmatpush1.bf16.msra.mxu0 0
      %955 = vmatprep.subr.bf16.mxu0 0
      %956 = vmatpush1.bf16.msra.mxu0 0
      %957 = vmatprep.subr.bf16.mxu0 0
      %958 = vmatpush1.bf16.msra.mxu0 0
      %959 = vmatprep.subr.bf16.mxu0 0
      %960 = vmatpush1.bf16.msra.mxu0 0
      %961 = vmatprep.subr.bf16.mxu0 0
      %962 = vmatpush1.bf16.msra.mxu0 0
      %963 = vmatprep.subr.bf16.mxu0 0
      %964 = vmatpush1.bf16.msra.mxu0 0
      %965 = vmatprep.subr.bf16.mxu0 0
      %966 = vmatpush1.bf16.msra.mxu0 0
      %967 = vmatprep.subr.bf16.mxu0 0
      %968 = vmatpush1.bf16.msra.mxu0 0
      %969 = vmatprep.subr.bf16.mxu0 0
      %970 = vmatpush1.bf16.msra.mxu0 0
      %971 = vmatprep.mubr.bf16.mxu0 0
      %972 = vmatmul.mubr.bf16.gmra.mrb[0].mxu0 %v834
      %v973 = vpop.f32.mrb[0].mxu0
      %v974 = vadd.f32 0.0, %v973
      %v975 = vpop.f32.mrb[0].mxu0
      %v976 = vadd.f32 0.0, %v975
      %v977 = vpop.f32.mrb[0].mxu0
      %v978 = vpop.f32.mrb[0].mxu0
      %979 = vdwg.mxu0
      %980 = vmatprep.subr.bf16.mxu0 0
      %981 = vmatpush1.bf16.msra.mxu0 %v855
      %982 = vmatprep.subr.bf16.mxu0 0
      %983 = vmatpush1.bf16.msra.mxu0 0
      %984 = vmatprep.subr.bf16.mxu0 0
      %985 = vmatpush1.bf16.msra.mxu0 0
      %986 = vmatprep.subr.bf16.mxu0 0
      %987 = vmatpush1.bf16.msra.mxu0 0
      %988 = vmatprep.subr.bf16.mxu0 0
      %989 = vmatpush1.bf16.msra.mxu0 0
      %990 = vmatprep.subr.bf16.mxu0 0
      %991 = vmatpush1.bf16.msra.mxu0 0
      %992 = vmatprep.subr.bf16.mxu0 0
      %993 = vmatpush1.bf16.msra.mxu0 0
      %994 = vmatprep.subr.bf16.mxu0 0
      %995 = vmatpush1.bf16.msra.mxu0 0
      %996 = vmatprep.subr.bf16.mxu0 0
      %997 = vmatpush1.bf16.msra.mxu0 0
      %998 = vmatprep.subr.bf16.mxu0 0
      %999 = vmatpush1.bf16.msra.mxu0 0
      %1000 = vmatprep.subr.bf16.mxu0 0
      %1001 = vmatpush1.bf16.msra.mxu0 0
      %1002 = vmatprep.subr.bf16.mxu0 0
      %1003 = vmatpush1.bf16.msra.mxu0 0
      %1004 = vmatprep.subr.bf16.mxu0 0
      %1005 = vmatpush1.bf16.msra.mxu0 0
      %1006 = vmatprep.subr.bf16.mxu0 0
      %1007 = vmatpush1.bf16.msra.mxu0 0
      %1008 = vmatprep.subr.bf16.mxu0 0
      %1009 = vmatpush1.bf16.msra.mxu0 0
      %1010 = vmatprep.subr.bf16.mxu0 0
      %1011 = vmatpush1.bf16.msra.mxu0 0
      %1012 = vmatprep.mubr.bf16.mxu0 0
      %1013 = vmatmul.mubr.bf16.gmra.mrb[0].mxu0 %v834
      %v1014 = vpop.f32.mrb[0].mxu0
      %v1015 = vadd.f32 0.0, %v1014
      %v1016 = vpop.f32.mrb[0].mxu0
      %v1017 = vpop.f32.mrb[0].mxu0
      %v1018 = vpop.f32.mrb[0].mxu0
      %1019 = vdwg.mxu0
      %v1020 = vadd.f32 %v641, %v892
      %v1021 = vadd.f32 %v643, %v894
      %v1022 = vadd.f32 %v682, %v933
      %v1023 = vadd.f32 %v684, %v935
      %v1024 = vadd.f32 %v723, %v974
      %v1025 = vadd.f32 %v725, %v976
      %v1026 = vadd.f32 %v764, %v1015
      %v1027 = vld [vmem:[%s278] sm:$0xff]
      %v1028 = vld [vmem:[%s278 + $0x8] sm:$0xff]
      %s1029 = scalar_lea.vmem %s1, 12
      %v1030 = vld [vmem:[%s1029] sm:$0xf]
      %v1033 = vcombine.high %v1027, %v1027
      %v1035 = vunpack.c.l.s4 1983009808
      %v1036 = vunpack.c.0.s8 %v1035
      %v1037 = vlaneseq
      %v1038 = vshrl.u32 %v1037, 7
      %v1039 = vsub.s32 %v1036, %v1038
      %v1040 = vrot.slane %v1027, %v1039
      %v1042 = vunpack.c.l.s4 1983009808
      %v1043 = vunpack.c.0.s8 %v1042
      %v1044 = vlaneseq
      %v1045 = vshrl.u32 %v1044, 7
      %v1046 = vsub.s32 %v1043, %v1045
      %v1047 = vrot.slane %v1033, %v1046
      %v1048 = vcombine.high %v1040, %v1040
      %v1049 = vcombine.high %v1047, %v1047
      %v1050 = vcombine.high %v1028, %v1028
      %v1052 = vunpack.c.l.s4 1983009808
      %v1053 = vunpack.c.0.s8 %v1052
      %v1054 = vlaneseq
      %v1055 = vshrl.u32 %v1054, 7
      %v1056 = vsub.s32 %v1053, %v1055
      %v1057 = vrot.slane %v1028, %v1056
      %v1059 = vunpack.c.l.s4 1983009808
      %v1060 = vunpack.c.0.s8 %v1059
      %v1061 = vlaneseq
      %v1062 = vshrl.u32 %v1061, 7
      %v1063 = vsub.s32 %v1060, %v1062
      %v1064 = vrot.slane %v1050, %v1063
      %v1065 = vcombine.high %v1057, %v1057
      %v1066 = vcombine.high %v1064, %v1064
      %1067 = vrot.lane.b32.xlu0 %v1040, 118
      %v1068 = vpop.permute.xlu0 %1067
      %1069 = vrot.lane.b32.xlu0 %v1048, 118
      %v1070 = vpop.permute.xlu0 %1069
      %1071 = vrot.lane.b32.xlu0 %v1047, 118
      %v1072 = vpop.permute.xlu0 %1071
      %1073 = vrot.lane.b32.xlu0 %v1049, 118
      %v1074 = vpop.permute.xlu0 %1073
      %1075 = vrot.lane.b32.xlu0 %v1057, 118
      %v1076 = vpop.permute.xlu0 %1075
      %1077 = vrot.lane.b32.xlu0 %v1065, 118
      %v1078 = vpop.permute.xlu0 %1077
      %1079 = vrot.lane.b32.xlu0 %v1064, 118
      %v1080 = vpop.permute.xlu0 %1079
      %1081 = vrot.lane.b32.xlu0 %v1066, 118
      %v1082 = vpop.permute.xlu0 %1081
      %vm1083 = vcmask 965632
      %v1084 = vsel %vm1083, %v1068, %v1070
      %v1085 = vsel %vm1083, %v1070, %v1072
      %v1086 = vsel %vm1083, %v1072, %v1074
      %v1087 = vsel %vm1083, %v1074, %v1076
      %v1088 = vsel %vm1083, %v1076, %v1078
      %v1089 = vsel %vm1083, %v1078, %v1080
      %v1090 = vsel %vm1083, %v1080, %v1082
      %v1092 = vsel %vm376, %v1030, 0
      %v1095 = vsel %vm380, %v1084, 0
      %v1098 = vsel %vm380, %v1085, 0
      %v1101 = vsel %vm380, %v1086, 0
      %v1104 = vsel %vm380, %v1087, 0
      %v1107 = vsel %vm380, %v1088, 0
      %v1110 = vsel %vm380, %v1089, 0
      %v1113 = vsel %vm380, %v1090, 0
      %1115 = vmatprep.subr.bf16.mxu0 %v1098
      %1116 = vmatpush1.bf16.msra.mxu0 %v1095
      %1117 = vmatprep.subr.bf16.mxu0 0
      %1118 = vmatpush1.bf16.msra.mxu0 0
      %1119 = vmatprep.subr.bf16.mxu0 0
      %1120 = vmatpush1.bf16.msra.mxu0 0
      %1121 = vmatprep.subr.bf16.mxu0 0
      %1122 = vmatpush1.bf16.msra.mxu0 0
      %1123 = vmatprep.subr.bf16.mxu0 0
      %1124 = vmatpush1.bf16.msra.mxu0 0
      %1125 = vmatprep.subr.bf16.mxu0 0
      %1126 = vmatpush1.bf16.msra.mxu0 0
      %1127 = vmatprep.subr.bf16.mxu0 0
      %1128 = vmatpush1.bf16.msra.mxu0 0
      %1129 = vmatprep.subr.bf16.mxu0 0
      %1130 = vmatpush1.bf16.msra.mxu0 0
      %1131 = vmatprep.subr.bf16.mxu0 0
      %1132 = vmatpush1.bf16.msra.mxu0 0
      %1133 = vmatprep.subr.bf16.mxu0 0
      %1134 = vmatpush1.bf16.msra.mxu0 0
      %1135 = vmatprep.subr.bf16.mxu0 0
      %1136 = vmatpush1.bf16.msra.mxu0 0
      %1137 = vmatprep.subr.bf16.mxu0 0
      %1138 = vmatpush1.bf16.msra.mxu0 0
      %1139 = vmatprep.subr.bf16.mxu0 0
      %1140 = vmatpush1.bf16.msra.mxu0 0
      %1141 = vmatprep.subr.bf16.mxu0 0
      %1142 = vmatpush1.bf16.msra.mxu0 0
      %1143 = vmatprep.subr.bf16.mxu0 0
      %1144 = vmatpush1.bf16.msra.mxu0 0
      %1145 = vmatprep.subr.bf16.mxu0 0
      %1146 = vmatpush1.bf16.msra.mxu0 0
      %1147 = vmatprep.mubr.bf16.mxu0 0
      %1148 = vmatmul.mubr.bf16.gmra.mrb[0].mxu0 %v1092
      %v1149 = vpop.f32.mrb[0].mxu0
      %v1150 = vadd.f32 0.0, %v1149
      %v1151 = vpop.f32.mrb[0].mxu0
      %v1152 = vadd.f32 0.0, %v1151
      %v1153 = vpop.f32.mrb[0].mxu0
      %v1154 = vpop.f32.mrb[0].mxu0
      %1155 = vdwg.mxu0
      %1156 = vmatprep.subr.bf16.mxu0 %v1104
      %1157 = vmatpush1.bf16.msra.mxu0 %v1101
      %1158 = vmatprep.subr.bf16.mxu0 0
      %1159 = vmatpush1.bf16.msra.mxu0 0
      %1160 = vmatprep.subr.bf16.mxu0 0
      %1161 = vmatpush1.bf16.msra.mxu0 0
      %1162 = vmatprep.subr.bf16.mxu0 0
      %1163 = vmatpush1.bf16.msra.mxu0 0
      %1164 = vmatprep.subr.bf16.mxu0 0
      %1165 = vmatpush1.bf16.msra.mxu0 0
      %1166 = vmatprep.subr.bf16.mxu0 0
      %1167 = vmatpush1.bf16.msra.mxu0 0
      %1168 = vmatprep.subr.bf16.mxu0 0
      %1169 = vmatpush1.bf16.msra.mxu0 0
      %1170 = vmatprep.subr.bf16.mxu0 0
      %1171 = vmatpush1.bf16.msra.mxu0 0
      %1172 = vmatprep.subr.bf16.mxu0 0
      %1173 = vmatpush1.bf16.msra.mxu0 0
      %1174 = vmatprep.subr.bf16.mxu0 0
      %1175 = vmatpush1.bf16.msra.mxu0 0
      %1176 = vmatprep.subr.bf16.mxu0 0
      %1177 = vmatpush1.bf16.msra.mxu0 0
      %1178 = vmatprep.subr.bf16.mxu0 0
      %1179 = vmatpush1.bf16.msra.mxu0 0
      %1180 = vmatprep.subr.bf16.mxu0 0
      %1181 = vmatpush1.bf16.msra.mxu0 0
      %1182 = vmatprep.subr.bf16.mxu0 0
      %1183 = vmatpush1.bf16.msra.mxu0 0
      %1184 = vmatprep.subr.bf16.mxu0 0
      %1185 = vmatpush1.bf16.msra.mxu0 0
      %1186 = vmatprep.subr.bf16.mxu0 0
      %1187 = vmatpush1.bf16.msra.mxu0 0
      %1188 = vmatprep.mubr.bf16.mxu0 0
      %1189 = vmatmul.mubr.bf16.gmra.mrb[0].mxu0 %v1092
      %v1190 = vpop.f32.mrb[0].mxu0
      %v1191 = vadd.f32 0.0, %v1190
      %v1192 = vpop.f32.mrb[0].mxu0
      %v1193 = vadd.f32 0.0, %v1192
      %v1194 = vpop.f32.mrb[0].mxu0
      %v1195 = vpop.f32.mrb[0].mxu0
      %1196 = vdwg.mxu0
      %1197 = vmatprep.subr.bf16.mxu0 %v1110
      %1198 = vmatpush1.bf16.msra.mxu0 %v1107
      %1199 = vmatprep.subr.bf16.mxu0 0
      %1200 = vmatpush1.bf16.msra.mxu0 0
      %1201 = vmatprep.subr.bf16.mxu0 0
      %1202 = vmatpush1.bf16.msra.mxu0 0
      %1203 = vmatprep.subr.bf16.mxu0 0
      %1204 = vmatpush1.bf16.msra.mxu0 0
      %1205 = vmatprep.subr.bf16.mxu0 0
      %1206 = vmatpush1.bf16.msra.mxu0 0
      %1207 = vmatprep.subr.bf16.mxu0 0
      %1208 = vmatpush1.bf16.msra.mxu0 0
      %1209 = vmatprep.subr.bf16.mxu0 0
      %1210 = vmatpush1.bf16.msra.mxu0 0
      %1211 = vmatprep.subr.bf16.mxu0 0
      %1212 = vmatpush1.bf16.msra.mxu0 0
      %1213 = vmatprep.subr.bf16.mxu0 0
      %1214 = vmatpush1.bf16.msra.mxu0 0
      %1215 = vmatprep.subr.bf16.mxu0 0
      %1216 = vmatpush1.bf16.msra.mxu0 0
      %1217 = vmatprep.subr.bf16.mxu0 0
      %1218 = vmatpush1.bf16.msra.mxu0 0
      %1219 = vmatprep.subr.bf16.mxu0 0
      %1220 = vmatpush1.bf16.msra.mxu0 0
      %1221 = vmatprep.subr.bf16.mxu0 0
      %1222 = vmatpush1.bf16.msra.mxu0 0
      %1223 = vmatprep.subr.bf16.mxu0 0
      %1224 = vmatpush1.bf16.msra.mxu0 0
      %1225 = vmatprep.subr.bf16.mxu0 0
      %1226 = vmatpush1.bf16.msra.mxu0 0
      %1227 = vmatprep.subr.bf16.mxu0 0
      %1228 = vmatpush1.bf16.msra.mxu0 0
      %1229 = vmatprep.mubr.bf16.mxu0 0
      %1230 = vmatmul.mubr.bf16.gmra.mrb[0].mxu0 %v1092
      %v1231 = vpop.f32.mrb[0].mxu0
      %v1232 = vadd.f32 0.0, %v1231
      %v1233 = vpop.f32.mrb[0].mxu0
      %v1234 = vadd.f32 0.0, %v1233
      %v1235 = vpop.f32.mrb[0].mxu0
      %v1236 = vpop.f32.mrb[0].mxu0
      %1237 = vdwg.mxu0
      %1238 = vmatprep.subr.bf16.mxu0 0
      %1239 = vmatpush1.bf16.msra.mxu0 %v1113
      %1240 = vmatprep.subr.bf16.mxu0 0
      %1241 = vmatpush1.bf16.msra.mxu0 0
      %1242 = vmatprep.subr.bf16.mxu0 0
      %1243 = vmatpush1.bf16.msra.mxu0 0
      %1244 = vmatprep.subr.bf16.mxu0 0
      %1245 = vmatpush1.bf16.msra.mxu0 0
      %1246 = vmatprep.subr.bf16.mxu0 0
      %1247 = vmatpush1.bf16.msra.mxu0 0
      %1248 = vmatprep.subr.bf16.mxu0 0
      %1249 = vmatpush1.bf16.msra.mxu0 0
      %1250 = vmatprep.subr.bf16.mxu0 0
      %1251 = vmatpush1.bf16.msra.mxu0 0
      %1252 = vmatprep.subr.bf16.mxu0 0
      %1253 = vmatpush1.bf16.msra.mxu0 0
      %1254 = vmatprep.subr.bf16.mxu0 0
      %1255 = vmatpush1.bf16.msra.mxu0 0
      %1256 = vmatprep.subr.bf16.mxu0 0
      %1257 = vmatpush1.bf16.msra.mxu0 0
      %1258 = vmatprep.subr.bf16.mxu0 0
      %1259 = vmatpush1.bf16.msra.mxu0 0
      %1260 = vmatprep.subr.bf16.mxu0 0
      %1261 = vmatpush1.bf16.msra.mxu0 0
      %1262 = vmatprep.subr.bf16.mxu0 0
      %1263 = vmatpush1.bf16.msra.mxu0 0
      %1264 = vmatprep.subr.bf16.mxu0 0
      %1265 = vmatpush1.bf16.msra.mxu0 0
      %1266 = vmatprep.subr.bf16.mxu0 0
      %1267 = vmatpush1.bf16.msra.mxu0 0
      %1268 = vmatprep.subr.bf16.mxu0 0
      %1269 = vmatpush1.bf16.msra.mxu0 0
      %1270 = vmatprep.mubr.bf16.mxu0 0
      %1271 = vmatmul.mubr.bf16.gmra.mrb[0].mxu0 %v1092
      %v1272 = vpop.f32.mrb[0].mxu0
      %v1273 = vadd.f32 0.0, %v1272
      %v1274 = vpop.f32.mrb[0].mxu0
      %v1275 = vpop.f32.mrb[0].mxu0
      %v1276 = vpop.f32.mrb[0].mxu0
      %1277 = vdwg.mxu0
      %v1278 = vadd.f32 %v1020, %v1150
      %v1279 = vadd.f32 %v1021, %v1152
      %v1280 = vadd.f32 %v1022, %v1191
      %v1281 = vadd.f32 %v1023, %v1193
      %v1282 = vadd.f32 %v1024, %v1232
      %v1283 = vadd.f32 %v1025, %v1234
      %v1284 = vadd.f32 %v1026, %v1273
      %v1285 = vld [vmem:[%s278] sm:$0xff]
      %v1286 = vld [vmem:[%s278 + $0x8] sm:$0xff]
      %s1287 = scalar_lea.vmem %s1, 16
      %v1288 = vld [vmem:[%s1287] sm:$0xf]
      %v1291 = vcombine.high %v1285, %v1285
      %v1293 = vunpack.c.l.s4 1983009808
      %v1294 = vunpack.c.0.s8 %v1293
      %v1295 = vlaneseq
      %v1296 = vshrl.u32 %v1295, 7
      %v1297 = vsub.s32 %v1294, %v1296
      %v1298 = vrot.slane %v1285, %v1297
      %v1300 = vunpack.c.l.s4 1983009808
      %v1301 = vunpack.c.0.s8 %v1300
      %v1302 = vlaneseq
      %v1303 = vshrl.u32 %v1302, 7
      %v1304 = vsub.s32 %v1301, %v1303
      %v1305 = vrot.slane %v1291, %v1304
      %v1306 = vcombine.high %v1298, %v1298
      %v1307 = vcombine.high %v1305, %v1305
      %v1308 = vcombine.high %v1286, %v1286
      %v1310 = vunpack.c.l.s4 1983009808
      %v1311 = vunpack.c.0.s8 %v1310
      %v1312 = vlaneseq
      %v1313 = vshrl.u32 %v1312, 7
      %v1314 = vsub.s32 %v1311, %v1313
      %v1315 = vrot.slane %v1286, %v1314
      %v1317 = vunpack.c.l.s4 1983009808
      %v1318 = vunpack.c.0.s8 %v1317
      %v1319 = vlaneseq
      %v1320 = vshrl.u32 %v1319, 7
      %v1321 = vsub.s32 %v1318, %v1320
      %v1322 = vrot.slane %v1308, %v1321
      %v1323 = vcombine.high %v1315, %v1315
      %v1324 = vcombine.high %v1322, %v1322
      %1325 = vrot.lane.b32.xlu0 %v1298, 117
      %v1326 = vpop.permute.xlu0 %1325
      %1327 = vrot.lane.b32.xlu0 %v1306, 117
      %v1328 = vpop.permute.xlu0 %1327
      %1329 = vrot.lane.b32.xlu0 %v1305, 117
      %v1330 = vpop.permute.xlu0 %1329
      %1331 = vrot.lane.b32.xlu0 %v1307, 117
      %v1332 = vpop.permute.xlu0 %1331
      %1333 = vrot.lane.b32.xlu0 %v1315, 117
      %v1334 = vpop.permute.xlu0 %1333
      %1335 = vrot.lane.b32.xlu0 %v1323, 117
      %v1336 = vpop.permute.xlu0 %1335
      %1337 = vrot.lane.b32.xlu0 %v1322, 117
      %v1338 = vpop.permute.xlu0 %1337
      %1339 = vrot.lane.b32.xlu0 %v1324, 117
      %v1340 = vpop.permute.xlu0 %1339
      %vm1341 = vcmask 957440
      %v1342 = vsel %vm1341, %v1326, %v1328
      %v1343 = vsel %vm1341, %v1328, %v1330
      %v1344 = vsel %vm1341, %v1330, %v1332
      %v1345 = vsel %vm1341, %v1332, %v1334
      %v1346 = vsel %vm1341, %v1334, %v1336
      %v1347 = vsel %vm1341, %v1336, %v1338
      %v1348 = vsel %vm1341, %v1338, %v1340
      %v1350 = vsel %vm376, %v1288, 0
      %v1353 = vsel %vm380, %v1342, 0
      %v1356 = vsel %vm380, %v1343, 0
      %v1359 = vsel %vm380, %v1344, 0
      %v1362 = vsel %vm380, %v1345, 0
      %v1365 = vsel %vm380, %v1346, 0
      %v1368 = vsel %vm380, %v1347, 0
      %v1371 = vsel %vm380, %v1348, 0
      %1373 = vmatprep.subr.bf16.mxu0 %v1356
      %1374 = vmatpush1.bf16.msra.mxu0 %v1353
      %1375 = vmatprep.subr.bf16.mxu0 0
      %1376 = vmatpush1.bf16.msra.mxu0 0
      %1377 = vmatprep.subr.bf16.mxu0 0
      %1378 = vmatpush1.bf16.msra.mxu0 0
      %1379 = vmatprep.subr.bf16.mxu0 0
      %1380 = vmatpush1.bf16.msra.mxu0 0
      %1381 = vmatprep.subr.bf16.mxu0 0
      %1382 = vmatpush1.bf16.msra.mxu0 0
      %1383 = vmatprep.subr.bf16.mxu0 0
      %1384 = vmatpush1.bf16.msra.mxu0 0
      %1385 = vmatprep.subr.bf16.mxu0 0
      %1386 = vmatpush1.bf16.msra.mxu0 0
      %1387 = vmatprep.subr.bf16.mxu0 0
      %1388 = vmatpush1.bf16.msra.mxu0 0
      %1389 = vmatprep.subr.bf16.mxu0 0
      %1390 = vmatpush1.bf16.msra.mxu0 0
      %1391 = vmatprep.subr.bf16.mxu0 0
      %1392 = vmatpush1.bf16.msra.mxu0 0
      %1393 = vmatprep.subr.bf16.mxu0 0
      %1394 = vmatpush1.bf16.msra.mxu0 0
      %1395 = vmatprep.subr.bf16.mxu0 0
      %1396 = vmatpush1.bf16.msra.mxu0 0
      %1397 = vmatprep.subr.bf16.mxu0 0
      %1398 = vmatpush1.bf16.msra.mxu0 0
      %1399 = vmatprep.subr.bf16.mxu0 0
      %1400 = vmatpush1.bf16.msra.mxu0 0
      %1401 = vmatprep.subr.bf16.mxu0 0
      %1402 = vmatpush1.bf16.msra.mxu0 0
      %1403 = vmatprep.subr.bf16.mxu0 0
      %1404 = vmatpush1.bf16.msra.mxu0 0
      %1405 = vmatprep.mubr.bf16.mxu0 0
      %1406 = vmatmul.mubr.bf16.gmra.mrb[0].mxu0 %v1350
      %v1407 = vpop.f32.mrb[0].mxu0
      %v1408 = vadd.f32 0.0, %v1407
      %v1409 = vpop.f32.mrb[0].mxu0
      %v1410 = vadd.f32 0.0, %v1409
      %v1411 = vpop.f32.mrb[0].mxu0
      %v1412 = vpop.f32.mrb[0].mxu0
      %1413 = vdwg.mxu0
      %1414 = vmatprep.subr.bf16.mxu0 %v1362
      %1415 = vmatpush1.bf16.msra.mxu0 %v1359
      %1416 = vmatprep.subr.bf16.mxu0 0
      %1417 = vmatpush1.bf16.msra.mxu0 0
      %1418 = vmatprep.subr.bf16.mxu0 0
      %1419 = vmatpush1.bf16.msra.mxu0 0
      %1420 = vmatprep.subr.bf16.mxu0 0
      %1421 = vmatpush1.bf16.msra.mxu0 0
      %1422 = vmatprep.subr.bf16.mxu0 0
      %1423 = vmatpush1.bf16.msra.mxu0 0
      %1424 = vmatprep.subr.bf16.mxu0 0
      %1425 = vmatpush1.bf16.msra.mxu0 0
      %1426 = vmatprep.subr.bf16.mxu0 0
      %1427 = vmatpush1.bf16.msra.mxu0 0
      %1428 = vmatprep.subr.bf16.mxu0 0
      %1429 = vmatpush1.bf16.msra.mxu0 0
      %1430 = vmatprep.subr.bf16.mxu0 0
      %1431 = vmatpush1.bf16.msra.mxu0 0
      %1432 = vmatprep.subr.bf16.mxu0 0
      %1433 = vmatpush1.bf16.msra.mxu0 0
      %1434 = vmatprep.subr.bf16.mxu0 0
      %1435 = vmatpush1.bf16.msra.mxu0 0
      %1436 = vmatprep.subr.bf16.mxu0 0
      %1437 = vmatpush1.bf16.msra.mxu0 0
      %1438 = vmatprep.subr.bf16.mxu0 0
      %1439 = vmatpush1.bf16.msra.mxu0 0
      %1440 = vmatprep.subr.bf16.mxu0 0
      %1441 = vmatpush1.bf16.msra.mxu0 0
      %1442 = vmatprep.subr.bf16.mxu0 0
      %1443 = vmatpush1.bf16.msra.mxu0 0
      %1444 = vmatprep.subr.bf16.mxu0 0
      %1445 = vmatpush1.bf16.msra.mxu0 0
      %1446 = vmatprep.mubr.bf16.mxu0 0
      %1447 = vmatmul.mubr.bf16.gmra.mrb[0].mxu0 %v1350
      %v1448 = vpop.f32.mrb[0].mxu0
      %v1449 = vadd.f32 0.0, %v1448
      %v1450 = vpop.f32.mrb[0].mxu0
      %v1451 = vadd.f32 0.0, %v1450
      %v1452 = vpop.f32.mrb[0].mxu0
      %v1453 = vpop.f32.mrb[0].mxu0
      %1454 = vdwg.mxu0
      %1455 = vmatprep.subr.bf16.mxu0 %v1368
      %1456 = vmatpush1.bf16.msra.mxu0 %v1365
      %1457 = vmatprep.subr.bf16.mxu0 0
      %1458 = vmatpush1.bf16.msra.mxu0 0
      %1459 = vmatprep.subr.bf16.mxu0 0
      %1460 = vmatpush1.bf16.msra.mxu0 0
      %1461 = vmatprep.subr.bf16.mxu0 0
      %1462 = vmatpush1.bf16.msra.mxu0 0
      %1463 = vmatprep.subr.bf16.mxu0 0
      %1464 = vmatpush1.bf16.msra.mxu0 0
      %1465 = vmatprep.subr.bf16.mxu0 0
      %1466 = vmatpush1.bf16.msra.mxu0 0
      %1467 = vmatprep.subr.bf16.mxu0 0
      %1468 = vmatpush1.bf16.msra.mxu0 0
      %1469 = vmatprep.subr.bf16.mxu0 0
      %1470 = vmatpush1.bf16.msra.mxu0 0
      %1471 = vmatprep.subr.bf16.mxu0 0
      %1472 = vmatpush1.bf16.msra.mxu0 0
      %1473 = vmatprep.subr.bf16.mxu0 0
      %1474 = vmatpush1.bf16.msra.mxu0 0
      %1475 = vmatprep.subr.bf16.mxu0 0
      %1476 = vmatpush1.bf16.msra.mxu0 0
      %1477 = vmatprep.subr.bf16.mxu0 0
      %1478 = vmatpush1.bf16.msra.mxu0 0
      %1479 = vmatprep.subr.bf16.mxu0 0
      %1480 = vmatpush1.bf16.msra.mxu0 0
      %1481 = vmatprep.subr.bf16.mxu0 0
      %1482 = vmatpush1.bf16.msra.mxu0 0
      %1483 = vmatprep.subr.bf16.mxu0 0
      %1484 = vmatpush1.bf16.msra.mxu0 0
      %1485 = vmatprep.subr.bf16.mxu0 0
      %1486 = vmatpush1.bf16.msra.mxu0 0
      %1487 = vmatprep.mubr.bf16.mxu0 0
      %1488 = vmatmul.mubr.bf16.gmra.mrb[0].mxu0 %v1350
      %v1489 = vpop.f32.mrb[0].mxu0
      %v1490 = vadd.f32 0.0, %v1489
      %v1491 = vpop.f32.mrb[0].mxu0
      %v1492 = vadd.f32 0.0, %v1491
      %v1493 = vpop.f32.mrb[0].mxu0
      %v1494 = vpop.f32.mrb[0].mxu0
      %1495 = vdwg.mxu0
      %1496 = vmatprep.subr.bf16.mxu0 0
      %1497 = vmatpush1.bf16.msra.mxu0 %v1371
      %1498 = vmatprep.subr.bf16.mxu0 0
      %1499 = vmatpush1.bf16.msra.mxu0 0
      %1500 = vmatprep.subr.bf16.mxu0 0
      %1501 = vmatpush1.bf16.msra.mxu0 0
      %1502 = vmatprep.subr.bf16.mxu0 0
      %1503 = vmatpush1.bf16.msra.mxu0 0
      %1504 = vmatprep.subr.bf16.mxu0 0
      %1505 = vmatpush1.bf16.msra.mxu0 0
      %1506 = vmatprep.subr.bf16.mxu0 0
      %1507 = vmatpush1.bf16.msra.mxu0 0
      %1508 = vmatprep.subr.bf16.mxu0 0
      %1509 = vmatpush1.bf16.msra.mxu0 0
      %1510 = vmatprep.subr.bf16.mxu0 0
      %1511 = vmatpush1.bf16.msra.mxu0 0
      %1512 = vmatprep.subr.bf16.mxu0 0
      %1513 = vmatpush1.bf16.msra.mxu0 0
      %1514 = vmatprep.subr.bf16.mxu0 0
      %1515 = vmatpush1.bf16.msra.mxu0 0
      %1516 = vmatprep.subr.bf16.mxu0 0
      %1517 = vmatpush1.bf16.msra.mxu0 0
      %1518 = vmatprep.subr.bf16.mxu0 0
      %1519 = vmatpush1.bf16.msra.mxu0 0
      %1520 = vmatprep.subr.bf16.mxu0 0
      %1521 = vmatpush1.bf16.msra.mxu0 0
      %1522 = vmatprep.subr.bf16.mxu0 0
      %1523 = vmatpush1.bf16.msra.mxu0 0
      %1524 = vmatprep.subr.bf16.mxu0 0
      %1525 = vmatpush1.bf16.msra.mxu0 0
      %1526 = vmatprep.subr.bf16.mxu0 0
      %1527 = vmatpush1.bf16.msra.mxu0 0
      %1528 = vmatprep.mubr.bf16.mxu0 0
      %1529 = vmatmul.mubr.bf16.gmra.mrb[0].mxu0 %v1350
      %v1530 = vpop.f32.mrb[0].mxu0
      %v1531 = vadd.f32 0.0, %v1530
      %v1532 = vpop.f32.mrb[0].mxu0
      %v1533 = vpop.f32.mrb[0].mxu0
      %v1534 = vpop.f32.mrb[0].mxu0
      %1535 = vdwg.mxu0
      %v1536 = vadd.f32 %v1278, %v1408
      %v1537 = vadd.f32 %v1279, %v1410
      %v1538 = vadd.f32 %v1280, %v1449
      %v1539 = vadd.f32 %v1281, %v1451
      %v1540 = vadd.f32 %v1282, %v1490
      %v1541 = vadd.f32 %v1283, %v1492
      %v1542 = vadd.f32 %v1284, %v1531
      %v1543 = vld [vmem:[%s278] sm:$0xff]
      %v1544 = vld [vmem:[%s278 + $0x8] sm:$0xff]
      %s1545 = scalar_lea.vmem %s1, 20
      %v1546 = vld [vmem:[%s1545] sm:$0xf]
      %v1549 = vcombine.high %v1543, %v1543
      %v1551 = vunpack.c.l.s4 1983009808
      %v1552 = vunpack.c.0.s8 %v1551
      %v1553 = vlaneseq
      %v1554 = vshrl.u32 %v1553, 7
      %v1555 = vsub.s32 %v1552, %v1554
      %v1556 = vrot.slane %v1543, %v1555
      %v1558 = vunpack.c.l.s4 1983009808
      %v1559 = vunpack.c.0.s8 %v1558
      %v1560 = vlaneseq
      %v1561 = vshrl.u32 %v1560, 7
      %v1562 = vsub.s32 %v1559, %v1561
      %v1563 = vrot.slane %v1549, %v1562
      %v1564 = vcombine.high %v1556, %v1556
      %v1565 = vcombine.high %v1563, %v1563
      %v1566 = vcombine.high %v1544, %v1544
      %v1568 = vunpack.c.l.s4 1983009808
      %v1569 = vunpack.c.0.s8 %v1568
      %v1570 = vlaneseq
      %v1571 = vshrl.u32 %v1570, 7
      %v1572 = vsub.s32 %v1569, %v1571
      %v1573 = vrot.slane %v1544, %v1572
      %v1575 = vunpack.c.l.s4 1983009808
      %v1576 = vunpack.c.0.s8 %v1575
      %v1577 = vlaneseq
      %v1578 = vshrl.u32 %v1577, 7
      %v1579 = vsub.s32 %v1576, %v1578
      %v1580 = vrot.slane %v1566, %v1579
      %v1581 = vcombine.high %v1573, %v1573
      %v1582 = vcombine.high %v1580, %v1580
      %1583 = vrot.lane.b32.xlu0 %v1556, 116
      %v1584 = vpop.permute.xlu0 %1583
      %1585 = vrot.lane.b32.xlu0 %v1564, 116
      %v1586 = vpop.permute.xlu0 %1585
      %1587 = vrot.lane.b32.xlu0 %v1563, 116
      %v1588 = vpop.permute.xlu0 %1587
      %1589 = vrot.lane.b32.xlu0 %v1565, 116
      %v1590 = vpop.permute.xlu0 %1589
      %1591 = vrot.lane.b32.xlu0 %v1573, 116
      %v1592 = vpop.permute.xlu0 %1591
      %1593 = vrot.lane.b32.xlu0 %v1581, 116
      %v1594 = vpop.permute.xlu0 %1593
      %1595 = vrot.lane.b32.xlu0 %v1580, 116
      %v1596 = vpop.permute.xlu0 %1595
      %1597 = vrot.lane.b32.xlu0 %v1582, 116
      %v1598 = vpop.permute.xlu0 %1597
      %vm1599 = vcmask 949248
      %v1600 = vsel %vm1599, %v1584, %v1586
      %v1601 = vsel %vm1599, %v1586, %v1588
      %v1602 = vsel %vm1599, %v1588, %v1590
      %v1603 = vsel %vm1599, %v1590, %v1592
      %v1604 = vsel %vm1599, %v1592, %v1594
      %v1605 = vsel %vm1599, %v1594, %v1596
      %v1606 = vsel %vm1599, %v1596, %v1598
      %v1608 = vsel %vm376, %v1546, 0
      %v1611 = vsel %vm380, %v1600, 0
      %v1614 = vsel %vm380, %v1601, 0
      %v1617 = vsel %vm380, %v1602, 0
      %v1620 = vsel %vm380, %v1603, 0
      %v1623 = vsel %vm380, %v1604, 0
      %v1626 = vsel %vm380, %v1605, 0
      %v1629 = vsel %vm380, %v1606, 0
      %1631 = vmatprep.subr.bf16.mxu0 %v1614
      %1632 = vmatpush1.bf16.msra.mxu0 %v1611
      %1633 = vmatprep.subr.bf16.mxu0 0
      %1634 = vmatpush1.bf16.msra.mxu0 0
      %1635 = vmatprep.subr.bf16.mxu0 0
      %1636 = vmatpush1.bf16.msra.mxu0 0
      %1637 = vmatprep.subr.bf16.mxu0 0
      %1638 = vmatpush1.bf16.msra.mxu0 0
      %1639 = vmatprep.subr.bf16.mxu0 0
      %1640 = vmatpush1.bf16.msra.mxu0 0
      %1641 = vmatprep.subr.bf16.mxu0 0
      %1642 = vmatpush1.bf16.msra.mxu0 0
      %1643 = vmatprep.subr.bf16.mxu0 0
      %1644 = vmatpush1.bf16.msra.mxu0 0
      %1645 = vmatprep.subr.bf16.mxu0 0
      %1646 = vmatpush1.bf16.msra.mxu0 0
      %1647 = vmatprep.subr.bf16.mxu0 0
      %1648 = vmatpush1.bf16.msra.mxu0 0
      %1649 = vmatprep.subr.bf16.mxu0 0
      %1650 = vmatpush1.bf16.msra.mxu0 0
      %1651 = vmatprep.subr.bf16.mxu0 0
      %1652 = vmatpush1.bf16.msra.mxu0 0
      %1653 = vmatprep.subr.bf16.mxu0 0
      %1654 = vmatpush1.bf16.msra.mxu0 0
      %1655 = vmatprep.subr.bf16.mxu0 0
      %1656 = vmatpush1.bf16.msra.mxu0 0
      %1657 = vmatprep.subr.bf16.mxu0 0
      %1658 = vmatpush1.bf16.msra.mxu0 0
      %1659 = vmatprep.subr.bf16.mxu0 0
      %1660 = vmatpush1.bf16.msra.mxu0 0
      %1661 = vmatprep.subr.bf16.mxu0 0
      %1662 = vmatpush1.bf16.msra.mxu0 0
      %1663 = vmatprep.mubr.bf16.mxu0 0
      %1664 = vmatmul.mubr.bf16.gmra.mrb[0].mxu0 %v1608
      %v1665 = vpop.f32.mrb[0].mxu0
      %v1666 = vadd.f32 0.0, %v1665
      %v1667 = vpop.f32.mrb[0].mxu0
      %v1668 = vadd.f32 0.0, %v1667
      %v1669 = vpop.f32.mrb[0].mxu0
      %v1670 = vpop.f32.mrb[0].mxu0
      %1671 = vdwg.mxu0
      %1672 = vmatprep.subr.bf16.mxu0 %v1620
      %1673 = vmatpush1.bf16.msra.mxu0 %v1617
      %1674 = vmatprep.subr.bf16.mxu0 0
      %1675 = vmatpush1.bf16.msra.mxu0 0
      %1676 = vmatprep.subr.bf16.mxu0 0
      %1677 = vmatpush1.bf16.msra.mxu0 0
      %1678 = vmatprep.subr.bf16.mxu0 0
      %1679 = vmatpush1.bf16.msra.mxu0 0
      %1680 = vmatprep.subr.bf16.mxu0 0
      %1681 = vmatpush1.bf16.msra.mxu0 0
      %1682 = vmatprep.subr.bf16.mxu0 0
      %1683 = vmatpush1.bf16.msra.mxu0 0
      %1684 = vmatprep.subr.bf16.mxu0 0
      %1685 = vmatpush1.bf16.msra.mxu0 0
      %1686 = vmatprep.subr.bf16.mxu0 0
      %1687 = vmatpush1.bf16.msra.mxu0 0
      %1688 = vmatprep.subr.bf16.mxu0 0
      %1689 = vmatpush1.bf16.msra.mxu0 0
      %1690 = vmatprep.subr.bf16.mxu0 0
      %1691 = vmatpush1.bf16.msra.mxu0 0
      %1692 = vmatprep.subr.bf16.mxu0 0
      %1693 = vmatpush1.bf16.msra.mxu0 0
      %1694 = vmatprep.subr.bf16.mxu0 0
      %1695 = vmatpush1.bf16.msra.mxu0 0
      %1696 = vmatprep.subr.bf16.mxu0 0
      %1697 = vmatpush1.bf16.msra.mxu0 0
      %1698 = vmatprep.subr.bf16.mxu0 0
      %1699 = vmatpush1.bf16.msra.mxu0 0
      %1700 = vmatprep.subr.bf16.mxu0 0
      %1701 = vmatpush1.bf16.msra.mxu0 0
      %1702 = vmatprep.subr.bf16.mxu0 0
      %1703 = vmatpush1.bf16.msra.mxu0 0
      %1704 = vmatprep.mubr.bf16.mxu0 0
      %1705 = vmatmul.mubr.bf16.gmra.mrb[0].mxu0 %v1608
      %v1706 = vpop.f32.mrb[0].mxu0
      %v1707 = vadd.f32 0.0, %v1706
      %v1708 = vpop.f32.mrb[0].mxu0
      %v1709 = vadd.f32 0.0, %v1708
      %v1710 = vpop.f32.mrb[0].mxu0
      %v1711 = vpop.f32.mrb[0].mxu0
      %1712 = vdwg.mxu0
      %1713 = vmatprep.subr.bf16.mxu0 %v1626
      %1714 = vmatpush1.bf16.msra.mxu0 %v1623
      %1715 = vmatprep.subr.bf16.mxu0 0
      %1716 = vmatpush1.bf16.msra.mxu0 0
      %1717 = vmatprep.subr.bf16.mxu0 0
      %1718 = vmatpush1.bf16.msra.mxu0 0
      %1719 = vmatprep.subr.bf16.mxu0 0
      %1720 = vmatpush1.bf16.msra.mxu0 0
      %1721 = vmatprep.subr.bf16.mxu0 0
      %1722 = vmatpush1.bf16.msra.mxu0 0
      %1723 = vmatprep.subr.bf16.mxu0 0
      %1724 = vmatpush1.bf16.msra.mxu0 0
      %1725 = vmatprep.subr.bf16.mxu0 0
      %1726 = vmatpush1.bf16.msra.mxu0 0
      %1727 = vmatprep.subr.bf16.mxu0 0
      %1728 = vmatpush1.bf16.msra.mxu0 0
      %1729 = vmatprep.subr.bf16.mxu0 0
      %1730 = vmatpush1.bf16.msra.mxu0 0
      %1731 = vmatprep.subr.bf16.mxu0 0
      %1732 = vmatpush1.bf16.msra.mxu0 0
      %1733 = vmatprep.subr.bf16.mxu0 0
      %1734 = vmatpush1.bf16.msra.mxu0 0
      %1735 = vmatprep.subr.bf16.mxu0 0
      %1736 = vmatpush1.bf16.msra.mxu0 0
      %1737 = vmatprep.subr.bf16.mxu0 0
      %1738 = vmatpush1.bf16.msra.mxu0 0
      %1739 = vmatprep.subr.bf16.mxu0 0
      %1740 = vmatpush1.bf16.msra.mxu0 0
      %1741 = vmatprep.subr.bf16.mxu0 0
      %1742 = vmatpush1.bf16.msra.mxu0 0
      %1743 = vmatprep.subr.bf16.mxu0 0
      %1744 = vmatpush1.bf16.msra.mxu0 0
      %1745 = vmatprep.mubr.bf16.mxu0 0
      %1746 = vmatmul.mubr.bf16.gmra.mrb[0].mxu0 %v1608
      %v1747 = vpop.f32.mrb[0].mxu0
      %v1748 = vadd.f32 0.0, %v1747
      %v1749 = vpop.f32.mrb[0].mxu0
      %v1750 = vadd.f32 0.0, %v1749
      %v1751 = vpop.f32.mrb[0].mxu0
      %v1752 = vpop.f32.mrb[0].mxu0
      %1753 = vdwg.mxu0
      %1754 = vmatprep.subr.bf16.mxu0 0
      %1755 = vmatpush1.bf16.msra.mxu0 %v1629
      %1756 = vmatprep.subr.bf16.mxu0 0
      %1757 = vmatpush1.bf16.msra.mxu0 0
      %1758 = vmatprep.subr.bf16.mxu0 0
      %1759 = vmatpush1.bf16.msra.mxu0 0
      %1760 = vmatprep.subr.bf16.mxu0 0
      %1761 = vmatpush1.bf16.msra.mxu0 0
      %1762 = vmatprep.subr.bf16.mxu0 0
      %1763 = vmatpush1.bf16.msra.mxu0 0
      %1764 = vmatprep.subr.bf16.mxu0 0
      %1765 = vmatpush1.bf16.msra.mxu0 0
      %1766 = vmatprep.subr.bf16.mxu0 0
      %1767 = vmatpush1.bf16.msra.mxu0 0
      %1768 = vmatprep.subr.bf16.mxu0 0
      %1769 = vmatpush1.bf16.msra.mxu0 0
      %1770 = vmatprep.subr.bf16.mxu0 0
      %1771 = vmatpush1.bf16.msra.mxu0 0
      %1772 = vmatprep.subr.bf16.mxu0 0
      %1773 = vmatpush1.bf16.msra.mxu0 0
      %1774 = vmatprep.subr.bf16.mxu0 0
      %1775 = vmatpush1.bf16.msra.mxu0 0
      %1776 = vmatprep.subr.bf16.mxu0 0
      %1777 = vmatpush1.bf16.msra.mxu0 0
      %1778 = vmatprep.subr.bf16.mxu0 0
      %1779 = vmatpush1.bf16.msra.mxu0 0
      %1780 = vmatprep.subr.bf16.mxu0 0
      %1781 = vmatpush1.bf16.msra.mxu0 0
      %1782 = vmatprep.subr.bf16.mxu0 0
      %1783 = vmatpush1.bf16.msra.mxu0 0
      %1784 = vmatprep.subr.bf16.mxu0 0
      %1785 = vmatpush1.bf16.msra.mxu0 0
      %1786 = vmatprep.mubr.bf16.mxu0 0
      %1787 = vmatmul.mubr.bf16.gmra.mrb[0].mxu0 %v1608
      %v1788 = vpop.f32.mrb[0].mxu0
      %v1789 = vadd.f32 0.0, %v1788
      %v1790 = vpop.f32.mrb[0].mxu0
      %v1791 = vpop.f32.mrb[0].mxu0
      %v1792 = vpop.f32.mrb[0].mxu0
      %1793 = vdwg.mxu0
      %v1794 = vadd.f32 %v1536, %v1666
      %v1795 = vadd.f32 %v1537, %v1668
      %v1796 = vadd.f32 %v1538, %v1707
      %v1797 = vadd.f32 %v1539, %v1709
      %v1798 = vadd.f32 %v1540, %v1748
      %v1799 = vadd.f32 %v1541, %v1750
      %v1800 = vadd.f32 %v1542, %v1789
      %v1801 = vld [vmem:[%s278] sm:$0xff]
      %v1802 = vld [vmem:[%s278 + $0x8] sm:$0xff]
      %s1803 = scalar_lea.vmem %s1, 24
      %v1804 = vld [vmem:[%s1803] sm:$0xf]
      %v1807 = vcombine.high %v1801, %v1801
      %v1809 = vunpack.c.l.s4 1983009808
      %v1810 = vunpack.c.0.s8 %v1809
      %v1811 = vlaneseq
      %v1812 = vshrl.u32 %v1811, 7
      %v1813 = vsub.s32 %v1810, %v1812
      %v1814 = vrot.slane %v1801, %v1813
      %v1816 = vunpack.c.l.s4 1983009808
      %v1817 = vunpack.c.0.s8 %v1816
      %v1818 = vlaneseq
      %v1819 = vshrl.u32 %v1818, 7
      %v1820 = vsub.s32 %v1817, %v1819
      %v1821 = vrot.slane %v1807, %v1820
      %v1822 = vcombine.high %v1814, %v1814
      %v1823 = vcombine.high %v1821, %v1821
      %v1824 = vcombine.high %v1802, %v1802
      %v1826 = vunpack.c.l.s4 1983009808
      %v1827 = vunpack.c.0.s8 %v1826
      %v1828 = vlaneseq
      %v1829 = vshrl.u32 %v1828, 7
      %v1830 = vsub.s32 %v1827, %v1829
      %v1831 = vrot.slane %v1802, %v1830
      %v1833 = vunpack.c.l.s4 1983009808
      %v1834 = vunpack.c.0.s8 %v1833
      %v1835 = vlaneseq
      %v1836 = vshrl.u32 %v1835, 7
      %v1837 = vsub.s32 %v1834, %v1836
      %v1838 = vrot.slane %v1824, %v1837
      %v1839 = vcombine.high %v1831, %v1831
      %v1840 = vcombine.high %v1838, %v1838
      %1841 = vrot.lane.b32.xlu0 %v1814, 108
      %v1842 = vpop.permute.xlu0 %1841
      %1843 = vrot.lane.b32.xlu0 %v1822, 108
      %v1844 = vpop.permute.xlu0 %1843
      %1845 = vrot.lane.b32.xlu0 %v1821, 108
      %v1846 = vpop.permute.xlu0 %1845
      %1847 = vrot.lane.b32.xlu0 %v1823, 108
      %v1848 = vpop.permute.xlu0 %1847
      %1849 = vrot.lane.b32.xlu0 %v1831, 108
      %v1850 = vpop.permute.xlu0 %1849
      %1851 = vrot.lane.b32.xlu0 %v1839, 108
      %v1852 = vpop.permute.xlu0 %1851
      %1853 = vrot.lane.b32.xlu0 %v1838, 108
      %v1854 = vpop.permute.xlu0 %1853
      %1855 = vrot.lane.b32.xlu0 %v1840, 108
      %v1856 = vpop.permute.xlu0 %1855
      %vm1857 = vcmask 883712
      %v1858 = vsel %vm1857, %v1842, %v1844
      %v1859 = vsel %vm1857, %v1844, %v1846
      %v1860 = vsel %vm1857, %v1846, %v1848
      %v1861 = vsel %vm1857, %v1848, %v1850
      %v1862 = vsel %vm1857, %v1850, %v1852
      %v1863 = vsel %vm1857, %v1852, %v1854
      %v1864 = vsel %vm1857, %v1854, %v1856
      %v1866 = vsel %vm376, %v1804, 0
      %v1869 = vsel %vm380, %v1858, 0
      %v1872 = vsel %vm380, %v1859, 0
      %v1875 = vsel %vm380, %v1860, 0
      %v1878 = vsel %vm380, %v1861, 0
      %v1881 = vsel %vm380, %v1862, 0
      %v1884 = vsel %vm380, %v1863, 0
      %v1887 = vsel %vm380, %v1864, 0
      %1889 = vmatprep.subr.bf16.mxu0 %v1872
      %1890 = vmatpush1.bf16.msra.mxu0 %v1869
      %1891 = vmatprep.subr.bf16.mxu0 0
      %1892 = vmatpush1.bf16.msra.mxu0 0
      %1893 = vmatprep.subr.bf16.mxu0 0
      %1894 = vmatpush1.bf16.msra.mxu0 0
      %1895 = vmatprep.subr.bf16.mxu0 0
      %1896 = vmatpush1.bf16.msra.mxu0 0
      %1897 = vmatprep.subr.bf16.mxu0 0
      %1898 = vmatpush1.bf16.msra.mxu0 0
      %1899 = vmatprep.subr.bf16.mxu0 0
      %1900 = vmatpush1.bf16.msra.mxu0 0
      %1901 = vmatprep.subr.bf16.mxu0 0
      %1902 = vmatpush1.bf16.msra.mxu0 0
      %1903 = vmatprep.subr.bf16.mxu0 0
      %1904 = vmatpush1.bf16.msra.mxu0 0
      %1905 = vmatprep.subr.bf16.mxu0 0
      %1906 = vmatpush1.bf16.msra.mxu0 0
      %1907 = vmatprep.subr.bf16.mxu0 0
      %1908 = vmatpush1.bf16.msra.mxu0 0
      %1909 = vmatprep.subr.bf16.mxu0 0
      %1910 = vmatpush1.bf16.msra.mxu0 0
      %1911 = vmatprep.subr.bf16.mxu0 0
      %1912 = vmatpush1.bf16.msra.mxu0 0
      %1913 = vmatprep.subr.bf16.mxu0 0
      %1914 = vmatpush1.bf16.msra.mxu0 0
      %1915 = vmatprep.subr.bf16.mxu0 0
      %1916 = vmatpush1.bf16.msra.mxu0 0
      %1917 = vmatprep.subr.bf16.mxu0 0
      %1918 = vmatpush1.bf16.msra.mxu0 0
      %1919 = vmatprep.subr.bf16.mxu0 0
      %1920 = vmatpush1.bf16.msra.mxu0 0
      %1921 = vmatprep.mubr.bf16.mxu0 0
      %1922 = vmatmul.mubr.bf16.gmra.mrb[0].mxu0 %v1866
      %v1923 = vpop.f32.mrb[0].mxu0
      %v1924 = vadd.f32 0.0, %v1923
      %v1925 = vpop.f32.mrb[0].mxu0
      %v1926 = vadd.f32 0.0, %v1925
      %v1927 = vpop.f32.mrb[0].mxu0
      %v1928 = vpop.f32.mrb[0].mxu0
      %1929 = vdwg.mxu0
      %1930 = vmatprep.subr.bf16.mxu0 %v1878
      %1931 = vmatpush1.bf16.msra.mxu0 %v1875
      %1932 = vmatprep.subr.bf16.mxu0 0
      %1933 = vmatpush1.bf16.msra.mxu0 0
      %1934 = vmatprep.subr.bf16.mxu0 0
      %1935 = vmatpush1.bf16.msra.mxu0 0
      %1936 = vmatprep.subr.bf16.mxu0 0
      %1937 = vmatpush1.bf16.msra.mxu0 0
      %1938 = vmatprep.subr.bf16.mxu0 0
      %1939 = vmatpush1.bf16.msra.mxu0 0
      %1940 = vmatprep.subr.bf16.mxu0 0
      %1941 = vmatpush1.bf16.msra.mxu0 0
      %1942 = vmatprep.subr.bf16.mxu0 0
      %1943 = vmatpush1.bf16.msra.mxu0 0
      %1944 = vmatprep.subr.bf16.mxu0 0
      %1945 = vmatpush1.bf16.msra.mxu0 0
      %1946 = vmatprep.subr.bf16.mxu0 0
      %1947 = vmatpush1.bf16.msra.mxu0 0
      %1948 = vmatprep.subr.bf16.mxu0 0
      %1949 = vmatpush1.bf16.msra.mxu0 0
      %1950 = vmatprep.subr.bf16.mxu0 0
      %1951 = vmatpush1.bf16.msra.mxu0 0
      %1952 = vmatprep.subr.bf16.mxu0 0
      %1953 = vmatpush1.bf16.msra.mxu0 0
      %1954 = vmatprep.subr.bf16.mxu0 0
      %1955 = vmatpush1.bf16.msra.mxu0 0
      %1956 = vmatprep.subr.bf16.mxu0 0
      %1957 = vmatpush1.bf16.msra.mxu0 0
      %1958 = vmatprep.subr.bf16.mxu0 0
      %1959 = vmatpush1.bf16.msra.mxu0 0
      %1960 = vmatprep.subr.bf16.mxu0 0
      %1961 = vmatpush1.bf16.msra.mxu0 0
      %1962 = vmatprep.mubr.bf16.mxu0 0
      %1963 = vmatmul.mubr.bf16.gmra.mrb[0].mxu0 %v1866
      %v1964 = vpop.f32.mrb[0].mxu0
      %v1965 = vadd.f32 0.0, %v1964
      %v1966 = vpop.f32.mrb[0].mxu0
      %v1967 = vadd.f32 0.0, %v1966
      %v1968 = vpop.f32.mrb[0].mxu0
      %v1969 = vpop.f32.mrb[0].mxu0
      %1970 = vdwg.mxu0
      %1971 = vmatprep.subr.bf16.mxu0 %v1884
      %1972 = vmatpush1.bf16.msra.mxu0 %v1881
      %1973 = vmatprep.subr.bf16.mxu0 0
      %1974 = vmatpush1.bf16.msra.mxu0 0
      %1975 = vmatprep.subr.bf16.mxu0 0
      %1976 = vmatpush1.bf16.msra.mxu0 0
      %1977 = vmatprep.subr.bf16.mxu0 0
      %1978 = vmatpush1.bf16.msra.mxu0 0
      %1979 = vmatprep.subr.bf16.mxu0 0
      %1980 = vmatpush1.bf16.msra.mxu0 0
      %1981 = vmatprep.subr.bf16.mxu0 0
      %1982 = vmatpush1.bf16.msra.mxu0 0
      %1983 = vmatprep.subr.bf16.mxu0 0
      %1984 = vmatpush1.bf16.msra.mxu0 0
      %1985 = vmatprep.subr.bf16.mxu0 0
      %1986 = vmatpush1.bf16.msra.mxu0 0
      %1987 = vmatprep.subr.bf16.mxu0 0
      %1988 = vmatpush1.bf16.msra.mxu0 0
      %1989 = vmatprep.subr.bf16.mxu0 0
      %1990 = vmatpush1.bf16.msra.mxu0 0
      %1991 = vmatprep.subr.bf16.mxu0 0
      %1992 = vmatpush1.bf16.msra.mxu0 0
      %1993 = vmatprep.subr.bf16.mxu0 0
      %1994 = vmatpush1.bf16.msra.mxu0 0
      %1995 = vmatprep.subr.bf16.mxu0 0
      %1996 = vmatpush1.bf16.msra.mxu0 0
      %1997 = vmatprep.subr.bf16.mxu0 0
      %1998 = vmatpush1.bf16.msra.mxu0 0
      %1999 = vmatprep.subr.bf16.mxu0 0
      %2000 = vmatpush1.bf16.msra.mxu0 0
      %2001 = vmatprep.subr.bf16.mxu0 0
      %2002 = vmatpush1.bf16.msra.mxu0 0
      %2003 = vmatprep.mubr.bf16.mxu0 0
      %2004 = vmatmul.mubr.bf16.gmra.mrb[0].mxu0 %v1866
      %v2005 = vpop.f32.mrb[0].mxu0
      %v2006 = vadd.f32 0.0, %v2005
      %v2007 = vpop.f32.mrb[0].mxu0
      %v2008 = vadd.f32 0.0, %v2007
      %v2009 = vpop.f32.mrb[0].mxu0
      %v2010 = vpop.f32.mrb[0].mxu0
      %2011 = vdwg.mxu0
      %2012 = vmatprep.subr.bf16.mxu0 0
      %2013 = vmatpush1.bf16.msra.mxu0 %v1887
      %2014 = vmatprep.subr.bf16.mxu0 0
      %2015 = vmatpush1.bf16.msra.mxu0 0
      %2016 = vmatprep.subr.bf16.mxu0 0
      %2017 = vmatpush1.bf16.msra.mxu0 0
      %2018 = vmatprep.subr.bf16.mxu0 0
      %2019 = vmatpush1.bf16.msra.mxu0 0
      %2020 = vmatprep.subr.bf16.mxu0 0
      %2021 = vmatpush1.bf16.msra.mxu0 0
      %2022 = vmatprep.subr.bf16.mxu0 0
      %2023 = vmatpush1.bf16.msra.mxu0 0
      %2024 = vmatprep.subr.bf16.mxu0 0
      %2025 = vmatpush1.bf16.msra.mxu0 0
      %2026 = vmatprep.subr.bf16.mxu0 0
      %2027 = vmatpush1.bf16.msra.mxu0 0
      %2028 = vmatprep.subr.bf16.mxu0 0
      %2029 = vmatpush1.bf16.msra.mxu0 0
      %2030 = vmatprep.subr.bf16.mxu0 0
      %2031 = vmatpush1.bf16.msra.mxu0 0
      %2032 = vmatprep.subr.bf16.mxu0 0
      %2033 = vmatpush1.bf16.msra.mxu0 0
      %2034 = vmatprep.subr.bf16.mxu0 0
      %2035 = vmatpush1.bf16.msra.mxu0 0
      %2036 = vmatprep.subr.bf16.mxu0 0
      %2037 = vmatpush1.bf16.msra.mxu0 0
      %2038 = vmatprep.subr.bf16.mxu0 0
      %2039 = vmatpush1.bf16.msra.mxu0 0
      %2040 = vmatprep.subr.bf16.mxu0 0
      %2041 = vmatpush1.bf16.msra.mxu0 0
      %2042 = vmatprep.subr.bf16.mxu0 0
      %2043 = vmatpush1.bf16.msra.mxu0 0
      %2044 = vmatprep.mubr.bf16.mxu0 0
      %2045 = vmatmul.mubr.bf16.gmra.mrb[0].mxu0 %v1866
      %v2046 = vpop.f32.mrb[0].mxu0
      %v2047 = vadd.f32 0.0, %v2046
      %v2048 = vpop.f32.mrb[0].mxu0
      %v2049 = vpop.f32.mrb[0].mxu0
      %v2050 = vpop.f32.mrb[0].mxu0
      %2051 = vdwg.mxu0
      %v2052 = vadd.f32 %v1794, %v1924
      %v2053 = vadd.f32 %v1795, %v1926
      %v2054 = vadd.f32 %v1796, %v1965
      %v2055 = vadd.f32 %v1797, %v1967
      %v2056 = vadd.f32 %v1798, %v2006
      %v2057 = vadd.f32 %v1799, %v2008
      %v2058 = vadd.f32 %v1800, %v2047
      %v2059 = vld [vmem:[%s278] sm:$0xff]
      %v2060 = vld [vmem:[%s278 + $0x8] sm:$0xff]
      %s2061 = scalar_lea.vmem %s1, 28
      %v2062 = vld [vmem:[%s2061] sm:$0xf]
      %v2065 = vcombine.high %v2059, %v2059
      %v2067 = vunpack.c.l.s4 1983009808
      %v2068 = vunpack.c.0.s8 %v2067
      %v2069 = vlaneseq
      %v2070 = vshrl.u32 %v2069, 7
      %v2071 = vsub.s32 %v2068, %v2070
      %v2072 = vrot.slane %v2059, %v2071
      %v2074 = vunpack.c.l.s4 1983009808
      %v2075 = vunpack.c.0.s8 %v2074
      %v2076 = vlaneseq
      %v2077 = vshrl.u32 %v2076, 7
      %v2078 = vsub.s32 %v2075, %v2077
      %v2079 = vrot.slane %v2065, %v2078
      %v2080 = vcombine.high %v2072, %v2072
      %v2081 = vcombine.high %v2079, %v2079
      %v2082 = vcombine.high %v2060, %v2060
      %v2084 = vunpack.c.l.s4 1983009808
      %v2085 = vunpack.c.0.s8 %v2084
      %v2086 = vlaneseq
      %v2087 = vshrl.u32 %v2086, 7
      %v2088 = vsub.s32 %v2085, %v2087
      %v2089 = vrot.slane %v2060, %v2088
      %v2091 = vunpack.c.l.s4 1983009808
      %v2092 = vunpack.c.0.s8 %v2091
      %v2093 = vlaneseq
      %v2094 = vshrl.u32 %v2093, 7
      %v2095 = vsub.s32 %v2092, %v2094
      %v2096 = vrot.slane %v2082, %v2095
      %v2097 = vcombine.high %v2089, %v2089
      %v2098 = vcombine.high %v2096, %v2096
      %2099 = vrot.lane.b32.xlu0 %v2072, 107
      %v2100 = vpop.permute.xlu0 %2099
      %2101 = vrot.lane.b32.xlu0 %v2080, 107
      %v2102 = vpop.permute.xlu0 %2101
      %2103 = vrot.lane.b32.xlu0 %v2079, 107
      %v2104 = vpop.permute.xlu0 %2103
      %2105 = vrot.lane.b32.xlu0 %v2081, 107
      %v2106 = vpop.permute.xlu0 %2105
      %2107 = vrot.lane.b32.xlu0 %v2089, 107
      %v2108 = vpop.permute.xlu0 %2107
      %2109 = vrot.lane.b32.xlu0 %v2097, 107
      %v2110 = vpop.permute.xlu0 %2109
      %2111 = vrot.lane.b32.xlu0 %v2096, 107
      %v2112 = vpop.permute.xlu0 %2111
      %2113 = vrot.lane.b32.xlu0 %v2098, 107
      %v2114 = vpop.permute.xlu0 %2113
      %vm2115 = vcmask 875520
      %v2116 = vsel %vm2115, %v2100, %v2102
      %v2117 = vsel %vm2115, %v2102, %v2104
      %v2118 = vsel %vm2115, %v2104, %v2106
      %v2119 = vsel %vm2115, %v2106, %v2108
      %v2120 = vsel %vm2115, %v2108, %v2110
      %v2121 = vsel %vm2115, %v2110, %v2112
      %v2122 = vsel %vm2115, %v2112, %v2114
      %v2124 = vsel %vm376, %v2062, 0
      %v2127 = vsel %vm380, %v2116, 0
      %v2130 = vsel %vm380, %v2117, 0
      %v2133 = vsel %vm380, %v2118, 0
      %v2136 = vsel %vm380, %v2119, 0
      %v2139 = vsel %vm380, %v2120, 0
      %v2142 = vsel %vm380, %v2121, 0
      %v2145 = vsel %vm380, %v2122, 0
      %2147 = vmatprep.subr.bf16.mxu0 %v2130
      %2148 = vmatpush1.bf16.msra.mxu0 %v2127
      %2149 = vmatprep.subr.bf16.mxu0 0
      %2150 = vmatpush1.bf16.msra.mxu0 0
      %2151 = vmatprep.subr.bf16.mxu0 0
      %2152 = vmatpush1.bf16.msra.mxu0 0
      %2153 = vmatprep.subr.bf16.mxu0 0
      %2154 = vmatpush1.bf16.msra.mxu0 0
      %2155 = vmatprep.subr.bf16.mxu0 0
      %2156 = vmatpush1.bf16.msra.mxu0 0
      %2157 = vmatprep.subr.bf16.mxu0 0
      %2158 = vmatpush1.bf16.msra.mxu0 0
      %2159 = vmatprep.subr.bf16.mxu0 0
      %2160 = vmatpush1.bf16.msra.mxu0 0
      %2161 = vmatprep.subr.bf16.mxu0 0
      %2162 = vmatpush1.bf16.msra.mxu0 0
      %2163 = vmatprep.subr.bf16.mxu0 0
      %2164 = vmatpush1.bf16.msra.mxu0 0
      %2165 = vmatprep.subr.bf16.mxu0 0
      %2166 = vmatpush1.bf16.msra.mxu0 0
      %2167 = vmatprep.subr.bf16.mxu0 0
      %2168 = vmatpush1.bf16.msra.mxu0 0
      %2169 = vmatprep.subr.bf16.mxu0 0
      %2170 = vmatpush1.bf16.msra.mxu0 0
      %2171 = vmatprep.subr.bf16.mxu0 0
      %2172 = vmatpush1.bf16.msra.mxu0 0
      %2173 = vmatprep.subr.bf16.mxu0 0
      %2174 = vmatpush1.bf16.msra.mxu0 0
      %2175 = vmatprep.subr.bf16.mxu0 0
      %2176 = vmatpush1.bf16.msra.mxu0 0
      %2177 = vmatprep.subr.bf16.mxu0 0
      %2178 = vmatpush1.bf16.msra.mxu0 0
      %2179 = vmatprep.mubr.bf16.mxu0 0
      %2180 = vmatmul.mubr.bf16.gmra.mrb[0].mxu0 %v2124
      %v2181 = vpop.f32.mrb[0].mxu0
      %v2182 = vadd.f32 0.0, %v2181
      %v2183 = vpop.f32.mrb[0].mxu0
      %v2184 = vadd.f32 0.0, %v2183
      %v2185 = vpop.f32.mrb[0].mxu0
      %v2186 = vpop.f32.mrb[0].mxu0
      %2187 = vdwg.mxu0
      %2188 = vmatprep.subr.bf16.mxu0 %v2136
      %2189 = vmatpush1.bf16.msra.mxu0 %v2133
      %2190 = vmatprep.subr.bf16.mxu0 0
      %2191 = vmatpush1.bf16.msra.mxu0 0
      %2192 = vmatprep.subr.bf16.mxu0 0
      %2193 = vmatpush1.bf16.msra.mxu0 0
      %2194 = vmatprep.subr.bf16.mxu0 0
      %2195 = vmatpush1.bf16.msra.mxu0 0
      %2196 = vmatprep.subr.bf16.mxu0 0
      %2197 = vmatpush1.bf16.msra.mxu0 0
      %2198 = vmatprep.subr.bf16.mxu0 0
      %2199 = vmatpush1.bf16.msra.mxu0 0
      %2200 = vmatprep.subr.bf16.mxu0 0
      %2201 = vmatpush1.bf16.msra.mxu0 0
      %2202 = vmatprep.subr.bf16.mxu0 0
      %2203 = vmatpush1.bf16.msra.mxu0 0
      %2204 = vmatprep.subr.bf16.mxu0 0
      %2205 = vmatpush1.bf16.msra.mxu0 0
      %2206 = vmatprep.subr.bf16.mxu0 0
      %2207 = vmatpush1.bf16.msra.mxu0 0
      %2208 = vmatprep.subr.bf16.mxu0 0
      %2209 = vmatpush1.bf16.msra.mxu0 0
      %2210 = vmatprep.subr.bf16.mxu0 0
      %2211 = vmatpush1.bf16.msra.mxu0 0
      %2212 = vmatprep.subr.bf16.mxu0 0
      %2213 = vmatpush1.bf16.msra.mxu0 0
      %2214 = vmatprep.subr.bf16.mxu0 0
      %2215 = vmatpush1.bf16.msra.mxu0 0
      %2216 = vmatprep.subr.bf16.mxu0 0
      %2217 = vmatpush1.bf16.msra.mxu0 0
      %2218 = vmatprep.subr.bf16.mxu0 0
      %2219 = vmatpush1.bf16.msra.mxu0 0
      %2220 = vmatprep.mubr.bf16.mxu0 0
      %2221 = vmatmul.mubr.bf16.gmra.mrb[0].mxu0 %v2124
      %v2222 = vpop.f32.mrb[0].mxu0
      %v2223 = vadd.f32 0.0, %v2222
      %v2224 = vpop.f32.mrb[0].mxu0
      %v2225 = vadd.f32 0.0, %v2224
      %v2226 = vpop.f32.mrb[0].mxu0
      %v2227 = vpop.f32.mrb[0].mxu0
      %2228 = vdwg.mxu0
      %2229 = vmatprep.subr.bf16.mxu0 %v2142
      %2230 = vmatpush1.bf16.msra.mxu0 %v2139
      %2231 = vmatprep.subr.bf16.mxu0 0
      %2232 = vmatpush1.bf16.msra.mxu0 0
      %2233 = vmatprep.subr.bf16.mxu0 0
      %2234 = vmatpush1.bf16.msra.mxu0 0
      %2235 = vmatprep.subr.bf16.mxu0 0
      %2236 = vmatpush1.bf16.msra.mxu0 0
      %2237 = vmatprep.subr.bf16.mxu0 0
      %2238 = vmatpush1.bf16.msra.mxu0 0
      %2239 = vmatprep.subr.bf16.mxu0 0
      %2240 = vmatpush1.bf16.msra.mxu0 0
      %2241 = vmatprep.subr.bf16.mxu0 0
      %2242 = vmatpush1.bf16.msra.mxu0 0
      %2243 = vmatprep.subr.bf16.mxu0 0
      %2244 = vmatpush1.bf16.msra.mxu0 0
      %2245 = vmatprep.subr.bf16.mxu0 0
      %2246 = vmatpush1.bf16.msra.mxu0 0
      %2247 = vmatprep.subr.bf16.mxu0 0
      %2248 = vmatpush1.bf16.msra.mxu0 0
      %2249 = vmatprep.subr.bf16.mxu0 0
      %2250 = vmatpush1.bf16.msra.mxu0 0
      %2251 = vmatprep.subr.bf16.mxu0 0
      %2252 = vmatpush1.bf16.msra.mxu0 0
      %2253 = vmatprep.subr.bf16.mxu0 0
      %2254 = vmatpush1.bf16.msra.mxu0 0
      %2255 = vmatprep.subr.bf16.mxu0 0
      %2256 = vmatpush1.bf16.msra.mxu0 0
      %2257 = vmatprep.subr.bf16.mxu0 0
      %2258 = vmatpush1.bf16.msra.mxu0 0
      %2259 = vmatprep.subr.bf16.mxu0 0
      %2260 = vmatpush1.bf16.msra.mxu0 0
      %2261 = vmatprep.mubr.bf16.mxu0 0
      %2262 = vmatmul.mubr.bf16.gmra.mrb[0].mxu0 %v2124
      %v2263 = vpop.f32.mrb[0].mxu0
      %v2264 = vadd.f32 0.0, %v2263
      %v2265 = vpop.f32.mrb[0].mxu0
      %v2266 = vadd.f32 0.0, %v2265
      %v2267 = vpop.f32.mrb[0].mxu0
      %v2268 = vpop.f32.mrb[0].mxu0
      %2269 = vdwg.mxu0
      %2270 = vmatprep.subr.bf16.mxu0 0
      %2271 = vmatpush1.bf16.msra.mxu0 %v2145
      %2272 = vmatprep.subr.bf16.mxu0 0
      %2273 = vmatpush1.bf16.msra.mxu0 0
      %2274 = vmatprep.subr.bf16.mxu0 0
      %2275 = vmatpush1.bf16.msra.mxu0 0
      %2276 = vmatprep.subr.bf16.mxu0 0
      %2277 = vmatpush1.bf16.msra.mxu0 0
      %2278 = vmatprep.subr.bf16.mxu0 0
      %2279 = vmatpush1.bf16.msra.mxu0 0
      %2280 = vmatprep.subr.bf16.mxu0 0
      %2281 = vmatpush1.bf16.msra.mxu0 0
      %2282 = vmatprep.subr.bf16.mxu0 0
      %2283 = vmatpush1.bf16.msra.mxu0 0
      %2284 = vmatprep.subr.bf16.mxu0 0
      %2285 = vmatpush1.bf16.msra.mxu0 0
      %2286 = vmatprep.subr.bf16.mxu0 0
      %2287 = vmatpush1.bf16.msra.mxu0 0
      %2288 = vmatprep.subr.bf16.mxu0 0
      %2289 = vmatpush1.bf16.msra.mxu0 0
      %2290 = vmatprep.subr.bf16.mxu0 0
      %2291 = vmatpush1.bf16.msra.mxu0 0
      %2292 = vmatprep.subr.bf16.mxu0 0
      %2293 = vmatpush1.bf16.msra.mxu0 0
      %2294 = vmatprep.subr.bf16.mxu0 0
      %2295 = vmatpush1.bf16.msra.mxu0 0
      %2296 = vmatprep.subr.bf16.mxu0 0
      %2297 = vmatpush1.bf16.msra.mxu0 0
      %2298 = vmatprep.subr.bf16.mxu0 0
      %2299 = vmatpush1.bf16.msra.mxu0 0
      %2300 = vmatprep.subr.bf16.mxu0 0
      %2301 = vmatpush1.bf16.msra.mxu0 0
      %2302 = vmatprep.mubr.bf16.mxu0 0
      %2303 = vmatmul.mubr.bf16.gmra.mrb[0].mxu0 %v2124
      %v2304 = vpop.f32.mrb[0].mxu0
      %v2305 = vadd.f32 0.0, %v2304
      %v2306 = vpop.f32.mrb[0].mxu0
      %v2307 = vpop.f32.mrb[0].mxu0
      %v2308 = vpop.f32.mrb[0].mxu0
      %2309 = vdwg.mxu0
      %v2310 = vadd.f32 %v2052, %v2182
      %v2311 = vadd.f32 %v2053, %v2184
      %v2312 = vadd.f32 %v2054, %v2223
      %v2313 = vadd.f32 %v2055, %v2225
      %v2314 = vadd.f32 %v2056, %v2264
      %v2315 = vadd.f32 %v2057, %v2266
      %v2316 = vadd.f32 %v2058, %v2305
      %v2317 = vld [vmem:[%s278] sm:$0xff]
      %v2318 = vld [vmem:[%s278 + $0x8] sm:$0xff]
      %s2319 = scalar_lea.vmem %s1, 32
      %v2320 = vld [vmem:[%s2319] sm:$0xf]
      %v2323 = vcombine.high %v2317, %v2317
      %v2325 = vunpack.c.l.s4 1983009808
      %v2326 = vunpack.c.0.s8 %v2325
      %v2327 = vlaneseq
      %v2328 = vshrl.u32 %v2327, 7
      %v2329 = vsub.s32 %v2326, %v2328
      %v2330 = vrot.slane %v2317, %v2329
      %v2332 = vunpack.c.l.s4 1983009808
      %v2333 = vunpack.c.0.s8 %v2332
      %v2334 = vlaneseq
      %v2335 = vshrl.u32 %v2334, 7
      %v2336 = vsub.s32 %v2333, %v2335
      %v2337 = vrot.slane %v2323, %v2336
      %v2338 = vcombine.high %v2330, %v2330
      %v2339 = vcombine.high %v2337, %v2337
      %v2340 = vcombine.high %v2318, %v2318
      %v2342 = vunpack.c.l.s4 1983009808
      %v2343 = vunpack.c.0.s8 %v2342
      %v2344 = vlaneseq
      %v2345 = vshrl.u32 %v2344, 7
      %v2346 = vsub.s32 %v2343, %v2345
      %v2347 = vrot.slane %v2318, %v2346
      %v2349 = vunpack.c.l.s4 1983009808
      %v2350 = vunpack.c.0.s8 %v2349
      %v2351 = vlaneseq
      %v2352 = vshrl.u32 %v2351, 7
      %v2353 = vsub.s32 %v2350, %v2352
      %v2354 = vrot.slane %v2340, %v2353
      %v2355 = vcombine.high %v2347, %v2347
      %v2356 = vcombine.high %v2354, %v2354
      %2357 = vrot.lane.b32.xlu0 %v2330, 106
      %v2358 = vpop.permute.xlu0 %2357
      %2359 = vrot.lane.b32.xlu0 %v2338, 106
      %v2360 = vpop.permute.xlu0 %2359
      %2361 = vrot.lane.b32.xlu0 %v2337, 106
      %v2362 = vpop.permute.xlu0 %2361
      %2363 = vrot.lane.b32.xlu0 %v2339, 106
      %v2364 = vpop.permute.xlu0 %2363
      %2365 = vrot.lane.b32.xlu0 %v2347, 106
      %v2366 = vpop.permute.xlu0 %2365
      %2367 = vrot.lane.b32.xlu0 %v2355, 106
      %v2368 = vpop.permute.xlu0 %2367
      %2369 = vrot.lane.b32.xlu0 %v2354, 106
      %v2370 = vpop.permute.xlu0 %2369
      %2371 = vrot.lane.b32.xlu0 %v2356, 106
      %v2372 = vpop.permute.xlu0 %2371
      %vm2373 = vcmask 867328
      %v2374 = vsel %vm2373, %v2358, %v2360
      %v2375 = vsel %vm2373, %v2360, %v2362
      %v2376 = vsel %vm2373, %v2362, %v2364
      %v2377 = vsel %vm2373, %v2364, %v2366
      %v2378 = vsel %vm2373, %v2366, %v2368
      %v2379 = vsel %vm2373, %v2368, %v2370
      %v2380 = vsel %vm2373, %v2370, %v2372
      %v2382 = vsel %vm376, %v2320, 0
      %v2385 = vsel %vm380, %v2374, 0
      %v2388 = vsel %vm380, %v2375, 0
      %v2391 = vsel %vm380, %v2376, 0
      %v2394 = vsel %vm380, %v2377, 0
      %v2397 = vsel %vm380, %v2378, 0
      %v2400 = vsel %vm380, %v2379, 0
      %v2403 = vsel %vm380, %v2380, 0
      %2405 = vmatprep.subr.bf16.mxu0 %v2388
      %2406 = vmatpush1.bf16.msra.mxu0 %v2385
      %2407 = vmatprep.subr.bf16.mxu0 0
      %2408 = vmatpush1.bf16.msra.mxu0 0
      %2409 = vmatprep.subr.bf16.mxu0 0
      %2410 = vmatpush1.bf16.msra.mxu0 0
      %2411 = vmatprep.subr.bf16.mxu0 0
      %2412 = vmatpush1.bf16.msra.mxu0 0
      %2413 = vmatprep.subr.bf16.mxu0 0
      %2414 = vmatpush1.bf16.msra.mxu0 0
      %2415 = vmatprep.subr.bf16.mxu0 0
      %2416 = vmatpush1.bf16.msra.mxu0 0
      %2417 = vmatprep.subr.bf16.mxu0 0
      %2418 = vmatpush1.bf16.msra.mxu0 0
      %2419 = vmatprep.subr.bf16.mxu0 0
      %2420 = vmatpush1.bf16.msra.mxu0 0
      %2421 = vmatprep.subr.bf16.mxu0 0
      %2422 = vmatpush1.bf16.msra.mxu0 0
      %2423 = vmatprep.subr.bf16.mxu0 0
      %2424 = vmatpush1.bf16.msra.mxu0 0
      %2425 = vmatprep.subr.bf16.mxu0 0
      %2426 = vmatpush1.bf16.msra.mxu0 0
      %2427 = vmatprep.subr.bf16.mxu0 0
      %2428 = vmatpush1.bf16.msra.mxu0 0
      %2429 = vmatprep.subr.bf16.mxu0 0
      %2430 = vmatpush1.bf16.msra.mxu0 0
      %2431 = vmatprep.subr.bf16.mxu0 0
      %2432 = vmatpush1.bf16.msra.mxu0 0
      %2433 = vmatprep.subr.bf16.mxu0 0
      %2434 = vmatpush1.bf16.msra.mxu0 0
      %2435 = vmatprep.subr.bf16.mxu0 0
      %2436 = vmatpush1.bf16.msra.mxu0 0
      %2437 = vmatprep.mubr.bf16.mxu0 0
      %2438 = vmatmul.mubr.bf16.gmra.mrb[0].mxu0 %v2382
      %v2439 = vpop.f32.mrb[0].mxu0
      %v2440 = vadd.f32 0.0, %v2439
      %v2441 = vpop.f32.mrb[0].mxu0
      %v2442 = vadd.f32 0.0, %v2441
      %v2443 = vpop.f32.mrb[0].mxu0
      %v2444 = vpop.f32.mrb[0].mxu0
      %2445 = vdwg.mxu0
      %2446 = vmatprep.subr.bf16.mxu0 %v2394
      %2447 = vmatpush1.bf16.msra.mxu0 %v2391
      %2448 = vmatprep.subr.bf16.mxu0 0
      %2449 = vmatpush1.bf16.msra.mxu0 0
      %2450 = vmatprep.subr.bf16.mxu0 0
      %2451 = vmatpush1.bf16.msra.mxu0 0
      %2452 = vmatprep.subr.bf16.mxu0 0
      %2453 = vmatpush1.bf16.msra.mxu0 0
      %2454 = vmatprep.subr.bf16.mxu0 0
      %2455 = vmatpush1.bf16.msra.mxu0 0
      %2456 = vmatprep.subr.bf16.mxu0 0
      %2457 = vmatpush1.bf16.msra.mxu0 0
      %2458 = vmatprep.subr.bf16.mxu0 0
      %2459 = vmatpush1.bf16.msra.mxu0 0
      %2460 = vmatprep.subr.bf16.mxu0 0
      %2461 = vmatpush1.bf16.msra.mxu0 0
      %2462 = vmatprep.subr.bf16.mxu0 0
      %2463 = vmatpush1.bf16.msra.mxu0 0
      %2464 = vmatprep.subr.bf16.mxu0 0
      %2465 = vmatpush1.bf16.msra.mxu0 0
      %2466 = vmatprep.subr.bf16.mxu0 0
      %2467 = vmatpush1.bf16.msra.mxu0 0
      %2468 = vmatprep.subr.bf16.mxu0 0
      %2469 = vmatpush1.bf16.msra.mxu0 0
      %2470 = vmatprep.subr.bf16.mxu0 0
      %2471 = vmatpush1.bf16.msra.mxu0 0
      %2472 = vmatprep.subr.bf16.mxu0 0
      %2473 = vmatpush1.bf16.msra.mxu0 0
      %2474 = vmatprep.subr.bf16.mxu0 0
      %2475 = vmatpush1.bf16.msra.mxu0 0
      %2476 = vmatprep.subr.bf16.mxu0 0
      %2477 = vmatpush1.bf16.msra.mxu0 0
      %2478 = vmatprep.mubr.bf16.mxu0 0
      %2479 = vmatmul.mubr.bf16.gmra.mrb[0].mxu0 %v2382
      %v2480 = vpop.f32.mrb[0].mxu0
      %v2481 = vadd.f32 0.0, %v2480
      %v2482 = vpop.f32.mrb[0].mxu0
      %v2483 = vadd.f32 0.0, %v2482
      %v2484 = vpop.f32.mrb[0].mxu0
      %v2485 = vpop.f32.mrb[0].mxu0
      %2486 = vdwg.mxu0
      %2487 = vmatprep.subr.bf16.mxu0 %v2400
      %2488 = vmatpush1.bf16.msra.mxu0 %v2397
      %2489 = vmatprep.subr.bf16.mxu0 0
      %2490 = vmatpush1.bf16.msra.mxu0 0
      %2491 = vmatprep.subr.bf16.mxu0 0
      %2492 = vmatpush1.bf16.msra.mxu0 0
      %2493 = vmatprep.subr.bf16.mxu0 0
      %2494 = vmatpush1.bf16.msra.mxu0 0
      %2495 = vmatprep.subr.bf16.mxu0 0
      %2496 = vmatpush1.bf16.msra.mxu0 0
      %2497 = vmatprep.subr.bf16.mxu0 0
      %2498 = vmatpush1.bf16.msra.mxu0 0
      %2499 = vmatprep.subr.bf16.mxu0 0
      %2500 = vmatpush1.bf16.msra.mxu0 0
      %2501 = vmatprep.subr.bf16.mxu0 0
      %2502 = vmatpush1.bf16.msra.mxu0 0
      %2503 = vmatprep.subr.bf16.mxu0 0
      %2504 = vmatpush1.bf16.msra.mxu0 0
      %2505 = vmatprep.subr.bf16.mxu0 0
      %2506 = vmatpush1.bf16.msra.mxu0 0
      %2507 = vmatprep.subr.bf16.mxu0 0
      %2508 = vmatpush1.bf16.msra.mxu0 0
      %2509 = vmatprep.subr.bf16.mxu0 0
      %2510 = vmatpush1.bf16.msra.mxu0 0
      %2511 = vmatprep.subr.bf16.mxu0 0
      %2512 = vmatpush1.bf16.msra.mxu0 0
      %2513 = vmatprep.subr.bf16.mxu0 0
      %2514 = vmatpush1.bf16.msra.mxu0 0
      %2515 = vmatprep.subr.bf16.mxu0 0
      %2516 = vmatpush1.bf16.msra.mxu0 0
      %2517 = vmatprep.subr.bf16.mxu0 0
      %2518 = vmatpush1.bf16.msra.mxu0 0
      %2519 = vmatprep.mubr.bf16.mxu0 0
      %2520 = vmatmul.mubr.bf16.gmra.mrb[0].mxu0 %v2382
      %v2521 = vpop.f32.mrb[0].mxu0
      %v2522 = vadd.f32 0.0, %v2521
      %v2523 = vpop.f32.mrb[0].mxu0
      %v2524 = vadd.f32 0.0, %v2523
      %v2525 = vpop.f32.mrb[0].mxu0
      %v2526 = vpop.f32.mrb[0].mxu0
      %2527 = vdwg.mxu0
      %2528 = vmatprep.subr.bf16.mxu0 0
      %2529 = vmatpush1.bf16.msra.mxu0 %v2403
      %2530 = vmatprep.subr.bf16.mxu0 0
      %2531 = vmatpush1.bf16.msra.mxu0 0
      %2532 = vmatprep.subr.bf16.mxu0 0
      %2533 = vmatpush1.bf16.msra.mxu0 0
      %2534 = vmatprep.subr.bf16.mxu0 0
      %2535 = vmatpush1.bf16.msra.mxu0 0
      %2536 = vmatprep.subr.bf16.mxu0 0
      %2537 = vmatpush1.bf16.msra.mxu0 0
      %2538 = vmatprep.subr.bf16.mxu0 0
      %2539 = vmatpush1.bf16.msra.mxu0 0
      %2540 = vmatprep.subr.bf16.mxu0 0
      %2541 = vmatpush1.bf16.msra.mxu0 0
      %2542 = vmatprep.subr.bf16.mxu0 0
      %2543 = vmatpush1.bf16.msra.mxu0 0
      %2544 = vmatprep.subr.bf16.mxu0 0
      %2545 = vmatpush1.bf16.msra.mxu0 0
      %2546 = vmatprep.subr.bf16.mxu0 0
      %2547 = vmatpush1.bf16.msra.mxu0 0
      %2548 = vmatprep.subr.bf16.mxu0 0
      %2549 = vmatpush1.bf16.msra.mxu0 0
      %2550 = vmatprep.subr.bf16.mxu0 0
      %2551 = vmatpush1.bf16.msra.mxu0 0
      %2552 = vmatprep.subr.bf16.mxu0 0
      %2553 = vmatpush1.bf16.msra.mxu0 0
      %2554 = vmatprep.subr.bf16.mxu0 0
      %2555 = vmatpush1.bf16.msra.mxu0 0
      %2556 = vmatprep.subr.bf16.mxu0 0
      %2557 = vmatpush1.bf16.msra.mxu0 0
      %2558 = vmatprep.subr.bf16.mxu0 0
      %2559 = vmatpush1.bf16.msra.mxu0 0
      %2560 = vmatprep.mubr.bf16.mxu0 0
      %2561 = vmatmul.mubr.bf16.gmra.mrb[0].mxu0 %v2382
      %v2562 = vpop.f32.mrb[0].mxu0
      %v2563 = vadd.f32 0.0, %v2562
      %v2564 = vpop.f32.mrb[0].mxu0
      %v2565 = vpop.f32.mrb[0].mxu0
      %v2566 = vpop.f32.mrb[0].mxu0
      %2567 = vdwg.mxu0
      %v2568 = vadd.f32 %v2310, %v2440
      %v2569 = vadd.f32 %v2311, %v2442
      %v2570 = vadd.f32 %v2312, %v2481
      %v2571 = vadd.f32 %v2313, %v2483
      %v2572 = vadd.f32 %v2314, %v2522
      %v2573 = vadd.f32 %v2315, %v2524
      %v2574 = vadd.f32 %v2316, %v2563
      %v2575 = vld [vmem:[%s278] sm:$0xff]
      %v2576 = vld [vmem:[%s278 + $0x8] sm:$0xff]
      %s2577 = scalar_lea.vmem %s1, 36
      %v2578 = vld [vmem:[%s2577] sm:$0xf]
      %v2581 = vcombine.high %v2575, %v2575
      %v2583 = vunpack.c.l.s4 1983009808
      %v2584 = vunpack.c.0.s8 %v2583
      %v2585 = vlaneseq
      %v2586 = vshrl.u32 %v2585, 7
      %v2587 = vsub.s32 %v2584, %v2586
      %v2588 = vrot.slane %v2575, %v2587
      %v2590 = vunpack.c.l.s4 1983009808
      %v2591 = vunpack.c.0.s8 %v2590
      %v2592 = vlaneseq
      %v2593 = vshrl.u32 %v2592, 7
      %v2594 = vsub.s32 %v2591, %v2593
      %v2595 = vrot.slane %v2581, %v2594
      %v2596 = vcombine.high %v2588, %v2588
      %v2597 = vcombine.high %v2595, %v2595
      %v2598 = vcombine.high %v2576, %v2576
      %v2600 = vunpack.c.l.s4 1983009808
      %v2601 = vunpack.c.0.s8 %v2600
      %v2602 = vlaneseq
      %v2603 = vshrl.u32 %v2602, 7
      %v2604 = vsub.s32 %v2601, %v2603
      %v2605 = vrot.slane %v2576, %v2604
      %v2607 = vunpack.c.l.s4 1983009808
      %v2608 = vunpack.c.0.s8 %v2607
      %v2609 = vlaneseq
      %v2610 = vshrl.u32 %v2609, 7
      %v2611 = vsub.s32 %v2608, %v2610
      %v2612 = vrot.slane %v2598, %v2611
      %v2613 = vcombine.high %v2605, %v2605
      %v2614 = vcombine.high %v2612, %v2612
      %2615 = vrot.lane.b32.xlu0 %v2588, 28
      %v2616 = vpop.permute.xlu0 %2615
      %2617 = vrot.lane.b32.xlu0 %v2596, 28
      %v2618 = vpop.permute.xlu0 %2617
      %2619 = vrot.lane.b32.xlu0 %v2595, 28
      %v2620 = vpop.permute.xlu0 %2619
      %2621 = vrot.lane.b32.xlu0 %v2597, 28
      %v2622 = vpop.permute.xlu0 %2621
      %2623 = vrot.lane.b32.xlu0 %v2605, 28
      %v2624 = vpop.permute.xlu0 %2623
      %2625 = vrot.lane.b32.xlu0 %v2613, 28
      %v2626 = vpop.permute.xlu0 %2625
      %2627 = vrot.lane.b32.xlu0 %v2612, 28
      %v2628 = vpop.permute.xlu0 %2627
      %2629 = vrot.lane.b32.xlu0 %v2614, 28
      %v2630 = vpop.permute.xlu0 %2629
      %vm2631 = vcmask 228352
      %v2632 = vsel %vm2631, %v2616, %v2618
      %v2633 = vsel %vm2631, %v2618, %v2620
      %v2634 = vsel %vm2631, %v2620, %v2622
      %v2635 = vsel %vm2631, %v2622, %v2624
      %v2636 = vsel %vm2631, %v2624, %v2626
      %v2637 = vsel %vm2631, %v2626, %v2628
      %v2638 = vsel %vm2631, %v2628, %v2630
      %v2640 = vsel %vm376, %v2578, 0
      %v2643 = vsel %vm380, %v2632, 0
      %v2646 = vsel %vm380, %v2633, 0
      %v2649 = vsel %vm380, %v2634, 0
      %v2652 = vsel %vm380, %v2635, 0
      %v2655 = vsel %vm380, %v2636, 0
      %v2658 = vsel %vm380, %v2637, 0
      %v2661 = vsel %vm380, %v2638, 0
      %2663 = vmatprep.subr.bf16.mxu0 %v2646
      %2664 = vmatpush1.bf16.msra.mxu0 %v2643
      %2665 = vmatprep.subr.bf16.mxu0 0
      %2666 = vmatpush1.bf16.msra.mxu0 0
      %2667 = vmatprep.subr.bf16.mxu0 0
      %2668 = vmatpush1.bf16.msra.mxu0 0
      %2669 = vmatprep.subr.bf16.mxu0 0
      %2670 = vmatpush1.bf16.msra.mxu0 0
      %2671 = vmatprep.subr.bf16.mxu0 0
      %2672 = vmatpush1.bf16.msra.mxu0 0
      %2673 = vmatprep.subr.bf16.mxu0 0
      %2674 = vmatpush1.bf16.msra.mxu0 0
      %2675 = vmatprep.subr.bf16.mxu0 0
      %2676 = vmatpush1.bf16.msra.mxu0 0
      %2677 = vmatprep.subr.bf16.mxu0 0
      %2678 = vmatpush1.bf16.msra.mxu0 0
      %2679 = vmatprep.subr.bf16.mxu0 0
      %2680 = vmatpush1.bf16.msra.mxu0 0
      %2681 = vmatprep.subr.bf16.mxu0 0
      %2682 = vmatpush1.bf16.msra.mxu0 0
      %2683 = vmatprep.subr.bf16.mxu0 0
      %2684 = vmatpush1.bf16.msra.mxu0 0
      %2685 = vmatprep.subr.bf16.mxu0 0
      %2686 = vmatpush1.bf16.msra.mxu0 0
      %2687 = vmatprep.subr.bf16.mxu0 0
      %2688 = vmatpush1.bf16.msra.mxu0 0
      %2689 = vmatprep.subr.bf16.mxu0 0
      %2690 = vmatpush1.bf16.msra.mxu0 0
      %2691 = vmatprep.subr.bf16.mxu0 0
      %2692 = vmatpush1.bf16.msra.mxu0 0
      %2693 = vmatprep.subr.bf16.mxu0 0
      %2694 = vmatpush1.bf16.msra.mxu0 0
      %2695 = vmatprep.mubr.bf16.mxu0 0
      %2696 = vmatmul.mubr.bf16.gmra.mrb[0].mxu0 %v2640
      %v2697 = vpop.f32.mrb[0].mxu0
      %v2698 = vadd.f32 0.0, %v2697
      %v2699 = vpop.f32.mrb[0].mxu0
      %v2700 = vadd.f32 0.0, %v2699
      %v2701 = vpop.f32.mrb[0].mxu0
      %v2702 = vpop.f32.mrb[0].mxu0
      %2703 = vdwg.mxu0
      %2704 = vmatprep.subr.bf16.mxu0 %v2652
      %2705 = vmatpush1.bf16.msra.mxu0 %v2649
      %2706 = vmatprep.subr.bf16.mxu0 0
      %2707 = vmatpush1.bf16.msra.mxu0 0
      %2708 = vmatprep.subr.bf16.mxu0 0
      %2709 = vmatpush1.bf16.msra.mxu0 0
      %2710 = vmatprep.subr.bf16.mxu0 0
      %2711 = vmatpush1.bf16.msra.mxu0 0
      %2712 = vmatprep.subr.bf16.mxu0 0
      %2713 = vmatpush1.bf16.msra.mxu0 0
      %2714 = vmatprep.subr.bf16.mxu0 0
      %2715 = vmatpush1.bf16.msra.mxu0 0
      %2716 = vmatprep.subr.bf16.mxu0 0
      %2717 = vmatpush1.bf16.msra.mxu0 0
      %2718 = vmatprep.subr.bf16.mxu0 0
      %2719 = vmatpush1.bf16.msra.mxu0 0
      %2720 = vmatprep.subr.bf16.mxu0 0
      %2721 = vmatpush1.bf16.msra.mxu0 0
      %2722 = vmatprep.subr.bf16.mxu0 0
      %2723 = vmatpush1.bf16.msra.mxu0 0
      %2724 = vmatprep.subr.bf16.mxu0 0
      %2725 = vmatpush1.bf16.msra.mxu0 0
      %2726 = vmatprep.subr.bf16.mxu0 0
      %2727 = vmatpush1.bf16.msra.mxu0 0
      %2728 = vmatprep.subr.bf16.mxu0 0
      %2729 = vmatpush1.bf16.msra.mxu0 0
      %2730 = vmatprep.subr.bf16.mxu0 0
      %2731 = vmatpush1.bf16.msra.mxu0 0
      %2732 = vmatprep.subr.bf16.mxu0 0
      %2733 = vmatpush1.bf16.msra.mxu0 0
      %2734 = vmatprep.subr.bf16.mxu0 0
      %2735 = vmatpush1.bf16.msra.mxu0 0
      %2736 = vmatprep.mubr.bf16.mxu0 0
      %2737 = vmatmul.mubr.bf16.gmra.mrb[0].mxu0 %v2640
      %v2738 = vpop.f32.mrb[0].mxu0
      %v2739 = vadd.f32 0.0, %v2738
      %v2740 = vpop.f32.mrb[0].mxu0
      %v2741 = vadd.f32 0.0, %v2740
      %v2742 = vpop.f32.mrb[0].mxu0
      %v2743 = vpop.f32.mrb[0].mxu0
      %2744 = vdwg.mxu0
      %2745 = vmatprep.subr.bf16.mxu0 %v2658
      %2746 = vmatpush1.bf16.msra.mxu0 %v2655
      %2747 = vmatprep.subr.bf16.mxu0 0
      %2748 = vmatpush1.bf16.msra.mxu0 0
      %2749 = vmatprep.subr.bf16.mxu0 0
      %2750 = vmatpush1.bf16.msra.mxu0 0
      %2751 = vmatprep.subr.bf16.mxu0 0
      %2752 = vmatpush1.bf16.msra.mxu0 0
      %2753 = vmatprep.subr.bf16.mxu0 0
      %2754 = vmatpush1.bf16.msra.mxu0 0
      %2755 = vmatprep.subr.bf16.mxu0 0
      %2756 = vmatpush1.bf16.msra.mxu0 0
      %2757 = vmatprep.subr.bf16.mxu0 0
      %2758 = vmatpush1.bf16.msra.mxu0 0
      %2759 = vmatprep.subr.bf16.mxu0 0
      %2760 = vmatpush1.bf16.msra.mxu0 0
      %2761 = vmatprep.subr.bf16.mxu0 0
      %2762 = vmatpush1.bf16.msra.mxu0 0
      %2763 = vmatprep.subr.bf16.mxu0 0
      %2764 = vmatpush1.bf16.msra.mxu0 0
      %2765 = vmatprep.subr.bf16.mxu0 0
      %2766 = vmatpush1.bf16.msra.mxu0 0
      %2767 = vmatprep.subr.bf16.mxu0 0
      %2768 = vmatpush1.bf16.msra.mxu0 0
      %2769 = vmatprep.subr.bf16.mxu0 0
      %2770 = vmatpush1.bf16.msra.mxu0 0
      %2771 = vmatprep.subr.bf16.mxu0 0
      %2772 = vmatpush1.bf16.msra.mxu0 0
      %2773 = vmatprep.subr.bf16.mxu0 0
      %2774 = vmatpush1.bf16.msra.mxu0 0
      %2775 = vmatprep.subr.bf16.mxu0 0
      %2776 = vmatpush1.bf16.msra.mxu0 0
      %2777 = vmatprep.mubr.bf16.mxu0 0
      %2778 = vmatmul.mubr.bf16.gmra.mrb[0].mxu0 %v2640
      %v2779 = vpop.f32.mrb[0].mxu0
      %v2780 = vadd.f32 0.0, %v2779
      %v2781 = vpop.f32.mrb[0].mxu0
      %v2782 = vadd.f32 0.0, %v2781
      %v2783 = vpop.f32.mrb[0].mxu0
      %v2784 = vpop.f32.mrb[0].mxu0
      %2785 = vdwg.mxu0
      %2786 = vmatprep.subr.bf16.mxu0 0
      %2787 = vmatpush1.bf16.msra.mxu0 %v2661
      %2788 = vmatprep.subr.bf16.mxu0 0
      %2789 = vmatpush1.bf16.msra.mxu0 0
      %2790 = vmatprep.subr.bf16.mxu0 0
      %2791 = vmatpush1.bf16.msra.mxu0 0
      %2792 = vmatprep.subr.bf16.mxu0 0
      %2793 = vmatpush1.bf16.msra.mxu0 0
      %2794 = vmatprep.subr.bf16.mxu0 0
      %2795 = vmatpush1.bf16.msra.mxu0 0
      %2796 = vmatprep.subr.bf16.mxu0 0
      %2797 = vmatpush1.bf16.msra.mxu0 0
      %2798 = vmatprep.subr.bf16.mxu0 0
      %2799 = vmatpush1.bf16.msra.mxu0 0
      %2800 = vmatprep.subr.bf16.mxu0 0
      %2801 = vmatpush1.bf16.msra.mxu0 0
      %2802 = vmatprep.subr.bf16.mxu0 0
      %2803 = vmatpush1.bf16.msra.mxu0 0
      %2804 = vmatprep.subr.bf16.mxu0 0
      %2805 = vmatpush1.bf16.msra.mxu0 0
      %2806 = vmatprep.subr.bf16.mxu0 0
      %2807 = vmatpush1.bf16.msra.mxu0 0
      %2808 = vmatprep.subr.bf16.mxu0 0
      %2809 = vmatpush1.bf16.msra.mxu0 0
      %2810 = vmatprep.subr.bf16.mxu0 0
      %2811 = vmatpush1.bf16.msra.mxu0 0
      %2812 = vmatprep.subr.bf16.mxu0 0
      %2813 = vmatpush1.bf16.msra.mxu0 0
      %2814 = vmatprep.subr.bf16.mxu0 0
      %2815 = vmatpush1.bf16.msra.mxu0 0
      %2816 = vmatprep.subr.bf16.mxu0 0
      %2817 = vmatpush1.bf16.msra.mxu0 0
      %2818 = vmatprep.mubr.bf16.mxu0 0
      %2819 = vmatmul.mubr.bf16.gmra.mrb[0].mxu0 %v2640
      %v2820 = vpop.f32.mrb[0].mxu0
      %v2821 = vadd.f32 0.0, %v2820
      %v2822 = vpop.f32.mrb[0].mxu0
      %v2823 = vpop.f32.mrb[0].mxu0
      %v2824 = vpop.f32.mrb[0].mxu0
      %2825 = vdwg.mxu0
      %v2826 = vadd.f32 %v2568, %v2698
      %v2827 = vadd.f32 %v2569, %v2700
      %v2828 = vadd.f32 %v2570, %v2739
      %v2829 = vadd.f32 %v2571, %v2741
      %v2830 = vadd.f32 %v2572, %v2780
      %v2831 = vadd.f32 %v2573, %v2782
      %v2832 = vadd.f32 %v2574, %v2821
      %v2833 = vld [vmem:[%s278] sm:$0xff]
      %v2834 = vld [vmem:[%s278 + $0x8] sm:$0xff]
      %s2835 = scalar_lea.vmem %s1, 40
      %v2836 = vld [vmem:[%s2835] sm:$0xf]
      %v2839 = vcombine.high %v2833, %v2833
      %v2841 = vunpack.c.l.s4 1983009808
      %v2842 = vunpack.c.0.s8 %v2841
      %v2843 = vlaneseq
      %v2844 = vshrl.u32 %v2843, 7
      %v2845 = vsub.s32 %v2842, %v2844
      %v2846 = vrot.slane %v2833, %v2845
      %v2848 = vunpack.c.l.s4 1983009808
      %v2849 = vunpack.c.0.s8 %v2848
      %v2850 = vlaneseq
      %v2851 = vshrl.u32 %v2850, 7
      %v2852 = vsub.s32 %v2849, %v2851
      %v2853 = vrot.slane %v2839, %v2852
      %v2854 = vcombine.high %v2846, %v2846
      %v2855 = vcombine.high %v2853, %v2853
      %v2856 = vcombine.high %v2834, %v2834
      %v2858 = vunpack.c.l.s4 1983009808
      %v2859 = vunpack.c.0.s8 %v2858
      %v2860 = vlaneseq
      %v2861 = vshrl.u32 %v2860, 7
      %v2862 = vsub.s32 %v2859, %v2861
      %v2863 = vrot.slane %v2834, %v2862
      %v2865 = vunpack.c.l.s4 1983009808
      %v2866 = vunpack.c.0.s8 %v2865
      %v2867 = vlaneseq
      %v2868 = vshrl.u32 %v2867, 7
      %v2869 = vsub.s32 %v2866, %v2868
      %v2870 = vrot.slane %v2856, %v2869
      %v2871 = vcombine.high %v2863, %v2863
      %v2872 = vcombine.high %v2870, %v2870
      %2873 = vrot.lane.b32.xlu0 %v2846, 27
      %v2874 = vpop.permute.xlu0 %2873
      %2875 = vrot.lane.b32.xlu0 %v2854, 27
      %v2876 = vpop.permute.xlu0 %2875
      %2877 = vrot.lane.b32.xlu0 %v2853, 27
      %v2878 = vpop.permute.xlu0 %2877
      %2879 = vrot.lane.b32.xlu0 %v2855, 27
      %v2880 = vpop.permute.xlu0 %2879
      %2881 = vrot.lane.b32.xlu0 %v2863, 27
      %v2882 = vpop.permute.xlu0 %2881
      %2883 = vrot.lane.b32.xlu0 %v2871, 27
      %v2884 = vpop.permute.xlu0 %2883
      %2885 = vrot.lane.b32.xlu0 %v2870, 27
      %v2886 = vpop.permute.xlu0 %2885
      %2887 = vrot.lane.b32.xlu0 %v2872, 27
      %v2888 = vpop.permute.xlu0 %2887
      %vm2889 = vcmask 220160
      %v2890 = vsel %vm2889, %v2874, %v2876
      %v2891 = vsel %vm2889, %v2876, %v2878
      %v2892 = vsel %vm2889, %v2878, %v2880
      %v2893 = vsel %vm2889, %v2880, %v2882
      %v2894 = vsel %vm2889, %v2882, %v2884
      %v2895 = vsel %vm2889, %v2884, %v2886
      %v2896 = vsel %vm2889, %v2886, %v2888
      %v2898 = vsel %vm376, %v2836, 0
      %v2901 = vsel %vm380, %v2890, 0
      %v2904 = vsel %vm380, %v2891, 0
      %v2907 = vsel %vm380, %v2892, 0
      %v2910 = vsel %vm380, %v2893, 0
      %v2913 = vsel %vm380, %v2894, 0
      %v2916 = vsel %vm380, %v2895, 0
      %v2919 = vsel %vm380, %v2896, 0
      %2921 = vmatprep.subr.bf16.mxu0 %v2904
      %2922 = vmatpush1.bf16.msra.mxu0 %v2901
      %2923 = vmatprep.subr.bf16.mxu0 0
      %2924 = vmatpush1.bf16.msra.mxu0 0
      %2925 = vmatprep.subr.bf16.mxu0 0
      %2926 = vmatpush1.bf16.msra.mxu0 0
      %2927 = vmatprep.subr.bf16.mxu0 0
      %2928 = vmatpush1.bf16.msra.mxu0 0
      %2929 = vmatprep.subr.bf16.mxu0 0
      %2930 = vmatpush1.bf16.msra.mxu0 0
      %2931 = vmatprep.subr.bf16.mxu0 0
      %2932 = vmatpush1.bf16.msra.mxu0 0
      %2933 = vmatprep.subr.bf16.mxu0 0
      %2934 = vmatpush1.bf16.msra.mxu0 0
      %2935 = vmatprep.subr.bf16.mxu0 0
      %2936 = vmatpush1.bf16.msra.mxu0 0
      %2937 = vmatprep.subr.bf16.mxu0 0
      %2938 = vmatpush1.bf16.msra.mxu0 0
      %2939 = vmatprep.subr.bf16.mxu0 0
      %2940 = vmatpush1.bf16.msra.mxu0 0
      %2941 = vmatprep.subr.bf16.mxu0 0
      %2942 = vmatpush1.bf16.msra.mxu0 0
      %2943 = vmatprep.subr.bf16.mxu0 0
      %2944 = vmatpush1.bf16.msra.mxu0 0
      %2945 = vmatprep.subr.bf16.mxu0 0
      %2946 = vmatpush1.bf16.msra.mxu0 0
      %2947 = vmatprep.subr.bf16.mxu0 0
      %2948 = vmatpush1.bf16.msra.mxu0 0
      %2949 = vmatprep.subr.bf16.mxu0 0
      %2950 = vmatpush1.bf16.msra.mxu0 0
      %2951 = vmatprep.subr.bf16.mxu0 0
      %2952 = vmatpush1.bf16.msra.mxu0 0
      %2953 = vmatprep.mubr.bf16.mxu0 0
      %2954 = vmatmul.mubr.bf16.gmra.mrb[0].mxu0 %v2898
      %v2955 = vpop.f32.mrb[0].mxu0
      %v2956 = vadd.f32 0.0, %v2955
      %v2957 = vpop.f32.mrb[0].mxu0
      %v2958 = vadd.f32 0.0, %v2957
      %v2959 = vpop.f32.mrb[0].mxu0
      %v2960 = vpop.f32.mrb[0].mxu0
      %2961 = vdwg.mxu0
      %2962 = vmatprep.subr.bf16.mxu0 %v2910
      %2963 = vmatpush1.bf16.msra.mxu0 %v2907
      %2964 = vmatprep.subr.bf16.mxu0 0
      %2965 = vmatpush1.bf16.msra.mxu0 0
      %2966 = vmatprep.subr.bf16.mxu0 0
      %2967 = vmatpush1.bf16.msra.mxu0 0
      %2968 = vmatprep.subr.bf16.mxu0 0
      %2969 = vmatpush1.bf16.msra.mxu0 0
      %2970 = vmatprep.subr.bf16.mxu0 0
      %2971 = vmatpush1.bf16.msra.mxu0 0
      %2972 = vmatprep.subr.bf16.mxu0 0
      %2973 = vmatpush1.bf16.msra.mxu0 0
      %2974 = vmatprep.subr.bf16.mxu0 0
      %2975 = vmatpush1.bf16.msra.mxu0 0
      %2976 = vmatprep.subr.bf16.mxu0 0
      %2977 = vmatpush1.bf16.msra.mxu0 0
      %2978 = vmatprep.subr.bf16.mxu0 0
      %2979 = vmatpush1.bf16.msra.mxu0 0
      %2980 = vmatprep.subr.bf16.mxu0 0
      %2981 = vmatpush1.bf16.msra.mxu0 0
      %2982 = vmatprep.subr.bf16.mxu0 0
      %2983 = vmatpush1.bf16.msra.mxu0 0
      %2984 = vmatprep.subr.bf16.mxu0 0
      %2985 = vmatpush1.bf16.msra.mxu0 0
      %2986 = vmatprep.subr.bf16.mxu0 0
      %2987 = vmatpush1.bf16.msra.mxu0 0
      %2988 = vmatprep.subr.bf16.mxu0 0
      %2989 = vmatpush1.bf16.msra.mxu0 0
      %2990 = vmatprep.subr.bf16.mxu0 0
      %2991 = vmatpush1.bf16.msra.mxu0 0
      %2992 = vmatprep.subr.bf16.mxu0 0
      %2993 = vmatpush1.bf16.msra.mxu0 0
      %2994 = vmatprep.mubr.bf16.mxu0 0
      %2995 = vmatmul.mubr.bf16.gmra.mrb[0].mxu0 %v2898
      %v2996 = vpop.f32.mrb[0].mxu0
      %v2997 = vadd.f32 0.0, %v2996
      %v2998 = vpop.f32.mrb[0].mxu0
      %v2999 = vadd.f32 0.0, %v2998
      %v3000 = vpop.f32.mrb[0].mxu0
      %v3001 = vpop.f32.mrb[0].mxu0
      %3002 = vdwg.mxu0
      %3003 = vmatprep.subr.bf16.mxu0 %v2916
      %3004 = vmatpush1.bf16.msra.mxu0 %v2913
      %3005 = vmatprep.subr.bf16.mxu0 0
      %3006 = vmatpush1.bf16.msra.mxu0 0
      %3007 = vmatprep.subr.bf16.mxu0 0
      %3008 = vmatpush1.bf16.msra.mxu0 0
      %3009 = vmatprep.subr.bf16.mxu0 0
      %3010 = vmatpush1.bf16.msra.mxu0 0
      %3011 = vmatprep.subr.bf16.mxu0 0
      %3012 = vmatpush1.bf16.msra.mxu0 0
      %3013 = vmatprep.subr.bf16.mxu0 0
      %3014 = vmatpush1.bf16.msra.mxu0 0
      %3015 = vmatprep.subr.bf16.mxu0 0
      %3016 = vmatpush1.bf16.msra.mxu0 0
      %3017 = vmatprep.subr.bf16.mxu0 0
      %3018 = vmatpush1.bf16.msra.mxu0 0
      %3019 = vmatprep.subr.bf16.mxu0 0
      %3020 = vmatpush1.bf16.msra.mxu0 0
      %3021 = vmatprep.subr.bf16.mxu0 0
      %3022 = vmatpush1.bf16.msra.mxu0 0
      %3023 = vmatprep.subr.bf16.mxu0 0
      %3024 = vmatpush1.bf16.msra.mxu0 0
      %3025 = vmatprep.subr.bf16.mxu0 0
      %3026 = vmatpush1.bf16.msra.mxu0 0
      %3027 = vmatprep.subr.bf16.mxu0 0
      %3028 = vmatpush1.bf16.msra.mxu0 0
      %3029 = vmatprep.subr.bf16.mxu0 0
      %3030 = vmatpush1.bf16.msra.mxu0 0
      %3031 = vmatprep.subr.bf16.mxu0 0
      %3032 = vmatpush1.bf16.msra.mxu0 0
      %3033 = vmatprep.subr.bf16.mxu0 0
      %3034 = vmatpush1.bf16.msra.mxu0 0
      %3035 = vmatprep.mubr.bf16.mxu0 0
      %3036 = vmatmul.mubr.bf16.gmra.mrb[0].mxu0 %v2898
      %v3037 = vpop.f32.mrb[0].mxu0
      %v3038 = vadd.f32 0.0, %v3037
      %v3039 = vpop.f32.mrb[0].mxu0
      %v3040 = vadd.f32 0.0, %v3039
      %v3041 = vpop.f32.mrb[0].mxu0
      %v3042 = vpop.f32.mrb[0].mxu0
      %3043 = vdwg.mxu0
      %3044 = vmatprep.subr.bf16.mxu0 0
      %3045 = vmatpush1.bf16.msra.mxu0 %v2919
      %3046 = vmatprep.subr.bf16.mxu0 0
      %3047 = vmatpush1.bf16.msra.mxu0 0
      %3048 = vmatprep.subr.bf16.mxu0 0
      %3049 = vmatpush1.bf16.msra.mxu0 0
      %3050 = vmatprep.subr.bf16.mxu0 0
      %3051 = vmatpush1.bf16.msra.mxu0 0
      %3052 = vmatprep.subr.bf16.mxu0 0
      %3053 = vmatpush1.bf16.msra.mxu0 0
      %3054 = vmatprep.subr.bf16.mxu0 0
      %3055 = vmatpush1.bf16.msra.mxu0 0
      %3056 = vmatprep.subr.bf16.mxu0 0
      %3057 = vmatpush1.bf16.msra.mxu0 0
      %3058 = vmatprep.subr.bf16.mxu0 0
      %3059 = vmatpush1.bf16.msra.mxu0 0
      %3060 = vmatprep.subr.bf16.mxu0 0
      %3061 = vmatpush1.bf16.msra.mxu0 0
      %3062 = vmatprep.subr.bf16.mxu0 0
      %3063 = vmatpush1.bf16.msra.mxu0 0
      %3064 = vmatprep.subr.bf16.mxu0 0
      %3065 = vmatpush1.bf16.msra.mxu0 0
      %3066 = vmatprep.subr.bf16.mxu0 0
      %3067 = vmatpush1.bf16.msra.mxu0 0
      %3068 = vmatprep.subr.bf16.mxu0 0
      %3069 = vmatpush1.bf16.msra.mxu0 0
      %3070 = vmatprep.subr.bf16.mxu0 0
      %3071 = vmatpush1.bf16.msra.mxu0 0
      %3072 = vmatprep.subr.bf16.mxu0 0
      %3073 = vmatpush1.bf16.msra.mxu0 0
      %3074 = vmatprep.subr.bf16.mxu0 0
      %3075 = vmatpush1.bf16.msra.mxu0 0
      %3076 = vmatprep.mubr.bf16.mxu0 0
      %3077 = vmatmul.mubr.bf16.gmra.mrb[0].mxu0 %v2898
      %v3078 = vpop.f32.mrb[0].mxu0
      %v3079 = vadd.f32 0.0, %v3078
      %v3080 = vpop.f32.mrb[0].mxu0
      %v3081 = vpop.f32.mrb[0].mxu0
      %v3082 = vpop.f32.mrb[0].mxu0
      %3083 = vdwg.mxu0
      %v3084 = vadd.f32 %v2826, %v2956
      %v3085 = vadd.f32 %v2827, %v2958
      %v3086 = vadd.f32 %v2828, %v2997
      %v3087 = vadd.f32 %v2829, %v2999
      %v3088 = vadd.f32 %v2830, %v3038
      %v3089 = vadd.f32 %v2831, %v3040
      %v3090 = vadd.f32 %v2832, %v3079
      %v3091 = vld [vmem:[%s278] sm:$0xff]
      %v3092 = vld [vmem:[%s278 + $0x8] sm:$0xff]
      %s3093 = scalar_lea.vmem %s1, 44
      %v3094 = vld [vmem:[%s3093] sm:$0xf]
      %v3097 = vcombine.high %v3091, %v3091
      %v3099 = vunpack.c.l.s4 1983009808
      %v3100 = vunpack.c.0.s8 %v3099
      %v3101 = vlaneseq
      %v3102 = vshrl.u32 %v3101, 7
      %v3103 = vsub.s32 %v3100, %v3102
      %v3104 = vrot.slane %v3091, %v3103
      %v3106 = vunpack.c.l.s4 1983009808
      %v3107 = vunpack.c.0.s8 %v3106
      %v3108 = vlaneseq
      %v3109 = vshrl.u32 %v3108, 7
      %v3110 = vsub.s32 %v3107, %v3109
      %v3111 = vrot.slane %v3097, %v3110
      %v3112 = vcombine.high %v3104, %v3104
      %v3113 = vcombine.high %v3111, %v3111
      %v3114 = vcombine.high %v3092, %v3092
      %v3116 = vunpack.c.l.s4 1983009808
      %v3117 = vunpack.c.0.s8 %v3116
      %v3118 = vlaneseq
      %v3119 = vshrl.u32 %v3118, 7
      %v3120 = vsub.s32 %v3117, %v3119
      %v3121 = vrot.slane %v3092, %v3120
      %v3123 = vunpack.c.l.s4 1983009808
      %v3124 = vunpack.c.0.s8 %v3123
      %v3125 = vlaneseq
      %v3126 = vshrl.u32 %v3125, 7
      %v3127 = vsub.s32 %v3124, %v3126
      %v3128 = vrot.slane %v3114, %v3127
      %v3129 = vcombine.high %v3121, %v3121
      %v3130 = vcombine.high %v3128, %v3128
      %3131 = vrot.lane.b32.xlu0 %v3104, 26
      %v3132 = vpop.permute.xlu0 %3131
      %3133 = vrot.lane.b32.xlu0 %v3112, 26
      %v3134 = vpop.permute.xlu0 %3133
      %3135 = vrot.lane.b32.xlu0 %v3111, 26
      %v3136 = vpop.permute.xlu0 %3135
      %3137 = vrot.lane.b32.xlu0 %v3113, 26
      %v3138 = vpop.permute.xlu0 %3137
      %3139 = vrot.lane.b32.xlu0 %v3121, 26
      %v3140 = vpop.permute.xlu0 %3139
      %3141 = vrot.lane.b32.xlu0 %v3129, 26
      %v3142 = vpop.permute.xlu0 %3141
      %3143 = vrot.lane.b32.xlu0 %v3128, 26
      %v3144 = vpop.permute.xlu0 %3143
      %3145 = vrot.lane.b32.xlu0 %v3130, 26
      %v3146 = vpop.permute.xlu0 %3145
      %vm3147 = vcmask 211968
      %v3148 = vsel %vm3147, %v3132, %v3134
      %v3149 = vsel %vm3147, %v3134, %v3136
      %v3150 = vsel %vm3147, %v3136, %v3138
      %v3151 = vsel %vm3147, %v3138, %v3140
      %v3152 = vsel %vm3147, %v3140, %v3142
      %v3153 = vsel %vm3147, %v3142, %v3144
      %v3154 = vsel %vm3147, %v3144, %v3146
      %v3156 = vsel %vm376, %v3094, 0
      %v3159 = vsel %vm380, %v3148, 0
      %v3162 = vsel %vm380, %v3149, 0
      %v3165 = vsel %vm380, %v3150, 0
      %v3168 = vsel %vm380, %v3151, 0
      %v3171 = vsel %vm380, %v3152, 0
      %v3174 = vsel %vm380, %v3153, 0
      %v3177 = vsel %vm380, %v3154, 0
      %3179 = vmatprep.subr.bf16.mxu0 %v3162
      %3180 = vmatpush1.bf16.msra.mxu0 %v3159
      %3181 = vmatprep.subr.bf16.mxu0 0
      %3182 = vmatpush1.bf16.msra.mxu0 0
      %3183 = vmatprep.subr.bf16.mxu0 0
      %3184 = vmatpush1.bf16.msra.mxu0 0
      %3185 = vmatprep.subr.bf16.mxu0 0
      %3186 = vmatpush1.bf16.msra.mxu0 0
      %3187 = vmatprep.subr.bf16.mxu0 0
      %3188 = vmatpush1.bf16.msra.mxu0 0
      %3189 = vmatprep.subr.bf16.mxu0 0
      %3190 = vmatpush1.bf16.msra.mxu0 0
      %3191 = vmatprep.subr.bf16.mxu0 0
      %3192 = vmatpush1.bf16.msra.mxu0 0
      %3193 = vmatprep.subr.bf16.mxu0 0
      %3194 = vmatpush1.bf16.msra.mxu0 0
      %3195 = vmatprep.subr.bf16.mxu0 0
      %3196 = vmatpush1.bf16.msra.mxu0 0
      %3197 = vmatprep.subr.bf16.mxu0 0
      %3198 = vmatpush1.bf16.msra.mxu0 0
      %3199 = vmatprep.subr.bf16.mxu0 0
      %3200 = vmatpush1.bf16.msra.mxu0 0
      %3201 = vmatprep.subr.bf16.mxu0 0
      %3202 = vmatpush1.bf16.msra.mxu0 0
      %3203 = vmatprep.subr.bf16.mxu0 0
      %3204 = vmatpush1.bf16.msra.mxu0 0
      %3205 = vmatprep.subr.bf16.mxu0 0
      %3206 = vmatpush1.bf16.msra.mxu0 0
      %3207 = vmatprep.subr.bf16.mxu0 0
      %3208 = vmatpush1.bf16.msra.mxu0 0
      %3209 = vmatprep.subr.bf16.mxu0 0
      %3210 = vmatpush1.bf16.msra.mxu0 0
      %3211 = vmatprep.mubr.bf16.mxu0 0
      %3212 = vmatmul.mubr.bf16.gmra.mrb[0].mxu0 %v3156
      %v3213 = vpop.f32.mrb[0].mxu0
      %v3214 = vadd.f32 0.0, %v3213
      %v3215 = vpop.f32.mrb[0].mxu0
      %v3216 = vadd.f32 0.0, %v3215
      %v3217 = vpop.f32.mrb[0].mxu0
      %v3218 = vpop.f32.mrb[0].mxu0
      %3219 = vdwg.mxu0
      %3220 = vmatprep.subr.bf16.mxu0 %v3168
      %3221 = vmatpush1.bf16.msra.mxu0 %v3165
      %3222 = vmatprep.subr.bf16.mxu0 0
      %3223 = vmatpush1.bf16.msra.mxu0 0
      %3224 = vmatprep.subr.bf16.mxu0 0
      %3225 = vmatpush1.bf16.msra.mxu0 0
      %3226 = vmatprep.subr.bf16.mxu0 0
      %3227 = vmatpush1.bf16.msra.mxu0 0
      %3228 = vmatprep.subr.bf16.mxu0 0
      %3229 = vmatpush1.bf16.msra.mxu0 0
      %3230 = vmatprep.subr.bf16.mxu0 0
      %3231 = vmatpush1.bf16.msra.mxu0 0
      %3232 = vmatprep.subr.bf16.mxu0 0
      %3233 = vmatpush1.bf16.msra.mxu0 0
      %3234 = vmatprep.subr.bf16.mxu0 0
      %3235 = vmatpush1.bf16.msra.mxu0 0
      %3236 = vmatprep.subr.bf16.mxu0 0
      %3237 = vmatpush1.bf16.msra.mxu0 0
      %3238 = vmatprep.subr.bf16.mxu0 0
      %3239 = vmatpush1.bf16.msra.mxu0 0
      %3240 = vmatprep.subr.bf16.mxu0 0
      %3241 = vmatpush1.bf16.msra.mxu0 0
      %3242 = vmatprep.subr.bf16.mxu0 0
      %3243 = vmatpush1.bf16.msra.mxu0 0
      %3244 = vmatprep.subr.bf16.mxu0 0
      %3245 = vmatpush1.bf16.msra.mxu0 0
      %3246 = vmatprep.subr.bf16.mxu0 0
      %3247 = vmatpush1.bf16.msra.mxu0 0
      %3248 = vmatprep.subr.bf16.mxu0 0
      %3249 = vmatpush1.bf16.msra.mxu0 0
      %3250 = vmatprep.subr.bf16.mxu0 0
      %3251 = vmatpush1.bf16.msra.mxu0 0
      %3252 = vmatprep.mubr.bf16.mxu0 0
      %3253 = vmatmul.mubr.bf16.gmra.mrb[0].mxu0 %v3156
      %v3254 = vpop.f32.mrb[0].mxu0
      %v3255 = vadd.f32 0.0, %v3254
      %v3256 = vpop.f32.mrb[0].mxu0
      %v3257 = vadd.f32 0.0, %v3256
      %v3258 = vpop.f32.mrb[0].mxu0
      %v3259 = vpop.f32.mrb[0].mxu0
      %3260 = vdwg.mxu0
      %3261 = vmatprep.subr.bf16.mxu0 %v3174
      %3262 = vmatpush1.bf16.msra.mxu0 %v3171
      %3263 = vmatprep.subr.bf16.mxu0 0
      %3264 = vmatpush1.bf16.msra.mxu0 0
      %3265 = vmatprep.subr.bf16.mxu0 0
      %3266 = vmatpush1.bf16.msra.mxu0 0
      %3267 = vmatprep.subr.bf16.mxu0 0
      %3268 = vmatpush1.bf16.msra.mxu0 0
      %3269 = vmatprep.subr.bf16.mxu0 0
      %3270 = vmatpush1.bf16.msra.mxu0 0
      %3271 = vmatprep.subr.bf16.mxu0 0
      %3272 = vmatpush1.bf16.msra.mxu0 0
      %3273 = vmatprep.subr.bf16.mxu0 0
      %3274 = vmatpush1.bf16.msra.mxu0 0
      %3275 = vmatprep.subr.bf16.mxu0 0
      %3276 = vmatpush1.bf16.msra.mxu0 0
      %3277 = vmatprep.subr.bf16.mxu0 0
      %3278 = vmatpush1.bf16.msra.mxu0 0
      %3279 = vmatprep.subr.bf16.mxu0 0
      %3280 = vmatpush1.bf16.msra.mxu0 0
      %3281 = vmatprep.subr.bf16.mxu0 0
      %3282 = vmatpush1.bf16.msra.mxu0 0
      %3283 = vmatprep.subr.bf16.mxu0 0
      %3284 = vmatpush1.bf16.msra.mxu0 0
      %3285 = vmatprep.subr.bf16.mxu0 0
      %3286 = vmatpush1.bf16.msra.mxu0 0
      %3287 = vmatprep.subr.bf16.mxu0 0
      %3288 = vmatpush1.bf16.msra.mxu0 0
      %3289 = vmatprep.subr.bf16.mxu0 0
      %3290 = vmatpush1.bf16.msra.mxu0 0
      %3291 = vmatprep.subr.bf16.mxu0 0
      %3292 = vmatpush1.bf16.msra.mxu0 0
      %3293 = vmatprep.mubr.bf16.mxu0 0
      %3294 = vmatmul.mubr.bf16.gmra.mrb[0].mxu0 %v3156
      %v3295 = vpop.f32.mrb[0].mxu0
      %v3296 = vadd.f32 0.0, %v3295
      %v3297 = vpop.f32.mrb[0].mxu0
      %v3298 = vadd.f32 0.0, %v3297
      %v3299 = vpop.f32.mrb[0].mxu0
      %v3300 = vpop.f32.mrb[0].mxu0
      %3301 = vdwg.mxu0
      %3302 = vmatprep.subr.bf16.mxu0 0
      %3303 = vmatpush1.bf16.msra.mxu0 %v3177
      %3304 = vmatprep.subr.bf16.mxu0 0
      %3305 = vmatpush1.bf16.msra.mxu0 0
      %3306 = vmatprep.subr.bf16.mxu0 0
      %3307 = vmatpush1.bf16.msra.mxu0 0
      %3308 = vmatprep.subr.bf16.mxu0 0
      %3309 = vmatpush1.bf16.msra.mxu0 0
      %3310 = vmatprep.subr.bf16.mxu0 0
      %3311 = vmatpush1.bf16.msra.mxu0 0
      %3312 = vmatprep.subr.bf16.mxu0 0
      %3313 = vmatpush1.bf16.msra.mxu0 0
      %3314 = vmatprep.subr.bf16.mxu0 0
      %3315 = vmatpush1.bf16.msra.mxu0 0
      %3316 = vmatprep.subr.bf16.mxu0 0
      %3317 = vmatpush1.bf16.msra.mxu0 0
      %3318 = vmatprep.subr.bf16.mxu0 0
      %3319 = vmatpush1.bf16.msra.mxu0 0
      %3320 = vmatprep.subr.bf16.mxu0 0
      %3321 = vmatpush1.bf16.msra.mxu0 0
      %3322 = vmatprep.subr.bf16.mxu0 0
      %3323 = vmatpush1.bf16.msra.mxu0 0
      %3324 = vmatprep.subr.bf16.mxu0 0
      %3325 = vmatpush1.bf16.msra.mxu0 0
      %3326 = vmatprep.subr.bf16.mxu0 0
      %3327 = vmatpush1.bf16.msra.mxu0 0
      %3328 = vmatprep.subr.bf16.mxu0 0
      %3329 = vmatpush1.bf16.msra.mxu0 0
      %3330 = vmatprep.subr.bf16.mxu0 0
      %3331 = vmatpush1.bf16.msra.mxu0 0
      %3332 = vmatprep.subr.bf16.mxu0 0
      %3333 = vmatpush1.bf16.msra.mxu0 0
      %3334 = vmatprep.mubr.bf16.mxu0 0
      %3335 = vmatmul.mubr.bf16.gmra.mrb[0].mxu0 %v3156
      %v3336 = vpop.f32.mrb[0].mxu0
      %v3337 = vadd.f32 0.0, %v3336
      %v3338 = vpop.f32.mrb[0].mxu0
      %v3339 = vpop.f32.mrb[0].mxu0
      %v3340 = vpop.f32.mrb[0].mxu0
      %3341 = vdwg.mxu0
      %v3342 = vadd.f32 %v3084, %v3214
      %v3343 = vadd.f32 %v3085, %v3216
      %v3344 = vadd.f32 %v3086, %v3255
      %v3345 = vadd.f32 %v3087, %v3257
      %v3346 = vadd.f32 %v3088, %v3296
      %v3347 = vadd.f32 %v3089, %v3298
      %v3348 = vadd.f32 %v3090, %v3337
      %v3349 = vld [vmem:[%s278] sm:$0xff]
      %v3350 = vld [vmem:[%s278 + $0x8] sm:$0xff]
      %s3351 = scalar_lea.vmem %s1, 48
      %v3352 = vld [vmem:[%s3351] sm:$0xf]
      %v3355 = vcombine.high %v3349, %v3349
      %v3357 = vunpack.c.l.s4 1983009808
      %v3358 = vunpack.c.0.s8 %v3357
      %v3359 = vlaneseq
      %v3360 = vshrl.u32 %v3359, 7
      %v3361 = vsub.s32 %v3358, %v3360
      %v3362 = vrot.slane %v3349, %v3361
      %v3364 = vunpack.c.l.s4 1983009808
      %v3365 = vunpack.c.0.s8 %v3364
      %v3366 = vlaneseq
      %v3367 = vshrl.u32 %v3366, 7
      %v3368 = vsub.s32 %v3365, %v3367
      %v3369 = vrot.slane %v3355, %v3368
      %v3370 = vcombine.high %v3362, %v3362
      %v3371 = vcombine.high %v3369, %v3369
      %v3372 = vcombine.high %v3350, %v3350
      %v3374 = vunpack.c.l.s4 1983009808
      %v3375 = vunpack.c.0.s8 %v3374
      %v3376 = vlaneseq
      %v3377 = vshrl.u32 %v3376, 7
      %v3378 = vsub.s32 %v3375, %v3377
      %v3379 = vrot.slane %v3350, %v3378
      %v3381 = vunpack.c.l.s4 1983009808
      %v3382 = vunpack.c.0.s8 %v3381
      %v3383 = vlaneseq
      %v3384 = vshrl.u32 %v3383, 7
      %v3385 = vsub.s32 %v3382, %v3384
      %v3386 = vrot.slane %v3372, %v3385
      %v3387 = vcombine.high %v3379, %v3379
      %v3388 = vcombine.high %v3386, %v3386
      %3389 = vrot.lane.b32.xlu0 %v3362, 18
      %v3390 = vpop.permute.xlu0 %3389
      %3391 = vrot.lane.b32.xlu0 %v3370, 18
      %v3392 = vpop.permute.xlu0 %3391
      %3393 = vrot.lane.b32.xlu0 %v3369, 18
      %v3394 = vpop.permute.xlu0 %3393
      %3395 = vrot.lane.b32.xlu0 %v3371, 18
      %v3396 = vpop.permute.xlu0 %3395
      %3397 = vrot.lane.b32.xlu0 %v3379, 18
      %v3398 = vpop.permute.xlu0 %3397
      %3399 = vrot.lane.b32.xlu0 %v3387, 18
      %v3400 = vpop.permute.xlu0 %3399
      %3401 = vrot.lane.b32.xlu0 %v3386, 18
      %v3402 = vpop.permute.xlu0 %3401
      %3403 = vrot.lane.b32.xlu0 %v3388, 18
      %v3404 = vpop.permute.xlu0 %3403
      %vm3405 = vcmask 146432
      %v3406 = vsel %vm3405, %v3390, %v3392
      %v3407 = vsel %vm3405, %v3392, %v3394
      %v3408 = vsel %vm3405, %v3394, %v3396
      %v3409 = vsel %vm3405, %v3396, %v3398
      %v3410 = vsel %vm3405, %v3398, %v3400
      %v3411 = vsel %vm3405, %v3400, %v3402
      %v3412 = vsel %vm3405, %v3402, %v3404
      %v3414 = vsel %vm376, %v3352, 0
      %v3417 = vsel %vm380, %v3406, 0
      %v3420 = vsel %vm380, %v3407, 0
      %v3423 = vsel %vm380, %v3408, 0
      %v3426 = vsel %vm380, %v3409, 0
      %v3429 = vsel %vm380, %v3410, 0
      %v3432 = vsel %vm380, %v3411, 0
      %v3435 = vsel %vm380, %v3412, 0
      %3437 = vmatprep.subr.bf16.mxu0 %v3420
      %3438 = vmatpush1.bf16.msra.mxu0 %v3417
      %3439 = vmatprep.subr.bf16.mxu0 0
      %3440 = vmatpush1.bf16.msra.mxu0 0
      %3441 = vmatprep.subr.bf16.mxu0 0
      %3442 = vmatpush1.bf16.msra.mxu0 0
      %3443 = vmatprep.subr.bf16.mxu0 0
      %3444 = vmatpush1.bf16.msra.mxu0 0
      %3445 = vmatprep.subr.bf16.mxu0 0
      %3446 = vmatpush1.bf16.msra.mxu0 0
      %3447 = vmatprep.subr.bf16.mxu0 0
      %3448 = vmatpush1.bf16.msra.mxu0 0
      %3449 = vmatprep.subr.bf16.mxu0 0
      %3450 = vmatpush1.bf16.msra.mxu0 0
      %3451 = vmatprep.subr.bf16.mxu0 0
      %3452 = vmatpush1.bf16.msra.mxu0 0
      %3453 = vmatprep.subr.bf16.mxu0 0
      %3454 = vmatpush1.bf16.msra.mxu0 0
      %3455 = vmatprep.subr.bf16.mxu0 0
      %3456 = vmatpush1.bf16.msra.mxu0 0
      %3457 = vmatprep.subr.bf16.mxu0 0
      %3458 = vmatpush1.bf16.msra.mxu0 0
      %3459 = vmatprep.subr.bf16.mxu0 0
      %3460 = vmatpush1.bf16.msra.mxu0 0
      %3461 = vmatprep.subr.bf16.mxu0 0
      %3462 = vmatpush1.bf16.msra.mxu0 0
      %3463 = vmatprep.subr.bf16.mxu0 0
      %3464 = vmatpush1.bf16.msra.mxu0 0
      %3465 = vmatprep.subr.bf16.mxu0 0
      %3466 = vmatpush1.bf16.msra.mxu0 0
      %3467 = vmatprep.subr.bf16.mxu0 0
      %3468 = vmatpush1.bf16.msra.mxu0 0
      %3469 = vmatprep.mubr.bf16.mxu0 0
      %3470 = vmatmul.mubr.bf16.gmra.mrb[0].mxu0 %v3414
      %v3471 = vpop.f32.mrb[0].mxu0
      %v3472 = vadd.f32 0.0, %v3471
      %v3473 = vpop.f32.mrb[0].mxu0
      %v3474 = vadd.f32 0.0, %v3473
      %v3475 = vpop.f32.mrb[0].mxu0
      %v3476 = vpop.f32.mrb[0].mxu0
      %3477 = vdwg.mxu0
      %3478 = vmatprep.subr.bf16.mxu0 %v3426
      %3479 = vmatpush1.bf16.msra.mxu0 %v3423
      %3480 = vmatprep.subr.bf16.mxu0 0
      %3481 = vmatpush1.bf16.msra.mxu0 0
      %3482 = vmatprep.subr.bf16.mxu0 0
      %3483 = vmatpush1.bf16.msra.mxu0 0
      %3484 = vmatprep.subr.bf16.mxu0 0
      %3485 = vmatpush1.bf16.msra.mxu0 0
      %3486 = vmatprep.subr.bf16.mxu0 0
      %3487 = vmatpush1.bf16.msra.mxu0 0
      %3488 = vmatprep.subr.bf16.mxu0 0
      %3489 = vmatpush1.bf16.msra.mxu0 0
      %3490 = vmatprep.subr.bf16.mxu0 0
      %3491 = vmatpush1.bf16.msra.mxu0 0
      %3492 = vmatprep.subr.bf16.mxu0 0
      %3493 = vmatpush1.bf16.msra.mxu0 0
      %3494 = vmatprep.subr.bf16.mxu0 0
      %3495 = vmatpush1.bf16.msra.mxu0 0
      %3496 = vmatprep.subr.bf16.mxu0 0
      %3497 = vmatpush1.bf16.msra.mxu0 0
      %3498 = vmatprep.subr.bf16.mxu0 0
      %3499 = vmatpush1.bf16.msra.mxu0 0
      %3500 = vmatprep.subr.bf16.mxu0 0
      %3501 = vmatpush1.bf16.msra.mxu0 0
      %3502 = vmatprep.subr.bf16.mxu0 0
      %3503 = vmatpush1.bf16.msra.mxu0 0
      %3504 = vmatprep.subr.bf16.mxu0 0
      %3505 = vmatpush1.bf16.msra.mxu0 0
      %3506 = vmatprep.subr.bf16.mxu0 0
      %3507 = vmatpush1.bf16.msra.mxu0 0
      %3508 = vmatprep.subr.bf16.mxu0 0
      %3509 = vmatpush1.bf16.msra.mxu0 0
      %3510 = vmatprep.mubr.bf16.mxu0 0
      %3511 = vmatmul.mubr.bf16.gmra.mrb[0].mxu0 %v3414
      %v3512 = vpop.f32.mrb[0].mxu0
      %v3513 = vadd.f32 0.0, %v3512
      %v3514 = vpop.f32.mrb[0].mxu0
      %v3515 = vadd.f32 0.0, %v3514
      %v3516 = vpop.f32.mrb[0].mxu0
      %v3517 = vpop.f32.mrb[0].mxu0
      %3518 = vdwg.mxu0
      %3519 = vmatprep.subr.bf16.mxu0 %v3432
      %3520 = vmatpush1.bf16.msra.mxu0 %v3429
      %3521 = vmatprep.subr.bf16.mxu0 0
      %3522 = vmatpush1.bf16.msra.mxu0 0
      %3523 = vmatprep.subr.bf16.mxu0 0
      %3524 = vmatpush1.bf16.msra.mxu0 0
      %3525 = vmatprep.subr.bf16.mxu0 0
      %3526 = vmatpush1.bf16.msra.mxu0 0
      %3527 = vmatprep.subr.bf16.mxu0 0
      %3528 = vmatpush1.bf16.msra.mxu0 0
      %3529 = vmatprep.subr.bf16.mxu0 0
      %3530 = vmatpush1.bf16.msra.mxu0 0
      %3531 = vmatprep.subr.bf16.mxu0 0
      %3532 = vmatpush1.bf16.msra.mxu0 0
      %3533 = vmatprep.subr.bf16.mxu0 0
      %3534 = vmatpush1.bf16.msra.mxu0 0
      %3535 = vmatprep.subr.bf16.mxu0 0
      %3536 = vmatpush1.bf16.msra.mxu0 0
      %3537 = vmatprep.subr.bf16.mxu0 0
      %3538 = vmatpush1.bf16.msra.mxu0 0
      %3539 = vmatprep.subr.bf16.mxu0 0
      %3540 = vmatpush1.bf16.msra.mxu0 0
      %3541 = vmatprep.subr.bf16.mxu0 0
      %3542 = vmatpush1.bf16.msra.mxu0 0
      %3543 = vmatprep.subr.bf16.mxu0 0
      %3544 = vmatpush1.bf16.msra.mxu0 0
      %3545 = vmatprep.subr.bf16.mxu0 0
      %3546 = vmatpush1.bf16.msra.mxu0 0
      %3547 = vmatprep.subr.bf16.mxu0 0
      %3548 = vmatpush1.bf16.msra.mxu0 0
      %3549 = vmatprep.subr.bf16.mxu0 0
      %3550 = vmatpush1.bf16.msra.mxu0 0
      %3551 = vmatprep.mubr.bf16.mxu0 0
      %3552 = vmatmul.mubr.bf16.gmra.mrb[0].mxu0 %v3414
      %v3553 = vpop.f32.mrb[0].mxu0
      %v3554 = vadd.f32 0.0, %v3553
      %v3555 = vpop.f32.mrb[0].mxu0
      %v3556 = vadd.f32 0.0, %v3555
      %v3557 = vpop.f32.mrb[0].mxu0
      %v3558 = vpop.f32.mrb[0].mxu0
      %3559 = vdwg.mxu0
      %3560 = vmatprep.subr.bf16.mxu0 0
      %3561 = vmatpush1.bf16.msra.mxu0 %v3435
      %3562 = vmatprep.subr.bf16.mxu0 0
      %3563 = vmatpush1.bf16.msra.mxu0 0
      %3564 = vmatprep.subr.bf16.mxu0 0
      %3565 = vmatpush1.bf16.msra.mxu0 0
      %3566 = vmatprep.subr.bf16.mxu0 0
      %3567 = vmatpush1.bf16.msra.mxu0 0
      %3568 = vmatprep.subr.bf16.mxu0 0
      %3569 = vmatpush1.bf16.msra.mxu0 0
      %3570 = vmatprep.subr.bf16.mxu0 0
      %3571 = vmatpush1.bf16.msra.mxu0 0
      %3572 = vmatprep.subr.bf16.mxu0 0
      %3573 = vmatpush1.bf16.msra.mxu0 0
      %3574 = vmatprep.subr.bf16.mxu0 0
      %3575 = vmatpush1.bf16.msra.mxu0 0
      %3576 = vmatprep.subr.bf16.mxu0 0
      %3577 = vmatpush1.bf16.msra.mxu0 0
      %3578 = vmatprep.subr.bf16.mxu0 0
      %3579 = vmatpush1.bf16.msra.mxu0 0
      %3580 = vmatprep.subr.bf16.mxu0 0
      %3581 = vmatpush1.bf16.msra.mxu0 0
      %3582 = vmatprep.subr.bf16.mxu0 0
      %3583 = vmatpush1.bf16.msra.mxu0 0
      %3584 = vmatprep.subr.bf16.mxu0 0
      %3585 = vmatpush1.bf16.msra.mxu0 0
      %3586 = vmatprep.subr.bf16.mxu0 0
      %3587 = vmatpush1.bf16.msra.mxu0 0
      %3588 = vmatprep.subr.bf16.mxu0 0
      %3589 = vmatpush1.bf16.msra.mxu0 0
      %3590 = vmatprep.subr.bf16.mxu0 0
      %3591 = vmatpush1.bf16.msra.mxu0 0
      %3592 = vmatprep.mubr.bf16.mxu0 0
      %3593 = vmatmul.mubr.bf16.gmra.mrb[0].mxu0 %v3414
      %v3594 = vpop.f32.mrb[0].mxu0
      %v3595 = vadd.f32 0.0, %v3594
      %v3596 = vpop.f32.mrb[0].mxu0
      %v3597 = vpop.f32.mrb[0].mxu0
      %v3598 = vpop.f32.mrb[0].mxu0
      %3599 = vdwg.mxu0
      %v3600 = vadd.f32 %v3342, %v3472
      %v3601 = vadd.f32 %v3343, %v3474
      %v3602 = vadd.f32 %v3344, %v3513
      %v3603 = vadd.f32 %v3345, %v3515
      %v3604 = vadd.f32 %v3346, %v3554
      %v3605 = vadd.f32 %v3347, %v3556
      %v3606 = vadd.f32 %v3348, %v3595
      %v3607 = vld [vmem:[%s278] sm:$0xff]
      %v3608 = vld [vmem:[%s278 + $0x8] sm:$0xff]
      %s3609 = scalar_lea.vmem %s1, 52
      %v3610 = vld [vmem:[%s3609] sm:$0xf]
      %v3613 = vcombine.high %v3607, %v3607
      %v3615 = vunpack.c.l.s4 1983009808
      %v3616 = vunpack.c.0.s8 %v3615
      %v3617 = vlaneseq
      %v3618 = vshrl.u32 %v3617, 7
      %v3619 = vsub.s32 %v3616, %v3618
      %v3620 = vrot.slane %v3607, %v3619
      %v3622 = vunpack.c.l.s4 1983009808
      %v3623 = vunpack.c.0.s8 %v3622
      %v3624 = vlaneseq
      %v3625 = vshrl.u32 %v3624, 7
      %v3626 = vsub.s32 %v3623, %v3625
      %v3627 = vrot.slane %v3613, %v3626
      %v3628 = vcombine.high %v3620, %v3620
      %v3629 = vcombine.high %v3627, %v3627
      %v3630 = vcombine.high %v3608, %v3608
      %v3632 = vunpack.c.l.s4 1983009808
      %v3633 = vunpack.c.0.s8 %v3632
      %v3634 = vlaneseq
      %v3635 = vshrl.u32 %v3634, 7
      %v3636 = vsub.s32 %v3633, %v3635
      %v3637 = vrot.slane %v3608, %v3636
      %v3639 = vunpack.c.l.s4 1983009808
      %v3640 = vunpack.c.0.s8 %v3639
      %v3641 = vlaneseq
      %v3642 = vshrl.u32 %v3641, 7
      %v3643 = vsub.s32 %v3640, %v3642
      %v3644 = vrot.slane %v3630, %v3643
      %v3645 = vcombine.high %v3637, %v3637
      %v3646 = vcombine.high %v3644, %v3644
      %3647 = vrot.lane.b32.xlu0 %v3620, 17
      %v3648 = vpop.permute.xlu0 %3647
      %3649 = vrot.lane.b32.xlu0 %v3628, 17
      %v3650 = vpop.permute.xlu0 %3649
      %3651 = vrot.lane.b32.xlu0 %v3627, 17
      %v3652 = vpop.permute.xlu0 %3651
      %3653 = vrot.lane.b32.xlu0 %v3629, 17
      %v3654 = vpop.permute.xlu0 %3653
      %3655 = vrot.lane.b32.xlu0 %v3637, 17
      %v3656 = vpop.permute.xlu0 %3655
      %3657 = vrot.lane.b32.xlu0 %v3645, 17
      %v3658 = vpop.permute.xlu0 %3657
      %3659 = vrot.lane.b32.xlu0 %v3644, 17
      %v3660 = vpop.permute.xlu0 %3659
      %3661 = vrot.lane.b32.xlu0 %v3646, 17
      %v3662 = vpop.permute.xlu0 %3661
      %vm3663 = vcmask 138240
      %v3664 = vsel %vm3663, %v3648, %v3650
      %v3665 = vsel %vm3663, %v3650, %v3652
      %v3666 = vsel %vm3663, %v3652, %v3654
      %v3667 = vsel %vm3663, %v3654, %v3656
      %v3668 = vsel %vm3663, %v3656, %v3658
      %v3669 = vsel %vm3663, %v3658, %v3660
      %v3670 = vsel %vm3663, %v3660, %v3662
      %v3672 = vsel %vm376, %v3610, 0
      %v3675 = vsel %vm380, %v3664, 0
      %v3678 = vsel %vm380, %v3665, 0
      %v3681 = vsel %vm380, %v3666, 0
      %v3684 = vsel %vm380, %v3667, 0
      %v3687 = vsel %vm380, %v3668, 0
      %v3690 = vsel %vm380, %v3669, 0
      %v3693 = vsel %vm380, %v3670, 0
      %3695 = vmatprep.subr.bf16.mxu0 %v3678
      %3696 = vmatpush1.bf16.msra.mxu0 %v3675
      %3697 = vmatprep.subr.bf16.mxu0 0
      %3698 = vmatpush1.bf16.msra.mxu0 0
      %3699 = vmatprep.subr.bf16.mxu0 0
      %3700 = vmatpush1.bf16.msra.mxu0 0
      %3701 = vmatprep.subr.bf16.mxu0 0
      %3702 = vmatpush1.bf16.msra.mxu0 0
      %3703 = vmatprep.subr.bf16.mxu0 0
      %3704 = vmatpush1.bf16.msra.mxu0 0
      %3705 = vmatprep.subr.bf16.mxu0 0
      %3706 = vmatpush1.bf16.msra.mxu0 0
      %3707 = vmatprep.subr.bf16.mxu0 0
      %3708 = vmatpush1.bf16.msra.mxu0 0
      %3709 = vmatprep.subr.bf16.mxu0 0
      %3710 = vmatpush1.bf16.msra.mxu0 0
      %3711 = vmatprep.subr.bf16.mxu0 0
      %3712 = vmatpush1.bf16.msra.mxu0 0
      %3713 = vmatprep.subr.bf16.mxu0 0
      %3714 = vmatpush1.bf16.msra.mxu0 0
      %3715 = vmatprep.subr.bf16.mxu0 0
      %3716 = vmatpush1.bf16.msra.mxu0 0
      %3717 = vmatprep.subr.bf16.mxu0 0
      %3718 = vmatpush1.bf16.msra.mxu0 0
      %3719 = vmatprep.subr.bf16.mxu0 0
      %3720 = vmatpush1.bf16.msra.mxu0 0
      %3721 = vmatprep.subr.bf16.mxu0 0
      %3722 = vmatpush1.bf16.msra.mxu0 0
      %3723 = vmatprep.subr.bf16.mxu0 0
      %3724 = vmatpush1.bf16.msra.mxu0 0
      %3725 = vmatprep.subr.bf16.mxu0 0
      %3726 = vmatpush1.bf16.msra.mxu0 0
      %3727 = vmatprep.mubr.bf16.mxu0 0
      %3728 = vmatmul.mubr.bf16.gmra.mrb[0].mxu0 %v3672
      %v3729 = vpop.f32.mrb[0].mxu0
      %v3730 = vadd.f32 0.0, %v3729
      %v3731 = vpop.f32.mrb[0].mxu0
      %v3732 = vadd.f32 0.0, %v3731
      %v3733 = vpop.f32.mrb[0].mxu0
      %v3734 = vpop.f32.mrb[0].mxu0
      %3735 = vdwg.mxu0
      %3736 = vmatprep.subr.bf16.mxu0 %v3684
      %3737 = vmatpush1.bf16.msra.mxu0 %v3681
      %3738 = vmatprep.subr.bf16.mxu0 0
      %3739 = vmatpush1.bf16.msra.mxu0 0
      %3740 = vmatprep.subr.bf16.mxu0 0
      %3741 = vmatpush1.bf16.msra.mxu0 0
      %3742 = vmatprep.subr.bf16.mxu0 0
      %3743 = vmatpush1.bf16.msra.mxu0 0
      %3744 = vmatprep.subr.bf16.mxu0 0
      %3745 = vmatpush1.bf16.msra.mxu0 0
      %3746 = vmatprep.subr.bf16.mxu0 0
      %3747 = vmatpush1.bf16.msra.mxu0 0
      %3748 = vmatprep.subr.bf16.mxu0 0
      %3749 = vmatpush1.bf16.msra.mxu0 0
      %3750 = vmatprep.subr.bf16.mxu0 0
      %3751 = vmatpush1.bf16.msra.mxu0 0
      %3752 = vmatprep.subr.bf16.mxu0 0
      %3753 = vmatpush1.bf16.msra.mxu0 0
      %3754 = vmatprep.subr.bf16.mxu0 0
      %3755 = vmatpush1.bf16.msra.mxu0 0
      %3756 = vmatprep.subr.bf16.mxu0 0
      %3757 = vmatpush1.bf16.msra.mxu0 0
      %3758 = vmatprep.subr.bf16.mxu0 0
      %3759 = vmatpush1.bf16.msra.mxu0 0
      %3760 = vmatprep.subr.bf16.mxu0 0
      %3761 = vmatpush1.bf16.msra.mxu0 0
      %3762 = vmatprep.subr.bf16.mxu0 0
      %3763 = vmatpush1.bf16.msra.mxu0 0
      %3764 = vmatprep.subr.bf16.mxu0 0
      %3765 = vmatpush1.bf16.msra.mxu0 0
      %3766 = vmatprep.subr.bf16.mxu0 0
      %3767 = vmatpush1.bf16.msra.mxu0 0
      %3768 = vmatprep.mubr.bf16.mxu0 0
      %3769 = vmatmul.mubr.bf16.gmra.mrb[0].mxu0 %v3672
      %v3770 = vpop.f32.mrb[0].mxu0
      %v3771 = vadd.f32 0.0, %v3770
      %v3772 = vpop.f32.mrb[0].mxu0
      %v3773 = vadd.f32 0.0, %v3772
      %v3774 = vpop.f32.mrb[0].mxu0
      %v3775 = vpop.f32.mrb[0].mxu0
      %3776 = vdwg.mxu0
      %3777 = vmatprep.subr.bf16.mxu0 %v3690
      %3778 = vmatpush1.bf16.msra.mxu0 %v3687
      %3779 = vmatprep.subr.bf16.mxu0 0
      %3780 = vmatpush1.bf16.msra.mxu0 0
      %3781 = vmatprep.subr.bf16.mxu0 0
      %3782 = vmatpush1.bf16.msra.mxu0 0
      %3783 = vmatprep.subr.bf16.mxu0 0
      %3784 = vmatpush1.bf16.msra.mxu0 0
      %3785 = vmatprep.subr.bf16.mxu0 0
      %3786 = vmatpush1.bf16.msra.mxu0 0
      %3787 = vmatprep.subr.bf16.mxu0 0
      %3788 = vmatpush1.bf16.msra.mxu0 0
      %3789 = vmatprep.subr.bf16.mxu0 0
      %3790 = vmatpush1.bf16.msra.mxu0 0
      %3791 = vmatprep.subr.bf16.mxu0 0
      %3792 = vmatpush1.bf16.msra.mxu0 0
      %3793 = vmatprep.subr.bf16.mxu0 0
      %3794 = vmatpush1.bf16.msra.mxu0 0
      %3795 = vmatprep.subr.bf16.mxu0 0
      %3796 = vmatpush1.bf16.msra.mxu0 0
      %3797 = vmatprep.subr.bf16.mxu0 0
      %3798 = vmatpush1.bf16.msra.mxu0 0
      %3799 = vmatprep.subr.bf16.mxu0 0
      %3800 = vmatpush1.bf16.msra.mxu0 0
      %3801 = vmatprep.subr.bf16.mxu0 0
      %3802 = vmatpush1.bf16.msra.mxu0 0
      %3803 = vmatprep.subr.bf16.mxu0 0
      %3804 = vmatpush1.bf16.msra.mxu0 0
      %3805 = vmatprep.subr.bf16.mxu0 0
      %3806 = vmatpush1.bf16.msra.mxu0 0
      %3807 = vmatprep.subr.bf16.mxu0 0
      %3808 = vmatpush1.bf16.msra.mxu0 0
      %3809 = vmatprep.mubr.bf16.mxu0 0
      %3810 = vmatmul.mubr.bf16.gmra.mrb[0].mxu0 %v3672
      %v3811 = vpop.f32.mrb[0].mxu0
      %v3812 = vadd.f32 0.0, %v3811
      %v3813 = vpop.f32.mrb[0].mxu0
      %v3814 = vadd.f32 0.0, %v3813
      %v3815 = vpop.f32.mrb[0].mxu0
      %v3816 = vpop.f32.mrb[0].mxu0
      %3817 = vdwg.mxu0
      %3818 = vmatprep.subr.bf16.mxu0 0
      %3819 = vmatpush1.bf16.msra.mxu0 %v3693
      %3820 = vmatprep.subr.bf16.mxu0 0
      %3821 = vmatpush1.bf16.msra.mxu0 0
      %3822 = vmatprep.subr.bf16.mxu0 0
      %3823 = vmatpush1.bf16.msra.mxu0 0
      %3824 = vmatprep.subr.bf16.mxu0 0
      %3825 = vmatpush1.bf16.msra.mxu0 0
      %3826 = vmatprep.subr.bf16.mxu0 0
      %3827 = vmatpush1.bf16.msra.mxu0 0
      %3828 = vmatprep.subr.bf16.mxu0 0
      %3829 = vmatpush1.bf16.msra.mxu0 0
      %3830 = vmatprep.subr.bf16.mxu0 0
      %3831 = vmatpush1.bf16.msra.mxu0 0
      %3832 = vmatprep.subr.bf16.mxu0 0
      %3833 = vmatpush1.bf16.msra.mxu0 0
      %3834 = vmatprep.subr.bf16.mxu0 0
      %3835 = vmatpush1.bf16.msra.mxu0 0
      %3836 = vmatprep.subr.bf16.mxu0 0
      %3837 = vmatpush1.bf16.msra.mxu0 0
      %3838 = vmatprep.subr.bf16.mxu0 0
      %3839 = vmatpush1.bf16.msra.mxu0 0
      %3840 = vmatprep.subr.bf16.mxu0 0
      %3841 = vmatpush1.bf16.msra.mxu0 0
      %3842 = vmatprep.subr.bf16.mxu0 0
      %3843 = vmatpush1.bf16.msra.mxu0 0
      %3844 = vmatprep.subr.bf16.mxu0 0
      %3845 = vmatpush1.bf16.msra.mxu0 0
      %3846 = vmatprep.subr.bf16.mxu0 0
      %3847 = vmatpush1.bf16.msra.mxu0 0
      %3848 = vmatprep.subr.bf16.mxu0 0
      %3849 = vmatpush1.bf16.msra.mxu0 0
      %3850 = vmatprep.mubr.bf16.mxu0 0
      %3851 = vmatmul.mubr.bf16.gmra.mrb[0].mxu0 %v3672
      %v3852 = vpop.f32.mrb[0].mxu0
      %v3853 = vadd.f32 0.0, %v3852
      %v3854 = vpop.f32.mrb[0].mxu0
      %v3855 = vpop.f32.mrb[0].mxu0
      %v3856 = vpop.f32.mrb[0].mxu0
      %3857 = vdwg.mxu0
      %v3858 = vadd.f32 %v3600, %v3730
      %v3859 = vadd.f32 %v3601, %v3732
      %v3860 = vadd.f32 %v3602, %v3771
      %v3861 = vadd.f32 %v3603, %v3773
      %v3862 = vadd.f32 %v3604, %v3812
      %v3863 = vadd.f32 %v3605, %v3814
      %v3864 = vadd.f32 %v3606, %v3853
      %v3865 = vld [vmem:[%s278] sm:$0xff]
      %v3866 = vld [vmem:[%s278 + $0x8] sm:$0xff]
      %s3867 = scalar_lea.vmem %s1, 56
      %v3868 = vld [vmem:[%s3867] sm:$0xf]
      %v3871 = vcombine.high %v3865, %v3865
      %v3873 = vunpack.c.l.s4 1983009808
      %v3874 = vunpack.c.0.s8 %v3873
      %v3875 = vlaneseq
      %v3876 = vshrl.u32 %v3875, 7
      %v3877 = vsub.s32 %v3874, %v3876
      %v3878 = vrot.slane %v3865, %v3877
      %v3880 = vunpack.c.l.s4 1983009808
      %v3881 = vunpack.c.0.s8 %v3880
      %v3882 = vlaneseq
      %v3883 = vshrl.u32 %v3882, 7
      %v3884 = vsub.s32 %v3881, %v3883
      %v3885 = vrot.slane %v3871, %v3884
      %v3886 = vcombine.high %v3878, %v3878
      %v3887 = vcombine.high %v3885, %v3885
      %v3888 = vcombine.high %v3866, %v3866
      %v3890 = vunpack.c.l.s4 1983009808
      %v3891 = vunpack.c.0.s8 %v3890
      %v3892 = vlaneseq
      %v3893 = vshrl.u32 %v3892, 7
      %v3894 = vsub.s32 %v3891, %v3893
      %v3895 = vrot.slane %v3866, %v3894
      %v3897 = vunpack.c.l.s4 1983009808
      %v3898 = vunpack.c.0.s8 %v3897
      %v3899 = vlaneseq
      %v3900 = vshrl.u32 %v3899, 7
      %v3901 = vsub.s32 %v3898, %v3900
      %v3902 = vrot.slane %v3888, %v3901
      %v3903 = vcombine.high %v3895, %v3895
      %v3904 = vcombine.high %v3902, %v3902
      %3905 = vrot.lane.b32.xlu0 %v3878, 16
      %v3906 = vpop.permute.xlu0 %3905
      %3907 = vrot.lane.b32.xlu0 %v3886, 16
      %v3908 = vpop.permute.xlu0 %3907
      %3909 = vrot.lane.b32.xlu0 %v3885, 16
      %v3910 = vpop.permute.xlu0 %3909
      %3911 = vrot.lane.b32.xlu0 %v3887, 16
      %v3912 = vpop.permute.xlu0 %3911
      %3913 = vrot.lane.b32.xlu0 %v3895, 16
      %v3914 = vpop.permute.xlu0 %3913
      %3915 = vrot.lane.b32.xlu0 %v3903, 16
      %v3916 = vpop.permute.xlu0 %3915
      %3917 = vrot.lane.b32.xlu0 %v3902, 16
      %v3918 = vpop.permute.xlu0 %3917
      %3919 = vrot.lane.b32.xlu0 %v3904, 16
      %v3920 = vpop.permute.xlu0 %3919
      %vm3921 = vcmask 130048
      %v3922 = vsel %vm3921, %v3906, %v3908
      %v3923 = vsel %vm3921, %v3908, %v3910
      %v3924 = vsel %vm3921, %v3910, %v3912
      %v3925 = vsel %vm3921, %v3912, %v3914
      %v3926 = vsel %vm3921, %v3914, %v3916
      %v3927 = vsel %vm3921, %v3916, %v3918
      %v3928 = vsel %vm3921, %v3918, %v3920
      %v3930 = vsel %vm376, %v3868, 0
      %v3933 = vsel %vm380, %v3922, 0
      %v3936 = vsel %vm380, %v3923, 0
      %v3939 = vsel %vm380, %v3924, 0
      %v3942 = vsel %vm380, %v3925, 0
      %v3945 = vsel %vm380, %v3926, 0
      %v3948 = vsel %vm380, %v3927, 0
      %v3951 = vsel %vm380, %v3928, 0
      %3953 = vmatprep.subr.bf16.mxu0 %v3936
      %3954 = vmatpush1.bf16.msra.mxu0 %v3933
      %3955 = vmatprep.subr.bf16.mxu0 0
      %3956 = vmatpush1.bf16.msra.mxu0 0
      %3957 = vmatprep.subr.bf16.mxu0 0
      %3958 = vmatpush1.bf16.msra.mxu0 0
      %3959 = vmatprep.subr.bf16.mxu0 0
      %3960 = vmatpush1.bf16.msra.mxu0 0
      %3961 = vmatprep.subr.bf16.mxu0 0
      %3962 = vmatpush1.bf16.msra.mxu0 0
      %3963 = vmatprep.subr.bf16.mxu0 0
      %3964 = vmatpush1.bf16.msra.mxu0 0
      %3965 = vmatprep.subr.bf16.mxu0 0
      %3966 = vmatpush1.bf16.msra.mxu0 0
      %3967 = vmatprep.subr.bf16.mxu0 0
      %3968 = vmatpush1.bf16.msra.mxu0 0
      %3969 = vmatprep.subr.bf16.mxu0 0
      %3970 = vmatpush1.bf16.msra.mxu0 0
      %3971 = vmatprep.subr.bf16.mxu0 0
      %3972 = vmatpush1.bf16.msra.mxu0 0
      %3973 = vmatprep.subr.bf16.mxu0 0
      %3974 = vmatpush1.bf16.msra.mxu0 0
      %3975 = vmatprep.subr.bf16.mxu0 0
      %3976 = vmatpush1.bf16.msra.mxu0 0
      %3977 = vmatprep.subr.bf16.mxu0 0
      %3978 = vmatpush1.bf16.msra.mxu0 0
      %3979 = vmatprep.subr.bf16.mxu0 0
      %3980 = vmatpush1.bf16.msra.mxu0 0
      %3981 = vmatprep.subr.bf16.mxu0 0
      %3982 = vmatpush1.bf16.msra.mxu0 0
      %3983 = vmatprep.subr.bf16.mxu0 0
      %3984 = vmatpush1.bf16.msra.mxu0 0
      %3985 = vmatprep.mubr.bf16.mxu0 0
      %3986 = vmatmul.mubr.bf16.gmra.mrb[0].mxu0 %v3930
      %v3987 = vpop.f32.mrb[0].mxu0
      %v3988 = vadd.f32 0.0, %v3987
      %v3989 = vpop.f32.mrb[0].mxu0
      %v3990 = vadd.f32 0.0, %v3989
      %v3991 = vpop.f32.mrb[0].mxu0
      %v3992 = vpop.f32.mrb[0].mxu0
      %3993 = vdwg.mxu0
      %3994 = vmatprep.subr.bf16.mxu0 %v3942
      %3995 = vmatpush1.bf16.msra.mxu0 %v3939
      %3996 = vmatprep.subr.bf16.mxu0 0
      %3997 = vmatpush1.bf16.msra.mxu0 0
      %3998 = vmatprep.subr.bf16.mxu0 0
      %3999 = vmatpush1.bf16.msra.mxu0 0
      %4000 = vmatprep.subr.bf16.mxu0 0
      %4001 = vmatpush1.bf16.msra.mxu0 0
      %4002 = vmatprep.subr.bf16.mxu0 0
      %4003 = vmatpush1.bf16.msra.mxu0 0
      %4004 = vmatprep.subr.bf16.mxu0 0
      %4005 = vmatpush1.bf16.msra.mxu0 0
      %4006 = vmatprep.subr.bf16.mxu0 0
      %4007 = vmatpush1.bf16.msra.mxu0 0
      %4008 = vmatprep.subr.bf16.mxu0 0
      %4009 = vmatpush1.bf16.msra.mxu0 0
      %4010 = vmatprep.subr.bf16.mxu0 0
      %4011 = vmatpush1.bf16.msra.mxu0 0
      %4012 = vmatprep.subr.bf16.mxu0 0
      %4013 = vmatpush1.bf16.msra.mxu0 0
      %4014 = vmatprep.subr.bf16.mxu0 0
      %4015 = vmatpush1.bf16.msra.mxu0 0
      %4016 = vmatprep.subr.bf16.mxu0 0
      %4017 = vmatpush1.bf16.msra.mxu0 0
      %4018 = vmatprep.subr.bf16.mxu0 0
      %4019 = vmatpush1.bf16.msra.mxu0 0
      %4020 = vmatprep.subr.bf16.mxu0 0
      %4021 = vmatpush1.bf16.msra.mxu0 0
      %4022 = vmatprep.subr.bf16.mxu0 0
      %4023 = vmatpush1.bf16.msra.mxu0 0
      %4024 = vmatprep.subr.bf16.mxu0 0
      %4025 = vmatpush1.bf16.msra.mxu0 0
      %4026 = vmatprep.mubr.bf16.mxu0 0
      %4027 = vmatmul.mubr.bf16.gmra.mrb[0].mxu0 %v3930
      %v4028 = vpop.f32.mrb[0].mxu0
      %v4029 = vadd.f32 0.0, %v4028
      %v4030 = vpop.f32.mrb[0].mxu0
      %v4031 = vadd.f32 0.0, %v4030
      %v4032 = vpop.f32.mrb[0].mxu0
      %v4033 = vpop.f32.mrb[0].mxu0
      %4034 = vdwg.mxu0
      %4035 = vmatprep.subr.bf16.mxu0 %v3948
      %4036 = vmatpush1.bf16.msra.mxu0 %v3945
      %4037 = vmatprep.subr.bf16.mxu0 0
      %4038 = vmatpush1.bf16.msra.mxu0 0
      %4039 = vmatprep.subr.bf16.mxu0 0
      %4040 = vmatpush1.bf16.msra.mxu0 0
      %4041 = vmatprep.subr.bf16.mxu0 0
      %4042 = vmatpush1.bf16.msra.mxu0 0
      %4043 = vmatprep.subr.bf16.mxu0 0
      %4044 = vmatpush1.bf16.msra.mxu0 0
      %4045 = vmatprep.subr.bf16.mxu0 0
      %4046 = vmatpush1.bf16.msra.mxu0 0
      %4047 = vmatprep.subr.bf16.mxu0 0
      %4048 = vmatpush1.bf16.msra.mxu0 0
      %4049 = vmatprep.subr.bf16.mxu0 0
      %4050 = vmatpush1.bf16.msra.mxu0 0
      %4051 = vmatprep.subr.bf16.mxu0 0
      %4052 = vmatpush1.bf16.msra.mxu0 0
      %4053 = vmatprep.subr.bf16.mxu0 0
      %4054 = vmatpush1.bf16.msra.mxu0 0
      %4055 = vmatprep.subr.bf16.mxu0 0
      %4056 = vmatpush1.bf16.msra.mxu0 0
      %4057 = vmatprep.subr.bf16.mxu0 0
      %4058 = vmatpush1.bf16.msra.mxu0 0
      %4059 = vmatprep.subr.bf16.mxu0 0
      %4060 = vmatpush1.bf16.msra.mxu0 0
      %4061 = vmatprep.subr.bf16.mxu0 0
      %4062 = vmatpush1.bf16.msra.mxu0 0
      %4063 = vmatprep.subr.bf16.mxu0 0
      %4064 = vmatpush1.bf16.msra.mxu0 0
      %4065 = vmatprep.subr.bf16.mxu0 0
      %4066 = vmatpush1.bf16.msra.mxu0 0
      %4067 = vmatprep.mubr.bf16.mxu0 0
      %4068 = vmatmul.mubr.bf16.gmra.mrb[0].mxu0 %v3930
      %v4069 = vpop.f32.mrb[0].mxu0
      %v4070 = vadd.f32 0.0, %v4069
      %v4071 = vpop.f32.mrb[0].mxu0
      %v4072 = vadd.f32 0.0, %v4071
      %v4073 = vpop.f32.mrb[0].mxu0
      %v4074 = vpop.f32.mrb[0].mxu0
      %4075 = vdwg.mxu0
      %4076 = vmatprep.subr.bf16.mxu0 0
      %4077 = vmatpush1.bf16.msra.mxu0 %v3951
      %4078 = vmatprep.subr.bf16.mxu0 0
      %4079 = vmatpush1.bf16.msra.mxu0 0
      %4080 = vmatprep.subr.bf16.mxu0 0
      %4081 = vmatpush1.bf16.msra.mxu0 0
      %4082 = vmatprep.subr.bf16.mxu0 0
      %4083 = vmatpush1.bf16.msra.mxu0 0
      %4084 = vmatprep.subr.bf16.mxu0 0
      %4085 = vmatpush1.bf16.msra.mxu0 0
      %4086 = vmatprep.subr.bf16.mxu0 0
      %4087 = vmatpush1.bf16.msra.mxu0 0
      %4088 = vmatprep.subr.bf16.mxu0 0
      %4089 = vmatpush1.bf16.msra.mxu0 0
      %4090 = vmatprep.subr.bf16.mxu0 0
      %4091 = vmatpush1.bf16.msra.mxu0 0
      %4092 = vmatprep.subr.bf16.mxu0 0
      %4093 = vmatpush1.bf16.msra.mxu0 0
      %4094 = vmatprep.subr.bf16.mxu0 0
      %4095 = vmatpush1.bf16.msra.mxu0 0
      %4096 = vmatprep.subr.bf16.mxu0 0
      %4097 = vmatpush1.bf16.msra.mxu0 0
      %4098 = vmatprep.subr.bf16.mxu0 0
      %4099 = vmatpush1.bf16.msra.mxu0 0
      %4100 = vmatprep.subr.bf16.mxu0 0
      %4101 = vmatpush1.bf16.msra.mxu0 0
      %4102 = vmatprep.subr.bf16.mxu0 0
      %4103 = vmatpush1.bf16.msra.mxu0 0
      %4104 = vmatprep.subr.bf16.mxu0 0
      %4105 = vmatpush1.bf16.msra.mxu0 0
      %4106 = vmatprep.subr.bf16.mxu0 0
      %4107 = vmatpush1.bf16.msra.mxu0 0
      %4108 = vmatprep.mubr.bf16.mxu0 0
      %4109 = vmatmul.mubr.bf16.gmra.mrb[0].mxu0 %v3930
      %v4110 = vpop.f32.mrb[0].mxu0
      %v4111 = vadd.f32 0.0, %v4110
      %v4112 = vpop.f32.mrb[0].mxu0
      %v4113 = vpop.f32.mrb[0].mxu0
      %v4114 = vpop.f32.mrb[0].mxu0
      %4115 = vdwg.mxu0
      %v4116 = vadd.f32 %v3858, %v3988
      %v4117 = vadd.f32 %v3859, %v3990
      %v4118 = vadd.f32 %v3860, %v4029
      %v4119 = vadd.f32 %v3861, %v4031
      %v4120 = vadd.f32 %v3862, %v4070
      %v4121 = vadd.f32 %v3863, %v4072
      %v4122 = vadd.f32 %v3864, %v4111
      %v4123 = vld [vmem:[%s278] sm:$0xff]
      %v4124 = vld [vmem:[%s278 + $0x8] sm:$0xff]
      %s4125 = scalar_lea.vmem %s1, 60
      %v4126 = vld [vmem:[%s4125] sm:$0xf]
      %v4129 = vcombine.high %v4123, %v4123
      %v4131 = vunpack.c.l.s4 1983009808
      %v4132 = vunpack.c.0.s8 %v4131
      %v4133 = vlaneseq
      %v4134 = vshrl.u32 %v4133, 7
      %v4135 = vsub.s32 %v4132, %v4134
      %v4136 = vrot.slane %v4123, %v4135
      %v4138 = vunpack.c.l.s4 1983009808
      %v4139 = vunpack.c.0.s8 %v4138
      %v4140 = vlaneseq
      %v4141 = vshrl.u32 %v4140, 7
      %v4142 = vsub.s32 %v4139, %v4141
      %v4143 = vrot.slane %v4129, %v4142
      %v4144 = vcombine.high %v4136, %v4136
      %v4145 = vcombine.high %v4143, %v4143
      %v4146 = vcombine.high %v4124, %v4124
      %v4148 = vunpack.c.l.s4 1983009808
      %v4149 = vunpack.c.0.s8 %v4148
      %v4150 = vlaneseq
      %v4151 = vshrl.u32 %v4150, 7
      %v4152 = vsub.s32 %v4149, %v4151
      %v4153 = vrot.slane %v4124, %v4152
      %v4155 = vunpack.c.l.s4 1983009808
      %v4156 = vunpack.c.0.s8 %v4155
      %v4157 = vlaneseq
      %v4158 = vshrl.u32 %v4157, 7
      %v4159 = vsub.s32 %v4156, %v4158
      %v4160 = vrot.slane %v4146, %v4159
      %v4161 = vcombine.high %v4153, %v4153
      %v4162 = vcombine.high %v4160, %v4160
      %4163 = vrot.lane.b32.xlu0 %v4136, 8
      %v4164 = vpop.permute.xlu0 %4163
      %4165 = vrot.lane.b32.xlu0 %v4144, 8
      %v4166 = vpop.permute.xlu0 %4165
      %4167 = vrot.lane.b32.xlu0 %v4143, 8
      %v4168 = vpop.permute.xlu0 %4167
      %4169 = vrot.lane.b32.xlu0 %v4145, 8
      %v4170 = vpop.permute.xlu0 %4169
      %4171 = vrot.lane.b32.xlu0 %v4153, 8
      %v4172 = vpop.permute.xlu0 %4171
      %4173 = vrot.lane.b32.xlu0 %v4161, 8
      %v4174 = vpop.permute.xlu0 %4173
      %4175 = vrot.lane.b32.xlu0 %v4160, 8
      %v4176 = vpop.permute.xlu0 %4175
      %4177 = vrot.lane.b32.xlu0 %v4162, 8
      %v4178 = vpop.permute.xlu0 %4177
      %vm4179 = vcmask 64512
      %v4180 = vsel %vm4179, %v4164, %v4166
      %v4181 = vsel %vm4179, %v4166, %v4168
      %v4182 = vsel %vm4179, %v4168, %v4170
      %v4183 = vsel %vm4179, %v4170, %v4172
      %v4184 = vsel %vm4179, %v4172, %v4174
      %v4185 = vsel %vm4179, %v4174, %v4176
      %v4186 = vsel %vm4179, %v4176, %v4178
      %v4188 = vsel %vm376, %v4126, 0
      %v4191 = vsel %vm380, %v4180, 0
      %v4194 = vsel %vm380, %v4181, 0
      %v4197 = vsel %vm380, %v4182, 0
      %v4200 = vsel %vm380, %v4183, 0
      %v4203 = vsel %vm380, %v4184, 0
      %v4206 = vsel %vm380, %v4185, 0
      %v4209 = vsel %vm380, %v4186, 0
      %4211 = vmatprep.subr.bf16.mxu0 %v4194
      %4212 = vmatpush1.bf16.msra.mxu0 %v4191
      %4213 = vmatprep.subr.bf16.mxu0 0
      %4214 = vmatpush1.bf16.msra.mxu0 0
      %4215 = vmatprep.subr.bf16.mxu0 0
      %4216 = vmatpush1.bf16.msra.mxu0 0
      %4217 = vmatprep.subr.bf16.mxu0 0
      %4218 = vmatpush1.bf16.msra.mxu0 0
      %4219 = vmatprep.subr.bf16.mxu0 0
      %4220 = vmatpush1.bf16.msra.mxu0 0
      %4221 = vmatprep.subr.bf16.mxu0 0
      %4222 = vmatpush1.bf16.msra.mxu0 0
      %4223 = vmatprep.subr.bf16.mxu0 0
      %4224 = vmatpush1.bf16.msra.mxu0 0
      %4225 = vmatprep.subr.bf16.mxu0 0
      %4226 = vmatpush1.bf16.msra.mxu0 0
      %4227 = vmatprep.subr.bf16.mxu0 0
      %4228 = vmatpush1.bf16.msra.mxu0 0
      %4229 = vmatprep.subr.bf16.mxu0 0
      %4230 = vmatpush1.bf16.msra.mxu0 0
      %4231 = vmatprep.subr.bf16.mxu0 0
      %4232 = vmatpush1.bf16.msra.mxu0 0
      %4233 = vmatprep.subr.bf16.mxu0 0
      %4234 = vmatpush1.bf16.msra.mxu0 0
      %4235 = vmatprep.subr.bf16.mxu0 0
      %4236 = vmatpush1.bf16.msra.mxu0 0
      %4237 = vmatprep.subr.bf16.mxu0 0
      %4238 = vmatpush1.bf16.msra.mxu0 0
      %4239 = vmatprep.subr.bf16.mxu0 0
      %4240 = vmatpush1.bf16.msra.mxu0 0
      %4241 = vmatprep.subr.bf16.mxu0 0
      %4242 = vmatpush1.bf16.msra.mxu0 0
      %4243 = vmatprep.mubr.bf16.mxu0 0
      %4244 = vmatmul.mubr.bf16.gmra.mrb[0].mxu0 %v4188
      %v4245 = vpop.f32.mrb[0].mxu0
      %v4246 = vadd.f32 0.0, %v4245
      %v4247 = vpop.f32.mrb[0].mxu0
      %v4248 = vadd.f32 0.0, %v4247
      %v4249 = vpop.f32.mrb[0].mxu0
      %v4250 = vpop.f32.mrb[0].mxu0
      %4251 = vdwg.mxu0
      %4252 = vmatprep.subr.bf16.mxu0 %v4200
      %4253 = vmatpush1.bf16.msra.mxu0 %v4197
      %4254 = vmatprep.subr.bf16.mxu0 0
      %4255 = vmatpush1.bf16.msra.mxu0 0
      %4256 = vmatprep.subr.bf16.mxu0 0
      %4257 = vmatpush1.bf16.msra.mxu0 0
      %4258 = vmatprep.subr.bf16.mxu0 0
      %4259 = vmatpush1.bf16.msra.mxu0 0
      %4260 = vmatprep.subr.bf16.mxu0 0
      %4261 = vmatpush1.bf16.msra.mxu0 0
      %4262 = vmatprep.subr.bf16.mxu0 0
      %4263 = vmatpush1.bf16.msra.mxu0 0
      %4264 = vmatprep.subr.bf16.mxu0 0
      %4265 = vmatpush1.bf16.msra.mxu0 0
      %4266 = vmatprep.subr.bf16.mxu0 0
      %4267 = vmatpush1.bf16.msra.mxu0 0
      %4268 = vmatprep.subr.bf16.mxu0 0
      %4269 = vmatpush1.bf16.msra.mxu0 0
      %4270 = vmatprep.subr.bf16.mxu0 0
      %4271 = vmatpush1.bf16.msra.mxu0 0
      %4272 = vmatprep.subr.bf16.mxu0 0
      %4273 = vmatpush1.bf16.msra.mxu0 0
      %4274 = vmatprep.subr.bf16.mxu0 0
      %4275 = vmatpush1.bf16.msra.mxu0 0
      %4276 = vmatprep.subr.bf16.mxu0 0
      %4277 = vmatpush1.bf16.msra.mxu0 0
      %4278 = vmatprep.subr.bf16.mxu0 0
      %4279 = vmatpush1.bf16.msra.mxu0 0
      %4280 = vmatprep.subr.bf16.mxu0 0
      %4281 = vmatpush1.bf16.msra.mxu0 0
      %4282 = vmatprep.subr.bf16.mxu0 0
      %4283 = vmatpush1.bf16.msra.mxu0 0
      %4284 = vmatprep.mubr.bf16.mxu0 0
      %4285 = vmatmul.mubr.bf16.gmra.mrb[0].mxu0 %v4188
      %v4286 = vpop.f32.mrb[0].mxu0
      %v4287 = vadd.f32 0.0, %v4286
      %v4288 = vpop.f32.mrb[0].mxu0
      %v4289 = vadd.f32 0.0, %v4288
      %v4290 = vpop.f32.mrb[0].mxu0
      %v4291 = vpop.f32.mrb[0].mxu0
      %4292 = vdwg.mxu0
      %4293 = vmatprep.subr.bf16.mxu0 %v4206
      %4294 = vmatpush1.bf16.msra.mxu0 %v4203
      %4295 = vmatprep.subr.bf16.mxu0 0
      %4296 = vmatpush1.bf16.msra.mxu0 0
      %4297 = vmatprep.subr.bf16.mxu0 0
      %4298 = vmatpush1.bf16.msra.mxu0 0
      %4299 = vmatprep.subr.bf16.mxu0 0
      %4300 = vmatpush1.bf16.msra.mxu0 0
      %4301 = vmatprep.subr.bf16.mxu0 0
      %4302 = vmatpush1.bf16.msra.mxu0 0
      %4303 = vmatprep.subr.bf16.mxu0 0
      %4304 = vmatpush1.bf16.msra.mxu0 0
      %4305 = vmatprep.subr.bf16.mxu0 0
      %4306 = vmatpush1.bf16.msra.mxu0 0
      %4307 = vmatprep.subr.bf16.mxu0 0
      %4308 = vmatpush1.bf16.msra.mxu0 0
      %4309 = vmatprep.subr.bf16.mxu0 0
      %4310 = vmatpush1.bf16.msra.mxu0 0
      %4311 = vmatprep.subr.bf16.mxu0 0
      %4312 = vmatpush1.bf16.msra.mxu0 0
      %4313 = vmatprep.subr.bf16.mxu0 0
      %4314 = vmatpush1.bf16.msra.mxu0 0
      %4315 = vmatprep.subr.bf16.mxu0 0
      %4316 = vmatpush1.bf16.msra.mxu0 0
      %4317 = vmatprep.subr.bf16.mxu0 0
      %4318 = vmatpush1.bf16.msra.mxu0 0
      %4319 = vmatprep.subr.bf16.mxu0 0
      %4320 = vmatpush1.bf16.msra.mxu0 0
      %4321 = vmatprep.subr.bf16.mxu0 0
      %4322 = vmatpush1.bf16.msra.mxu0 0
      %4323 = vmatprep.subr.bf16.mxu0 0
      %4324 = vmatpush1.bf16.msra.mxu0 0
      %4325 = vmatprep.mubr.bf16.mxu0 0
      %4326 = vmatmul.mubr.bf16.gmra.mrb[0].mxu0 %v4188
      %v4327 = vpop.f32.mrb[0].mxu0
      %v4328 = vadd.f32 0.0, %v4327
      %v4329 = vpop.f32.mrb[0].mxu0
      %v4330 = vadd.f32 0.0, %v4329
      %v4331 = vpop.f32.mrb[0].mxu0
      %v4332 = vpop.f32.mrb[0].mxu0
      %4333 = vdwg.mxu0
      %4334 = vmatprep.subr.bf16.mxu0 0
      %4335 = vmatpush1.bf16.msra.mxu0 %v4209
      %4336 = vmatprep.subr.bf16.mxu0 0
      %4337 = vmatpush1.bf16.msra.mxu0 0
      %4338 = vmatprep.subr.bf16.mxu0 0
      %4339 = vmatpush1.bf16.msra.mxu0 0
      %4340 = vmatprep.subr.bf16.mxu0 0
      %4341 = vmatpush1.bf16.msra.mxu0 0
      %4342 = vmatprep.subr.bf16.mxu0 0
      %4343 = vmatpush1.bf16.msra.mxu0 0
      %4344 = vmatprep.subr.bf16.mxu0 0
      %4345 = vmatpush1.bf16.msra.mxu0 0
      %4346 = vmatprep.subr.bf16.mxu0 0
      %4347 = vmatpush1.bf16.msra.mxu0 0
      %4348 = vmatprep.subr.bf16.mxu0 0
      %4349 = vmatpush1.bf16.msra.mxu0 0
      %4350 = vmatprep.subr.bf16.mxu0 0
      %4351 = vmatpush1.bf16.msra.mxu0 0
      %4352 = vmatprep.subr.bf16.mxu0 0
      %4353 = vmatpush1.bf16.msra.mxu0 0
      %4354 = vmatprep.subr.bf16.mxu0 0
      %4355 = vmatpush1.bf16.msra.mxu0 0
      %4356 = vmatprep.subr.bf16.mxu0 0
      %4357 = vmatpush1.bf16.msra.mxu0 0
      %4358 = vmatprep.subr.bf16.mxu0 0
      %4359 = vmatpush1.bf16.msra.mxu0 0
      %4360 = vmatprep.subr.bf16.mxu0 0
      %4361 = vmatpush1.bf16.msra.mxu0 0
      %4362 = vmatprep.subr.bf16.mxu0 0
      %4363 = vmatpush1.bf16.msra.mxu0 0
      %4364 = vmatprep.subr.bf16.mxu0 0
      %4365 = vmatpush1.bf16.msra.mxu0 0
      %4366 = vmatprep.mubr.bf16.mxu0 0
      %4367 = vmatmul.mubr.bf16.gmra.mrb[0].mxu0 %v4188
      %v4368 = vpop.f32.mrb[0].mxu0
      %v4369 = vadd.f32 0.0, %v4368
      %v4370 = vpop.f32.mrb[0].mxu0
      %v4371 = vpop.f32.mrb[0].mxu0
      %v4372 = vpop.f32.mrb[0].mxu0
      %4373 = vdwg.mxu0
      %v4374 = vadd.f32 %v4116, %v4246
      %v4375 = vadd.f32 %v4117, %v4248
      %v4376 = vadd.f32 %v4118, %v4287
      %v4377 = vadd.f32 %v4119, %v4289
      %v4378 = vadd.f32 %v4120, %v4328
      %v4379 = vadd.f32 %v4121, %v4330
      %v4380 = vadd.f32 %v4122, %v4369
      %v4381 = vld [vmem:[%s278] sm:$0xff]
      %v4382 = vld [vmem:[%s278 + $0x8] sm:$0xff]
      %s4383 = scalar_lea.vmem %s1, 64
      %v4384 = vld [vmem:[%s4383] sm:$0xf]
      %v4387 = vcombine.high %v4381, %v4381
      %v4389 = vunpack.c.l.s4 1983009808
      %v4390 = vunpack.c.0.s8 %v4389
      %v4391 = vlaneseq
      %v4392 = vshrl.u32 %v4391, 7
      %v4393 = vsub.s32 %v4390, %v4392
      %v4394 = vrot.slane %v4381, %v4393
      %v4396 = vunpack.c.l.s4 1983009808
      %v4397 = vunpack.c.0.s8 %v4396
      %v4398 = vlaneseq
      %v4399 = vshrl.u32 %v4398, 7
      %v4400 = vsub.s32 %v4397, %v4399
      %v4401 = vrot.slane %v4387, %v4400
      %v4402 = vcombine.high %v4394, %v4394
      %v4403 = vcombine.high %v4401, %v4401
      %v4404 = vcombine.high %v4382, %v4382
      %v4406 = vunpack.c.l.s4 1983009808
      %v4407 = vunpack.c.0.s8 %v4406
      %v4408 = vlaneseq
      %v4409 = vshrl.u32 %v4408, 7
      %v4410 = vsub.s32 %v4407, %v4409
      %v4411 = vrot.slane %v4382, %v4410
      %v4413 = vunpack.c.l.s4 1983009808
      %v4414 = vunpack.c.0.s8 %v4413
      %v4415 = vlaneseq
      %v4416 = vshrl.u32 %v4415, 7
      %v4417 = vsub.s32 %v4414, %v4416
      %v4418 = vrot.slane %v4404, %v4417
      %v4419 = vcombine.high %v4411, %v4411
      %v4420 = vcombine.high %v4418, %v4418
      %4421 = vrot.lane.b32.xlu0 %v4394, 7
      %v4422 = vpop.permute.xlu0 %4421
      %4423 = vrot.lane.b32.xlu0 %v4402, 7
      %v4424 = vpop.permute.xlu0 %4423
      %4425 = vrot.lane.b32.xlu0 %v4401, 7
      %v4426 = vpop.permute.xlu0 %4425
      %4427 = vrot.lane.b32.xlu0 %v4403, 7
      %v4428 = vpop.permute.xlu0 %4427
      %4429 = vrot.lane.b32.xlu0 %v4411, 7
      %v4430 = vpop.permute.xlu0 %4429
      %4431 = vrot.lane.b32.xlu0 %v4419, 7
      %v4432 = vpop.permute.xlu0 %4431
      %4433 = vrot.lane.b32.xlu0 %v4418, 7
      %v4434 = vpop.permute.xlu0 %4433
      %4435 = vrot.lane.b32.xlu0 %v4420, 7
      %v4436 = vpop.permute.xlu0 %4435
      %vm4437 = vcmask 56320
      %v4438 = vsel %vm4437, %v4422, %v4424
      %v4439 = vsel %vm4437, %v4424, %v4426
      %v4440 = vsel %vm4437, %v4426, %v4428
      %v4441 = vsel %vm4437, %v4428, %v4430
      %v4442 = vsel %vm4437, %v4430, %v4432
      %v4443 = vsel %vm4437, %v4432, %v4434
      %v4444 = vsel %vm4437, %v4434, %v4436
      %v4446 = vsel %vm376, %v4384, 0
      %v4449 = vsel %vm380, %v4438, 0
      %v4452 = vsel %vm380, %v4439, 0
      %v4455 = vsel %vm380, %v4440, 0
      %v4458 = vsel %vm380, %v4441, 0
      %v4461 = vsel %vm380, %v4442, 0
      %v4464 = vsel %vm380, %v4443, 0
      %v4467 = vsel %vm380, %v4444, 0
      %4469 = vmatprep.subr.bf16.mxu0 %v4452
      %4470 = vmatpush1.bf16.msra.mxu0 %v4449
      %4471 = vmatprep.subr.bf16.mxu0 0
      %4472 = vmatpush1.bf16.msra.mxu0 0
      %4473 = vmatprep.subr.bf16.mxu0 0
      %4474 = vmatpush1.bf16.msra.mxu0 0
      %4475 = vmatprep.subr.bf16.mxu0 0
      %4476 = vmatpush1.bf16.msra.mxu0 0
      %4477 = vmatprep.subr.bf16.mxu0 0
      %4478 = vmatpush1.bf16.msra.mxu0 0
      %4479 = vmatprep.subr.bf16.mxu0 0
      %4480 = vmatpush1.bf16.msra.mxu0 0
      %4481 = vmatprep.subr.bf16.mxu0 0
      %4482 = vmatpush1.bf16.msra.mxu0 0
      %4483 = vmatprep.subr.bf16.mxu0 0
      %4484 = vmatpush1.bf16.msra.mxu0 0
      %4485 = vmatprep.subr.bf16.mxu0 0
      %4486 = vmatpush1.bf16.msra.mxu0 0
      %4487 = vmatprep.subr.bf16.mxu0 0
      %4488 = vmatpush1.bf16.msra.mxu0 0
      %4489 = vmatprep.subr.bf16.mxu0 0
      %4490 = vmatpush1.bf16.msra.mxu0 0
      %4491 = vmatprep.subr.bf16.mxu0 0
      %4492 = vmatpush1.bf16.msra.mxu0 0
      %4493 = vmatprep.subr.bf16.mxu0 0
      %4494 = vmatpush1.bf16.msra.mxu0 0
      %4495 = vmatprep.subr.bf16.mxu0 0
      %4496 = vmatpush1.bf16.msra.mxu0 0
      %4497 = vmatprep.subr.bf16.mxu0 0
      %4498 = vmatpush1.bf16.msra.mxu0 0
      %4499 = vmatprep.subr.bf16.mxu0 0
      %4500 = vmatpush1.bf16.msra.mxu0 0
      %4501 = vmatprep.mubr.bf16.mxu0 0
      %4502 = vmatmul.mubr.bf16.gmra.mrb[0].mxu0 %v4446
      %v4503 = vpop.f32.mrb[0].mxu0
      %v4504 = vadd.f32 0.0, %v4503
      %v4505 = vpop.f32.mrb[0].mxu0
      %v4506 = vadd.f32 0.0, %v4505
      %v4507 = vpop.f32.mrb[0].mxu0
      %v4508 = vpop.f32.mrb[0].mxu0
      %4509 = vdwg.mxu0
      %4510 = vmatprep.subr.bf16.mxu0 %v4458
      %4511 = vmatpush1.bf16.msra.mxu0 %v4455
      %4512 = vmatprep.subr.bf16.mxu0 0
      %4513 = vmatpush1.bf16.msra.mxu0 0
      %4514 = vmatprep.subr.bf16.mxu0 0
      %4515 = vmatpush1.bf16.msra.mxu0 0
      %4516 = vmatprep.subr.bf16.mxu0 0
      %4517 = vmatpush1.bf16.msra.mxu0 0
      %4518 = vmatprep.subr.bf16.mxu0 0
      %4519 = vmatpush1.bf16.msra.mxu0 0
      %4520 = vmatprep.subr.bf16.mxu0 0
      %4521 = vmatpush1.bf16.msra.mxu0 0
      %4522 = vmatprep.subr.bf16.mxu0 0
      %4523 = vmatpush1.bf16.msra.mxu0 0
      %4524 = vmatprep.subr.bf16.mxu0 0
      %4525 = vmatpush1.bf16.msra.mxu0 0
      %4526 = vmatprep.subr.bf16.mxu0 0
      %4527 = vmatpush1.bf16.msra.mxu0 0
      %4528 = vmatprep.subr.bf16.mxu0 0
      %4529 = vmatpush1.bf16.msra.mxu0 0
      %4530 = vmatprep.subr.bf16.mxu0 0
      %4531 = vmatpush1.bf16.msra.mxu0 0
      %4532 = vmatprep.subr.bf16.mxu0 0
      %4533 = vmatpush1.bf16.msra.mxu0 0
      %4534 = vmatprep.subr.bf16.mxu0 0
      %4535 = vmatpush1.bf16.msra.mxu0 0
      %4536 = vmatprep.subr.bf16.mxu0 0
      %4537 = vmatpush1.bf16.msra.mxu0 0
      %4538 = vmatprep.subr.bf16.mxu0 0
      %4539 = vmatpush1.bf16.msra.mxu0 0
      %4540 = vmatprep.subr.bf16.mxu0 0
      %4541 = vmatpush1.bf16.msra.mxu0 0
      %4542 = vmatprep.mubr.bf16.mxu0 0
      %4543 = vmatmul.mubr.bf16.gmra.mrb[0].mxu0 %v4446
      %v4544 = vpop.f32.mrb[0].mxu0
      %v4545 = vadd.f32 0.0, %v4544
      %v4546 = vpop.f32.mrb[0].mxu0
      %v4547 = vadd.f32 0.0, %v4546
      %v4548 = vpop.f32.mrb[0].mxu0
      %v4549 = vpop.f32.mrb[0].mxu0
      %4550 = vdwg.mxu0
      %4551 = vmatprep.subr.bf16.mxu0 %v4464
      %4552 = vmatpush1.bf16.msra.mxu0 %v4461
      %4553 = vmatprep.subr.bf16.mxu0 0
      %4554 = vmatpush1.bf16.msra.mxu0 0
      %4555 = vmatprep.subr.bf16.mxu0 0
      %4556 = vmatpush1.bf16.msra.mxu0 0
      %4557 = vmatprep.subr.bf16.mxu0 0
      %4558 = vmatpush1.bf16.msra.mxu0 0
      %4559 = vmatprep.subr.bf16.mxu0 0
      %4560 = vmatpush1.bf16.msra.mxu0 0
      %4561 = vmatprep.subr.bf16.mxu0 0
      %4562 = vmatpush1.bf16.msra.mxu0 0
      %4563 = vmatprep.subr.bf16.mxu0 0
      %4564 = vmatpush1.bf16.msra.mxu0 0
      %4565 = vmatprep.subr.bf16.mxu0 0
      %4566 = vmatpush1.bf16.msra.mxu0 0
      %4567 = vmatprep.subr.bf16.mxu0 0
      %4568 = vmatpush1.bf16.msra.mxu0 0
      %4569 = vmatprep.subr.bf16.mxu0 0
      %4570 = vmatpush1.bf16.msra.mxu0 0
      %4571 = vmatprep.subr.bf16.mxu0 0
      %4572 = vmatpush1.bf16.msra.mxu0 0
      %4573 = vmatprep.subr.bf16.mxu0 0
      %4574 = vmatpush1.bf16.msra.mxu0 0
      %4575 = vmatprep.subr.bf16.mxu0 0
      %4576 = vmatpush1.bf16.msra.mxu0 0
      %4577 = vmatprep.subr.bf16.mxu0 0
      %4578 = vmatpush1.bf16.msra.mxu0 0
      %4579 = vmatprep.subr.bf16.mxu0 0
      %4580 = vmatpush1.bf16.msra.mxu0 0
      %4581 = vmatprep.subr.bf16.mxu0 0
      %4582 = vmatpush1.bf16.msra.mxu0 0
      %4583 = vmatprep.mubr.bf16.mxu0 0
      %4584 = vmatmul.mubr.bf16.gmra.mrb[0].mxu0 %v4446
      %v4585 = vpop.f32.mrb[0].mxu0
      %v4586 = vadd.f32 0.0, %v4585
      %v4587 = vpop.f32.mrb[0].mxu0
      %v4588 = vadd.f32 0.0, %v4587
      %v4589 = vpop.f32.mrb[0].mxu0
      %v4590 = vpop.f32.mrb[0].mxu0
      %4591 = vdwg.mxu0
      %4592 = vmatprep.subr.bf16.mxu0 0
      %4593 = vmatpush1.bf16.msra.mxu0 %v4467
      %4594 = vmatprep.subr.bf16.mxu0 0
      %4595 = vmatpush1.bf16.msra.mxu0 0
      %4596 = vmatprep.subr.bf16.mxu0 0
      %4597 = vmatpush1.bf16.msra.mxu0 0
      %4598 = vmatprep.subr.bf16.mxu0 0
      %4599 = vmatpush1.bf16.msra.mxu0 0
      %4600 = vmatprep.subr.bf16.mxu0 0
      %4601 = vmatpush1.bf16.msra.mxu0 0
      %4602 = vmatprep.subr.bf16.mxu0 0
      %4603 = vmatpush1.bf16.msra.mxu0 0
      %4604 = vmatprep.subr.bf16.mxu0 0
      %4605 = vmatpush1.bf16.msra.mxu0 0
      %4606 = vmatprep.subr.bf16.mxu0 0
      %4607 = vmatpush1.bf16.msra.mxu0 0
      %4608 = vmatprep.subr.bf16.mxu0 0
      %4609 = vmatpush1.bf16.msra.mxu0 0
      %4610 = vmatprep.subr.bf16.mxu0 0
      %4611 = vmatpush1.bf16.msra.mxu0 0
      %4612 = vmatprep.subr.bf16.mxu0 0
      %4613 = vmatpush1.bf16.msra.mxu0 0
      %4614 = vmatprep.subr.bf16.mxu0 0
      %4615 = vmatpush1.bf16.msra.mxu0 0
      %4616 = vmatprep.subr.bf16.mxu0 0
      %4617 = vmatpush1.bf16.msra.mxu0 0
      %4618 = vmatprep.subr.bf16.mxu0 0
      %4619 = vmatpush1.bf16.msra.mxu0 0
      %4620 = vmatprep.subr.bf16.mxu0 0
      %4621 = vmatpush1.bf16.msra.mxu0 0
      %4622 = vmatprep.subr.bf16.mxu0 0
      %4623 = vmatpush1.bf16.msra.mxu0 0
      %4624 = vmatprep.mubr.bf16.mxu0 0
      %4625 = vmatmul.mubr.bf16.gmra.mrb[0].mxu0 %v4446
      %v4626 = vpop.f32.mrb[0].mxu0
      %v4627 = vadd.f32 0.0, %v4626
      %v4628 = vpop.f32.mrb[0].mxu0
      %v4629 = vpop.f32.mrb[0].mxu0
      %v4630 = vpop.f32.mrb[0].mxu0
      %4631 = vdwg.mxu0
      %v4632 = vadd.f32 %v4374, %v4504
      %v4633 = vadd.f32 %v4375, %v4506
      %v4634 = vadd.f32 %v4376, %v4545
      %v4635 = vadd.f32 %v4377, %v4547
      %v4636 = vadd.f32 %v4378, %v4586
      %v4637 = vadd.f32 %v4379, %v4588
      %v4638 = vadd.f32 %v4380, %v4627
      %v4639 = vld [vmem:[%s278] sm:$0xff]
      %v4640 = vld [vmem:[%s278 + $0x8] sm:$0xff]
      %s4641 = scalar_lea.vmem %s1, 68
      %v4642 = vld [vmem:[%s4641] sm:$0xf]
      %v4645 = vcombine.high %v4639, %v4639
      %v4647 = vunpack.c.l.s4 1983009808
      %v4648 = vunpack.c.0.s8 %v4647
      %v4649 = vlaneseq
      %v4650 = vshrl.u32 %v4649, 7
      %v4651 = vsub.s32 %v4648, %v4650
      %v4652 = vrot.slane %v4639, %v4651
      %v4654 = vunpack.c.l.s4 1983009808
      %v4655 = vunpack.c.0.s8 %v4654
      %v4656 = vlaneseq
      %v4657 = vshrl.u32 %v4656, 7
      %v4658 = vsub.s32 %v4655, %v4657
      %v4659 = vrot.slane %v4645, %v4658
      %v4660 = vcombine.high %v4652, %v4652
      %v4661 = vcombine.high %v4659, %v4659
      %v4662 = vcombine.high %v4640, %v4640
      %v4664 = vunpack.c.l.s4 1983009808
      %v4665 = vunpack.c.0.s8 %v4664
      %v4666 = vlaneseq
      %v4667 = vshrl.u32 %v4666, 7
      %v4668 = vsub.s32 %v4665, %v4667
      %v4669 = vrot.slane %v4640, %v4668
      %v4671 = vunpack.c.l.s4 1983009808
      %v4672 = vunpack.c.0.s8 %v4671
      %v4673 = vlaneseq
      %v4674 = vshrl.u32 %v4673, 7
      %v4675 = vsub.s32 %v4672, %v4674
      %v4676 = vrot.slane %v4662, %v4675
      %v4677 = vcombine.high %v4669, %v4669
      %v4678 = vcombine.high %v4676, %v4676
      %4679 = vrot.lane.b32.xlu0 %v4652, 6
      %v4680 = vpop.permute.xlu0 %4679
      %4681 = vrot.lane.b32.xlu0 %v4660, 6
      %v4682 = vpop.permute.xlu0 %4681
      %4683 = vrot.lane.b32.xlu0 %v4659, 6
      %v4684 = vpop.permute.xlu0 %4683
      %4685 = vrot.lane.b32.xlu0 %v4661, 6
      %v4686 = vpop.permute.xlu0 %4685
      %4687 = vrot.lane.b32.xlu0 %v4669, 6
      %v4688 = vpop.permute.xlu0 %4687
      %4689 = vrot.lane.b32.xlu0 %v4677, 6
      %v4690 = vpop.permute.xlu0 %4689
      %4691 = vrot.lane.b32.xlu0 %v4676, 6
      %v4692 = vpop.permute.xlu0 %4691
      %4693 = vrot.lane.b32.xlu0 %v4678, 6
      %v4694 = vpop.permute.xlu0 %4693
      %vm4695 = vcmask 48128
      %v4696 = vsel %vm4695, %v4680, %v4682
      %v4697 = vsel %vm4695, %v4682, %v4684
      %v4698 = vsel %vm4695, %v4684, %v4686
      %v4699 = vsel %vm4695, %v4686, %v4688
      %v4700 = vsel %vm4695, %v4688, %v4690
      %v4701 = vsel %vm4695, %v4690, %v4692
      %v4702 = vsel %vm4695, %v4692, %v4694
      %v4704 = vsel %vm376, %v4642, 0
      %v4707 = vsel %vm380, %v4696, 0
      %v4710 = vsel %vm380, %v4697, 0
      %v4713 = vsel %vm380, %v4698, 0
      %v4716 = vsel %vm380, %v4699, 0
      %v4719 = vsel %vm380, %v4700, 0
      %v4722 = vsel %vm380, %v4701, 0
      %v4725 = vsel %vm380, %v4702, 0
      %4727 = vmatprep.subr.bf16.mxu0 %v4710
      %4728 = vmatpush1.bf16.msra.mxu0 %v4707
      %4729 = vmatprep.subr.bf16.mxu0 0
      %4730 = vmatpush1.bf16.msra.mxu0 0
      %4731 = vmatprep.subr.bf16.mxu0 0
      %4732 = vmatpush1.bf16.msra.mxu0 0
      %4733 = vmatprep.subr.bf16.mxu0 0
      %4734 = vmatpush1.bf16.msra.mxu0 0
      %4735 = vmatprep.subr.bf16.mxu0 0
      %4736 = vmatpush1.bf16.msra.mxu0 0
      %4737 = vmatprep.subr.bf16.mxu0 0
      %4738 = vmatpush1.bf16.msra.mxu0 0
      %4739 = vmatprep.subr.bf16.mxu0 0
      %4740 = vmatpush1.bf16.msra.mxu0 0
      %4741 = vmatprep.subr.bf16.mxu0 0
      %4742 = vmatpush1.bf16.msra.mxu0 0
      %4743 = vmatprep.subr.bf16.mxu0 0
      %4744 = vmatpush1.bf16.msra.mxu0 0
      %4745 = vmatprep.subr.bf16.mxu0 0
      %4746 = vmatpush1.bf16.msra.mxu0 0
      %4747 = vmatprep.subr.bf16.mxu0 0
      %4748 = vmatpush1.bf16.msra.mxu0 0
      %4749 = vmatprep.subr.bf16.mxu0 0
      %4750 = vmatpush1.bf16.msra.mxu0 0
      %4751 = vmatprep.subr.bf16.mxu0 0
      %4752 = vmatpush1.bf16.msra.mxu0 0
      %4753 = vmatprep.subr.bf16.mxu0 0
      %4754 = vmatpush1.bf16.msra.mxu0 0
      %4755 = vmatprep.subr.bf16.mxu0 0
      %4756 = vmatpush1.bf16.msra.mxu0 0
      %4757 = vmatprep.subr.bf16.mxu0 0
      %4758 = vmatpush1.bf16.msra.mxu0 0
      %4759 = vmatprep.mubr.bf16.mxu0 0
      %4760 = vmatmul.mubr.bf16.gmra.mrb[0].mxu0 %v4704
      %v4761 = vpop.f32.mrb[0].mxu0
      %v4762 = vadd.f32 0.0, %v4761
      %v4763 = vpop.f32.mrb[0].mxu0
      %v4764 = vadd.f32 0.0, %v4763
      %v4765 = vpop.f32.mrb[0].mxu0
      %v4766 = vpop.f32.mrb[0].mxu0
      %4767 = vdwg.mxu0
      %4768 = vmatprep.subr.bf16.mxu0 %v4716
      %4769 = vmatpush1.bf16.msra.mxu0 %v4713
      %4770 = vmatprep.subr.bf16.mxu0 0
      %4771 = vmatpush1.bf16.msra.mxu0 0
      %4772 = vmatprep.subr.bf16.mxu0 0
      %4773 = vmatpush1.bf16.msra.mxu0 0
      %4774 = vmatprep.subr.bf16.mxu0 0
      %4775 = vmatpush1.bf16.msra.mxu0 0
      %4776 = vmatprep.subr.bf16.mxu0 0
      %4777 = vmatpush1.bf16.msra.mxu0 0
      %4778 = vmatprep.subr.bf16.mxu0 0
      %4779 = vmatpush1.bf16.msra.mxu0 0
      %4780 = vmatprep.subr.bf16.mxu0 0
      %4781 = vmatpush1.bf16.msra.mxu0 0
      %4782 = vmatprep.subr.bf16.mxu0 0
      %4783 = vmatpush1.bf16.msra.mxu0 0
      %4784 = vmatprep.subr.bf16.mxu0 0
      %4785 = vmatpush1.bf16.msra.mxu0 0
      %4786 = vmatprep.subr.bf16.mxu0 0
      %4787 = vmatpush1.bf16.msra.mxu0 0
      %4788 = vmatprep.subr.bf16.mxu0 0
      %4789 = vmatpush1.bf16.msra.mxu0 0
      %4790 = vmatprep.subr.bf16.mxu0 0
      %4791 = vmatpush1.bf16.msra.mxu0 0
      %4792 = vmatprep.subr.bf16.mxu0 0
      %4793 = vmatpush1.bf16.msra.mxu0 0
      %4794 = vmatprep.subr.bf16.mxu0 0
      %4795 = vmatpush1.bf16.msra.mxu0 0
      %4796 = vmatprep.subr.bf16.mxu0 0
      %4797 = vmatpush1.bf16.msra.mxu0 0
      %4798 = vmatprep.subr.bf16.mxu0 0
      %4799 = vmatpush1.bf16.msra.mxu0 0
      %4800 = vmatprep.mubr.bf16.mxu0 0
      %4801 = vmatmul.mubr.bf16.gmra.mrb[0].mxu0 %v4704
      %v4802 = vpop.f32.mrb[0].mxu0
      %v4803 = vadd.f32 0.0, %v4802
      %v4804 = vpop.f32.mrb[0].mxu0
      %v4805 = vadd.f32 0.0, %v4804
      %v4806 = vpop.f32.mrb[0].mxu0
      %v4807 = vpop.f32.mrb[0].mxu0
      %4808 = vdwg.mxu0
      %4809 = vmatprep.subr.bf16.mxu0 %v4722
      %4810 = vmatpush1.bf16.msra.mxu0 %v4719
      %4811 = vmatprep.subr.bf16.mxu0 0
      %4812 = vmatpush1.bf16.msra.mxu0 0
      %4813 = vmatprep.subr.bf16.mxu0 0
      %4814 = vmatpush1.bf16.msra.mxu0 0
      %4815 = vmatprep.subr.bf16.mxu0 0
      %4816 = vmatpush1.bf16.msra.mxu0 0
      %4817 = vmatprep.subr.bf16.mxu0 0
      %4818 = vmatpush1.bf16.msra.mxu0 0
      %4819 = vmatprep.subr.bf16.mxu0 0
      %4820 = vmatpush1.bf16.msra.mxu0 0
      %4821 = vmatprep.subr.bf16.mxu0 0
      %4822 = vmatpush1.bf16.msra.mxu0 0
      %4823 = vmatprep.subr.bf16.mxu0 0
      %4824 = vmatpush1.bf16.msra.mxu0 0
      %4825 = vmatprep.subr.bf16.mxu0 0
      %4826 = vmatpush1.bf16.msra.mxu0 0
      %4827 = vmatprep.subr.bf16.mxu0 0
      %4828 = vmatpush1.bf16.msra.mxu0 0
      %4829 = vmatprep.subr.bf16.mxu0 0
      %4830 = vmatpush1.bf16.msra.mxu0 0
      %4831 = vmatprep.subr.bf16.mxu0 0
      %4832 = vmatpush1.bf16.msra.mxu0 0
      %4833 = vmatprep.subr.bf16.mxu0 0
      %4834 = vmatpush1.bf16.msra.mxu0 0
      %4835 = vmatprep.subr.bf16.mxu0 0
      %4836 = vmatpush1.bf16.msra.mxu0 0
      %4837 = vmatprep.subr.bf16.mxu0 0
      %4838 = vmatpush1.bf16.msra.mxu0 0
      %4839 = vmatprep.subr.bf16.mxu0 0
      %4840 = vmatpush1.bf16.msra.mxu0 0
      %4841 = vmatprep.mubr.bf16.mxu0 0
      %4842 = vmatmul.mubr.bf16.gmra.mrb[0].mxu0 %v4704
      %v4843 = vpop.f32.mrb[0].mxu0
      %v4844 = vadd.f32 0.0, %v4843
      %v4845 = vpop.f32.mrb[0].mxu0
      %v4846 = vadd.f32 0.0, %v4845
      %v4847 = vpop.f32.mrb[0].mxu0
      %v4848 = vpop.f32.mrb[0].mxu0
      %4849 = vdwg.mxu0
      %4850 = vmatprep.subr.bf16.mxu0 0
      %4851 = vmatpush1.bf16.msra.mxu0 %v4725
      %4852 = vmatprep.subr.bf16.mxu0 0
      %4853 = vmatpush1.bf16.msra.mxu0 0
      %4854 = vmatprep.subr.bf16.mxu0 0
      %4855 = vmatpush1.bf16.msra.mxu0 0
      %4856 = vmatprep.subr.bf16.mxu0 0
      %4857 = vmatpush1.bf16.msra.mxu0 0
      %4858 = vmatprep.subr.bf16.mxu0 0
      %4859 = vmatpush1.bf16.msra.mxu0 0
      %4860 = vmatprep.subr.bf16.mxu0 0
      %4861 = vmatpush1.bf16.msra.mxu0 0
      %4862 = vmatprep.subr.bf16.mxu0 0
      %4863 = vmatpush1.bf16.msra.mxu0 0
      %4864 = vmatprep.subr.bf16.mxu0 0
      %4865 = vmatpush1.bf16.msra.mxu0 0
      %4866 = vmatprep.subr.bf16.mxu0 0
      %4867 = vmatpush1.bf16.msra.mxu0 0
      %4868 = vmatprep.subr.bf16.mxu0 0
      %4869 = vmatpush1.bf16.msra.mxu0 0
      %4870 = vmatprep.subr.bf16.mxu0 0
      %4871 = vmatpush1.bf16.msra.mxu0 0
      %4872 = vmatprep.subr.bf16.mxu0 0
      %4873 = vmatpush1.bf16.msra.mxu0 0
      %4874 = vmatprep.subr.bf16.mxu0 0
      %4875 = vmatpush1.bf16.msra.mxu0 0
      %4876 = vmatprep.subr.bf16.mxu0 0
      %4877 = vmatpush1.bf16.msra.mxu0 0
      %4878 = vmatprep.subr.bf16.mxu0 0
      %4879 = vmatpush1.bf16.msra.mxu0 0
      %4880 = vmatprep.subr.bf16.mxu0 0
      %4881 = vmatpush1.bf16.msra.mxu0 0
      %4882 = vmatprep.mubr.bf16.mxu0 0
      %4883 = vmatmul.mubr.bf16.gmra.mrb[0].mxu0 %v4704
      %v4884 = vpop.f32.mrb[0].mxu0
      %v4885 = vadd.f32 0.0, %v4884
      %v4886 = vpop.f32.mrb[0].mxu0
      %v4887 = vpop.f32.mrb[0].mxu0
      %v4888 = vpop.f32.mrb[0].mxu0
      %4889 = vdwg.mxu0
      %v4890 = vadd.f32 %v4632, %v4762
      %v4891 = vadd.f32 %v4633, %v4764
      %v4892 = vadd.f32 %v4634, %v4803
      %v4893 = vadd.f32 %v4635, %v4805
      %v4894 = vadd.f32 %v4636, %v4844
      %v4895 = vadd.f32 %v4637, %v4846
      %v4896 = vadd.f32 %v4638, %v4885
      %v4897 = vld [vmem:[%s278 + $0x2] sm:$0xff]
      %v4898 = vld [vmem:[%s278 + $0xa] sm:$0xff]
      %s4899 = scalar_lea.vmem %s1, 72
      %v4900 = vld [vmem:[%s4899] sm:$0xf]
      %v4903 = vcombine.high %v4897, %v4897
      %v4905 = vunpack.c.l.s4 1983009808
      %v4906 = vunpack.c.0.s8 %v4905
      %v4907 = vlaneseq
      %v4908 = vshrl.u32 %v4907, 7
      %v4909 = vsub.s32 %v4906, %v4908
      %v4910 = vrot.slane %v4897, %v4909
      %v4912 = vunpack.c.l.s4 1983009808
      %v4913 = vunpack.c.0.s8 %v4912
      %v4914 = vlaneseq
      %v4915 = vshrl.u32 %v4914, 7
      %v4916 = vsub.s32 %v4913, %v4915
      %v4917 = vrot.slane %v4903, %v4916
      %v4918 = vcombine.high %v4910, %v4910
      %v4919 = vcombine.high %v4917, %v4917
      %v4920 = vcombine.high %v4898, %v4898
      %v4922 = vunpack.c.l.s4 1983009808
      %v4923 = vunpack.c.0.s8 %v4922
      %v4924 = vlaneseq
      %v4925 = vshrl.u32 %v4924, 7
      %v4926 = vsub.s32 %v4923, %v4925
      %v4927 = vrot.slane %v4898, %v4926
      %v4929 = vunpack.c.l.s4 1983009808
      %v4930 = vunpack.c.0.s8 %v4929
      %v4931 = vlaneseq
      %v4932 = vshrl.u32 %v4931, 7
      %v4933 = vsub.s32 %v4930, %v4932
      %v4934 = vrot.slane %v4920, %v4933
      %v4935 = vcombine.high %v4927, %v4927
      %v4936 = vcombine.high %v4934, %v4934
      %4937 = vrot.lane.b32.xlu0 %v4910, 56
      %v4938 = vpop.permute.xlu0 %4937
      %4939 = vrot.lane.b32.xlu0 %v4918, 56
      %v4940 = vpop.permute.xlu0 %4939
      %4941 = vrot.lane.b32.xlu0 %v4917, 56
      %v4942 = vpop.permute.xlu0 %4941
      %4943 = vrot.lane.b32.xlu0 %v4919, 56
      %v4944 = vpop.permute.xlu0 %4943
      %4945 = vrot.lane.b32.xlu0 %v4927, 56
      %v4946 = vpop.permute.xlu0 %4945
      %4947 = vrot.lane.b32.xlu0 %v4935, 56
      %v4948 = vpop.permute.xlu0 %4947
      %4949 = vrot.lane.b32.xlu0 %v4934, 56
      %v4950 = vpop.permute.xlu0 %4949
      %4951 = vrot.lane.b32.xlu0 %v4936, 56
      %v4952 = vpop.permute.xlu0 %4951
      %vm4953 = vcmask 457728
      %v4954 = vsel %vm4953, %v4938, %v4940
      %v4955 = vsel %vm4953, %v4940, %v4942
      %v4956 = vsel %vm4953, %v4942, %v4944
      %v4957 = vsel %vm4953, %v4944, %v4946
      %v4958 = vsel %vm4953, %v4946, %v4948
      %v4959 = vsel %vm4953, %v4948, %v4950
      %v4960 = vsel %vm4953, %v4950, %v4952
      %v4962 = vsel %vm376, %v4900, 0
      %v4965 = vsel %vm380, %v4954, 0
      %v4968 = vsel %vm380, %v4955, 0
      %v4971 = vsel %vm380, %v4956, 0
      %v4974 = vsel %vm380, %v4957, 0
      %v4977 = vsel %vm380, %v4958, 0
      %v4980 = vsel %vm380, %v4959, 0
      %v4983 = vsel %vm380, %v4960, 0
      %4985 = vmatprep.subr.bf16.mxu0 %v4968
      %4986 = vmatpush1.bf16.msra.mxu0 %v4965
      %4987 = vmatprep.subr.bf16.mxu0 0
      %4988 = vmatpush1.bf16.msra.mxu0 0
      %4989 = vmatprep.subr.bf16.mxu0 0
      %4990 = vmatpush1.bf16.msra.mxu0 0
      %4991 = vmatprep.subr.bf16.mxu0 0
      %4992 = vmatpush1.bf16.msra.mxu0 0
      %4993 = vmatprep.subr.bf16.mxu0 0
      %4994 = vmatpush1.bf16.msra.mxu0 0
      %4995 = vmatprep.subr.bf16.mxu0 0
      %4996 = vmatpush1.bf16.msra.mxu0 0
      %4997 = vmatprep.subr.bf16.mxu0 0
      %4998 = vmatpush1.bf16.msra.mxu0 0
      %4999 = vmatprep.subr.bf16.mxu0 0
      %5000 = vmatpush1.bf16.msra.mxu0 0
      %5001 = vmatprep.subr.bf16.mxu0 0
      %5002 = vmatpush1.bf16.msra.mxu0 0
      %5003 = vmatprep.subr.bf16.mxu0 0
      %5004 = vmatpush1.bf16.msra.mxu0 0
      %5005 = vmatprep.subr.bf16.mxu0 0
      %5006 = vmatpush1.bf16.msra.mxu0 0
      %5007 = vmatprep.subr.bf16.mxu0 0
      %5008 = vmatpush1.bf16.msra.mxu0 0
      %5009 = vmatprep.subr.bf16.mxu0 0
      %5010 = vmatpush1.bf16.msra.mxu0 0
      %5011 = vmatprep.subr.bf16.mxu0 0
      %5012 = vmatpush1.bf16.msra.mxu0 0
      %5013 = vmatprep.subr.bf16.mxu0 0
      %5014 = vmatpush1.bf16.msra.mxu0 0
      %5015 = vmatprep.subr.bf16.mxu0 0
      %5016 = vmatpush1.bf16.msra.mxu0 0
      %5017 = vmatprep.mubr.bf16.mxu0 0
      %5018 = vmatmul.mubr.bf16.gmra.mrb[0].mxu0 %v4962
      %v5019 = vpop.f32.mrb[0].mxu0
      %v5020 = vadd.f32 0.0, %v5019
      %v5021 = vpop.f32.mrb[0].mxu0
      %v5022 = vadd.f32 0.0, %v5021
      %v5023 = vpop.f32.mrb[0].mxu0
      %v5024 = vpop.f32.mrb[0].mxu0
      %5025 = vdwg.mxu0
      %5026 = vmatprep.subr.bf16.mxu0 %v4974
      %5027 = vmatpush1.bf16.msra.mxu0 %v4971
      %5028 = vmatprep.subr.bf16.mxu0 0
      %5029 = vmatpush1.bf16.msra.mxu0 0
      %5030 = vmatprep.subr.bf16.mxu0 0
      %5031 = vmatpush1.bf16.msra.mxu0 0
      %5032 = vmatprep.subr.bf16.mxu0 0
      %5033 = vmatpush1.bf16.msra.mxu0 0
      %5034 = vmatprep.subr.bf16.mxu0 0
      %5035 = vmatpush1.bf16.msra.mxu0 0
      %5036 = vmatprep.subr.bf16.mxu0 0
      %5037 = vmatpush1.bf16.msra.mxu0 0
      %5038 = vmatprep.subr.bf16.mxu0 0
      %5039 = vmatpush1.bf16.msra.mxu0 0
      %5040 = vmatprep.subr.bf16.mxu0 0
      %5041 = vmatpush1.bf16.msra.mxu0 0
      %5042 = vmatprep.subr.bf16.mxu0 0
      %5043 = vmatpush1.bf16.msra.mxu0 0
      %5044 = vmatprep.subr.bf16.mxu0 0
      %5045 = vmatpush1.bf16.msra.mxu0 0
      %5046 = vmatprep.subr.bf16.mxu0 0
      %5047 = vmatpush1.bf16.msra.mxu0 0
      %5048 = vmatprep.subr.bf16.mxu0 0
      %5049 = vmatpush1.bf16.msra.mxu0 0
      %5050 = vmatprep.subr.bf16.mxu0 0
      %5051 = vmatpush1.bf16.msra.mxu0 0
      %5052 = vmatprep.subr.bf16.mxu0 0
      %5053 = vmatpush1.bf16.msra.mxu0 0
      %5054 = vmatprep.subr.bf16.mxu0 0
      %5055 = vmatpush1.bf16.msra.mxu0 0
      %5056 = vmatprep.subr.bf16.mxu0 0
      %5057 = vmatpush1.bf16.msra.mxu0 0
      %5058 = vmatprep.mubr.bf16.mxu0 0
      %5059 = vmatmul.mubr.bf16.gmra.mrb[0].mxu0 %v4962
      %v5060 = vpop.f32.mrb[0].mxu0
      %v5061 = vadd.f32 0.0, %v5060
      %v5062 = vpop.f32.mrb[0].mxu0
      %v5063 = vadd.f32 0.0, %v5062
      %v5064 = vpop.f32.mrb[0].mxu0
      %v5065 = vpop.f32.mrb[0].mxu0
      %5066 = vdwg.mxu0
      %5067 = vmatprep.subr.bf16.mxu0 %v4980
      %5068 = vmatpush1.bf16.msra.mxu0 %v4977
      %5069 = vmatprep.subr.bf16.mxu0 0
      %5070 = vmatpush1.bf16.msra.mxu0 0
      %5071 = vmatprep.subr.bf16.mxu0 0
      %5072 = vmatpush1.bf16.msra.mxu0 0
      %5073 = vmatprep.subr.bf16.mxu0 0
      %5074 = vmatpush1.bf16.msra.mxu0 0
      %5075 = vmatprep.subr.bf16.mxu0 0
      %5076 = vmatpush1.bf16.msra.mxu0 0
      %5077 = vmatprep.subr.bf16.mxu0 0
      %5078 = vmatpush1.bf16.msra.mxu0 0
      %5079 = vmatprep.subr.bf16.mxu0 0
      %5080 = vmatpush1.bf16.msra.mxu0 0
      %5081 = vmatprep.subr.bf16.mxu0 0
      %5082 = vmatpush1.bf16.msra.mxu0 0
      %5083 = vmatprep.subr.bf16.mxu0 0
      %5084 = vmatpush1.bf16.msra.mxu0 0
      %5085 = vmatprep.subr.bf16.mxu0 0
      %5086 = vmatpush1.bf16.msra.mxu0 0
      %5087 = vmatprep.subr.bf16.mxu0 0
      %5088 = vmatpush1.bf16.msra.mxu0 0
      %5089 = vmatprep.subr.bf16.mxu0 0
      %5090 = vmatpush1.bf16.msra.mxu0 0
      %5091 = vmatprep.subr.bf16.mxu0 0
      %5092 = vmatpush1.bf16.msra.mxu0 0
      %5093 = vmatprep.subr.bf16.mxu0 0
      %5094 = vmatpush1.bf16.msra.mxu0 0
      %5095 = vmatprep.subr.bf16.mxu0 0
      %5096 = vmatpush1.bf16.msra.mxu0 0
      %5097 = vmatprep.subr.bf16.mxu0 0
      %5098 = vmatpush1.bf16.msra.mxu0 0
      %5099 = vmatprep.mubr.bf16.mxu0 0
      %5100 = vmatmul.mubr.bf16.gmra.mrb[0].mxu0 %v4962
      %v5101 = vpop.f32.mrb[0].mxu0
      %v5102 = vadd.f32 0.0, %v5101
      %v5103 = vpop.f32.mrb[0].mxu0
      %v5104 = vadd.f32 0.0, %v5103
      %v5105 = vpop.f32.mrb[0].mxu0
      %v5106 = vpop.f32.mrb[0].mxu0
      %5107 = vdwg.mxu0
      %5108 = vmatprep.subr.bf16.mxu0 0
      %5109 = vmatpush1.bf16.msra.mxu0 %v4983
      %5110 = vmatprep.subr.bf16.mxu0 0
      %5111 = vmatpush1.bf16.msra.mxu0 0
      %5112 = vmatprep.subr.bf16.mxu0 0
      %5113 = vmatpush1.bf16.msra.mxu0 0
      %5114 = vmatprep.subr.bf16.mxu0 0
      %5115 = vmatpush1.bf16.msra.mxu0 0
      %5116 = vmatprep.subr.bf16.mxu0 0
      %5117 = vmatpush1.bf16.msra.mxu0 0
      %5118 = vmatprep.subr.bf16.mxu0 0
      %5119 = vmatpush1.bf16.msra.mxu0 0
      %5120 = vmatprep.subr.bf16.mxu0 0
      %5121 = vmatpush1.bf16.msra.mxu0 0
      %5122 = vmatprep.subr.bf16.mxu0 0
      %5123 = vmatpush1.bf16.msra.mxu0 0
      %5124 = vmatprep.subr.bf16.mxu0 0
      %5125 = vmatpush1.bf16.msra.mxu0 0
      %5126 = vmatprep.subr.bf16.mxu0 0
      %5127 = vmatpush1.bf16.msra.mxu0 0
      %5128 = vmatprep.subr.bf16.mxu0 0
      %5129 = vmatpush1.bf16.msra.mxu0 0
      %5130 = vmatprep.subr.bf16.mxu0 0
      %5131 = vmatpush1.bf16.msra.mxu0 0
      %5132 = vmatprep.subr.bf16.mxu0 0
      %5133 = vmatpush1.bf16.msra.mxu0 0
      %5134 = vmatprep.subr.bf16.mxu0 0
      %5135 = vmatpush1.bf16.msra.mxu0 0
      %5136 = vmatprep.subr.bf16.mxu0 0
      %5137 = vmatpush1.bf16.msra.mxu0 0
      %5138 = vmatprep.subr.bf16.mxu0 0
      %5139 = vmatpush1.bf16.msra.mxu0 0
      %5140 = vmatprep.mubr.bf16.mxu0 0
      %5141 = vmatmul.mubr.bf16.gmra.mrb[0].mxu0 %v4962
      %v5142 = vpop.f32.mrb[0].mxu0
      %v5143 = vadd.f32 0.0, %v5142
      %v5144 = vpop.f32.mrb[0].mxu0
      %v5145 = vpop.f32.mrb[0].mxu0
      %v5146 = vpop.f32.mrb[0].mxu0
      %5147 = vdwg.mxu0
      %v5148 = vadd.f32 %v4890, %v5020
      %v5149 = vadd.f32 %v4891, %v5022
      %v5150 = vadd.f32 %v4892, %v5061
      %v5151 = vadd.f32 %v4893, %v5063
      %v5152 = vadd.f32 %v4894, %v5102
      %v5153 = vadd.f32 %v4895, %v5104
      %v5154 = vadd.f32 %v4896, %v5143
      %v5155 = vld [vmem:[%s278 + $0x2] sm:$0xff]
      %v5156 = vld [vmem:[%s278 + $0xa] sm:$0xff]
      %s5157 = scalar_lea.vmem %s1, 76
      %v5158 = vld [vmem:[%s5157] sm:$0xf]
      %v5161 = vcombine.high %v5155, %v5155
      %v5163 = vunpack.c.l.s4 1983009808
      %v5164 = vunpack.c.0.s8 %v5163
      %v5165 = vlaneseq
      %v5166 = vshrl.u32 %v5165, 7
      %v5167 = vsub.s32 %v5164, %v5166
      %v5168 = vrot.slane %v5155, %v5167
      %v5170 = vunpack.c.l.s4 1983009808
      %v5171 = vunpack.c.0.s8 %v5170
      %v5172 = vlaneseq
      %v5173 = vshrl.u32 %v5172, 7
      %v5174 = vsub.s32 %v5171, %v5173
      %v5175 = vrot.slane %v5161, %v5174
      %v5176 = vcombine.high %v5168, %v5168
      %v5177 = vcombine.high %v5175, %v5175
      %v5178 = vcombine.high %v5156, %v5156
      %v5180 = vunpack.c.l.s4 1983009808
      %v5181 = vunpack.c.0.s8 %v5180
      %v5182 = vlaneseq
      %v5183 = vshrl.u32 %v5182, 7
      %v5184 = vsub.s32 %v5181, %v5183
      %v5185 = vrot.slane %v5156, %v5184
      %v5187 = vunpack.c.l.s4 1983009808
      %v5188 = vunpack.c.0.s8 %v5187
      %v5189 = vlaneseq
      %v5190 = vshrl.u32 %v5189, 7
      %v5191 = vsub.s32 %v5188, %v5190
      %v5192 = vrot.slane %v5178, %v5191
      %v5193 = vcombine.high %v5185, %v5185
      %v5194 = vcombine.high %v5192, %v5192
      %5195 = vrot.lane.b32.xlu0 %v5168, 55
      %v5196 = vpop.permute.xlu0 %5195
      %5197 = vrot.lane.b32.xlu0 %v5176, 55
      %v5198 = vpop.permute.xlu0 %5197
      %5199 = vrot.lane.b32.xlu0 %v5175, 55
      %v5200 = vpop.permute.xlu0 %5199
      %5201 = vrot.lane.b32.xlu0 %v5177, 55
      %v5202 = vpop.permute.xlu0 %5201
      %5203 = vrot.lane.b32.xlu0 %v5185, 55
      %v5204 = vpop.permute.xlu0 %5203
      %5205 = vrot.lane.b32.xlu0 %v5193, 55
      %v5206 = vpop.permute.xlu0 %5205
      %5207 = vrot.lane.b32.xlu0 %v5192, 55
      %v5208 = vpop.permute.xlu0 %5207
      %5209 = vrot.lane.b32.xlu0 %v5194, 55
      %v5210 = vpop.permute.xlu0 %5209
      %vm5211 = vcmask 449536
      %v5212 = vsel %vm5211, %v5196, %v5198
      %v5213 = vsel %vm5211, %v5198, %v5200
      %v5214 = vsel %vm5211, %v5200, %v5202
      %v5215 = vsel %vm5211, %v5202, %v5204
      %v5216 = vsel %vm5211, %v5204, %v5206
      %v5217 = vsel %vm5211, %v5206, %v5208
      %v5218 = vsel %vm5211, %v5208, %v5210
      %v5220 = vsel %vm376, %v5158, 0
      %v5223 = vsel %vm380, %v5212, 0
      %v5226 = vsel %vm380, %v5213, 0
      %v5229 = vsel %vm380, %v5214, 0
      %v5232 = vsel %vm380, %v5215, 0
      %v5235 = vsel %vm380, %v5216, 0
      %v5238 = vsel %vm380, %v5217, 0
      %v5241 = vsel %vm380, %v5218, 0
      %5243 = vmatprep.subr.bf16.mxu0 %v5226
      %5244 = vmatpush1.bf16.msra.mxu0 %v5223
      %5245 = vmatprep.subr.bf16.mxu0 0
      %5246 = vmatpush1.bf16.msra.mxu0 0
      %5247 = vmatprep.subr.bf16.mxu0 0
      %5248 = vmatpush1.bf16.msra.mxu0 0
      %5249 = vmatprep.subr.bf16.mxu0 0
      %5250 = vmatpush1.bf16.msra.mxu0 0
      %5251 = vmatprep.subr.bf16.mxu0 0
      %5252 = vmatpush1.bf16.msra.mxu0 0
      %5253 = vmatprep.subr.bf16.mxu0 0
      %5254 = vmatpush1.bf16.msra.mxu0 0
      %5255 = vmatprep.subr.bf16.mxu0 0
      %5256 = vmatpush1.bf16.msra.mxu0 0
      %5257 = vmatprep.subr.bf16.mxu0 0
      %5258 = vmatpush1.bf16.msra.mxu0 0
      %5259 = vmatprep.subr.bf16.mxu0 0
      %5260 = vmatpush1.bf16.msra.mxu0 0
      %5261 = vmatprep.subr.bf16.mxu0 0
      %5262 = vmatpush1.bf16.msra.mxu0 0
      %5263 = vmatprep.subr.bf16.mxu0 0
      %5264 = vmatpush1.bf16.msra.mxu0 0
      %5265 = vmatprep.subr.bf16.mxu0 0
      %5266 = vmatpush1.bf16.msra.mxu0 0
      %5267 = vmatprep.subr.bf16.mxu0 0
      %5268 = vmatpush1.bf16.msra.mxu0 0
      %5269 = vmatprep.subr.bf16.mxu0 0
      %5270 = vmatpush1.bf16.msra.mxu0 0
      %5271 = vmatprep.subr.bf16.mxu0 0
      %5272 = vmatpush1.bf16.msra.mxu0 0
      %5273 = vmatprep.subr.bf16.mxu0 0
      %5274 = vmatpush1.bf16.msra.mxu0 0
      %5275 = vmatprep.mubr.bf16.mxu0 0
      %5276 = vmatmul.mubr.bf16.gmra.mrb[0].mxu0 %v5220
      %v5277 = vpop.f32.mrb[0].mxu0
      %v5278 = vadd.f32 0.0, %v5277
      %v5279 = vpop.f32.mrb[0].mxu0
      %v5280 = vadd.f32 0.0, %v5279
      %v5281 = vpop.f32.mrb[0].mxu0
      %v5282 = vpop.f32.mrb[0].mxu0
      %5283 = vdwg.mxu0
      %5284 = vmatprep.subr.bf16.mxu0 %v5232
      %5285 = vmatpush1.bf16.msra.mxu0 %v5229
      %5286 = vmatprep.subr.bf16.mxu0 0
      %5287 = vmatpush1.bf16.msra.mxu0 0
      %5288 = vmatprep.subr.bf16.mxu0 0
      %5289 = vmatpush1.bf16.msra.mxu0 0
      %5290 = vmatprep.subr.bf16.mxu0 0
      %5291 = vmatpush1.bf16.msra.mxu0 0
      %5292 = vmatprep.subr.bf16.mxu0 0
      %5293 = vmatpush1.bf16.msra.mxu0 0
      %5294 = vmatprep.subr.bf16.mxu0 0
      %5295 = vmatpush1.bf16.msra.mxu0 0
      %5296 = vmatprep.subr.bf16.mxu0 0
      %5297 = vmatpush1.bf16.msra.mxu0 0
      %5298 = vmatprep.subr.bf16.mxu0 0
      %5299 = vmatpush1.bf16.msra.mxu0 0
      %5300 = vmatprep.subr.bf16.mxu0 0
      %5301 = vmatpush1.bf16.msra.mxu0 0
      %5302 = vmatprep.subr.bf16.mxu0 0
      %5303 = vmatpush1.bf16.msra.mxu0 0
      %5304 = vmatprep.subr.bf16.mxu0 0
      %5305 = vmatpush1.bf16.msra.mxu0 0
      %5306 = vmatprep.subr.bf16.mxu0 0
      %5307 = vmatpush1.bf16.msra.mxu0 0
      %5308 = vmatprep.subr.bf16.mxu0 0
      %5309 = vmatpush1.bf16.msra.mxu0 0
      %5310 = vmatprep.subr.bf16.mxu0 0
      %5311 = vmatpush1.bf16.msra.mxu0 0
      %5312 = vmatprep.subr.bf16.mxu0 0
      %5313 = vmatpush1.bf16.msra.mxu0 0
      %5314 = vmatprep.subr.bf16.mxu0 0
      %5315 = vmatpush1.bf16.msra.mxu0 0
      %5316 = vmatprep.mubr.bf16.mxu0 0
      %5317 = vmatmul.mubr.bf16.gmra.mrb[0].mxu0 %v5220
      %v5318 = vpop.f32.mrb[0].mxu0
      %v5319 = vadd.f32 0.0, %v5318
      %v5320 = vpop.f32.mrb[0].mxu0
      %v5321 = vadd.f32 0.0, %v5320
      %v5322 = vpop.f32.mrb[0].mxu0
      %v5323 = vpop.f32.mrb[0].mxu0
      %5324 = vdwg.mxu0
      %5325 = vmatprep.subr.bf16.mxu0 %v5238
      %5326 = vmatpush1.bf16.msra.mxu0 %v5235
      %5327 = vmatprep.subr.bf16.mxu0 0
      %5328 = vmatpush1.bf16.msra.mxu0 0
      %5329 = vmatprep.subr.bf16.mxu0 0
      %5330 = vmatpush1.bf16.msra.mxu0 0
      %5331 = vmatprep.subr.bf16.mxu0 0
      %5332 = vmatpush1.bf16.msra.mxu0 0
      %5333 = vmatprep.subr.bf16.mxu0 0
      %5334 = vmatpush1.bf16.msra.mxu0 0
      %5335 = vmatprep.subr.bf16.mxu0 0
      %5336 = vmatpush1.bf16.msra.mxu0 0
      %5337 = vmatprep.subr.bf16.mxu0 0
      %5338 = vmatpush1.bf16.msra.mxu0 0
      %5339 = vmatprep.subr.bf16.mxu0 0
      %5340 = vmatpush1.bf16.msra.mxu0 0
      %5341 = vmatprep.subr.bf16.mxu0 0
      %5342 = vmatpush1.bf16.msra.mxu0 0
      %5343 = vmatprep.subr.bf16.mxu0 0
      %5344 = vmatpush1.bf16.msra.mxu0 0
      %5345 = vmatprep.subr.bf16.mxu0 0
      %5346 = vmatpush1.bf16.msra.mxu0 0
      %5347 = vmatprep.subr.bf16.mxu0 0
      %5348 = vmatpush1.bf16.msra.mxu0 0
      %5349 = vmatprep.subr.bf16.mxu0 0
      %5350 = vmatpush1.bf16.msra.mxu0 0
      %5351 = vmatprep.subr.bf16.mxu0 0
      %5352 = vmatpush1.bf16.msra.mxu0 0
      %5353 = vmatprep.subr.bf16.mxu0 0
      %5354 = vmatpush1.bf16.msra.mxu0 0
      %5355 = vmatprep.subr.bf16.mxu0 0
      %5356 = vmatpush1.bf16.msra.mxu0 0
      %5357 = vmatprep.mubr.bf16.mxu0 0
      %5358 = vmatmul.mubr.bf16.gmra.mrb[0].mxu0 %v5220
      %v5359 = vpop.f32.mrb[0].mxu0
      %v5360 = vadd.f32 0.0, %v5359
      %v5361 = vpop.f32.mrb[0].mxu0
      %v5362 = vadd.f32 0.0, %v5361
      %v5363 = vpop.f32.mrb[0].mxu0
      %v5364 = vpop.f32.mrb[0].mxu0
      %5365 = vdwg.mxu0
      %5366 = vmatprep.subr.bf16.mxu0 0
      %5367 = vmatpush1.bf16.msra.mxu0 %v5241
      %5368 = vmatprep.subr.bf16.mxu0 0
      %5369 = vmatpush1.bf16.msra.mxu0 0
      %5370 = vmatprep.subr.bf16.mxu0 0
      %5371 = vmatpush1.bf16.msra.mxu0 0
      %5372 = vmatprep.subr.bf16.mxu0 0
      %5373 = vmatpush1.bf16.msra.mxu0 0
      %5374 = vmatprep.subr.bf16.mxu0 0
      %5375 = vmatpush1.bf16.msra.mxu0 0
      %5376 = vmatprep.subr.bf16.mxu0 0
      %5377 = vmatpush1.bf16.msra.mxu0 0
      %5378 = vmatprep.subr.bf16.mxu0 0
      %5379 = vmatpush1.bf16.msra.mxu0 0
      %5380 = vmatprep.subr.bf16.mxu0 0
      %5381 = vmatpush1.bf16.msra.mxu0 0
      %5382 = vmatprep.subr.bf16.mxu0 0
      %5383 = vmatpush1.bf16.msra.mxu0 0
      %5384 = vmatprep.subr.bf16.mxu0 0
      %5385 = vmatpush1.bf16.msra.mxu0 0
      %5386 = vmatprep.subr.bf16.mxu0 0
      %5387 = vmatpush1.bf16.msra.mxu0 0
      %5388 = vmatprep.subr.bf16.mxu0 0
      %5389 = vmatpush1.bf16.msra.mxu0 0
      %5390 = vmatprep.subr.bf16.mxu0 0
      %5391 = vmatpush1.bf16.msra.mxu0 0
      %5392 = vmatprep.subr.bf16.mxu0 0
      %5393 = vmatpush1.bf16.msra.mxu0 0
      %5394 = vmatprep.subr.bf16.mxu0 0
      %5395 = vmatpush1.bf16.msra.mxu0 0
      %5396 = vmatprep.subr.bf16.mxu0 0
      %5397 = vmatpush1.bf16.msra.mxu0 0
      %5398 = vmatprep.mubr.bf16.mxu0 0
      %5399 = vmatmul.mubr.bf16.gmra.mrb[0].mxu0 %v5220
      %v5400 = vpop.f32.mrb[0].mxu0
      %v5401 = vadd.f32 0.0, %v5400
      %v5402 = vpop.f32.mrb[0].mxu0
      %v5403 = vpop.f32.mrb[0].mxu0
      %v5404 = vpop.f32.mrb[0].mxu0
      %5405 = vdwg.mxu0
      %v5406 = vadd.f32 %v5148, %v5278
      %v5407 = vadd.f32 %v5149, %v5280
      %v5408 = vadd.f32 %v5150, %v5319
      %v5409 = vadd.f32 %v5151, %v5321
      %v5410 = vadd.f32 %v5152, %v5360
      %v5411 = vadd.f32 %v5153, %v5362
      %v5412 = vadd.f32 %v5154, %v5401
      %v5413 = vld [vmem:[%s278 + $0x2] sm:$0xff]
      %v5414 = vld [vmem:[%s278 + $0xa] sm:$0xff]
      %s5415 = scalar_lea.vmem %s1, 80
      %v5416 = vld [vmem:[%s5415] sm:$0xf]
      %v5419 = vcombine.high %v5413, %v5413
      %v5421 = vunpack.c.l.s4 1983009808
      %v5422 = vunpack.c.0.s8 %v5421
      %v5423 = vlaneseq
      %v5424 = vshrl.u32 %v5423, 7
      %v5425 = vsub.s32 %v5422, %v5424
      %v5426 = vrot.slane %v5413, %v5425
      %v5428 = vunpack.c.l.s4 1983009808
      %v5429 = vunpack.c.0.s8 %v5428
      %v5430 = vlaneseq
      %v5431 = vshrl.u32 %v5430, 7
      %v5432 = vsub.s32 %v5429, %v5431
      %v5433 = vrot.slane %v5419, %v5432
      %v5434 = vcombine.high %v5426, %v5426
      %v5435 = vcombine.high %v5433, %v5433
      %v5436 = vcombine.high %v5414, %v5414
      %v5438 = vunpack.c.l.s4 1983009808
      %v5439 = vunpack.c.0.s8 %v5438
      %v5440 = vlaneseq
      %v5441 = vshrl.u32 %v5440, 7
      %v5442 = vsub.s32 %v5439, %v5441
      %v5443 = vrot.slane %v5414, %v5442
      %v5445 = vunpack.c.l.s4 1983009808
      %v5446 = vunpack.c.0.s8 %v5445
      %v5447 = vlaneseq
      %v5448 = vshrl.u32 %v5447, 7
      %v5449 = vsub.s32 %v5446, %v5448
      %v5450 = vrot.slane %v5436, %v5449
      %v5451 = vcombine.high %v5443, %v5443
      %v5452 = vcombine.high %v5450, %v5450
      %5453 = vrot.lane.b32.xlu0 %v5426, 54
      %v5454 = vpop.permute.xlu0 %5453
      %5455 = vrot.lane.b32.xlu0 %v5434, 54
      %v5456 = vpop.permute.xlu0 %5455
      %5457 = vrot.lane.b32.xlu0 %v5433, 54
      %v5458 = vpop.permute.xlu0 %5457
      %5459 = vrot.lane.b32.xlu0 %v5435, 54
      %v5460 = vpop.permute.xlu0 %5459
      %5461 = vrot.lane.b32.xlu0 %v5443, 54
      %v5462 = vpop.permute.xlu0 %5461
      %5463 = vrot.lane.b32.xlu0 %v5451, 54
      %v5464 = vpop.permute.xlu0 %5463
      %5465 = vrot.lane.b32.xlu0 %v5450, 54
      %v5466 = vpop.permute.xlu0 %5465
      %5467 = vrot.lane.b32.xlu0 %v5452, 54
      %v5468 = vpop.permute.xlu0 %5467
      %vm5469 = vcmask 441344
      %v5470 = vsel %vm5469, %v5454, %v5456
      %v5471 = vsel %vm5469, %v5456, %v5458
      %v5472 = vsel %vm5469, %v5458, %v5460
      %v5473 = vsel %vm5469, %v5460, %v5462
      %v5474 = vsel %vm5469, %v5462, %v5464
      %v5475 = vsel %vm5469, %v5464, %v5466
      %v5476 = vsel %vm5469, %v5466, %v5468
      %v5478 = vsel %vm376, %v5416, 0
      %v5481 = vsel %vm380, %v5470, 0
      %v5484 = vsel %vm380, %v5471, 0
      %v5487 = vsel %vm380, %v5472, 0
      %v5490 = vsel %vm380, %v5473, 0
      %v5493 = vsel %vm380, %v5474, 0
      %v5496 = vsel %vm380, %v5475, 0
      %v5499 = vsel %vm380, %v5476, 0
      %5501 = vmatprep.subr.bf16.mxu0 %v5484
      %5502 = vmatpush1.bf16.msra.mxu0 %v5481
      %5503 = vmatprep.subr.bf16.mxu0 0
      %5504 = vmatpush1.bf16.msra.mxu0 0
      %5505 = vmatprep.subr.bf16.mxu0 0
      %5506 = vmatpush1.bf16.msra.mxu0 0
      %5507 = vmatprep.subr.bf16.mxu0 0
      %5508 = vmatpush1.bf16.msra.mxu0 0
      %5509 = vmatprep.subr.bf16.mxu0 0
      %5510 = vmatpush1.bf16.msra.mxu0 0
      %5511 = vmatprep.subr.bf16.mxu0 0
      %5512 = vmatpush1.bf16.msra.mxu0 0
      %5513 = vmatprep.subr.bf16.mxu0 0
      %5514 = vmatpush1.bf16.msra.mxu0 0
      %5515 = vmatprep.subr.bf16.mxu0 0
      %5516 = vmatpush1.bf16.msra.mxu0 0
      %5517 = vmatprep.subr.bf16.mxu0 0
      %5518 = vmatpush1.bf16.msra.mxu0 0
      %5519 = vmatprep.subr.bf16.mxu0 0
      %5520 = vmatpush1.bf16.msra.mxu0 0
      %5521 = vmatprep.subr.bf16.mxu0 0
      %5522 = vmatpush1.bf16.msra.mxu0 0
      %5523 = vmatprep.subr.bf16.mxu0 0
      %5524 = vmatpush1.bf16.msra.mxu0 0
      %5525 = vmatprep.subr.bf16.mxu0 0
      %5526 = vmatpush1.bf16.msra.mxu0 0
      %5527 = vmatprep.subr.bf16.mxu0 0
      %5528 = vmatpush1.bf16.msra.mxu0 0
      %5529 = vmatprep.subr.bf16.mxu0 0
      %5530 = vmatpush1.bf16.msra.mxu0 0
      %5531 = vmatprep.subr.bf16.mxu0 0
      %5532 = vmatpush1.bf16.msra.mxu0 0
      %5533 = vmatprep.mubr.bf16.mxu0 0
      %5534 = vmatmul.mubr.bf16.gmra.mrb[0].mxu0 %v5478
      %v5535 = vpop.f32.mrb[0].mxu0
      %v5536 = vadd.f32 0.0, %v5535
      %v5537 = vpop.f32.mrb[0].mxu0
      %v5538 = vadd.f32 0.0, %v5537
      %v5539 = vpop.f32.mrb[0].mxu0
      %v5540 = vpop.f32.mrb[0].mxu0
      %5541 = vdwg.mxu0
      %5542 = vmatprep.subr.bf16.mxu0 %v5490
      %5543 = vmatpush1.bf16.msra.mxu0 %v5487
      %5544 = vmatprep.subr.bf16.mxu0 0
      %5545 = vmatpush1.bf16.msra.mxu0 0
      %5546 = vmatprep.subr.bf16.mxu0 0
      %5547 = vmatpush1.bf16.msra.mxu0 0
      %5548 = vmatprep.subr.bf16.mxu0 0
      %5549 = vmatpush1.bf16.msra.mxu0 0
      %5550 = vmatprep.subr.bf16.mxu0 0
      %5551 = vmatpush1.bf16.msra.mxu0 0
      %5552 = vmatprep.subr.bf16.mxu0 0
      %5553 = vmatpush1.bf16.msra.mxu0 0
      %5554 = vmatprep.subr.bf16.mxu0 0
      %5555 = vmatpush1.bf16.msra.mxu0 0
      %5556 = vmatprep.subr.bf16.mxu0 0
      %5557 = vmatpush1.bf16.msra.mxu0 0
      %5558 = vmatprep.subr.bf16.mxu0 0
      %5559 = vmatpush1.bf16.msra.mxu0 0
      %5560 = vmatprep.subr.bf16.mxu0 0
      %5561 = vmatpush1.bf16.msra.mxu0 0
      %5562 = vmatprep.subr.bf16.mxu0 0
      %5563 = vmatpush1.bf16.msra.mxu0 0
      %5564 = vmatprep.subr.bf16.mxu0 0
      %5565 = vmatpush1.bf16.msra.mxu0 0
      %5566 = vmatprep.subr.bf16.mxu0 0
      %5567 = vmatpush1.bf16.msra.mxu0 0
      %5568 = vmatprep.subr.bf16.mxu0 0
      %5569 = vmatpush1.bf16.msra.mxu0 0
      %5570 = vmatprep.subr.bf16.mxu0 0
      %5571 = vmatpush1.bf16.msra.mxu0 0
      %5572 = vmatprep.subr.bf16.mxu0 0
      %5573 = vmatpush1.bf16.msra.mxu0 0
      %5574 = vmatprep.mubr.bf16.mxu0 0
      %5575 = vmatmul.mubr.bf16.gmra.mrb[0].mxu0 %v5478
      %v5576 = vpop.f32.mrb[0].mxu0
      %v5577 = vadd.f32 0.0, %v5576
      %v5578 = vpop.f32.mrb[0].mxu0
      %v5579 = vadd.f32 0.0, %v5578
      %v5580 = vpop.f32.mrb[0].mxu0
      %v5581 = vpop.f32.mrb[0].mxu0
      %5582 = vdwg.mxu0
      %5583 = vmatprep.subr.bf16.mxu0 %v5496
      %5584 = vmatpush1.bf16.msra.mxu0 %v5493
      %5585 = vmatprep.subr.bf16.mxu0 0
      %5586 = vmatpush1.bf16.msra.mxu0 0
      %5587 = vmatprep.subr.bf16.mxu0 0
      %5588 = vmatpush1.bf16.msra.mxu0 0
      %5589 = vmatprep.subr.bf16.mxu0 0
      %5590 = vmatpush1.bf16.msra.mxu0 0
      %5591 = vmatprep.subr.bf16.mxu0 0
      %5592 = vmatpush1.bf16.msra.mxu0 0
      %5593 = vmatprep.subr.bf16.mxu0 0
      %5594 = vmatpush1.bf16.msra.mxu0 0
      %5595 = vmatprep.subr.bf16.mxu0 0
      %5596 = vmatpush1.bf16.msra.mxu0 0
      %5597 = vmatprep.subr.bf16.mxu0 0
      %5598 = vmatpush1.bf16.msra.mxu0 0
      %5599 = vmatprep.subr.bf16.mxu0 0
      %5600 = vmatpush1.bf16.msra.mxu0 0
      %5601 = vmatprep.subr.bf16.mxu0 0
      %5602 = vmatpush1.bf16.msra.mxu0 0
      %5603 = vmatprep.subr.bf16.mxu0 0
      %5604 = vmatpush1.bf16.msra.mxu0 0
      %5605 = vmatprep.subr.bf16.mxu0 0
      %5606 = vmatpush1.bf16.msra.mxu0 0
      %5607 = vmatprep.subr.bf16.mxu0 0
      %5608 = vmatpush1.bf16.msra.mxu0 0
      %5609 = vmatprep.subr.bf16.mxu0 0
      %5610 = vmatpush1.bf16.msra.mxu0 0
      %5611 = vmatprep.subr.bf16.mxu0 0
      %5612 = vmatpush1.bf16.msra.mxu0 0
      %5613 = vmatprep.subr.bf16.mxu0 0
      %5614 = vmatpush1.bf16.msra.mxu0 0
      %5615 = vmatprep.mubr.bf16.mxu0 0
      %5616 = vmatmul.mubr.bf16.gmra.mrb[0].mxu0 %v5478
      %v5617 = vpop.f32.mrb[0].mxu0
      %v5618 = vadd.f32 0.0, %v5617
      %v5619 = vpop.f32.mrb[0].mxu0
      %v5620 = vadd.f32 0.0, %v5619
      %v5621 = vpop.f32.mrb[0].mxu0
      %v5622 = vpop.f32.mrb[0].mxu0
      %5623 = vdwg.mxu0
      %5624 = vmatprep.subr.bf16.mxu0 0
      %5625 = vmatpush1.bf16.msra.mxu0 %v5499
      %5626 = vmatprep.subr.bf16.mxu0 0
      %5627 = vmatpush1.bf16.msra.mxu0 0
      %5628 = vmatprep.subr.bf16.mxu0 0
      %5629 = vmatpush1.bf16.msra.mxu0 0
      %5630 = vmatprep.subr.bf16.mxu0 0
      %5631 = vmatpush1.bf16.msra.mxu0 0
      %5632 = vmatprep.subr.bf16.mxu0 0
      %5633 = vmatpush1.bf16.msra.mxu0 0
      %5634 = vmatprep.subr.bf16.mxu0 0
      %5635 = vmatpush1.bf16.msra.mxu0 0
      %5636 = vmatprep.subr.bf16.mxu0 0
      %5637 = vmatpush1.bf16.msra.mxu0 0
      %5638 = vmatprep.subr.bf16.mxu0 0
      %5639 = vmatpush1.bf16.msra.mxu0 0
      %5640 = vmatprep.subr.bf16.mxu0 0
      %5641 = vmatpush1.bf16.msra.mxu0 0
      %5642 = vmatprep.subr.bf16.mxu0 0
      %5643 = vmatpush1.bf16.msra.mxu0 0
      %5644 = vmatprep.subr.bf16.mxu0 0
      %5645 = vmatpush1.bf16.msra.mxu0 0
      %5646 = vmatprep.subr.bf16.mxu0 0
      %5647 = vmatpush1.bf16.msra.mxu0 0
      %5648 = vmatprep.subr.bf16.mxu0 0
      %5649 = vmatpush1.bf16.msra.mxu0 0
      %5650 = vmatprep.subr.bf16.mxu0 0
      %5651 = vmatpush1.bf16.msra.mxu0 0
      %5652 = vmatprep.subr.bf16.mxu0 0
      %5653 = vmatpush1.bf16.msra.mxu0 0
      %5654 = vmatprep.subr.bf16.mxu0 0
      %5655 = vmatpush1.bf16.msra.mxu0 0
      %5656 = vmatprep.mubr.bf16.mxu0 0
      %5657 = vmatmul.mubr.bf16.gmra.mrb[0].mxu0 %v5478
      %v5658 = vpop.f32.mrb[0].mxu0
      %v5659 = vadd.f32 0.0, %v5658
      %v5660 = vpop.f32.mrb[0].mxu0
      %v5661 = vpop.f32.mrb[0].mxu0
      %v5662 = vpop.f32.mrb[0].mxu0
      %5663 = vdwg.mxu0
      %v5664 = vadd.f32 %v5406, %v5536
      %v5665 = vadd.f32 %v5407, %v5538
      %v5666 = vadd.f32 %v5408, %v5577
      %v5667 = vadd.f32 %v5409, %v5579
      %v5668 = vadd.f32 %v5410, %v5618
      %v5669 = vadd.f32 %v5411, %v5620
      %v5670 = vadd.f32 %v5412, %v5659
      %v5671 = vld [vmem:[%s278 + $0x2] sm:$0xff]
      %v5672 = vld [vmem:[%s278 + $0xa] sm:$0xff]
      %s5673 = scalar_lea.vmem %s1, 84
      %v5674 = vld [vmem:[%s5673] sm:$0xf]
      %v5677 = vcombine.high %v5671, %v5671
      %v5679 = vunpack.c.l.s4 1983009808
      %v5680 = vunpack.c.0.s8 %v5679
      %v5681 = vlaneseq
      %v5682 = vshrl.u32 %v5681, 7
      %v5683 = vsub.s32 %v5680, %v5682
      %v5684 = vrot.slane %v5671, %v5683
      %v5686 = vunpack.c.l.s4 1983009808
      %v5687 = vunpack.c.0.s8 %v5686
      %v5688 = vlaneseq
      %v5689 = vshrl.u32 %v5688, 7
      %v5690 = vsub.s32 %v5687, %v5689
      %v5691 = vrot.slane %v5677, %v5690
      %v5692 = vcombine.high %v5684, %v5684
      %v5693 = vcombine.high %v5691, %v5691
      %v5694 = vcombine.high %v5672, %v5672
      %v5696 = vunpack.c.l.s4 1983009808
      %v5697 = vunpack.c.0.s8 %v5696
      %v5698 = vlaneseq
      %v5699 = vshrl.u32 %v5698, 7
      %v5700 = vsub.s32 %v5697, %v5699
      %v5701 = vrot.slane %v5672, %v5700
      %v5703 = vunpack.c.l.s4 1983009808
      %v5704 = vunpack.c.0.s8 %v5703
      %v5705 = vlaneseq
      %v5706 = vshrl.u32 %v5705, 7
      %v5707 = vsub.s32 %v5704, %v5706
      %v5708 = vrot.slane %v5694, %v5707
      %v5709 = vcombine.high %v5701, %v5701
      %v5710 = vcombine.high %v5708, %v5708
      %5711 = vrot.lane.b32.xlu0 %v5684, 46
      %v5712 = vpop.permute.xlu0 %5711
      %5713 = vrot.lane.b32.xlu0 %v5692, 46
      %v5714 = vpop.permute.xlu0 %5713
      %5715 = vrot.lane.b32.xlu0 %v5691, 46
      %v5716 = vpop.permute.xlu0 %5715
      %5717 = vrot.lane.b32.xlu0 %v5693, 46
      %v5718 = vpop.permute.xlu0 %5717
      %5719 = vrot.lane.b32.xlu0 %v5701, 46
      %v5720 = vpop.permute.xlu0 %5719
      %5721 = vrot.lane.b32.xlu0 %v5709, 46
      %v5722 = vpop.permute.xlu0 %5721
      %5723 = vrot.lane.b32.xlu0 %v5708, 46
      %v5724 = vpop.permute.xlu0 %5723
      %5725 = vrot.lane.b32.xlu0 %v5710, 46
      %v5726 = vpop.permute.xlu0 %5725
      %vm5727 = vcmask 375808
      %v5728 = vsel %vm5727, %v5712, %v5714
      %v5729 = vsel %vm5727, %v5714, %v5716
      %v5730 = vsel %vm5727, %v5716, %v5718
      %v5731 = vsel %vm5727, %v5718, %v5720
      %v5732 = vsel %vm5727, %v5720, %v5722
      %v5733 = vsel %vm5727, %v5722, %v5724
      %v5734 = vsel %vm5727, %v5724, %v5726
      %v5736 = vsel %vm376, %v5674, 0
      %v5739 = vsel %vm380, %v5728, 0
      %v5742 = vsel %vm380, %v5729, 0
      %v5745 = vsel %vm380, %v5730, 0
      %v5748 = vsel %vm380, %v5731, 0
      %v5751 = vsel %vm380, %v5732, 0
      %v5754 = vsel %vm380, %v5733, 0
      %v5757 = vsel %vm380, %v5734, 0
      %5759 = vmatprep.subr.bf16.mxu0 %v5742
      %5760 = vmatpush1.bf16.msra.mxu0 %v5739
      %5761 = vmatprep.subr.bf16.mxu0 0
      %5762 = vmatpush1.bf16.msra.mxu0 0
      %5763 = vmatprep.subr.bf16.mxu0 0
      %5764 = vmatpush1.bf16.msra.mxu0 0
      %5765 = vmatprep.subr.bf16.mxu0 0
      %5766 = vmatpush1.bf16.msra.mxu0 0
      %5767 = vmatprep.subr.bf16.mxu0 0
      %5768 = vmatpush1.bf16.msra.mxu0 0
      %5769 = vmatprep.subr.bf16.mxu0 0
      %5770 = vmatpush1.bf16.msra.mxu0 0
      %5771 = vmatprep.subr.bf16.mxu0 0
      %5772 = vmatpush1.bf16.msra.mxu0 0
      %5773 = vmatprep.subr.bf16.mxu0 0
      %5774 = vmatpush1.bf16.msra.mxu0 0
      %5775 = vmatprep.subr.bf16.mxu0 0
      %5776 = vmatpush1.bf16.msra.mxu0 0
      %5777 = vmatprep.subr.bf16.mxu0 0
      %5778 = vmatpush1.bf16.msra.mxu0 0
      %5779 = vmatprep.subr.bf16.mxu0 0
      %5780 = vmatpush1.bf16.msra.mxu0 0
      %5781 = vmatprep.subr.bf16.mxu0 0
      %5782 = vmatpush1.bf16.msra.mxu0 0
      %5783 = vmatprep.subr.bf16.mxu0 0
      %5784 = vmatpush1.bf16.msra.mxu0 0
      %5785 = vmatprep.subr.bf16.mxu0 0
      %5786 = vmatpush1.bf16.msra.mxu0 0
      %5787 = vmatprep.subr.bf16.mxu0 0
      %5788 = vmatpush1.bf16.msra.mxu0 0
      %5789 = vmatprep.subr.bf16.mxu0 0
      %5790 = vmatpush1.bf16.msra.mxu0 0
      %5791 = vmatprep.mubr.bf16.mxu0 0
      %5792 = vmatmul.mubr.bf16.gmra.mrb[0].mxu0 %v5736
      %v5793 = vpop.f32.mrb[0].mxu0
      %v5794 = vadd.f32 0.0, %v5793
      %v5795 = vpop.f32.mrb[0].mxu0
      %v5796 = vadd.f32 0.0, %v5795
      %v5797 = vpop.f32.mrb[0].mxu0
      %v5798 = vpop.f32.mrb[0].mxu0
      %5799 = vdwg.mxu0
      %5800 = vmatprep.subr.bf16.mxu0 %v5748
      %5801 = vmatpush1.bf16.msra.mxu0 %v5745
      %5802 = vmatprep.subr.bf16.mxu0 0
      %5803 = vmatpush1.bf16.msra.mxu0 0
      %5804 = vmatprep.subr.bf16.mxu0 0
      %5805 = vmatpush1.bf16.msra.mxu0 0
      %5806 = vmatprep.subr.bf16.mxu0 0
      %5807 = vmatpush1.bf16.msra.mxu0 0
      %5808 = vmatprep.subr.bf16.mxu0 0
      %5809 = vmatpush1.bf16.msra.mxu0 0
      %5810 = vmatprep.subr.bf16.mxu0 0
      %5811 = vmatpush1.bf16.msra.mxu0 0
      %5812 = vmatprep.subr.bf16.mxu0 0
      %5813 = vmatpush1.bf16.msra.mxu0 0
      %5814 = vmatprep.subr.bf16.mxu0 0
      %5815 = vmatpush1.bf16.msra.mxu0 0
      %5816 = vmatprep.subr.bf16.mxu0 0
      %5817 = vmatpush1.bf16.msra.mxu0 0
      %5818 = vmatprep.subr.bf16.mxu0 0
      %5819 = vmatpush1.bf16.msra.mxu0 0
      %5820 = vmatprep.subr.bf16.mxu0 0
      %5821 = vmatpush1.bf16.msra.mxu0 0
      %5822 = vmatprep.subr.bf16.mxu0 0
      %5823 = vmatpush1.bf16.msra.mxu0 0
      %5824 = vmatprep.subr.bf16.mxu0 0
      %5825 = vmatpush1.bf16.msra.mxu0 0
      %5826 = vmatprep.subr.bf16.mxu0 0
      %5827 = vmatpush1.bf16.msra.mxu0 0
      %5828 = vmatprep.subr.bf16.mxu0 0
      %5829 = vmatpush1.bf16.msra.mxu0 0
      %5830 = vmatprep.subr.bf16.mxu0 0
      %5831 = vmatpush1.bf16.msra.mxu0 0
      %5832 = vmatprep.mubr.bf16.mxu0 0
      %5833 = vmatmul.mubr.bf16.gmra.mrb[0].mxu0 %v5736
      %v5834 = vpop.f32.mrb[0].mxu0
      %v5835 = vadd.f32 0.0, %v5834
      %v5836 = vpop.f32.mrb[0].mxu0
      %v5837 = vadd.f32 0.0, %v5836
      %v5838 = vpop.f32.mrb[0].mxu0
      %v5839 = vpop.f32.mrb[0].mxu0
      %5840 = vdwg.mxu0
      %5841 = vmatprep.subr.bf16.mxu0 %v5754
      %5842 = vmatpush1.bf16.msra.mxu0 %v5751
      %5843 = vmatprep.subr.bf16.mxu0 0
      %5844 = vmatpush1.bf16.msra.mxu0 0
      %5845 = vmatprep.subr.bf16.mxu0 0
      %5846 = vmatpush1.bf16.msra.mxu0 0
      %5847 = vmatprep.subr.bf16.mxu0 0
      %5848 = vmatpush1.bf16.msra.mxu0 0
      %5849 = vmatprep.subr.bf16.mxu0 0
      %5850 = vmatpush1.bf16.msra.mxu0 0
      %5851 = vmatprep.subr.bf16.mxu0 0
      %5852 = vmatpush1.bf16.msra.mxu0 0
      %5853 = vmatprep.subr.bf16.mxu0 0
      %5854 = vmatpush1.bf16.msra.mxu0 0
      %5855 = vmatprep.subr.bf16.mxu0 0
      %5856 = vmatpush1.bf16.msra.mxu0 0
      %5857 = vmatprep.subr.bf16.mxu0 0
      %5858 = vmatpush1.bf16.msra.mxu0 0
      %5859 = vmatprep.subr.bf16.mxu0 0
      %5860 = vmatpush1.bf16.msra.mxu0 0
      %5861 = vmatprep.subr.bf16.mxu0 0
      %5862 = vmatpush1.bf16.msra.mxu0 0
      %5863 = vmatprep.subr.bf16.mxu0 0
      %5864 = vmatpush1.bf16.msra.mxu0 0
      %5865 = vmatprep.subr.bf16.mxu0 0
      %5866 = vmatpush1.bf16.msra.mxu0 0
      %5867 = vmatprep.subr.bf16.mxu0 0
      %5868 = vmatpush1.bf16.msra.mxu0 0
      %5869 = vmatprep.subr.bf16.mxu0 0
      %5870 = vmatpush1.bf16.msra.mxu0 0
      %5871 = vmatprep.subr.bf16.mxu0 0
      %5872 = vmatpush1.bf16.msra.mxu0 0
      %5873 = vmatprep.mubr.bf16.mxu0 0
      %5874 = vmatmul.mubr.bf16.gmra.mrb[0].mxu0 %v5736
      %v5875 = vpop.f32.mrb[0].mxu0
      %v5876 = vadd.f32 0.0, %v5875
      %v5877 = vpop.f32.mrb[0].mxu0
      %v5878 = vadd.f32 0.0, %v5877
      %v5879 = vpop.f32.mrb[0].mxu0
      %v5880 = vpop.f32.mrb[0].mxu0
      %5881 = vdwg.mxu0
      %5882 = vmatprep.subr.bf16.mxu0 0
      %5883 = vmatpush1.bf16.msra.mxu0 %v5757
      %5884 = vmatprep.subr.bf16.mxu0 0
      %5885 = vmatpush1.bf16.msra.mxu0 0
      %5886 = vmatprep.subr.bf16.mxu0 0
      %5887 = vmatpush1.bf16.msra.mxu0 0
      %5888 = vmatprep.subr.bf16.mxu0 0
      %5889 = vmatpush1.bf16.msra.mxu0 0
      %5890 = vmatprep.subr.bf16.mxu0 0
      %5891 = vmatpush1.bf16.msra.mxu0 0
      %5892 = vmatprep.subr.bf16.mxu0 0
      %5893 = vmatpush1.bf16.msra.mxu0 0
      %5894 = vmatprep.subr.bf16.mxu0 0
      %5895 = vmatpush1.bf16.msra.mxu0 0
      %5896 = vmatprep.subr.bf16.mxu0 0
      %5897 = vmatpush1.bf16.msra.mxu0 0
      %5898 = vmatprep.subr.bf16.mxu0 0
      %5899 = vmatpush1.bf16.msra.mxu0 0
      %5900 = vmatprep.subr.bf16.mxu0 0
      %5901 = vmatpush1.bf16.msra.mxu0 0
      %5902 = vmatprep.subr.bf16.mxu0 0
      %5903 = vmatpush1.bf16.msra.mxu0 0
      %5904 = vmatprep.subr.bf16.mxu0 0
      %5905 = vmatpush1.bf16.msra.mxu0 0
      %5906 = vmatprep.subr.bf16.mxu0 0
      %5907 = vmatpush1.bf16.msra.mxu0 0
      %5908 = vmatprep.subr.bf16.mxu0 0
      %5909 = vmatpush1.bf16.msra.mxu0 0
      %5910 = vmatprep.subr.bf16.mxu0 0
      %5911 = vmatpush1.bf16.msra.mxu0 0
      %5912 = vmatprep.subr.bf16.mxu0 0
      %5913 = vmatpush1.bf16.msra.mxu0 0
      %5914 = vmatprep.mubr.bf16.mxu0 0
      %5915 = vmatmul.mubr.bf16.gmra.mrb[0].mxu0 %v5736
      %v5916 = vpop.f32.mrb[0].mxu0
      %v5917 = vadd.f32 0.0, %v5916
      %v5918 = vpop.f32.mrb[0].mxu0
      %v5919 = vpop.f32.mrb[0].mxu0
      %v5920 = vpop.f32.mrb[0].mxu0
      %5921 = vdwg.mxu0
      %v5922 = vadd.f32 %v5664, %v5794
      %v5923 = vadd.f32 %v5665, %v5796
      %v5924 = vadd.f32 %v5666, %v5835
      %v5925 = vadd.f32 %v5667, %v5837
      %v5926 = vadd.f32 %v5668, %v5876
      %v5927 = vadd.f32 %v5669, %v5878
      %v5928 = vadd.f32 %v5670, %v5917
      %v5929 = vld [vmem:[%s278 + $0x2] sm:$0xff]
      %v5930 = vld [vmem:[%s278 + $0xa] sm:$0xff]
      %s5931 = scalar_lea.vmem %s1, 88
      %v5932 = vld [vmem:[%s5931] sm:$0xf]
      %v5935 = vcombine.high %v5929, %v5929
      %v5937 = vunpack.c.l.s4 1983009808
      %v5938 = vunpack.c.0.s8 %v5937
      %v5939 = vlaneseq
      %v5940 = vshrl.u32 %v5939, 7
      %v5941 = vsub.s32 %v5938, %v5940
      %v5942 = vrot.slane %v5929, %v5941
      %v5944 = vunpack.c.l.s4 1983009808
      %v5945 = vunpack.c.0.s8 %v5944
      %v5946 = vlaneseq
      %v5947 = vshrl.u32 %v5946, 7
      %v5948 = vsub.s32 %v5945, %v5947
      %v5949 = vrot.slane %v5935, %v5948
      %v5950 = vcombine.high %v5942, %v5942
      %v5951 = vcombine.high %v5949, %v5949
      %v5952 = vcombine.high %v5930, %v5930
      %v5954 = vunpack.c.l.s4 1983009808
      %v5955 = vunpack.c.0.s8 %v5954
      %v5956 = vlaneseq
      %v5957 = vshrl.u32 %v5956, 7
      %v5958 = vsub.s32 %v5955, %v5957
      %v5959 = vrot.slane %v5930, %v5958
      %v5961 = vunpack.c.l.s4 1983009808
      %v5962 = vunpack.c.0.s8 %v5961
      %v5963 = vlaneseq
      %v5964 = vshrl.u32 %v5963, 7
      %v5965 = vsub.s32 %v5962, %v5964
      %v5966 = vrot.slane %v5952, %v5965
      %v5967 = vcombine.high %v5959, %v5959
      %v5968 = vcombine.high %v5966, %v5966
      %5969 = vrot.lane.b32.xlu0 %v5942, 45
      %v5970 = vpop.permute.xlu0 %5969
      %5971 = vrot.lane.b32.xlu0 %v5950, 45
      %v5972 = vpop.permute.xlu0 %5971
      %5973 = vrot.lane.b32.xlu0 %v5949, 45
      %v5974 = vpop.permute.xlu0 %5973
      %5975 = vrot.lane.b32.xlu0 %v5951, 45
      %v5976 = vpop.permute.xlu0 %5975
      %5977 = vrot.lane.b32.xlu0 %v5959, 45
      %v5978 = vpop.permute.xlu0 %5977
      %5979 = vrot.lane.b32.xlu0 %v5967, 45
      %v5980 = vpop.permute.xlu0 %5979
      %5981 = vrot.lane.b32.xlu0 %v5966, 45
      %v5982 = vpop.permute.xlu0 %5981
      %5983 = vrot.lane.b32.xlu0 %v5968, 45
      %v5984 = vpop.permute.xlu0 %5983
      %vm5985 = vcmask 367616
      %v5986 = vsel %vm5985, %v5970, %v5972
      %v5987 = vsel %vm5985, %v5972, %v5974
      %v5988 = vsel %vm5985, %v5974, %v5976
      %v5989 = vsel %vm5985, %v5976, %v5978
      %v5990 = vsel %vm5985, %v5978, %v5980
      %v5991 = vsel %vm5985, %v5980, %v5982
      %v5992 = vsel %vm5985, %v5982, %v5984
      %v5994 = vsel %vm376, %v5932, 0
      %v5997 = vsel %vm380, %v5986, 0
      %v6000 = vsel %vm380, %v5987, 0
      %v6003 = vsel %vm380, %v5988, 0
      %v6006 = vsel %vm380, %v5989, 0
      %v6009 = vsel %vm380, %v5990, 0
      %v6012 = vsel %vm380, %v5991, 0
      %v6015 = vsel %vm380, %v5992, 0
      %6017 = vmatprep.subr.bf16.mxu0 %v6000
      %6018 = vmatpush1.bf16.msra.mxu0 %v5997
      %6019 = vmatprep.subr.bf16.mxu0 0
      %6020 = vmatpush1.bf16.msra.mxu0 0
      %6021 = vmatprep.subr.bf16.mxu0 0
      %6022 = vmatpush1.bf16.msra.mxu0 0
      %6023 = vmatprep.subr.bf16.mxu0 0
      %6024 = vmatpush1.bf16.msra.mxu0 0
      %6025 = vmatprep.subr.bf16.mxu0 0
      %6026 = vmatpush1.bf16.msra.mxu0 0
      %6027 = vmatprep.subr.bf16.mxu0 0
      %6028 = vmatpush1.bf16.msra.mxu0 0
      %6029 = vmatprep.subr.bf16.mxu0 0
      %6030 = vmatpush1.bf16.msra.mxu0 0
      %6031 = vmatprep.subr.bf16.mxu0 0
      %6032 = vmatpush1.bf16.msra.mxu0 0
      %6033 = vmatprep.subr.bf16.mxu0 0
      %6034 = vmatpush1.bf16.msra.mxu0 0
      %6035 = vmatprep.subr.bf16.mxu0 0
      %6036 = vmatpush1.bf16.msra.mxu0 0
      %6037 = vmatprep.subr.bf16.mxu0 0
      %6038 = vmatpush1.bf16.msra.mxu0 0
      %6039 = vmatprep.subr.bf16.mxu0 0
      %6040 = vmatpush1.bf16.msra.mxu0 0
      %6041 = vmatprep.subr.bf16.mxu0 0
      %6042 = vmatpush1.bf16.msra.mxu0 0
      %6043 = vmatprep.subr.bf16.mxu0 0
      %6044 = vmatpush1.bf16.msra.mxu0 0
      %6045 = vmatprep.subr.bf16.mxu0 0
      %6046 = vmatpush1.bf16.msra.mxu0 0
      %6047 = vmatprep.subr.bf16.mxu0 0
      %6048 = vmatpush1.bf16.msra.mxu0 0
      %6049 = vmatprep.mubr.bf16.mxu0 0
      %6050 = vmatmul.mubr.bf16.gmra.mrb[0].mxu0 %v5994
      %v6051 = vpop.f32.mrb[0].mxu0
      %v6052 = vadd.f32 0.0, %v6051
      %v6053 = vpop.f32.mrb[0].mxu0
      %v6054 = vadd.f32 0.0, %v6053
      %v6055 = vpop.f32.mrb[0].mxu0
      %v6056 = vpop.f32.mrb[0].mxu0
      %6057 = vdwg.mxu0
      %6058 = vmatprep.subr.bf16.mxu0 %v6006
      %6059 = vmatpush1.bf16.msra.mxu0 %v6003
      %6060 = vmatprep.subr.bf16.mxu0 0
      %6061 = vmatpush1.bf16.msra.mxu0 0
      %6062 = vmatprep.subr.bf16.mxu0 0
      %6063 = vmatpush1.bf16.msra.mxu0 0
      %6064 = vmatprep.subr.bf16.mxu0 0
      %6065 = vmatpush1.bf16.msra.mxu0 0
      %6066 = vmatprep.subr.bf16.mxu0 0
      %6067 = vmatpush1.bf16.msra.mxu0 0
      %6068 = vmatprep.subr.bf16.mxu0 0
      %6069 = vmatpush1.bf16.msra.mxu0 0
      %6070 = vmatprep.subr.bf16.mxu0 0
      %6071 = vmatpush1.bf16.msra.mxu0 0
      %6072 = vmatprep.subr.bf16.mxu0 0
      %6073 = vmatpush1.bf16.msra.mxu0 0
      %6074 = vmatprep.subr.bf16.mxu0 0
      %6075 = vmatpush1.bf16.msra.mxu0 0
      %6076 = vmatprep.subr.bf16.mxu0 0
      %6077 = vmatpush1.bf16.msra.mxu0 0
      %6078 = vmatprep.subr.bf16.mxu0 0
      %6079 = vmatpush1.bf16.msra.mxu0 0
      %6080 = vmatprep.subr.bf16.mxu0 0
      %6081 = vmatpush1.bf16.msra.mxu0 0
      %6082 = vmatprep.subr.bf16.mxu0 0
      %6083 = vmatpush1.bf16.msra.mxu0 0
      %6084 = vmatprep.subr.bf16.mxu0 0
      %6085 = vmatpush1.bf16.msra.mxu0 0
      %6086 = vmatprep.subr.bf16.mxu0 0
      %6087 = vmatpush1.bf16.msra.mxu0 0
      %6088 = vmatprep.subr.bf16.mxu0 0
      %6089 = vmatpush1.bf16.msra.mxu0 0
      %6090 = vmatprep.mubr.bf16.mxu0 0
      %6091 = vmatmul.mubr.bf16.gmra.mrb[0].mxu0 %v5994
      %v6092 = vpop.f32.mrb[0].mxu0
      %v6093 = vadd.f32 0.0, %v6092
      %v6094 = vpop.f32.mrb[0].mxu0
      %v6095 = vadd.f32 0.0, %v6094
      %v6096 = vpop.f32.mrb[0].mxu0
      %v6097 = vpop.f32.mrb[0].mxu0
      %6098 = vdwg.mxu0
      %6099 = vmatprep.subr.bf16.mxu0 %v6012
      %6100 = vmatpush1.bf16.msra.mxu0 %v6009
      %6101 = vmatprep.subr.bf16.mxu0 0
      %6102 = vmatpush1.bf16.msra.mxu0 0
      %6103 = vmatprep.subr.bf16.mxu0 0
      %6104 = vmatpush1.bf16.msra.mxu0 0
      %6105 = vmatprep.subr.bf16.mxu0 0
      %6106 = vmatpush1.bf16.msra.mxu0 0
      %6107 = vmatprep.subr.bf16.mxu0 0
      %6108 = vmatpush1.bf16.msra.mxu0 0
      %6109 = vmatprep.subr.bf16.mxu0 0
      %6110 = vmatpush1.bf16.msra.mxu0 0
      %6111 = vmatprep.subr.bf16.mxu0 0
      %6112 = vmatpush1.bf16.msra.mxu0 0
      %6113 = vmatprep.subr.bf16.mxu0 0
      %6114 = vmatpush1.bf16.msra.mxu0 0
      %6115 = vmatprep.subr.bf16.mxu0 0
      %6116 = vmatpush1.bf16.msra.mxu0 0
      %6117 = vmatprep.subr.bf16.mxu0 0
      %6118 = vmatpush1.bf16.msra.mxu0 0
      %6119 = vmatprep.subr.bf16.mxu0 0
      %6120 = vmatpush1.bf16.msra.mxu0 0
      %6121 = vmatprep.subr.bf16.mxu0 0
      %6122 = vmatpush1.bf16.msra.mxu0 0
      %6123 = vmatprep.subr.bf16.mxu0 0
      %6124 = vmatpush1.bf16.msra.mxu0 0
      %6125 = vmatprep.subr.bf16.mxu0 0
      %6126 = vmatpush1.bf16.msra.mxu0 0
      %6127 = vmatprep.subr.bf16.mxu0 0
      %6128 = vmatpush1.bf16.msra.mxu0 0
      %6129 = vmatprep.subr.bf16.mxu0 0
      %6130 = vmatpush1.bf16.msra.mxu0 0
      %6131 = vmatprep.mubr.bf16.mxu0 0
      %6132 = vmatmul.mubr.bf16.gmra.mrb[0].mxu0 %v5994
      %v6133 = vpop.f32.mrb[0].mxu0
      %v6134 = vadd.f32 0.0, %v6133
      %v6135 = vpop.f32.mrb[0].mxu0
      %v6136 = vadd.f32 0.0, %v6135
      %v6137 = vpop.f32.mrb[0].mxu0
      %v6138 = vpop.f32.mrb[0].mxu0
      %6139 = vdwg.mxu0
      %6140 = vmatprep.subr.bf16.mxu0 0
      %6141 = vmatpush1.bf16.msra.mxu0 %v6015
      %6142 = vmatprep.subr.bf16.mxu0 0
      %6143 = vmatpush1.bf16.msra.mxu0 0
      %6144 = vmatprep.subr.bf16.mxu0 0
      %6145 = vmatpush1.bf16.msra.mxu0 0
      %6146 = vmatprep.subr.bf16.mxu0 0
      %6147 = vmatpush1.bf16.msra.mxu0 0
      %6148 = vmatprep.subr.bf16.mxu0 0
      %6149 = vmatpush1.bf16.msra.mxu0 0
      %6150 = vmatprep.subr.bf16.mxu0 0
      %6151 = vmatpush1.bf16.msra.mxu0 0
      %6152 = vmatprep.subr.bf16.mxu0 0
      %6153 = vmatpush1.bf16.msra.mxu0 0
      %6154 = vmatprep.subr.bf16.mxu0 0
      %6155 = vmatpush1.bf16.msra.mxu0 0
      %6156 = vmatprep.subr.bf16.mxu0 0
      %6157 = vmatpush1.bf16.msra.mxu0 0
      %6158 = vmatprep.subr.bf16.mxu0 0
      %6159 = vmatpush1.bf16.msra.mxu0 0
      %6160 = vmatprep.subr.bf16.mxu0 0
      %6161 = vmatpush1.bf16.msra.mxu0 0
      %6162 = vmatprep.subr.bf16.mxu0 0
      %6163 = vmatpush1.bf16.msra.mxu0 0
      %6164 = vmatprep.subr.bf16.mxu0 0
      %6165 = vmatpush1.bf16.msra.mxu0 0
      %6166 = vmatprep.subr.bf16.mxu0 0
      %6167 = vmatpush1.bf16.msra.mxu0 0
      %6168 = vmatprep.subr.bf16.mxu0 0
      %6169 = vmatpush1.bf16.msra.mxu0 0
      %6170 = vmatprep.subr.bf16.mxu0 0
      %6171 = vmatpush1.bf16.msra.mxu0 0
      %6172 = vmatprep.mubr.bf16.mxu0 0
      %6173 = vmatmul.mubr.bf16.gmra.mrb[0].mxu0 %v5994
      %v6174 = vpop.f32.mrb[0].mxu0
      %v6175 = vadd.f32 0.0, %v6174
      %v6176 = vpop.f32.mrb[0].mxu0
      %v6177 = vpop.f32.mrb[0].mxu0
      %v6178 = vpop.f32.mrb[0].mxu0
      %6179 = vdwg.mxu0
      %v6180 = vadd.f32 %v5922, %v6052
      %v6181 = vadd.f32 %v5923, %v6054
      %v6182 = vadd.f32 %v5924, %v6093
      %v6183 = vadd.f32 %v5925, %v6095
      %v6184 = vadd.f32 %v5926, %v6134
      %v6185 = vadd.f32 %v5927, %v6136
      %v6186 = vadd.f32 %v5928, %v6175
      %v6187 = vld [vmem:[%s278 + $0x2] sm:$0xff]
      %v6188 = vld [vmem:[%s278 + $0xa] sm:$0xff]
      %s6189 = scalar_lea.vmem %s1, 92
      %v6190 = vld [vmem:[%s6189] sm:$0xf]
      %v6193 = vcombine.high %v6187, %v6187
      %v6195 = vunpack.c.l.s4 1983009808
      %v6196 = vunpack.c.0.s8 %v6195
      %v6197 = vlaneseq
      %v6198 = vshrl.u32 %v6197, 7
      %v6199 = vsub.s32 %v6196, %v6198
      %v6200 = vrot.slane %v6187, %v6199
      %v6202 = vunpack.c.l.s4 1983009808
      %v6203 = vunpack.c.0.s8 %v6202
      %v6204 = vlaneseq
      %v6205 = vshrl.u32 %v6204, 7
      %v6206 = vsub.s32 %v6203, %v6205
      %v6207 = vrot.slane %v6193, %v6206
      %v6208 = vcombine.high %v6200, %v6200
      %v6209 = vcombine.high %v6207, %v6207
      %v6210 = vcombine.high %v6188, %v6188
      %v6212 = vunpack.c.l.s4 1983009808
      %v6213 = vunpack.c.0.s8 %v6212
      %v6214 = vlaneseq
      %v6215 = vshrl.u32 %v6214, 7
      %v6216 = vsub.s32 %v6213, %v6215
      %v6217 = vrot.slane %v6188, %v6216
      %v6219 = vunpack.c.l.s4 1983009808
      %v6220 = vunpack.c.0.s8 %v6219
      %v6221 = vlaneseq
      %v6222 = vshrl.u32 %v6221, 7
      %v6223 = vsub.s32 %v6220, %v6222
      %v6224 = vrot.slane %v6210, %v6223
      %v6225 = vcombine.high %v6217, %v6217
      %v6226 = vcombine.high %v6224, %v6224
      %6227 = vrot.lane.b32.xlu0 %v6200, 44
      %v6228 = vpop.permute.xlu0 %6227
      %6229 = vrot.lane.b32.xlu0 %v6208, 44
      %v6230 = vpop.permute.xlu0 %6229
      %6231 = vrot.lane.b32.xlu0 %v6207, 44
      %v6232 = vpop.permute.xlu0 %6231
      %6233 = vrot.lane.b32.xlu0 %v6209, 44
      %v6234 = vpop.permute.xlu0 %6233
      %6235 = vrot.lane.b32.xlu0 %v6217, 44
      %v6236 = vpop.permute.xlu0 %6235
      %6237 = vrot.lane.b32.xlu0 %v6225, 44
      %v6238 = vpop.permute.xlu0 %6237
      %6239 = vrot.lane.b32.xlu0 %v6224, 44
      %v6240 = vpop.permute.xlu0 %6239
      %6241 = vrot.lane.b32.xlu0 %v6226, 44
      %v6242 = vpop.permute.xlu0 %6241
      %vm6243 = vcmask 359424
      %v6244 = vsel %vm6243, %v6228, %v6230
      %v6245 = vsel %vm6243, %v6230, %v6232
      %v6246 = vsel %vm6243, %v6232, %v6234
      %v6247 = vsel %vm6243, %v6234, %v6236
      %v6248 = vsel %vm6243, %v6236, %v6238
      %v6249 = vsel %vm6243, %v6238, %v6240
      %v6250 = vsel %vm6243, %v6240, %v6242
      %v6252 = vsel %vm376, %v6190, 0
      %v6255 = vsel %vm380, %v6244, 0
      %v6258 = vsel %vm380, %v6245, 0
      %v6261 = vsel %vm380, %v6246, 0
      %v6264 = vsel %vm380, %v6247, 0
      %v6267 = vsel %vm380, %v6248, 0
      %v6270 = vsel %vm380, %v6249, 0
      %v6273 = vsel %vm380, %v6250, 0
      %6275 = vmatprep.subr.bf16.mxu0 %v6258
      %6276 = vmatpush1.bf16.msra.mxu0 %v6255
      %6277 = vmatprep.subr.bf16.mxu0 0
      %6278 = vmatpush1.bf16.msra.mxu0 0
      %6279 = vmatprep.subr.bf16.mxu0 0
      %6280 = vmatpush1.bf16.msra.mxu0 0
      %6281 = vmatprep.subr.bf16.mxu0 0
      %6282 = vmatpush1.bf16.msra.mxu0 0
      %6283 = vmatprep.subr.bf16.mxu0 0
      %6284 = vmatpush1.bf16.msra.mxu0 0
      %6285 = vmatprep.subr.bf16.mxu0 0
      %6286 = vmatpush1.bf16.msra.mxu0 0
      %6287 = vmatprep.subr.bf16.mxu0 0
      %6288 = vmatpush1.bf16.msra.mxu0 0
      %6289 = vmatprep.subr.bf16.mxu0 0
      %6290 = vmatpush1.bf16.msra.mxu0 0
      %6291 = vmatprep.subr.bf16.mxu0 0
      %6292 = vmatpush1.bf16.msra.mxu0 0
      %6293 = vmatprep.subr.bf16.mxu0 0
      %6294 = vmatpush1.bf16.msra.mxu0 0
      %6295 = vmatprep.subr.bf16.mxu0 0
      %6296 = vmatpush1.bf16.msra.mxu0 0
      %6297 = vmatprep.subr.bf16.mxu0 0
      %6298 = vmatpush1.bf16.msra.mxu0 0
      %6299 = vmatprep.subr.bf16.mxu0 0
      %6300 = vmatpush1.bf16.msra.mxu0 0
      %6301 = vmatprep.subr.bf16.mxu0 0
      %6302 = vmatpush1.bf16.msra.mxu0 0
      %6303 = vmatprep.subr.bf16.mxu0 0
      %6304 = vmatpush1.bf16.msra.mxu0 0
      %6305 = vmatprep.subr.bf16.mxu0 0
      %6306 = vmatpush1.bf16.msra.mxu0 0
      %6307 = vmatprep.mubr.bf16.mxu0 0
      %6308 = vmatmul.mubr.bf16.gmra.mrb[0].mxu0 %v6252
      %v6309 = vpop.f32.mrb[0].mxu0
      %v6310 = vadd.f32 0.0, %v6309
      %v6311 = vpop.f32.mrb[0].mxu0
      %v6312 = vadd.f32 0.0, %v6311
      %v6313 = vpop.f32.mrb[0].mxu0
      %v6314 = vpop.f32.mrb[0].mxu0
      %6315 = vdwg.mxu0
      %6316 = vmatprep.subr.bf16.mxu0 %v6264
      %6317 = vmatpush1.bf16.msra.mxu0 %v6261
      %6318 = vmatprep.subr.bf16.mxu0 0
      %6319 = vmatpush1.bf16.msra.mxu0 0
      %6320 = vmatprep.subr.bf16.mxu0 0
      %6321 = vmatpush1.bf16.msra.mxu0 0
      %6322 = vmatprep.subr.bf16.mxu0 0
      %6323 = vmatpush1.bf16.msra.mxu0 0
      %6324 = vmatprep.subr.bf16.mxu0 0
      %6325 = vmatpush1.bf16.msra.mxu0 0
      %6326 = vmatprep.subr.bf16.mxu0 0
      %6327 = vmatpush1.bf16.msra.mxu0 0
      %6328 = vmatprep.subr.bf16.mxu0 0
      %6329 = vmatpush1.bf16.msra.mxu0 0
      %6330 = vmatprep.subr.bf16.mxu0 0
      %6331 = vmatpush1.bf16.msra.mxu0 0
      %6332 = vmatprep.subr.bf16.mxu0 0
      %6333 = vmatpush1.bf16.msra.mxu0 0
      %6334 = vmatprep.subr.bf16.mxu0 0
      %6335 = vmatpush1.bf16.msra.mxu0 0
      %6336 = vmatprep.subr.bf16.mxu0 0
      %6337 = vmatpush1.bf16.msra.mxu0 0
      %6338 = vmatprep.subr.bf16.mxu0 0
      %6339 = vmatpush1.bf16.msra.mxu0 0
      %6340 = vmatprep.subr.bf16.mxu0 0
      %6341 = vmatpush1.bf16.msra.mxu0 0
      %6342 = vmatprep.subr.bf16.mxu0 0
      %6343 = vmatpush1.bf16.msra.mxu0 0
      %6344 = vmatprep.subr.bf16.mxu0 0
      %6345 = vmatpush1.bf16.msra.mxu0 0
      %6346 = vmatprep.subr.bf16.mxu0 0
      %6347 = vmatpush1.bf16.msra.mxu0 0
      %6348 = vmatprep.mubr.bf16.mxu0 0
      %6349 = vmatmul.mubr.bf16.gmra.mrb[0].mxu0 %v6252
      %v6350 = vpop.f32.mrb[0].mxu0
      %v6351 = vadd.f32 0.0, %v6350
      %v6352 = vpop.f32.mrb[0].mxu0
      %v6353 = vadd.f32 0.0, %v6352
      %v6354 = vpop.f32.mrb[0].mxu0
      %v6355 = vpop.f32.mrb[0].mxu0
      %6356 = vdwg.mxu0
      %6357 = vmatprep.subr.bf16.mxu0 %v6270
      %6358 = vmatpush1.bf16.msra.mxu0 %v6267
      %6359 = vmatprep.subr.bf16.mxu0 0
      %6360 = vmatpush1.bf16.msra.mxu0 0
      %6361 = vmatprep.subr.bf16.mxu0 0
      %6362 = vmatpush1.bf16.msra.mxu0 0
      %6363 = vmatprep.subr.bf16.mxu0 0
      %6364 = vmatpush1.bf16.msra.mxu0 0
      %6365 = vmatprep.subr.bf16.mxu0 0
      %6366 = vmatpush1.bf16.msra.mxu0 0
      %6367 = vmatprep.subr.bf16.mxu0 0
      %6368 = vmatpush1.bf16.msra.mxu0 0
      %6369 = vmatprep.subr.bf16.mxu0 0
      %6370 = vmatpush1.bf16.msra.mxu0 0
      %6371 = vmatprep.subr.bf16.mxu0 0
      %6372 = vmatpush1.bf16.msra.mxu0 0
      %6373 = vmatprep.subr.bf16.mxu0 0
      %6374 = vmatpush1.bf16.msra.mxu0 0
      %6375 = vmatprep.subr.bf16.mxu0 0
      %6376 = vmatpush1.bf16.msra.mxu0 0
      %6377 = vmatprep.subr.bf16.mxu0 0
      %6378 = vmatpush1.bf16.msra.mxu0 0
      %6379 = vmatprep.subr.bf16.mxu0 0
      %6380 = vmatpush1.bf16.msra.mxu0 0
      %6381 = vmatprep.subr.bf16.mxu0 0
      %6382 = vmatpush1.bf16.msra.mxu0 0
      %6383 = vmatprep.subr.bf16.mxu0 0
      %6384 = vmatpush1.bf16.msra.mxu0 0
      %6385 = vmatprep.subr.bf16.mxu0 0
      %6386 = vmatpush1.bf16.msra.mxu0 0
      %6387 = vmatprep.subr.bf16.mxu0 0
      %6388 = vmatpush1.bf16.msra.mxu0 0
      %6389 = vmatprep.mubr.bf16.mxu0 0
      %6390 = vmatmul.mubr.bf16.gmra.mrb[0].mxu0 %v6252
      %v6391 = vpop.f32.mrb[0].mxu0
      %v6392 = vadd.f32 0.0, %v6391
      %v6393 = vpop.f32.mrb[0].mxu0
      %v6394 = vadd.f32 0.0, %v6393
      %v6395 = vpop.f32.mrb[0].mxu0
      %v6396 = vpop.f32.mrb[0].mxu0
      %6397 = vdwg.mxu0
      %6398 = vmatprep.subr.bf16.mxu0 0
      %6399 = vmatpush1.bf16.msra.mxu0 %v6273
      %6400 = vmatprep.subr.bf16.mxu0 0
      %6401 = vmatpush1.bf16.msra.mxu0 0
      %6402 = vmatprep.subr.bf16.mxu0 0
      %6403 = vmatpush1.bf16.msra.mxu0 0
      %6404 = vmatprep.subr.bf16.mxu0 0
      %6405 = vmatpush1.bf16.msra.mxu0 0
      %6406 = vmatprep.subr.bf16.mxu0 0
      %6407 = vmatpush1.bf16.msra.mxu0 0
      %6408 = vmatprep.subr.bf16.mxu0 0
      %6409 = vmatpush1.bf16.msra.mxu0 0
      %6410 = vmatprep.subr.bf16.mxu0 0
      %6411 = vmatpush1.bf16.msra.mxu0 0
      %6412 = vmatprep.subr.bf16.mxu0 0
      %6413 = vmatpush1.bf16.msra.mxu0 0
      %6414 = vmatprep.subr.bf16.mxu0 0
      %6415 = vmatpush1.bf16.msra.mxu0 0
      %6416 = vmatprep.subr.bf16.mxu0 0
      %6417 = vmatpush1.bf16.msra.mxu0 0
      %6418 = vmatprep.subr.bf16.mxu0 0
      %6419 = vmatpush1.bf16.msra.mxu0 0
      %6420 = vmatprep.subr.bf16.mxu0 0
      %6421 = vmatpush1.bf16.msra.mxu0 0
      %6422 = vmatprep.subr.bf16.mxu0 0
      %6423 = vmatpush1.bf16.msra.mxu0 0
      %6424 = vmatprep.subr.bf16.mxu0 0
      %6425 = vmatpush1.bf16.msra.mxu0 0
      %6426 = vmatprep.subr.bf16.mxu0 0
      %6427 = vmatpush1.bf16.msra.mxu0 0
      %6428 = vmatprep.subr.bf16.mxu0 0
      %6429 = vmatpush1.bf16.msra.mxu0 0
      %6430 = vmatprep.mubr.bf16.mxu0 0
      %6431 = vmatmul.mubr.bf16.gmra.mrb[0].mxu0 %v6252
      %v6432 = vpop.f32.mrb[0].mxu0
      %v6433 = vadd.f32 0.0, %v6432
      %v6434 = vpop.f32.mrb[0].mxu0
      %v6435 = vpop.f32.mrb[0].mxu0
      %v6436 = vpop.f32.mrb[0].mxu0
      %6437 = vdwg.mxu0
      %v6438 = vadd.f32 %v6180, %v6310
      %v6439 = vadd.f32 %v6181, %v6312
      %v6440 = vadd.f32 %v6182, %v6351
      %v6441 = vadd.f32 %v6183, %v6353
      %v6442 = vadd.f32 %v6184, %v6392
      %v6443 = vadd.f32 %v6185, %v6394
      %v6444 = vadd.f32 %v6186, %v6433
      %v6445 = vld [vmem:[%s278 + $0x2] sm:$0xff]
      %v6446 = vld [vmem:[%s278 + $0xa] sm:$0xff]
      %s6447 = scalar_lea.vmem %s1, 96
      %v6448 = vld [vmem:[%s6447] sm:$0xf]
      %v6451 = vcombine.high %v6445, %v6445
      %v6453 = vunpack.c.l.s4 1983009808
      %v6454 = vunpack.c.0.s8 %v6453
      %v6455 = vlaneseq
      %v6456 = vshrl.u32 %v6455, 7
      %v6457 = vsub.s32 %v6454, %v6456
      %v6458 = vrot.slane %v6445, %v6457
      %v6460 = vunpack.c.l.s4 1983009808
      %v6461 = vunpack.c.0.s8 %v6460
      %v6462 = vlaneseq
      %v6463 = vshrl.u32 %v6462, 7
      %v6464 = vsub.s32 %v6461, %v6463
      %v6465 = vrot.slane %v6451, %v6464
      %v6466 = vcombine.high %v6458, %v6458
      %v6467 = vcombine.high %v6465, %v6465
      %v6468 = vcombine.high %v6446, %v6446
      %v6470 = vunpack.c.l.s4 1983009808
      %v6471 = vunpack.c.0.s8 %v6470
      %v6472 = vlaneseq
      %v6473 = vshrl.u32 %v6472, 7
      %v6474 = vsub.s32 %v6471, %v6473
      %v6475 = vrot.slane %v6446, %v6474
      %v6477 = vunpack.c.l.s4 1983009808
      %v6478 = vunpack.c.0.s8 %v6477
      %v6479 = vlaneseq
      %v6480 = vshrl.u32 %v6479, 7
      %v6481 = vsub.s32 %v6478, %v6480
      %v6482 = vrot.slane %v6468, %v6481
      %v6483 = vcombine.high %v6475, %v6475
      %v6484 = vcombine.high %v6482, %v6482
      %6485 = vrot.lane.b32.xlu0 %v6458, 36
      %v6486 = vpop.permute.xlu0 %6485
      %6487 = vrot.lane.b32.xlu0 %v6466, 36
      %v6488 = vpop.permute.xlu0 %6487
      %6489 = vrot.lane.b32.xlu0 %v6465, 36
      %v6490 = vpop.permute.xlu0 %6489
      %6491 = vrot.lane.b32.xlu0 %v6467, 36
      %v6492 = vpop.permute.xlu0 %6491
      %6493 = vrot.lane.b32.xlu0 %v6475, 36
      %v6494 = vpop.permute.xlu0 %6493
      %6495 = vrot.lane.b32.xlu0 %v6483, 36
      %v6496 = vpop.permute.xlu0 %6495
      %6497 = vrot.lane.b32.xlu0 %v6482, 36
      %v6498 = vpop.permute.xlu0 %6497
      %6499 = vrot.lane.b32.xlu0 %v6484, 36
      %v6500 = vpop.permute.xlu0 %6499
      %vm6501 = vcmask 293888
      %v6502 = vsel %vm6501, %v6486, %v6488
      %v6503 = vsel %vm6501, %v6488, %v6490
      %v6504 = vsel %vm6501, %v6490, %v6492
      %v6505 = vsel %vm6501, %v6492, %v6494
      %v6506 = vsel %vm6501, %v6494, %v6496
      %v6507 = vsel %vm6501, %v6496, %v6498
      %v6508 = vsel %vm6501, %v6498, %v6500
      %v6510 = vsel %vm376, %v6448, 0
      %v6513 = vsel %vm380, %v6502, 0
      %v6516 = vsel %vm380, %v6503, 0
      %v6519 = vsel %vm380, %v6504, 0
      %v6522 = vsel %vm380, %v6505, 0
      %v6525 = vsel %vm380, %v6506, 0
      %v6528 = vsel %vm380, %v6507, 0
      %v6531 = vsel %vm380, %v6508, 0
      %6533 = vmatprep.subr.bf16.mxu0 %v6516
      %6534 = vmatpush1.bf16.msra.mxu0 %v6513
      %6535 = vmatprep.subr.bf16.mxu0 0
      %6536 = vmatpush1.bf16.msra.mxu0 0
      %6537 = vmatprep.subr.bf16.mxu0 0
      %6538 = vmatpush1.bf16.msra.mxu0 0
      %6539 = vmatprep.subr.bf16.mxu0 0
      %6540 = vmatpush1.bf16.msra.mxu0 0
      %6541 = vmatprep.subr.bf16.mxu0 0
      %6542 = vmatpush1.bf16.msra.mxu0 0
      %6543 = vmatprep.subr.bf16.mxu0 0
      %6544 = vmatpush1.bf16.msra.mxu0 0
      %6545 = vmatprep.subr.bf16.mxu0 0
      %6546 = vmatpush1.bf16.msra.mxu0 0
      %6547 = vmatprep.subr.bf16.mxu0 0
      %6548 = vmatpush1.bf16.msra.mxu0 0
      %6549 = vmatprep.subr.bf16.mxu0 0
      %6550 = vmatpush1.bf16.msra.mxu0 0
      %6551 = vmatprep.subr.bf16.mxu0 0
      %6552 = vmatpush1.bf16.msra.mxu0 0
      %6553 = vmatprep.subr.bf16.mxu0 0
      %6554 = vmatpush1.bf16.msra.mxu0 0
      %6555 = vmatprep.subr.bf16.mxu0 0
      %6556 = vmatpush1.bf16.msra.mxu0 0
      %6557 = vmatprep.subr.bf16.mxu0 0
      %6558 = vmatpush1.bf16.msra.mxu0 0
      %6559 = vmatprep.subr.bf16.mxu0 0
      %6560 = vmatpush1.bf16.msra.mxu0 0
      %6561 = vmatprep.subr.bf16.mxu0 0
      %6562 = vmatpush1.bf16.msra.mxu0 0
      %6563 = vmatprep.subr.bf16.mxu0 0
      %6564 = vmatpush1.bf16.msra.mxu0 0
      %6565 = vmatprep.mubr.bf16.mxu0 0
      %6566 = vmatmul.mubr.bf16.gmra.mrb[0].mxu0 %v6510
      %v6567 = vpop.f32.mrb[0].mxu0
      %v6568 = vadd.f32 0.0, %v6567
      %v6569 = vpop.f32.mrb[0].mxu0
      %v6570 = vadd.f32 0.0, %v6569
      %v6571 = vpop.f32.mrb[0].mxu0
      %v6572 = vpop.f32.mrb[0].mxu0
      %6573 = vdwg.mxu0
      %6574 = vmatprep.subr.bf16.mxu0 %v6522
      %6575 = vmatpush1.bf16.msra.mxu0 %v6519
      %6576 = vmatprep.subr.bf16.mxu0 0
      %6577 = vmatpush1.bf16.msra.mxu0 0
      %6578 = vmatprep.subr.bf16.mxu0 0
      %6579 = vmatpush1.bf16.msra.mxu0 0
      %6580 = vmatprep.subr.bf16.mxu0 0
      %6581 = vmatpush1.bf16.msra.mxu0 0
      %6582 = vmatprep.subr.bf16.mxu0 0
      %6583 = vmatpush1.bf16.msra.mxu0 0
      %6584 = vmatprep.subr.bf16.mxu0 0
      %6585 = vmatpush1.bf16.msra.mxu0 0
      %6586 = vmatprep.subr.bf16.mxu0 0
      %6587 = vmatpush1.bf16.msra.mxu0 0
      %6588 = vmatprep.subr.bf16.mxu0 0
      %6589 = vmatpush1.bf16.msra.mxu0 0
      %6590 = vmatprep.subr.bf16.mxu0 0
      %6591 = vmatpush1.bf16.msra.mxu0 0
      %6592 = vmatprep.subr.bf16.mxu0 0
      %6593 = vmatpush1.bf16.msra.mxu0 0
      %6594 = vmatprep.subr.bf16.mxu0 0
      %6595 = vmatpush1.bf16.msra.mxu0 0
      %6596 = vmatprep.subr.bf16.mxu0 0
      %6597 = vmatpush1.bf16.msra.mxu0 0
      %6598 = vmatprep.subr.bf16.mxu0 0
      %6599 = vmatpush1.bf16.msra.mxu0 0
      %6600 = vmatprep.subr.bf16.mxu0 0
      %6601 = vmatpush1.bf16.msra.mxu0 0
      %6602 = vmatprep.subr.bf16.mxu0 0
      %6603 = vmatpush1.bf16.msra.mxu0 0
      %6604 = vmatprep.subr.bf16.mxu0 0
      %6605 = vmatpush1.bf16.msra.mxu0 0
      %6606 = vmatprep.mubr.bf16.mxu0 0
      %6607 = vmatmul.mubr.bf16.gmra.mrb[0].mxu0 %v6510
      %v6608 = vpop.f32.mrb[0].mxu0
      %v6609 = vadd.f32 0.0, %v6608
      %v6610 = vpop.f32.mrb[0].mxu0
      %v6611 = vadd.f32 0.0, %v6610
      %v6612 = vpop.f32.mrb[0].mxu0
      %v6613 = vpop.f32.mrb[0].mxu0
      %6614 = vdwg.mxu0
      %6615 = vmatprep.subr.bf16.mxu0 %v6528
      %6616 = vmatpush1.bf16.msra.mxu0 %v6525
      %6617 = vmatprep.subr.bf16.mxu0 0
      %6618 = vmatpush1.bf16.msra.mxu0 0
      %6619 = vmatprep.subr.bf16.mxu0 0
      %6620 = vmatpush1.bf16.msra.mxu0 0
      %6621 = vmatprep.subr.bf16.mxu0 0
      %6622 = vmatpush1.bf16.msra.mxu0 0
      %6623 = vmatprep.subr.bf16.mxu0 0
      %6624 = vmatpush1.bf16.msra.mxu0 0
      %6625 = vmatprep.subr.bf16.mxu0 0
      %6626 = vmatpush1.bf16.msra.mxu0 0
      %6627 = vmatprep.subr.bf16.mxu0 0
      %6628 = vmatpush1.bf16.msra.mxu0 0
      %6629 = vmatprep.subr.bf16.mxu0 0
      %6630 = vmatpush1.bf16.msra.mxu0 0
      %6631 = vmatprep.subr.bf16.mxu0 0
      %6632 = vmatpush1.bf16.msra.mxu0 0
      %6633 = vmatprep.subr.bf16.mxu0 0
      %6634 = vmatpush1.bf16.msra.mxu0 0
      %6635 = vmatprep.subr.bf16.mxu0 0
      %6636 = vmatpush1.bf16.msra.mxu0 0
      %6637 = vmatprep.subr.bf16.mxu0 0
      %6638 = vmatpush1.bf16.msra.mxu0 0
      %6639 = vmatprep.subr.bf16.mxu0 0
      %6640 = vmatpush1.bf16.msra.mxu0 0
      %6641 = vmatprep.subr.bf16.mxu0 0
      %6642 = vmatpush1.bf16.msra.mxu0 0
      %6643 = vmatprep.subr.bf16.mxu0 0
      %6644 = vmatpush1.bf16.msra.mxu0 0
      %6645 = vmatprep.subr.bf16.mxu0 0
      %6646 = vmatpush1.bf16.msra.mxu0 0
      %6647 = vmatprep.mubr.bf16.mxu0 0
      %6648 = vmatmul.mubr.bf16.gmra.mrb[0].mxu0 %v6510
      %v6649 = vpop.f32.mrb[0].mxu0
      %v6650 = vadd.f32 0.0, %v6649
      %v6651 = vpop.f32.mrb[0].mxu0
      %v6652 = vadd.f32 0.0, %v6651
      %v6653 = vpop.f32.mrb[0].mxu0
      %v6654 = vpop.f32.mrb[0].mxu0
      %6655 = vdwg.mxu0
      %6656 = vmatprep.subr.bf16.mxu0 0
      %6657 = vmatpush1.bf16.msra.mxu0 %v6531
      %6658 = vmatprep.subr.bf16.mxu0 0
      %6659 = vmatpush1.bf16.msra.mxu0 0
      %6660 = vmatprep.subr.bf16.mxu0 0
      %6661 = vmatpush1.bf16.msra.mxu0 0
      %6662 = vmatprep.subr.bf16.mxu0 0
      %6663 = vmatpush1.bf16.msra.mxu0 0
      %6664 = vmatprep.subr.bf16.mxu0 0
      %6665 = vmatpush1.bf16.msra.mxu0 0
      %6666 = vmatprep.subr.bf16.mxu0 0
      %6667 = vmatpush1.bf16.msra.mxu0 0
      %6668 = vmatprep.subr.bf16.mxu0 0
      %6669 = vmatpush1.bf16.msra.mxu0 0
      %6670 = vmatprep.subr.bf16.mxu0 0
      %6671 = vmatpush1.bf16.msra.mxu0 0
      %6672 = vmatprep.subr.bf16.mxu0 0
      %6673 = vmatpush1.bf16.msra.mxu0 0
      %6674 = vmatprep.subr.bf16.mxu0 0
      %6675 = vmatpush1.bf16.msra.mxu0 0
      %6676 = vmatprep.subr.bf16.mxu0 0
      %6677 = vmatpush1.bf16.msra.mxu0 0
      %6678 = vmatprep.subr.bf16.mxu0 0
      %6679 = vmatpush1.bf16.msra.mxu0 0
      %6680 = vmatprep.subr.bf16.mxu0 0
      %6681 = vmatpush1.bf16.msra.mxu0 0
      %6682 = vmatprep.subr.bf16.mxu0 0
      %6683 = vmatpush1.bf16.msra.mxu0 0
      %6684 = vmatprep.subr.bf16.mxu0 0
      %6685 = vmatpush1.bf16.msra.mxu0 0
      %6686 = vmatprep.subr.bf16.mxu0 0
      %6687 = vmatpush1.bf16.msra.mxu0 0
      %6688 = vmatprep.mubr.bf16.mxu0 0
      %6689 = vmatmul.mubr.bf16.gmra.mrb[0].mxu0 %v6510
      %v6690 = vpop.f32.mrb[0].mxu0
      %v6691 = vadd.f32 0.0, %v6690
      %v6692 = vpop.f32.mrb[0].mxu0
      %v6693 = vpop.f32.mrb[0].mxu0
      %v6694 = vpop.f32.mrb[0].mxu0
      %6695 = vdwg.mxu0
      %v6696 = vadd.f32 %v6438, %v6568
      %v6697 = vadd.f32 %v6439, %v6570
      %v6698 = vadd.f32 %v6440, %v6609
      %v6699 = vadd.f32 %v6441, %v6611
      %v6700 = vadd.f32 %v6442, %v6650
      %v6701 = vadd.f32 %v6443, %v6652
      %v6702 = vadd.f32 %v6444, %v6691
      %v6703 = vld [vmem:[%s278 + $0x2] sm:$0xff]
      %v6704 = vld [vmem:[%s278 + $0xa] sm:$0xff]
      %s6705 = scalar_lea.vmem %s1, 100
      %v6706 = vld [vmem:[%s6705] sm:$0xf]
      %v6709 = vcombine.high %v6703, %v6703
      %v6711 = vunpack.c.l.s4 1983009808
      %v6712 = vunpack.c.0.s8 %v6711
      %v6713 = vlaneseq
      %v6714 = vshrl.u32 %v6713, 7
      %v6715 = vsub.s32 %v6712, %v6714
      %v6716 = vrot.slane %v6703, %v6715
      %v6718 = vunpack.c.l.s4 1983009808
      %v6719 = vunpack.c.0.s8 %v6718
      %v6720 = vlaneseq
      %v6721 = vshrl.u32 %v6720, 7
      %v6722 = vsub.s32 %v6719, %v6721
      %v6723 = vrot.slane %v6709, %v6722
      %v6724 = vcombine.high %v6716, %v6716
      %v6725 = vcombine.high %v6723, %v6723
      %v6726 = vcombine.high %v6704, %v6704
      %v6728 = vunpack.c.l.s4 1983009808
      %v6729 = vunpack.c.0.s8 %v6728
      %v6730 = vlaneseq
      %v6731 = vshrl.u32 %v6730, 7
      %v6732 = vsub.s32 %v6729, %v6731
      %v6733 = vrot.slane %v6704, %v6732
      %v6735 = vunpack.c.l.s4 1983009808
      %v6736 = vunpack.c.0.s8 %v6735
      %v6737 = vlaneseq
      %v6738 = vshrl.u32 %v6737, 7
      %v6739 = vsub.s32 %v6736, %v6738
      %v6740 = vrot.slane %v6726, %v6739
      %v6741 = vcombine.high %v6733, %v6733
      %v6742 = vcombine.high %v6740, %v6740
      %6743 = vrot.lane.b32.xlu0 %v6716, 35
      %v6744 = vpop.permute.xlu0 %6743
      %6745 = vrot.lane.b32.xlu0 %v6724, 35
      %v6746 = vpop.permute.xlu0 %6745
      %6747 = vrot.lane.b32.xlu0 %v6723, 35
      %v6748 = vpop.permute.xlu0 %6747
      %6749 = vrot.lane.b32.xlu0 %v6725, 35
      %v6750 = vpop.permute.xlu0 %6749
      %6751 = vrot.lane.b32.xlu0 %v6733, 35
      %v6752 = vpop.permute.xlu0 %6751
      %6753 = vrot.lane.b32.xlu0 %v6741, 35
      %v6754 = vpop.permute.xlu0 %6753
      %6755 = vrot.lane.b32.xlu0 %v6740, 35
      %v6756 = vpop.permute.xlu0 %6755
      %6757 = vrot.lane.b32.xlu0 %v6742, 35
      %v6758 = vpop.permute.xlu0 %6757
      %vm6759 = vcmask 285696
      %v6760 = vsel %vm6759, %v6744, %v6746
      %v6761 = vsel %vm6759, %v6746, %v6748
      %v6762 = vsel %vm6759, %v6748, %v6750
      %v6763 = vsel %vm6759, %v6750, %v6752
      %v6764 = vsel %vm6759, %v6752, %v6754
      %v6765 = vsel %vm6759, %v6754, %v6756
      %v6766 = vsel %vm6759, %v6756, %v6758
      %v6768 = vsel %vm376, %v6706, 0
      %v6771 = vsel %vm380, %v6760, 0
      %v6774 = vsel %vm380, %v6761, 0
      %v6777 = vsel %vm380, %v6762, 0
      %v6780 = vsel %vm380, %v6763, 0
      %v6783 = vsel %vm380, %v6764, 0
      %v6786 = vsel %vm380, %v6765, 0
      %v6789 = vsel %vm380, %v6766, 0
      %6791 = vmatprep.subr.bf16.mxu0 %v6774
      %6792 = vmatpush1.bf16.msra.mxu0 %v6771
      %6793 = vmatprep.subr.bf16.mxu0 0
      %6794 = vmatpush1.bf16.msra.mxu0 0
      %6795 = vmatprep.subr.bf16.mxu0 0
      %6796 = vmatpush1.bf16.msra.mxu0 0
      %6797 = vmatprep.subr.bf16.mxu0 0
      %6798 = vmatpush1.bf16.msra.mxu0 0
      %6799 = vmatprep.subr.bf16.mxu0 0
      %6800 = vmatpush1.bf16.msra.mxu0 0
      %6801 = vmatprep.subr.bf16.mxu0 0
      %6802 = vmatpush1.bf16.msra.mxu0 0
      %6803 = vmatprep.subr.bf16.mxu0 0
      %6804 = vmatpush1.bf16.msra.mxu0 0
      %6805 = vmatprep.subr.bf16.mxu0 0
      %6806 = vmatpush1.bf16.msra.mxu0 0
      %6807 = vmatprep.subr.bf16.mxu0 0
      %6808 = vmatpush1.bf16.msra.mxu0 0
      %6809 = vmatprep.subr.bf16.mxu0 0
      %6810 = vmatpush1.bf16.msra.mxu0 0
      %6811 = vmatprep.subr.bf16.mxu0 0
      %6812 = vmatpush1.bf16.msra.mxu0 0
      %6813 = vmatprep.subr.bf16.mxu0 0
      %6814 = vmatpush1.bf16.msra.mxu0 0
      %6815 = vmatprep.subr.bf16.mxu0 0
      %6816 = vmatpush1.bf16.msra.mxu0 0
      %6817 = vmatprep.subr.bf16.mxu0 0
      %6818 = vmatpush1.bf16.msra.mxu0 0
      %6819 = vmatprep.subr.bf16.mxu0 0
      %6820 = vmatpush1.bf16.msra.mxu0 0
      %6821 = vmatprep.subr.bf16.mxu0 0
      %6822 = vmatpush1.bf16.msra.mxu0 0
      %6823 = vmatprep.mubr.bf16.mxu0 0
      %6824 = vmatmul.mubr.bf16.gmra.mrb[0].mxu0 %v6768
      %v6825 = vpop.f32.mrb[0].mxu0
      %v6826 = vadd.f32 0.0, %v6825
      %v6827 = vpop.f32.mrb[0].mxu0
      %v6828 = vadd.f32 0.0, %v6827
      %v6829 = vpop.f32.mrb[0].mxu0
      %v6830 = vpop.f32.mrb[0].mxu0
      %6831 = vdwg.mxu0
      %6832 = vmatprep.subr.bf16.mxu0 %v6780
      %6833 = vmatpush1.bf16.msra.mxu0 %v6777
      %6834 = vmatprep.subr.bf16.mxu0 0
      %6835 = vmatpush1.bf16.msra.mxu0 0
      %6836 = vmatprep.subr.bf16.mxu0 0
      %6837 = vmatpush1.bf16.msra.mxu0 0
      %6838 = vmatprep.subr.bf16.mxu0 0
      %6839 = vmatpush1.bf16.msra.mxu0 0
      %6840 = vmatprep.subr.bf16.mxu0 0
      %6841 = vmatpush1.bf16.msra.mxu0 0
      %6842 = vmatprep.subr.bf16.mxu0 0
      %6843 = vmatpush1.bf16.msra.mxu0 0
      %6844 = vmatprep.subr.bf16.mxu0 0
      %6845 = vmatpush1.bf16.msra.mxu0 0
      %6846 = vmatprep.subr.bf16.mxu0 0
      %6847 = vmatpush1.bf16.msra.mxu0 0
      %6848 = vmatprep.subr.bf16.mxu0 0
      %6849 = vmatpush1.bf16.msra.mxu0 0
      %6850 = vmatprep.subr.bf16.mxu0 0
      %6851 = vmatpush1.bf16.msra.mxu0 0
      %6852 = vmatprep.subr.bf16.mxu0 0
      %6853 = vmatpush1.bf16.msra.mxu0 0
      %6854 = vmatprep.subr.bf16.mxu0 0
      %6855 = vmatpush1.bf16.msra.mxu0 0
      %6856 = vmatprep.subr.bf16.mxu0 0
      %6857 = vmatpush1.bf16.msra.mxu0 0
      %6858 = vmatprep.subr.bf16.mxu0 0
      %6859 = vmatpush1.bf16.msra.mxu0 0
      %6860 = vmatprep.subr.bf16.mxu0 0
      %6861 = vmatpush1.bf16.msra.mxu0 0
      %6862 = vmatprep.subr.bf16.mxu0 0
      %6863 = vmatpush1.bf16.msra.mxu0 0
      %6864 = vmatprep.mubr.bf16.mxu0 0
      %6865 = vmatmul.mubr.bf16.gmra.mrb[0].mxu0 %v6768
      %v6866 = vpop.f32.mrb[0].mxu0
      %v6867 = vadd.f32 0.0, %v6866
      %v6868 = vpop.f32.mrb[0].mxu0
      %v6869 = vadd.f32 0.0, %v6868
      %v6870 = vpop.f32.mrb[0].mxu0
      %v6871 = vpop.f32.mrb[0].mxu0
      %6872 = vdwg.mxu0
      %6873 = vmatprep.subr.bf16.mxu0 %v6786
      %6874 = vmatpush1.bf16.msra.mxu0 %v6783
      %6875 = vmatprep.subr.bf16.mxu0 0
      %6876 = vmatpush1.bf16.msra.mxu0 0
      %6877 = vmatprep.subr.bf16.mxu0 0
      %6878 = vmatpush1.bf16.msra.mxu0 0
      %6879 = vmatprep.subr.bf16.mxu0 0
      %6880 = vmatpush1.bf16.msra.mxu0 0
      %6881 = vmatprep.subr.bf16.mxu0 0
      %6882 = vmatpush1.bf16.msra.mxu0 0
      %6883 = vmatprep.subr.bf16.mxu0 0
      %6884 = vmatpush1.bf16.msra.mxu0 0
      %6885 = vmatprep.subr.bf16.mxu0 0
      %6886 = vmatpush1.bf16.msra.mxu0 0
      %6887 = vmatprep.subr.bf16.mxu0 0
      %6888 = vmatpush1.bf16.msra.mxu0 0
      %6889 = vmatprep.subr.bf16.mxu0 0
      %6890 = vmatpush1.bf16.msra.mxu0 0
      %6891 = vmatprep.subr.bf16.mxu0 0
      %6892 = vmatpush1.bf16.msra.mxu0 0
      %6893 = vmatprep.subr.bf16.mxu0 0
      %6894 = vmatpush1.bf16.msra.mxu0 0
      %6895 = vmatprep.subr.bf16.mxu0 0
      %6896 = vmatpush1.bf16.msra.mxu0 0
      %6897 = vmatprep.subr.bf16.mxu0 0
      %6898 = vmatpush1.bf16.msra.mxu0 0
      %6899 = vmatprep.subr.bf16.mxu0 0
      %6900 = vmatpush1.bf16.msra.mxu0 0
      %6901 = vmatprep.subr.bf16.mxu0 0
      %6902 = vmatpush1.bf16.msra.mxu0 0
      %6903 = vmatprep.subr.bf16.mxu0 0
      %6904 = vmatpush1.bf16.msra.mxu0 0
      %6905 = vmatprep.mubr.bf16.mxu0 0
      %6906 = vmatmul.mubr.bf16.gmra.mrb[0].mxu0 %v6768
      %v6907 = vpop.f32.mrb[0].mxu0
      %v6908 = vadd.f32 0.0, %v6907
      %v6909 = vpop.f32.mrb[0].mxu0
      %v6910 = vadd.f32 0.0, %v6909
      %v6911 = vpop.f32.mrb[0].mxu0
      %v6912 = vpop.f32.mrb[0].mxu0
      %6913 = vdwg.mxu0
      %6914 = vmatprep.subr.bf16.mxu0 0
      %6915 = vmatpush1.bf16.msra.mxu0 %v6789
      %6916 = vmatprep.subr.bf16.mxu0 0
      %6917 = vmatpush1.bf16.msra.mxu0 0
      %6918 = vmatprep.subr.bf16.mxu0 0
      %6919 = vmatpush1.bf16.msra.mxu0 0
      %6920 = vmatprep.subr.bf16.mxu0 0
      %6921 = vmatpush1.bf16.msra.mxu0 0
      %6922 = vmatprep.subr.bf16.mxu0 0
      %6923 = vmatpush1.bf16.msra.mxu0 0
      %6924 = vmatprep.subr.bf16.mxu0 0
      %6925 = vmatpush1.bf16.msra.mxu0 0
      %6926 = vmatprep.subr.bf16.mxu0 0
      %6927 = vmatpush1.bf16.msra.mxu0 0
      %6928 = vmatprep.subr.bf16.mxu0 0
      %6929 = vmatpush1.bf16.msra.mxu0 0
      %6930 = vmatprep.subr.bf16.mxu0 0
      %6931 = vmatpush1.bf16.msra.mxu0 0
      %6932 = vmatprep.subr.bf16.mxu0 0
      %6933 = vmatpush1.bf16.msra.mxu0 0
      %6934 = vmatprep.subr.bf16.mxu0 0
      %6935 = vmatpush1.bf16.msra.mxu0 0
      %6936 = vmatprep.subr.bf16.mxu0 0
      %6937 = vmatpush1.bf16.msra.mxu0 0
      %6938 = vmatprep.subr.bf16.mxu0 0
      %6939 = vmatpush1.bf16.msra.mxu0 0
      %6940 = vmatprep.subr.bf16.mxu0 0
      %6941 = vmatpush1.bf16.msra.mxu0 0
      %6942 = vmatprep.subr.bf16.mxu0 0
      %6943 = vmatpush1.bf16.msra.mxu0 0
      %6944 = vmatprep.subr.bf16.mxu0 0
      %6945 = vmatpush1.bf16.msra.mxu0 0
      %6946 = vmatprep.mubr.bf16.mxu0 0
      %6947 = vmatmul.mubr.bf16.gmra.mrb[0].mxu0 %v6768
      %v6948 = vpop.f32.mrb[0].mxu0
      %v6949 = vadd.f32 0.0, %v6948
      %v6950 = vpop.f32.mrb[0].mxu0
      %v6951 = vpop.f32.mrb[0].mxu0
      %v6952 = vpop.f32.mrb[0].mxu0
      %6953 = vdwg.mxu0
      %v6954 = vadd.f32 %v6696, %v6826
      %v6955 = vadd.f32 %v6697, %v6828
      %v6956 = vadd.f32 %v6698, %v6867
      %v6957 = vadd.f32 %v6699, %v6869
      %v6958 = vadd.f32 %v6700, %v6908
      %v6959 = vadd.f32 %v6701, %v6910
      %v6960 = vadd.f32 %v6702, %v6949
      %v6961 = vld [vmem:[%s278 + $0x2] sm:$0xff]
      %v6962 = vld [vmem:[%s278 + $0xa] sm:$0xff]
      %s6963 = scalar_lea.vmem %s1, 104
      %v6964 = vld [vmem:[%s6963] sm:$0xf]
      %v6967 = vcombine.high %v6961, %v6961
      %v6969 = vunpack.c.l.s4 1983009808
      %v6970 = vunpack.c.0.s8 %v6969
      %v6971 = vlaneseq
      %v6972 = vshrl.u32 %v6971, 7
      %v6973 = vsub.s32 %v6970, %v6972
      %v6974 = vrot.slane %v6961, %v6973
      %v6976 = vunpack.c.l.s4 1983009808
      %v6977 = vunpack.c.0.s8 %v6976
      %v6978 = vlaneseq
      %v6979 = vshrl.u32 %v6978, 7
      %v6980 = vsub.s32 %v6977, %v6979
      %v6981 = vrot.slane %v6967, %v6980
      %v6982 = vcombine.high %v6974, %v6974
      %v6983 = vcombine.high %v6981, %v6981
      %v6984 = vcombine.high %v6962, %v6962
      %v6986 = vunpack.c.l.s4 1983009808
      %v6987 = vunpack.c.0.s8 %v6986
      %v6988 = vlaneseq
      %v6989 = vshrl.u32 %v6988, 7
      %v6990 = vsub.s32 %v6987, %v6989
      %v6991 = vrot.slane %v6962, %v6990
      %v6993 = vunpack.c.l.s4 1983009808
      %v6994 = vunpack.c.0.s8 %v6993
      %v6995 = vlaneseq
      %v6996 = vshrl.u32 %v6995, 7
      %v6997 = vsub.s32 %v6994, %v6996
      %v6998 = vrot.slane %v6984, %v6997
      %v6999 = vcombine.high %v6991, %v6991
      %v7000 = vcombine.high %v6998, %v6998
      %7001 = vrot.lane.b32.xlu0 %v6974, 34
      %v7002 = vpop.permute.xlu0 %7001
      %7003 = vrot.lane.b32.xlu0 %v6982, 34
      %v7004 = vpop.permute.xlu0 %7003
      %7005 = vrot.lane.b32.xlu0 %v6981, 34
      %v7006 = vpop.permute.xlu0 %7005
      %7007 = vrot.lane.b32.xlu0 %v6983, 34
      %v7008 = vpop.permute.xlu0 %7007
      %7009 = vrot.lane.b32.xlu0 %v6991, 34
      %v7010 = vpop.permute.xlu0 %7009
      %7011 = vrot.lane.b32.xlu0 %v6999, 34
      %v7012 = vpop.permute.xlu0 %7011
      %7013 = vrot.lane.b32.xlu0 %v6998, 34
      %v7014 = vpop.permute.xlu0 %7013
      %7015 = vrot.lane.b32.xlu0 %v7000, 34
      %v7016 = vpop.permute.xlu0 %7015
      %vm7017 = vcmask 277504
      %v7018 = vsel %vm7017, %v7002, %v7004
      %v7019 = vsel %vm7017, %v7004, %v7006
      %v7020 = vsel %vm7017, %v7006, %v7008
      %v7021 = vsel %vm7017, %v7008, %v7010
      %v7022 = vsel %vm7017, %v7010, %v7012
      %v7023 = vsel %vm7017, %v7012, %v7014
      %v7024 = vsel %vm7017, %v7014, %v7016
      %v7026 = vsel %vm376, %v6964, 0
      %v7029 = vsel %vm380, %v7018, 0
      %v7032 = vsel %vm380, %v7019, 0
      %v7035 = vsel %vm380, %v7020, 0
      %v7038 = vsel %vm380, %v7021, 0
      %v7041 = vsel %vm380, %v7022, 0
      %v7044 = vsel %vm380, %v7023, 0
      %v7047 = vsel %vm380, %v7024, 0
      %7049 = vmatprep.subr.bf16.mxu0 %v7032
      %7050 = vmatpush1.bf16.msra.mxu0 %v7029
      %7051 = vmatprep.subr.bf16.mxu0 0
      %7052 = vmatpush1.bf16.msra.mxu0 0
      %7053 = vmatprep.subr.bf16.mxu0 0
      %7054 = vmatpush1.bf16.msra.mxu0 0
      %7055 = vmatprep.subr.bf16.mxu0 0
      %7056 = vmatpush1.bf16.msra.mxu0 0
      %7057 = vmatprep.subr.bf16.mxu0 0
      %7058 = vmatpush1.bf16.msra.mxu0 0
      %7059 = vmatprep.subr.bf16.mxu0 0
      %7060 = vmatpush1.bf16.msra.mxu0 0
      %7061 = vmatprep.subr.bf16.mxu0 0
      %7062 = vmatpush1.bf16.msra.mxu0 0
      %7063 = vmatprep.subr.bf16.mxu0 0
      %7064 = vmatpush1.bf16.msra.mxu0 0
      %7065 = vmatprep.subr.bf16.mxu0 0
      %7066 = vmatpush1.bf16.msra.mxu0 0
      %7067 = vmatprep.subr.bf16.mxu0 0
      %7068 = vmatpush1.bf16.msra.mxu0 0
      %7069 = vmatprep.subr.bf16.mxu0 0
      %7070 = vmatpush1.bf16.msra.mxu0 0
      %7071 = vmatprep.subr.bf16.mxu0 0
      %7072 = vmatpush1.bf16.msra.mxu0 0
      %7073 = vmatprep.subr.bf16.mxu0 0
      %7074 = vmatpush1.bf16.msra.mxu0 0
      %7075 = vmatprep.subr.bf16.mxu0 0
      %7076 = vmatpush1.bf16.msra.mxu0 0
      %7077 = vmatprep.subr.bf16.mxu0 0
      %7078 = vmatpush1.bf16.msra.mxu0 0
      %7079 = vmatprep.subr.bf16.mxu0 0
      %7080 = vmatpush1.bf16.msra.mxu0 0
      %7081 = vmatprep.mubr.bf16.mxu0 0
      %7082 = vmatmul.mubr.bf16.gmra.mrb[0].mxu0 %v7026
      %v7083 = vpop.f32.mrb[0].mxu0
      %v7084 = vadd.f32 0.0, %v7083
      %v7085 = vpop.f32.mrb[0].mxu0
      %v7086 = vadd.f32 0.0, %v7085
      %v7087 = vpop.f32.mrb[0].mxu0
      %v7088 = vpop.f32.mrb[0].mxu0
      %7089 = vdwg.mxu0
      %7090 = vmatprep.subr.bf16.mxu0 %v7038
      %7091 = vmatpush1.bf16.msra.mxu0 %v7035
      %7092 = vmatprep.subr.bf16.mxu0 0
      %7093 = vmatpush1.bf16.msra.mxu0 0
      %7094 = vmatprep.subr.bf16.mxu0 0
      %7095 = vmatpush1.bf16.msra.mxu0 0
      %7096 = vmatprep.subr.bf16.mxu0 0
      %7097 = vmatpush1.bf16.msra.mxu0 0
      %7098 = vmatprep.subr.bf16.mxu0 0
      %7099 = vmatpush1.bf16.msra.mxu0 0
      %7100 = vmatprep.subr.bf16.mxu0 0
      %7101 = vmatpush1.bf16.msra.mxu0 0
      %7102 = vmatprep.subr.bf16.mxu0 0
      %7103 = vmatpush1.bf16.msra.mxu0 0
      %7104 = vmatprep.subr.bf16.mxu0 0
      %7105 = vmatpush1.bf16.msra.mxu0 0
      %7106 = vmatprep.subr.bf16.mxu0 0
      %7107 = vmatpush1.bf16.msra.mxu0 0
      %7108 = vmatprep.subr.bf16.mxu0 0
      %7109 = vmatpush1.bf16.msra.mxu0 0
      %7110 = vmatprep.subr.bf16.mxu0 0
      %7111 = vmatpush1.bf16.msra.mxu0 0
      %7112 = vmatprep.subr.bf16.mxu0 0
      %7113 = vmatpush1.bf16.msra.mxu0 0
      %7114 = vmatprep.subr.bf16.mxu0 0
      %7115 = vmatpush1.bf16.msra.mxu0 0
      %7116 = vmatprep.subr.bf16.mxu0 0
      %7117 = vmatpush1.bf16.msra.mxu0 0
      %7118 = vmatprep.subr.bf16.mxu0 0
      %7119 = vmatpush1.bf16.msra.mxu0 0
      %7120 = vmatprep.subr.bf16.mxu0 0
      %7121 = vmatpush1.bf16.msra.mxu0 0
      %7122 = vmatprep.mubr.bf16.mxu0 0
      %7123 = vmatmul.mubr.bf16.gmra.mrb[0].mxu0 %v7026
      %v7124 = vpop.f32.mrb[0].mxu0
      %v7125 = vadd.f32 0.0, %v7124
      %v7126 = vpop.f32.mrb[0].mxu0
      %v7127 = vadd.f32 0.0, %v7126
      %v7128 = vpop.f32.mrb[0].mxu0
      %v7129 = vpop.f32.mrb[0].mxu0
      %7130 = vdwg.mxu0
      %7131 = vmatprep.subr.bf16.mxu0 %v7044
      %7132 = vmatpush1.bf16.msra.mxu0 %v7041
      %7133 = vmatprep.subr.bf16.mxu0 0
      %7134 = vmatpush1.bf16.msra.mxu0 0
      %7135 = vmatprep.subr.bf16.mxu0 0
      %7136 = vmatpush1.bf16.msra.mxu0 0
      %7137 = vmatprep.subr.bf16.mxu0 0
      %7138 = vmatpush1.bf16.msra.mxu0 0
      %7139 = vmatprep.subr.bf16.mxu0 0
      %7140 = vmatpush1.bf16.msra.mxu0 0
      %7141 = vmatprep.subr.bf16.mxu0 0
      %7142 = vmatpush1.bf16.msra.mxu0 0
      %7143 = vmatprep.subr.bf16.mxu0 0
      %7144 = vmatpush1.bf16.msra.mxu0 0
      %7145 = vmatprep.subr.bf16.mxu0 0
      %7146 = vmatpush1.bf16.msra.mxu0 0
      %7147 = vmatprep.subr.bf16.mxu0 0
      %7148 = vmatpush1.bf16.msra.mxu0 0
      %7149 = vmatprep.subr.bf16.mxu0 0
      %7150 = vmatpush1.bf16.msra.mxu0 0
      %7151 = vmatprep.subr.bf16.mxu0 0
      %7152 = vmatpush1.bf16.msra.mxu0 0
      %7153 = vmatprep.subr.bf16.mxu0 0
      %7154 = vmatpush1.bf16.msra.mxu0 0
      %7155 = vmatprep.subr.bf16.mxu0 0
      %7156 = vmatpush1.bf16.msra.mxu0 0
      %7157 = vmatprep.subr.bf16.mxu0 0
      %7158 = vmatpush1.bf16.msra.mxu0 0
      %7159 = vmatprep.subr.bf16.mxu0 0
      %7160 = vmatpush1.bf16.msra.mxu0 0
      %7161 = vmatprep.subr.bf16.mxu0 0
      %7162 = vmatpush1.bf16.msra.mxu0 0
      %7163 = vmatprep.mubr.bf16.mxu0 0
      %7164 = vmatmul.mubr.bf16.gmra.mrb[0].mxu0 %v7026
      %v7165 = vpop.f32.mrb[0].mxu0
      %v7166 = vadd.f32 0.0, %v7165
      %v7167 = vpop.f32.mrb[0].mxu0
      %v7168 = vadd.f32 0.0, %v7167
      %v7169 = vpop.f32.mrb[0].mxu0
      %v7170 = vpop.f32.mrb[0].mxu0
      %7171 = vdwg.mxu0
      %7172 = vmatprep.subr.bf16.mxu0 0
      %7173 = vmatpush1.bf16.msra.mxu0 %v7047
      %7174 = vmatprep.subr.bf16.mxu0 0
      %7175 = vmatpush1.bf16.msra.mxu0 0
      %7176 = vmatprep.subr.bf16.mxu0 0
      %7177 = vmatpush1.bf16.msra.mxu0 0
      %7178 = vmatprep.subr.bf16.mxu0 0
      %7179 = vmatpush1.bf16.msra.mxu0 0
      %7180 = vmatprep.subr.bf16.mxu0 0
      %7181 = vmatpush1.bf16.msra.mxu0 0
      %7182 = vmatprep.subr.bf16.mxu0 0
      %7183 = vmatpush1.bf16.msra.mxu0 0
      %7184 = vmatprep.subr.bf16.mxu0 0
      %7185 = vmatpush1.bf16.msra.mxu0 0
      %7186 = vmatprep.subr.bf16.mxu0 0
      %7187 = vmatpush1.bf16.msra.mxu0 0
      %7188 = vmatprep.subr.bf16.mxu0 0
      %7189 = vmatpush1.bf16.msra.mxu0 0
      %7190 = vmatprep.subr.bf16.mxu0 0
      %7191 = vmatpush1.bf16.msra.mxu0 0
      %7192 = vmatprep.subr.bf16.mxu0 0
      %7193 = vmatpush1.bf16.msra.mxu0 0
      %7194 = vmatprep.subr.bf16.mxu0 0
      %7195 = vmatpush1.bf16.msra.mxu0 0
      %7196 = vmatprep.subr.bf16.mxu0 0
      %7197 = vmatpush1.bf16.msra.mxu0 0
      %7198 = vmatprep.subr.bf16.mxu0 0
      %7199 = vmatpush1.bf16.msra.mxu0 0
      %7200 = vmatprep.subr.bf16.mxu0 0
      %7201 = vmatpush1.bf16.msra.mxu0 0
      %7202 = vmatprep.subr.bf16.mxu0 0
      %7203 = vmatpush1.bf16.msra.mxu0 0
      %7204 = vmatprep.mubr.bf16.mxu0 0
      %7205 = vmatmul.mubr.bf16.gmra.mrb[0].mxu0 %v7026
      %v7206 = vpop.f32.mrb[0].mxu0
      %v7207 = vadd.f32 0.0, %v7206
      %v7208 = vpop.f32.mrb[0].mxu0
      %v7209 = vpop.f32.mrb[0].mxu0
      %v7210 = vpop.f32.mrb[0].mxu0
      %7211 = vdwg.mxu0
      %v7212 = vadd.f32 %v6954, %v7084
      %v7213 = vadd.f32 %v6955, %v7086
      %v7214 = vadd.f32 %v6956, %v7125
      %v7215 = vadd.f32 %v6957, %v7127
      %v7216 = vadd.f32 %v6958, %v7166
      %v7217 = vadd.f32 %v6959, %v7168
      %v7218 = vadd.f32 %v6960, %v7207
      %7219 = vst [vmem:[%s292] sm:$0xff] %v7212
      %7220 = vst [vmem:[%s292 + $0x8] sm:$0xff] %v7213
      %7221 = vst [vmem:[%s292 + $0x10] sm:$0xff] %v7214
      %7222 = vst [vmem:[%s292 + $0x18] sm:$0xff] %v7215
      %7223 = vst [vmem:[%s292 + $0x20] sm:$0xff] %v7216
      %7224 = vst [vmem:[%s292 + $0x28] sm:$0xff] %v7217
      %7225 = vst [vmem:[%s292 + $0x30] sm:$0xff] %v7218
      %v7226 = vld [vmem:[%s282] sm:$0xff]
      %v7228 = vlaneseq
      %v7229 = vshrl.u32 %v7228, 7
      %v7230 = vsub.s32 0, %v7229
      %v7231 = vrot.slane %v7226, %v7230
      %v7232 = vlaneseq
      %v7233 = vshrl.u32 %v7232, 7
      %v7234 = vsub.s32 1, %v7233
      %v7235 = vrot.slane %v7226, %v7234
      %v7236 = vlaneseq
      %v7237 = vshrl.u32 %v7236, 7
      %v7238 = vsub.s32 2, %v7237
      %v7239 = vrot.slane %v7226, %v7238
      %v7240 = vlaneseq
      %v7241 = vshrl.u32 %v7240, 7
      %v7242 = vsub.s32 3, %v7241
      %v7243 = vrot.slane %v7226, %v7242
      %v7244 = vlaneseq
      %v7245 = vshrl.u32 %v7244, 7
      %v7246 = vsub.s32 4, %v7245
      %v7247 = vrot.slane %v7226, %v7246
      %v7248 = vlaneseq
      %v7249 = vshrl.u32 %v7248, 7
      %v7250 = vsub.s32 5, %v7249
      %v7251 = vrot.slane %v7226, %v7250
      %v7252 = vlaneseq
      %v7253 = vshrl.u32 %v7252, 7
      %v7254 = vsub.s32 6, %v7253
      %v7255 = vrot.slane %v7226, %v7254
      %v7263 = vmul.f32 %v7212, %v7231
      %v7264 = vmul.f32 %v7213, %v7235
      %v7265 = vmul.f32 %v7214, %v7239
      %v7266 = vmul.f32 %v7215, %v7243
      %v7267 = vmul.f32 %v7216, %v7247
      %v7268 = vmul.f32 %v7217, %v7251
      %v7269 = vmul.f32 %v7218, %v7255
      %v7270 = vld [vmem:[%s297] sm:$0xff]
      %v7271 = vadd.f32 %v7263, %v7264
      %v7272 = vadd.f32 %v7271, %v7265
      %v7273 = vadd.f32 %v7272, %v7266
      %v7274 = vadd.f32 %v7273, %v7267
      %v7275 = vadd.f32 %v7274, %v7268
      %v7276 = vadd.f32 %v7275, %v7269
      %7277 = vadd.xlane.f32.xlu0 %v7276
      %v7278 = vpop.xlane.xlu0 %7277
      %v7279 = vadd.f32 %v7270, %v7278
      %vm7280 = vcmask 7168
      %7281 = vst.msk [vmem:[%s297] sm:$0xff] %vm7280, %v7279
      %v7282 = vld [vmem:[%s301] sm:$0xff]
      %v7283 = vmul.f32 %v7263, %v7212
      %v7284 = vmul.f32 %v7264, %v7213
      %v7285 = vmul.f32 %v7265, %v7214
      %v7286 = vmul.f32 %v7266, %v7215
      %v7287 = vmul.f32 %v7267, %v7216
      %v7288 = vmul.f32 %v7268, %v7217
      %v7289 = vmul.f32 %v7269, %v7218
      %v7290 = vadd.f32 %v7283, %v7284
      %v7291 = vadd.f32 %v7290, %v7285
      %v7292 = vadd.f32 %v7291, %v7286
      %v7293 = vadd.f32 %v7292, %v7287
      %v7294 = vadd.f32 %v7293, %v7288
      %v7295 = vadd.f32 %v7294, %v7289
      %7296 = vadd.xlane.f32.xlu0 %v7295
      %v7297 = vpop.xlane.xlu0 %7296
      %v7298 = vadd.f32 %v7282, %v7297
      %7299 = vst.msk [vmem:[%s301] sm:$0xff] %vm7280, %v7298
      %s7300 = smul.u32 7, %s22
      %p7301 = scmp.lt.s32.totalorder %s21, 1
      %s7302 = scalar_select %p7301, %s21, 1
      %p7303 = scmp.lt.s32.totalorder %s7300, 6
      %s7304 = scalar_select %p7303, %s7300, 6
      %s7305 = smul.addr %s7302, 7
      %s7306 = sadd.s32 %s7304, %s7305
      %s7307 = smul.addr %s7306, 8
      %s7308 = scalar_lea.vmem %s3, %s7307
      %p7309 = scmp.lt.s32.totalorder %s21, 1
      %s7310 = scalar_select %p7309, %s21, 1
      %s7311 = smul.addr %s7310, 8
      %s7312 = scalar_lea.vmem %s4, %s7311
      %p7313 = scmp.lt.s32.totalorder %s21, 1
      %s7314 = scalar_select %p7313, %s21, 1
      %s7315 = smul.addr %s7314, 8
      %s7316 = scalar_lea.vmem %s5, %s7315
      // Predicated region
      $region37: #{basic_block_forward.2} parent=31 // pred_check
        %p7317 = pneg %p124
      $region38: #{basic_block_forward.2} parent=31 // pred_check_branch
        %7319 = sbr.rel (%p7317) target = $region40
      $region39: #{basic_block_forward.2} parent=31 // pred_region
        %s7320 = smul.u32 7, %s22
      $region40: #{basic_block_forward.2} parent=31 // pred_fallthru
        _
      // Predicated region
      $region41: #{basic_block_forward.2} parent=31 // pred_check
        %p7321 = pneg %p150
      $region42: #{basic_block_forward.2} parent=31 // pred_check_branch
        %7323 = sbr.rel (%p7321) target = $region44
      $region43: #{basic_block_forward.2} parent=31 // pred_region
        _
      $region44: #{basic_block_forward.2} parent=31 // pred_fallthru
        _
      // Predicated region
      $region45: #{basic_block_forward.2} parent=31 // pred_check
        %p7324 = pneg %p176
      $region46: #{basic_block_forward.2} parent=31 // pred_check_branch
        %7326 = sbr.rel (%p7324) target = $region48
      $region47: #{basic_block_forward.2} parent=31 // pred_region
        _
      $region48: #{basic_block_forward.2} parent=31 // pred_fallthru
        _
    $region32: #{basic_block_forward.2} parent=5 // pred_fallthru
      _
    %p7327 = scmp.le.s32.totalorder 2, %s12
    // Predicated region
    $region49: #{basic_block_forward.2} parent=5 // pred_check
      %p7328 = pneg %p7327
    $region50: #{basic_block_forward.2} parent=5 // pred_check_branch
      %7330 = sbr.rel (%p7328) target = $region52
    $region51: #{basic_block_forward.2} parent=5 // pred_region
      %s7331 = ssub.s32 %s12, 2
      // Predicated region
      $region53: #{basic_block_forward.2} parent=51 // pred_check
        %p7332 = pneg %p130
      $region54: #{basic_block_forward.2} parent=51 // pred_check_branch
        %7334 = sbr.rel (%p7332) target = $region56
      $region55: #{basic_block_forward.2} parent=51 // pred_region
        %s7335 = smul.u32 7, %s24
        %p7336 = scmp.lt.s32.totalorder %s23, 1
        %s7337 = scalar_select %p7336, %s23, 1
        %p7338 = scmp.lt.s32.totalorder %s7335, 6
        %s7339 = scalar_select %p7338, %s7335, 6
        %s7340 = smul.addr %s7337, 7
        %s7341 = sadd.s32 %s7339, %s7340
        %s7342 = smul.addr %s7341, 8
        %s7343 = scalar_lea.vmem %s3, %s7342
      $region56: #{basic_block_forward.2} parent=51 // pred_fallthru
        _
      // Predicated region
      $region57: #{basic_block_forward.2} parent=51 // pred_check
        %p7344 = pneg %p156
      $region58: #{basic_block_forward.2} parent=51 // pred_check_branch
        %7346 = sbr.rel (%p7344) target = $region60
      $region59: #{basic_block_forward.2} parent=51 // pred_region
        %p7347 = scmp.lt.s32.totalorder %s23, 1
        %s7348 = scalar_select %p7347, %s23, 1
        %s7349 = smul.addr %s7348, 8
        %s7350 = scalar_lea.vmem %s4, %s7349
      $region60: #{basic_block_forward.2} parent=51 // pred_fallthru
        _
      // Predicated region
      $region61: #{basic_block_forward.2} parent=51 // pred_check
        %p7351 = pneg %p182
      $region62: #{basic_block_forward.2} parent=51 // pred_check_branch
        %7353 = sbr.rel (%p7351) target = $region64
      $region63: #{basic_block_forward.2} parent=51 // pred_region
        %p7354 = scmp.lt.s32.totalorder %s23, 1
        %s7355 = scalar_select %p7354, %s23, 1
        %s7356 = smul.addr %s7355, 8
        %s7357 = scalar_lea.vmem %s5, %s7356
      $region64: #{basic_block_forward.2} parent=51 // pred_fallthru
        _
    $region52: #{basic_block_forward.2} parent=5 // pred_fallthru
      _
  $region6: #{basic_block_forward.2} parent=0 // loop_footer
    %s16 = sadd.s32 1, %s12
  $region7: #{basic_block_forward.2} parent=0 // loop_footer_branch
    %11 = sbr.rel target = $region3
  $region8: #{basic_block_forward.2} parent=0 // loop_exit
    _

</llo_original>
